<compile_context>
chip_gen: v5e
topology: v5e:2x2
jax: 0.10.0
libtpu: 0.0.40
codegen_flags: <defaults>
</compile_context>

<pallas_src>
import math
from functools import partial

import jax
import jax.numpy as jnp
from jax import lax
from jax.experimental import pallas as pl
from jax.experimental.pallas import tpu as pltpu


# ----------------------------- kernel -------------------------------------


def encoder_block_kernel(
    x_ref,       # (Bt, S, D)  float32 activations
    wqkv_ref,    # (D, 3D)     compute dtype, columns reordered to [Q | K | V], Q pre-scaled
    bqkv_ref,    # (1, 3D)     float32, reordered/scaled to match
    wo_ref,      # (D, D)      compute dtype
    bo_ref,      # (1, D)      float32
    g1_ref,      # (1, D)      float32  LayerNorm1 gamma
    beta1_ref,   # (1, D)      float32  LayerNorm1 beta
    w1_ref,      # (D, F)      compute dtype
    b1_ref,      # (1, F)      float32
    w2_ref,      # (F, D)      compute dtype
    b2_ref,      # (1, D)      float32
    g2_ref,      # (1, D)      float32  LayerNorm2 gamma
    beta2_ref,   # (1, D)      float32  LayerNorm2 beta
    out_ref,     # (Bt, S, D)  float32
    *,
    num_heads: int,
):
    Bt, S, D = x_ref.shape
    H = num_heads
    hd = D // H
    R = Bt * S
    cdt = wqkv_ref.dtype                         # MXU compute dtype (bf16 or f32)
    exact_recip = jnp.dtype(cdt) == jnp.dtype(jnp.float32)

    x = x_ref[...].reshape(R, D)                 # (R, D) f32 — kept for residual

    # ---- QKV projection: one MXU-sized matmul, f32 accumulation ----
    # (1/sqrt(hd) softmax scale is pre-folded into the Q weight/bias columns.)
    qkv = jnp.dot(x.astype(cdt), wqkv_ref[...],
                  preferred_element_type=jnp.float32) + bqkv_ref[0]   # (R, 3D) f32

    # ---- head-batched attention ----
    # Heads are stacked on the LEADING axis so every matmul is a single
    # lane-dense 3-D einsum (no per-head loop, no masked sub-vreg VMEM stores).
    def split_heads(section):                    # (R, D) f32 -> (H*Bt, S, hd)
        return jnp.concatenate(
            [section[:, h * hd:(h + 1) * hd].reshape(Bt, S, hd) for h in range(H)],
            axis=0)

    qh = split_heads(qkv[:, 0 * D:1 * D]).astype(cdt)
    kh = split_heads(qkv[:, 1 * D:2 * D]).astype(cdt)
    vh = split_heads(qkv[:, 2 * D:3 * D]).astype(cdt)

    logits = jnp.einsum("gqd,gkd->gqk", qh, kh,
                        preferred_element_type=jnp.float32)           # (H*Bt,S,S) f32
    m = jnp.max(logits, axis=-1, keepdims=True)
    e = jnp.exp(logits - m)                                           # f32 (EUP)
    denom = jnp.sum(e, axis=-1, keepdims=True)                        # (H*Bt,S,1)
    # Exact reciprocal in the f32 validation path; EUP approx in the bf16 path.
    inv = (1.0 / denom) if exact_recip else pl.reciprocal(denom, approx=True)
    pv = jnp.einsum("gqk,gkd->gqd", e.astype(cdt), vh,
                    preferred_element_type=jnp.float32)               # (H*Bt,S,hd)
    pv = pv * inv                                                     # post-matmul normalize

    # Re-assemble the (R, D) lane-dense slab (heads back onto lanes, one concat).
    vals = jnp.concatenate(
        [pv[h * Bt:(h + 1) * Bt].reshape(R, hd) for h in range(H)], axis=-1)

    # ---- output projection (single MXU-sized matmul over the slab) ----
    attn_out = jnp.dot(vals.astype(cdt), wo_ref[...],
                       preferred_element_type=jnp.float32) + bo_ref[0]   # (R, D)

    # ---- residual + LayerNorm1 (f32 statistics) ----
    x1 = x + attn_out
    mu1 = jnp.mean(x1, axis=-1, keepdims=True)
    var1 = jnp.mean((x1 - mu1) * (x1 - mu1), axis=-1, keepdims=True)
    xn1 = (x1 - mu1) * lax.rsqrt(var1 + 1e-5) * g1_ref[0] + beta1_ref[0]

    # ---- feed-forward: Linear -> (Dropout p=0) -> ReLU -> Linear ----
    h1 = jnp.dot(xn1.astype(cdt), w1_ref[...],
                 preferred_element_type=jnp.float32) + b1_ref[0]
    h1 = jnp.maximum(h1, 0.0)
    ff = jnp.dot(h1.astype(cdt), w2_ref[...],
                 preferred_element_type=jnp.float32) + b2_ref[0]

    # ---- residual + LayerNorm2 (f32 statistics) ----
    x2 = xn1 + ff
    mu2 = jnp.mean(x2, axis=-1, keepdims=True)
    var2 = jnp.mean((x2 - mu2) * (x2 - mu2), axis=-1, keepdims=True)
    out = (x2 - mu2) * lax.rsqrt(var2 + 1e-5) * g2_ref[0] + beta2_ref[0]

    out_ref[...] = out.reshape(Bt, S, D).astype(out_ref.dtype)


# ----------------------------- wrapper -------------------------------------


def _pick_batch_block(batch, seq_len, target_rows=512):
    """Prefer ONE grid step covering the whole batch (v5e/v6e are single-TC:
    extra steps just shrink MXU tiles and double per-step overhead).  Only split
    when the per-step row count would exceed ~target_rows."""
    if batch * seq_len <= target_rows:
        return batch
    best = 1
    for c in range(batch, 0, -1):
        if batch % c == 0 and c * seq_len <= target_rows:
            best = c
            break
    return best


def _estimate_vmem_bytes(Bt, S, D, F, H, compute_dtype, *, single_buffered_weights):
    """Footprint-based VMEM request (weights + double-buffered activations +
    in-kernel temporaries) with headroom, instead of claiming all of VMEM
    (v7x only has 64 MiB/TC physically)."""
    cb = jnp.dtype(compute_dtype).itemsize
    R = Bt * S
    wmult = 1 if single_buffered_weights else 2
    weights = wmult * (3 * D * D + D * D + D * F + F * D) * cb
    biases = wmult * (3 * D + 6 * D + F) * 4
    act_io = 2 * 2 * R * D * 4                         # x & out blocks, double-buffered, f32
    qkv_tmp = R * 3 * D * (4 + cb)                     # f32 qkv + compute-dtype head copies
    attn_tmp = 2 * H * Bt * S * S * 4 + 2 * R * D * 4  # logits/probs + pv/vals slabs
    ffn_tmp = R * F * (4 + cb) + 2 * R * D * 4
    est = weights + biases + act_io + qkv_tmp + attn_tmp + ffn_tmp
    est = int(est * 1.5) + (4 << 20)                   # compiler temporaries / spill headroom
    # TODO(synk): at production D/F on v7x (64 MiB physical) the FFN should be
    # tiled over F so w1/w2 and the (R,F) hidden slab stream instead of residing.
    return max(32 << 20, min(est, 96 << 20))


def prepare_layer_params(p, num_heads, compute_dtype):
    """Host-side, ONE-TIME weight prep: reorder QKV columns to [Q|K|V] (heads
    contiguous inside each section), fold 1/sqrt(head_dim) into the Q section,
    cast matmul weights to the MXU compute dtype."""
    D = p["wo"].shape[0]
    H = num_heads
    hd = D // H
    f32 = jnp.float32
    scale = 1.0 / math.sqrt(hd)
    # torch layout: output column j = h*3*hd + s*hd + c (s in {q,k,v})
    wqkv = p["wqkv"].reshape(D, H, 3, hd).transpose(0, 2, 1, 3).reshape(D, 3 * D)
    bqkv = p["bqkv"].reshape(1, H, 3, hd).transpose(0, 2, 1, 3).reshape(1, 3 * D)
    wqkv = wqkv.at[:, :D].multiply(scale)   # fold softmax scale into Q columns
    bqkv = bqkv.at[:, :D].multiply(scale)
    return {
        "wqkv": wqkv.astype(compute_dtype),
        "bqkv": bqkv.astype(f32),
        "wo": p["wo"].astype(compute_dtype),
        "bo": p["bo"].astype(f32),
        "gamma1": p["gamma1"].astype(f32),
        "beta1": p["beta1"].astype(f32),
        "w1": p["w1"].astype(compute_dtype),
        "b1": p["b1"].astype(f32),
        "w2": p["w2"].astype(compute_dtype),
        "b2": p["b2"].astype(f32),
        "gamma2": p["gamma2"].astype(f32),
        "beta2": p["beta2"].astype(f32),
    }


def prepare_encoder_params(layer_params, num_heads, compute_dtype):
    return [prepare_layer_params(p, num_heads, compute_dtype) for p in layer_params]


def encoder_block_apply(x, kp, num_heads, *, block_batch=None):
    """One EncoderBlock layer via a single pallas_call (grid over batch blocks)."""
    B, S, D = x.shape
    F = kp["w1"].shape[1]
    Bt = block_batch if block_batch is not None else _pick_batch_block(B, S)
    assert B % Bt == 0, "batch must be divisible by the batch block"
    cdt = kp["wqkv"].dtype

    weight_shapes = [
        (D, 3 * D), (1, 3 * D),            # wqkv, bqkv
        (D, D), (1, D),                    # wo, bo
        (1, D), (1, D),                    # gamma1, beta1
        (D, F), (1, F),                    # w1, b1
        (F, D), (1, D),                    # w2, b2
        (1, D), (1, D),                    # gamma2, beta2
    ]

    def make_call(weight_mode):
        def const_spec(shape):
            nd = len(shape)

            def idx(b, _nd=nd):
                return (0,) * _nd

            if weight_mode is None:
                return pl.BlockSpec(shape, idx)
            return pl.BlockSpec(shape, idx, pipeline_mode=weight_mode)

        in_specs = [pl.BlockSpec((Bt, S, D), lambda b: (b, 0, 0))] + [
            const_spec(s) for s in weight_shapes
        ]
        out_spec = pl.BlockSpec((Bt, S, D), lambda b: (b, 0, 0))

        return pl.pallas_call(
            partial(encoder_block_kernel, num_heads=num_heads),
            out_shape=jax.ShapeDtypeStruct((B, S, D), x.dtype),
            grid_spec=pltpu.PrefetchScalarGridSpec(
                num_scalar_prefetch=0,
                grid=(B // Bt,),
                in_specs=in_specs,
                out_specs=out_spec,
            ),
            compiler_params=pltpu.CompilerParams(
                dimension_semantics=("parallel",),
                vmem_limit_bytes=_estimate_vmem_bytes(
                    Bt, S, D, F, num_heads, cdt,
                    single_buffered_weights=weight_mode is not None),
            ),
        )

    args = (x,
            kp["wqkv"], kp["bqkv"], kp["wo"], kp["bo"],
            kp["gamma1"], kp["beta1"], kp["w1"], kp["b1"],
            kp["w2"], kp["b2"], kp["gamma2"], kp["beta2"])

    try:
        # Grid-invariant weights/biases: single-buffered (halves weight VMEM).
        return make_call(pl.Buffered(1))(*args)
    except Exception:
        # Compatibility fallback if pipeline_mode=Buffered(1) is unsupported.
        return make_call(None)(*args)


def transformer_encoder_apply(x, prepared_layers, num_heads, *, block_batch=None):
    # TODO(synk): fuse the per-layer pallas_calls (layer grid axis or cross-call
    # DMA futures) to hide each layer's weight load behind the previous layer's
    # compute; optionally carry bf16 activations between layers.
    x = x.astype(jnp.float32)
    for kp in prepared_layers:
        x = encoder_block_apply(x, kp, num_heads, block_batch=block_batch)
    return x


# ----------------------------- param init ----------------------------------


def xavier_uniform(key, fan_in, fan_out, shape):
    a = math.sqrt(6.0 / (fan_in + fan_out))
    return jax.random.uniform(key, shape, jnp.float32, minval=-a, maxval=a)


def init_layer_params(key, input_dim, dim_feedforward):
    D, F = input_dim, dim_feedforward
    keys = jax.random.split(key, 4)
    # weights stored as [in, out] (transposed vs torch Linear weight [out, in]);
    # wqkv columns use the torch per-head-interleaved convention.
    return {
        "wqkv": xavier_uniform(keys[0], D, 3 * D, (D, 3 * D)),
        "bqkv": jnp.zeros((1, 3 * D), jnp.float32),
        "wo": xavier_uniform(keys[1], D, D, (D, D)),
        "bo": jnp.zeros((1, D), jnp.float32),
        "gamma1": jnp.ones((1, D), jnp.float32),
        "beta1": jnp.zeros((1, D), jnp.float32),
        "w1": xavier_uniform(keys[2], D, F, (D, F)),
        "b1": jnp.zeros((1, F), jnp.float32),
        "w2": xavier_uniform(keys[3], F, D, (F, D)),
        "b2": jnp.zeros((1, D), jnp.float32),
        "gamma2": jnp.ones((1, D), jnp.float32),
        "beta2": jnp.zeros((1, D), jnp.float32),
    }


# ----------------------------- reference (pure JAX) -------------------------


def encoder_block_ref(x, p, num_heads, compute_dtype=jnp.float32):
    """Pure-JAX mirror of the PyTorch EncoderBlock (matmul operands cast to
    compute_dtype, f32 accumulation) using the original interleaved weights."""
    B, S, D = x.shape
    hd = D // num_heads
    cdt = compute_dtype

    def mm(a, b):
        return jnp.matmul(a.astype(cdt), b.astype(cdt),
                          preferred_element_type=jnp.float32)

    qkv = mm(x, p["wqkv"]) + p["bqkv"][0]
    qkv = qkv.reshape(B, S, num_heads, 3 * hd).transpose(0, 2, 1, 3)
    q, k, v = jnp.split(qkv, 3, axis=-1)
    logits = jnp.einsum("bhqd,bhkd->bhqk", q.astype(cdt), k.astype(cdt),
                        preferred_element_type=jnp.float32) / math.sqrt(hd)
    attn = jax.nn.softmax(logits, axis=-1)
    vals = jnp.einsum("bhqk,bhkd->bhqd", attn.astype(cdt), v.astype(cdt),
                      preferred_element_type=jnp.float32)
    vals = vals.transpose(0, 2, 1, 3).reshape(B, S, D)
    o = mm(vals, p["wo"]) + p["bo"][0]
    x1 = x + o
    mu = x1.mean(-1, keepdims=True)
    var = ((x1 - mu) ** 2).mean(-1, keepdims=True)
    xn1 = (x1 - mu) / jnp.sqrt(var + 1e-5) * p["gamma1"][0] + p["beta1"][0]
    h1 = jnp.maximum(mm(xn1, p["w1"]) + p["b1"][0], 0.0)
    ff = mm(h1, p["w2"]) + p["b2"][0]
    x2 = xn1 + ff
    mu2 = x2.mean(-1, keepdims=True)
    var2 = ((x2 - mu2) ** 2).mean(-1, keepdims=True)
    return (x2 - mu2) / jnp.sqrt(var2 + 1e-5) * p["gamma2"][0] + p["beta2"][0]


# ----------------------------- main -----------------------------------------


if __name__ == "__main__":
    # Small but TPU-friendly config: lane-dense D (multiple of 128), S % 8 == 0.
    num_layers = 2
    batch, seq_len, input_dim = 4, 16, 128
    num_heads = 4
    dim_feedforward = 256

    root = jax.random.PRNGKey(0)
    kx, kp = jax.random.split(root)
    x = jax.random.normal(kx, (batch, seq_len, input_dim), jnp.float32)

    layer_keys = jax.random.split(kp, num_layers)
    layer_params = [init_layer_params(k, input_dim, dim_feedforward) for k in layer_keys]

    # Host-side weight prep hoisted out of the forward pass (done once per dtype).
    prep_f32 = prepare_encoder_params(layer_params, num_heads, jnp.float32)
    prep_bf16 = prepare_encoder_params(layer_params, num_heads, jnp.bfloat16)

    # (1) f32 compute path: tight check against the module reference (exact softmax).
    out_f32 = jax.block_until_ready(
        transformer_encoder_apply(x, prep_f32, num_heads))
    ref_f32 = x
    for p in layer_params:
        ref_f32 = encoder_block_ref(ref_f32, p, num_heads, jnp.float32)
    assert out_f32.shape == (batch, seq_len, input_dim)
    err_f32 = float(jnp.max(jnp.abs(out_f32 - ref_f32)))
    assert err_f32 < 1e-2, f"f32 mismatch vs reference: max abs err {err_f32}"

    # (2) bf16 (MXU-native) compute path: check against a reference that mirrors
    #     the bf16 matmul-operand casts (accumulation stays f32 in both).
    out_bf16 = jax.block_until_ready(
        transformer_encoder_apply(x, prep_bf16, num_heads))
    ref_bf16 = x
    for p in layer_params:
        ref_bf16 = encoder_block_ref(ref_bf16, p, num_heads, jnp.bfloat16)
    err_bf16 = float(jnp.max(jnp.abs(out_bf16 - ref_bf16)))
    assert err_bf16 < 5e-2, f"bf16 mismatch vs reference: max abs err {err_bf16}"

    # TODO(synk): MultiHeadLinformerAttention (use_linformer=True) branch is not
    # implemented; this script covers the standard MultiheadAttention encoder
    # path with dropout=0 (eval) and mask=None.
    print("KERNEL_OK")
</pallas_src>

<mosaic_0001>
module attributes {stable_mosaic.version = 11 : i64} {
  func.func @encoder_block_kernel(%arg0: i32, %arg1: memref<4x16x128xf32, #tpu.memory_space<vmem>>, %arg2: memref<128x384xf32, #tpu.memory_space<vmem>>, %arg3: memref<1x384xf32, #tpu.memory_space<vmem>>, %arg4: memref<128x128xf32, #tpu.memory_space<vmem>>, %arg5: memref<1x128xf32, #tpu.memory_space<vmem>>, %arg6: memref<1x128xf32, #tpu.memory_space<vmem>>, %arg7: memref<1x128xf32, #tpu.memory_space<vmem>>, %arg8: memref<128x256xf32, #tpu.memory_space<vmem>>, %arg9: memref<1x256xf32, #tpu.memory_space<vmem>>, %arg10: memref<256x128xf32, #tpu.memory_space<vmem>>, %arg11: memref<1x128xf32, #tpu.memory_space<vmem>>, %arg12: memref<1x128xf32, #tpu.memory_space<vmem>>, %arg13: memref<1x128xf32, #tpu.memory_space<vmem>>, %arg14: memref<4x16x128xf32, #tpu.memory_space<vmem>>) attributes {dimension_semantics = [#tpu.dimension_semantics<parallel>], iteration_bounds = array<i64: 1>, scalar_prefetch = 0 : i64, scratch_operands = 0 : i64, tpu.core_type = #tpu.core_type<tc>, window_params = [{transform_indices = @transform_0, window_bounds = array<i64: 4, 16, 128>}, {pipeline_mode = #tpu.pipeline_mode<synchronous>, transform_indices = @transform_1, window_bounds = array<i64: 128, 384>}, {pipeline_mode = #tpu.pipeline_mode<synchronous>, transform_indices = @transform_2, window_bounds = array<i64: 1, 384>}, {pipeline_mode = #tpu.pipeline_mode<synchronous>, transform_indices = @transform_3, window_bounds = array<i64: 128, 128>}, {pipeline_mode = #tpu.pipeline_mode<synchronous>, transform_indices = @transform_4, window_bounds = array<i64: 1, 128>}, {pipeline_mode = #tpu.pipeline_mode<synchronous>, transform_indices = @transform_5, window_bounds = array<i64: 1, 128>}, {pipeline_mode = #tpu.pipeline_mode<synchronous>, transform_indices = @transform_6, window_bounds = array<i64: 1, 128>}, {pipeline_mode = #tpu.pipeline_mode<synchronous>, transform_indices = @transform_7, window_bounds = array<i64: 128, 256>}, {pipeline_mode = #tpu.pipeline_mode<synchronous>, transform_indices = @transform_8, window_bounds = array<i64: 1, 256>}, {pipeline_mode = #tpu.pipeline_mode<synchronous>, transform_indices = @transform_9, window_bounds = array<i64: 256, 128>}, {pipeline_mode = #tpu.pipeline_mode<synchronous>, transform_indices = @transform_10, window_bounds = array<i64: 1, 128>}, {pipeline_mode = #tpu.pipeline_mode<synchronous>, transform_indices = @transform_11, window_bounds = array<i64: 1, 128>}, {pipeline_mode = #tpu.pipeline_mode<synchronous>, transform_indices = @transform_12, window_bounds = array<i64: 1, 128>}, {transform_indices = @transform_13, window_bounds = array<i64: 4, 16, 128>}]} {
    %c0 = arith.constant 0 : index
    %c0_0 = arith.constant 0 : index
    %c0_1 = arith.constant 0 : index
    %0 = vector.load %arg1[%c0, %c0_0, %c0_1] : memref<4x16x128xf32, #tpu.memory_space<vmem>>, vector<4x16x128xf32>
    %1 = vector.shape_cast %0 : vector<4x16x128xf32> to vector<64x128xf32>
    %c0_2 = arith.constant 0 : index
    %c0_3 = arith.constant 0 : index
    %2 = vector.load %arg2[%c0_2, %c0_3] : memref<128x384xf32, #tpu.memory_space<vmem>>, vector<128x384xf32>
    %cst = arith.constant dense<0.000000e+00> : vector<64x384xf32>
    %3 = tpu.matmul %1, %2, %cst {dimension_numbers = #tpu.dot_dimension_numbers<[1], [0], [0], [1], [0, 0, 1, 1], [], []>} : vector<64x128xf32>, vector<128x384xf32>, vector<64x384xf32> -> vector<64x384xf32>
    %c0_4 = arith.constant 0 : index
    %c0_5 = arith.constant 0 : index
    %4 = vector.load %arg3[%c0_4, %c0_5] : memref<1x384xf32, #tpu.memory_space<vmem>>, vector<1x384xf32>
    %5 = vector.shape_cast %4 : vector<1x384xf32> to vector<384xf32>
    %6 = vector.shape_cast %5 : vector<384xf32> to vector<1x384xf32>
    %7 = vector.broadcast %6 : vector<1x384xf32> to vector<64x384xf32>
    %8 = arith.addf %3, %7 : vector<64x384xf32>
    %9 = vector.extract_strided_slice %8 {offsets = [0, 0], sizes = [64, 128], strides = [1, 1]} : vector<64x384xf32> to vector<64x128xf32>
    %10 = vector.extract_strided_slice %9 {offsets = [0, 0], sizes = [64, 32], strides = [1, 1]} : vector<64x128xf32> to vector<64x32xf32>
    %11 = vector.shape_cast %10 : vector<64x32xf32> to vector<4x16x32xf32>
    %12 = vector.extract_strided_slice %9 {offsets = [0, 32], sizes = [64, 32], strides = [1, 1]} : vector<64x128xf32> to vector<64x32xf32>
    %13 = vector.shape_cast %12 : vector<64x32xf32> to vector<4x16x32xf32>
    %14 = vector.extract_strided_slice %9 {offsets = [0, 64], sizes = [64, 32], strides = [1, 1]} : vector<64x128xf32> to vector<64x32xf32>
    %15 = vector.shape_cast %14 : vector<64x32xf32> to vector<4x16x32xf32>
    %16 = vector.extract_strided_slice %9 {offsets = [0, 96], sizes = [64, 32], strides = [1, 1]} : vector<64x128xf32> to vector<64x32xf32>
    %17 = vector.shape_cast %16 : vector<64x32xf32> to vector<4x16x32xf32>
    %18 = tpu.concatenate %11, %13, %15, %17 in 0 : vector<4x16x32xf32>, vector<4x16x32xf32>, vector<4x16x32xf32>, vector<4x16x32xf32> -> vector<16x16x32xf32>
    %19 = vector.extract_strided_slice %8 {offsets = [0, 128], sizes = [64, 128], strides = [1, 1]} : vector<64x384xf32> to vector<64x128xf32>
    %20 = vector.extract_strided_slice %19 {offsets = [0, 0], sizes = [64, 32], strides = [1, 1]} : vector<64x128xf32> to vector<64x32xf32>
    %21 = vector.shape_cast %20 : vector<64x32xf32> to vector<4x16x32xf32>
    %22 = vector.extract_strided_slice %19 {offsets = [0, 32], sizes = [64, 32], strides = [1, 1]} : vector<64x128xf32> to vector<64x32xf32>
    %23 = vector.shape_cast %22 : vector<64x32xf32> to vector<4x16x32xf32>
    %24 = vector.extract_strided_slice %19 {offsets = [0, 64], sizes = [64, 32], strides = [1, 1]} : vector<64x128xf32> to vector<64x32xf32>
    %25 = vector.shape_cast %24 : vector<64x32xf32> to vector<4x16x32xf32>
    %26 = vector.extract_strided_slice %19 {offsets = [0, 96], sizes = [64, 32], strides = [1, 1]} : vector<64x128xf32> to vector<64x32xf32>
    %27 = vector.shape_cast %26 : vector<64x32xf32> to vector<4x16x32xf32>
    %28 = tpu.concatenate %21, %23, %25, %27 in 0 : vector<4x16x32xf32>, vector<4x16x32xf32>, vector<4x16x32xf32>, vector<4x16x32xf32> -> vector<16x16x32xf32>
    %29 = vector.extract_strided_slice %8 {offsets = [0, 256], sizes = [64, 128], strides = [1, 1]} : vector<64x384xf32> to vector<64x128xf32>
    %30 = vector.extract_strided_slice %29 {offsets = [0, 0], sizes = [64, 32], strides = [1, 1]} : vector<64x128xf32> to vector<64x32xf32>
    %31 = vector.shape_cast %30 : vector<64x32xf32> to vector<4x16x32xf32>
    %32 = vector.extract_strided_slice %29 {offsets = [0, 32], sizes = [64, 32], strides = [1, 1]} : vector<64x128xf32> to vector<64x32xf32>
    %33 = vector.shape_cast %32 : vector<64x32xf32> to vector<4x16x32xf32>
    %34 = vector.extract_strided_slice %29 {offsets = [0, 64], sizes = [64, 32], strides = [1, 1]} : vector<64x128xf32> to vector<64x32xf32>
    %35 = vector.shape_cast %34 : vector<64x32xf32> to vector<4x16x32xf32>
    %36 = vector.extract_strided_slice %29 {offsets = [0, 96], sizes = [64, 32], strides = [1, 1]} : vector<64x128xf32> to vector<64x32xf32>
    %37 = vector.shape_cast %36 : vector<64x32xf32> to vector<4x16x32xf32>
    %38 = tpu.concatenate %31, %33, %35, %37 in 0 : vector<4x16x32xf32>, vector<4x16x32xf32>, vector<4x16x32xf32>, vector<4x16x32xf32> -> vector<16x16x32xf32>
    "tpu.trace_start"() <{level = 10 : i32, message = "gqd,gkd->gqk"}> : () -> ()
    %cst_6 = arith.constant dense<0.000000e+00> : vector<16x16x16xf32>
    %39 = tpu.matmul %18, %28, %cst_6 {dimension_numbers = #tpu.dot_dimension_numbers<[2], [2], [1], [1], [0, 0, 0, 1, 1, 1], [0], [0]>} : vector<16x16x32xf32>, vector<16x16x32xf32>, vector<16x16x16xf32> -> vector<16x16x16xf32>
    "tpu.trace_stop"() : () -> ()
    %cst_7 = arith.constant dense<0xFF800000> : vector<16x16xf32>
    %40 = vector.multi_reduction <maximumf>, %39, %cst_7 [2] : vector<16x16x16xf32> to vector<16x16xf32>
    %41 = vector.shape_cast %40 : vector<16x16xf32> to vector<16x16x1xf32>
    %42 = vector.broadcast %41 : vector<16x16x1xf32> to vector<16x16x16xf32>
    %43 = arith.subf %39, %42 : vector<16x16x16xf32>
    %44 = math.exp %43 : vector<16x16x16xf32>
    %cst_8 = arith.constant dense<0.000000e+00> : vector<16x16xf32>
    %45 = vector.multi_reduction <add>, %44, %cst_8 [2] : vector<16x16x16xf32> to vector<16x16xf32>
    %46 = vector.shape_cast %45 : vector<16x16xf32> to vector<16x16x1xf32>
    %cst_9 = arith.constant 1.000000e+00 : f32
    %47 = vector.broadcast %cst_9 : f32 to vector<16x16x1xf32>
    %48 = arith.divf %47, %46 : vector<16x16x1xf32>
    "tpu.trace_start"() <{level = 10 : i32, message = "gqk,gkd->gqd"}> : () -> ()
    %cst_10 = arith.constant dense<0.000000e+00> : vector<16x16x32xf32>
    %49 = tpu.matmul %44, %38, %cst_10 {dimension_numbers = #tpu.dot_dimension_numbers<[2], [1], [1], [2], [0, 0, 0, 1, 1, 2], [0], [0]>} : vector<16x16x16xf32>, vector<16x16x32xf32>, vector<16x16x32xf32> -> vector<16x16x32xf32>
    "tpu.trace_stop"() : () -> ()
    %50 = vector.broadcast %48 : vector<16x16x1xf32> to vector<16x16x32xf32>
    %51 = arith.mulf %49, %50 : vector<16x16x32xf32>
    %52 = vector.extract_strided_slice %51 {offsets = [0, 0, 0], sizes = [4, 16, 32], strides = [1, 1, 1]} : vector<16x16x32xf32> to vector<4x16x32xf32>
    %53 = vector.shape_cast %52 : vector<4x16x32xf32> to vector<64x32xf32>
    %54 = vector.extract_strided_slice %51 {offsets = [4, 0, 0], sizes = [4, 16, 32], strides = [1, 1, 1]} : vector<16x16x32xf32> to vector<4x16x32xf32>
    %55 = vector.shape_cast %54 : vector<4x16x32xf32> to vector<64x32xf32>
    %56 = vector.extract_strided_slice %51 {offsets = [8, 0, 0], sizes = [4, 16, 32], strides = [1, 1, 1]} : vector<16x16x32xf32> to vector<4x16x32xf32>
    %57 = vector.shape_cast %56 : vector<4x16x32xf32> to vector<64x32xf32>
    %58 = vector.extract_strided_slice %51 {offsets = [12, 0, 0], sizes = [4, 16, 32], strides = [1, 1, 1]} : vector<16x16x32xf32> to vector<4x16x32xf32>
    %59 = vector.shape_cast %58 : vector<4x16x32xf32> to vector<64x32xf32>
    %60 = tpu.concatenate %53, %55, %57, %59 in 1 : vector<64x32xf32>, vector<64x32xf32>, vector<64x32xf32>, vector<64x32xf32> -> vector<64x128xf32>
    %c0_11 = arith.constant 0 : index
    %c0_12 = arith.constant 0 : index
    %61 = vector.load %arg4[%c0_11, %c0_12] : memref<128x128xf32, #tpu.memory_space<vmem>>, vector<128x128xf32>
    %cst_13 = arith.constant dense<0.000000e+00> : vector<64x128xf32>
    %62 = tpu.matmul %60, %61, %cst_13 {dimension_numbers = #tpu.dot_dimension_numbers<[1], [0], [0], [1], [0, 0, 1, 1], [], []>} : vector<64x128xf32>, vector<128x128xf32>, vector<64x128xf32> -> vector<64x128xf32>
    %c0_14 = arith.constant 0 : index
    %c0_15 = arith.constant 0 : index
    %63 = vector.load %arg5[%c0_14, %c0_15] : memref<1x128xf32, #tpu.memory_space<vmem>>, vector<1x128xf32>
    %64 = vector.shape_cast %63 : vector<1x128xf32> to vector<128xf32>
    %65 = vector.shape_cast %64 : vector<128xf32> to vector<1x128xf32>
    %66 = vector.broadcast %65 : vector<1x128xf32> to vector<64x128xf32>
    %67 = arith.addf %62, %66 : vector<64x128xf32>
    %68 = arith.addf %1, %67 : vector<64x128xf32>
    %cst_16 = arith.constant dense<0.000000e+00> : vector<64xf32>
    %69 = vector.multi_reduction <add>, %68, %cst_16 [1] : vector<64x128xf32> to vector<64xf32>
    %70 = vector.shape_cast %69 : vector<64xf32> to vector<64x1xf32>
    %cst_17 = arith.constant 1.280000e+02 : f32
    %71 = vector.broadcast %cst_17 : f32 to vector<64x1xf32>
    %72 = arith.divf %70, %71 : vector<64x1xf32>
    %73 = vector.broadcast %72 : vector<64x1xf32> to vector<64x128xf32>
    %74 = arith.subf %68, %73 : vector<64x128xf32>
    %75 = vector.broadcast %72 : vector<64x1xf32> to vector<64x128xf32>
    %76 = arith.subf %68, %75 : vector<64x128xf32>
    %77 = arith.mulf %74, %76 : vector<64x128xf32>
    %cst_18 = arith.constant dense<0.000000e+00> : vector<64xf32>
    %78 = vector.multi_reduction <add>, %77, %cst_18 [1] : vector<64x128xf32> to vector<64xf32>
    %79 = vector.shape_cast %78 : vector<64xf32> to vector<64x1xf32>
    %cst_19 = arith.constant 1.280000e+02 : f32
    %80 = vector.broadcast %cst_19 : f32 to vector<64x1xf32>
    %81 = arith.divf %79, %80 : vector<64x1xf32>
    %82 = vector.broadcast %72 : vector<64x1xf32> to vector<64x128xf32>
    %83 = arith.subf %68, %82 : vector<64x128xf32>
    %cst_20 = arith.constant 9.99999974E-6 : f32
    %84 = vector.broadcast %cst_20 : f32 to vector<64x1xf32>
    %85 = arith.addf %81, %84 : vector<64x1xf32>
    %86 = math.rsqrt %85 : vector<64x1xf32>
    %87 = vector.broadcast %86 : vector<64x1xf32> to vector<64x128xf32>
    %88 = arith.mulf %83, %87 : vector<64x128xf32>
    %c0_21 = arith.constant 0 : index
    %c0_22 = arith.constant 0 : index
    %89 = vector.load %arg6[%c0_21, %c0_22] : memref<1x128xf32, #tpu.memory_space<vmem>>, vector<1x128xf32>
    %90 = vector.shape_cast %89 : vector<1x128xf32> to vector<128xf32>
    %91 = vector.shape_cast %90 : vector<128xf32> to vector<1x128xf32>
    %92 = vector.broadcast %91 : vector<1x128xf32> to vector<64x128xf32>
    %93 = arith.mulf %88, %92 : vector<64x128xf32>
    %c0_23 = arith.constant 0 : index
    %c0_24 = arith.constant 0 : index
    %94 = vector.load %arg7[%c0_23, %c0_24] : memref<1x128xf32, #tpu.memory_space<vmem>>, vector<1x128xf32>
    %95 = vector.shape_cast %94 : vector<1x128xf32> to vector<128xf32>
    %96 = vector.shape_cast %95 : vector<128xf32> to vector<1x128xf32>
    %97 = vector.broadcast %96 : vector<1x128xf32> to vector<64x128xf32>
    %98 = arith.addf %93, %97 : vector<64x128xf32>
    %c0_25 = arith.constant 0 : index
    %c0_26 = arith.constant 0 : index
    %99 = vector.load %arg8[%c0_25, %c0_26] : memref<128x256xf32, #tpu.memory_space<vmem>>, vector<128x256xf32>
    %cst_27 = arith.constant dense<0.000000e+00> : vector<64x256xf32>
    %100 = tpu.matmul %98, %99, %cst_27 {dimension_numbers = #tpu.dot_dimension_numbers<[1], [0], [0], [1], [0, 0, 1, 1], [], []>} : vector<64x128xf32>, vector<128x256xf32>, vector<64x256xf32> -> vector<64x256xf32>
    %c0_28 = arith.constant 0 : index
    %c0_29 = arith.constant 0 : index
    %101 = vector.load %arg9[%c0_28, %c0_29] : memref<1x256xf32, #tpu.memory_space<vmem>>, vector<1x256xf32>
    %102 = vector.shape_cast %101 : vector<1x256xf32> to vector<256xf32>
    %103 = vector.shape_cast %102 : vector<256xf32> to vector<1x256xf32>
    %104 = vector.broadcast %103 : vector<1x256xf32> to vector<64x256xf32>
    %105 = arith.addf %100, %104 : vector<64x256xf32>
    %cst_30 = arith.constant 0.000000e+00 : f32
    %106 = vector.broadcast %cst_30 : f32 to vector<64x256xf32>
    %107 = arith.maximumf %105, %106 : vector<64x256xf32>
    %c0_31 = arith.constant 0 : index
    %c0_32 = arith.constant 0 : index
    %108 = vector.load %arg10[%c0_31, %c0_32] : memref<256x128xf32, #tpu.memory_space<vmem>>, vector<256x128xf32>
    %cst_33 = arith.constant dense<0.000000e+00> : vector<64x128xf32>
    %109 = tpu.matmul %107, %108, %cst_33 {dimension_numbers = #tpu.dot_dimension_numbers<[1], [0], [0], [1], [0, 0, 1, 1], [], []>} : vector<64x256xf32>, vector<256x128xf32>, vector<64x128xf32> -> vector<64x128xf32>
    %c0_34 = arith.constant 0 : index
    %c0_35 = arith.constant 0 : index
    %110 = vector.load %arg11[%c0_34, %c0_35] : memref<1x128xf32, #tpu.memory_space<vmem>>, vector<1x128xf32>
    %111 = vector.shape_cast %110 : vector<1x128xf32> to vector<128xf32>
    %112 = vector.shape_cast %111 : vector<128xf32> to vector<1x128xf32>
    %113 = vector.broadcast %112 : vector<1x128xf32> to vector<64x128xf32>
    %114 = arith.addf %109, %113 : vector<64x128xf32>
    %115 = arith.addf %98, %114 : vector<64x128xf32>
    %cst_36 = arith.constant dense<0.000000e+00> : vector<64xf32>
    %116 = vector.multi_reduction <add>, %115, %cst_36 [1] : vector<64x128xf32> to vector<64xf32>
    %117 = vector.shape_cast %116 : vector<64xf32> to vector<64x1xf32>
    %cst_37 = arith.constant 1.280000e+02 : f32
    %118 = vector.broadcast %cst_37 : f32 to vector<64x1xf32>
    %119 = arith.divf %117, %118 : vector<64x1xf32>
    %120 = vector.broadcast %119 : vector<64x1xf32> to vector<64x128xf32>
    %121 = arith.subf %115, %120 : vector<64x128xf32>
    %122 = vector.broadcast %119 : vector<64x1xf32> to vector<64x128xf32>
    %123 = arith.subf %115, %122 : vector<64x128xf32>
    %124 = arith.mulf %121, %123 : vector<64x128xf32>
    %cst_38 = arith.constant dense<0.000000e+00> : vector<64xf32>
    %125 = vector.multi_reduction <add>, %124, %cst_38 [1] : vector<64x128xf32> to vector<64xf32>
    %126 = vector.shape_cast %125 : vector<64xf32> to vector<64x1xf32>
    %cst_39 = arith.constant 1.280000e+02 : f32
    %127 = vector.broadcast %cst_39 : f32 to vector<64x1xf32>
    %128 = arith.divf %126, %127 : vector<64x1xf32>
    %129 = vector.broadcast %119 : vector<64x1xf32> to vector<64x128xf32>
    %130 = arith.subf %115, %129 : vector<64x128xf32>
    %cst_40 = arith.constant 9.99999974E-6 : f32
    %131 = vector.broadcast %cst_40 : f32 to vector<64x1xf32>
    %132 = arith.addf %128, %131 : vector<64x1xf32>
    %133 = math.rsqrt %132 : vector<64x1xf32>
    %134 = vector.broadcast %133 : vector<64x1xf32> to vector<64x128xf32>
    %135 = arith.mulf %130, %134 : vector<64x128xf32>
    %c0_41 = arith.constant 0 : index
    %c0_42 = arith.constant 0 : index
    %136 = vector.load %arg12[%c0_41, %c0_42] : memref<1x128xf32, #tpu.memory_space<vmem>>, vector<1x128xf32>
    %137 = vector.shape_cast %136 : vector<1x128xf32> to vector<128xf32>
    %138 = vector.shape_cast %137 : vector<128xf32> to vector<1x128xf32>
    %139 = vector.broadcast %138 : vector<1x128xf32> to vector<64x128xf32>
    %140 = arith.mulf %135, %139 : vector<64x128xf32>
    %c0_43 = arith.constant 0 : index
    %c0_44 = arith.constant 0 : index
    %141 = vector.load %arg13[%c0_43, %c0_44] : memref<1x128xf32, #tpu.memory_space<vmem>>, vector<1x128xf32>
    %142 = vector.shape_cast %141 : vector<1x128xf32> to vector<128xf32>
    %143 = vector.shape_cast %142 : vector<128xf32> to vector<1x128xf32>
    %144 = vector.broadcast %143 : vector<1x128xf32> to vector<64x128xf32>
    %145 = arith.addf %140, %144 : vector<64x128xf32>
    %146 = vector.shape_cast %145 : vector<64x128xf32> to vector<4x16x128xf32>
    %c0_45 = arith.constant 0 : index
    %c0_46 = arith.constant 0 : index
    %c0_47 = arith.constant 0 : index
    %147 = vector.load %arg14[%c0_45, %c0_46, %c0_47] : memref<4x16x128xf32, #tpu.memory_space<vmem>>, vector<4x16x128xf32>
    tpu.vector_store %arg14[%c0_45, %c0_46, %c0_47], %146 {strides = array<i32>} : memref<4x16x128xf32, #tpu.memory_space<vmem>>, vector<4x16x128xf32>,
    return
  }
  func.func @transform_0(%arg0: i32) -> (i32, i32, i32) {
    %c0_i32 = arith.constant 0 : i32
    %c0_i32_0 = arith.constant 0 : i32
    %c0_i32_1 = arith.constant 0 : i32
    return %arg0, %c0_i32, %c0_i32_0 : i32, i32, i32
  }
  func.func @transform_1(%arg0: i32) -> (i32, i32) {
    %c0_i32 = arith.constant 0 : i32
    %c0_i32_0 = arith.constant 0 : i32
    %c0_i32_1 = arith.constant 0 : i32
    return %c0_i32, %c0_i32_0 : i32, i32
  }
  func.func @transform_2(%arg0: i32) -> (i32, i32) {
    %c0_i32 = arith.constant 0 : i32
    %c0_i32_0 = arith.constant 0 : i32
    %c0_i32_1 = arith.constant 0 : i32
    return %c0_i32, %c0_i32_0 : i32, i32
  }
  func.func @transform_3(%arg0: i32) -> (i32, i32) {
    %c0_i32 = arith.constant 0 : i32
    %c0_i32_0 = arith.constant 0 : i32
    %c0_i32_1 = arith.constant 0 : i32
    return %c0_i32, %c0_i32_0 : i32, i32
  }
  func.func @transform_4(%arg0: i32) -> (i32, i32) {
    %c0_i32 = arith.constant 0 : i32
    %c0_i32_0 = arith.constant 0 : i32
    %c0_i32_1 = arith.constant 0 : i32
    return %c0_i32, %c0_i32_0 : i32, i32
  }
  func.func @transform_5(%arg0: i32) -> (i32, i32) {
    %c0_i32 = arith.constant 0 : i32
    %c0_i32_0 = arith.constant 0 : i32
    %c0_i32_1 = arith.constant 0 : i32
    return %c0_i32, %c0_i32_0 : i32, i32
  }
  func.func @transform_6(%arg0: i32) -> (i32, i32) {
    %c0_i32 = arith.constant 0 : i32
    %c0_i32_0 = arith.constant 0 : i32
    %c0_i32_1 = arith.constant 0 : i32
    return %c0_i32, %c0_i32_0 : i32, i32
  }
  func.func @transform_7(%arg0: i32) -> (i32, i32) {
    %c0_i32 = arith.constant 0 : i32
    %c0_i32_0 = arith.constant 0 : i32
    %c0_i32_1 = arith.constant 0 : i32
    return %c0_i32, %c0_i32_0 : i32, i32
  }
  func.func @transform_8(%arg0: i32) -> (i32, i32) {
    %c0_i32 = arith.constant 0 : i32
    %c0_i32_0 = arith.constant 0 : i32
    %c0_i32_1 = arith.constant 0 : i32
    return %c0_i32, %c0_i32_0 : i32, i32
  }
  func.func @transform_9(%arg0: i32) -> (i32, i32) {
    %c0_i32 = arith.constant 0 : i32
    %c0_i32_0 = arith.constant 0 : i32
    %c0_i32_1 = arith.constant 0 : i32
    return %c0_i32, %c0_i32_0 : i32, i32
  }
  func.func @transform_10(%arg0: i32) -> (i32, i32) {
    %c0_i32 = arith.constant 0 : i32
    %c0_i32_0 = arith.constant 0 : i32
    %c0_i32_1 = arith.constant 0 : i32
    return %c0_i32, %c0_i32_0 : i32, i32
  }
  func.func @transform_11(%arg0: i32) -> (i32, i32) {
    %c0_i32 = arith.constant 0 : i32
    %c0_i32_0 = arith.constant 0 : i32
    %c0_i32_1 = arith.constant 0 : i32
    return %c0_i32, %c0_i32_0 : i32, i32
  }
  func.func @transform_12(%arg0: i32) -> (i32, i32) {
    %c0_i32 = arith.constant 0 : i32
    %c0_i32_0 = arith.constant 0 : i32
    %c0_i32_1 = arith.constant 0 : i32
    return %c0_i32, %c0_i32_0 : i32, i32
  }
  func.func @transform_13(%arg0: i32) -> (i32, i32, i32) {
    %c0_i32 = arith.constant 0 : i32
    %c0_i32_0 = arith.constant 0 : i32
    %c0_i32_1 = arith.constant 0 : i32
    return %arg0, %c0_i32, %c0_i32_0 : i32, i32, i32
  }
}

module attributes {stable_mosaic.version = 11 : i64} {
  func.func @encoder_block_kernel(%arg0: i32, %arg1: memref<4x16x128xf32, #tpu.memory_space<vmem>>, %arg2: memref<128x384xf32, #tpu.memory_space<vmem>>, %arg3: memref<1x384xf32, #tpu.memory_space<vmem>>, %arg4: memref<128x128xf32, #tpu.memory_space<vmem>>, %arg5: memref<1x128xf32, #tpu.memory_space<vmem>>, %arg6: memref<1x128xf32, #tpu.memory_space<vmem>>, %arg7: memref<1x128xf32, #tpu.memory_space<vmem>>, %arg8: memref<128x256xf32, #tpu.memory_space<vmem>>, %arg9: memref<1x256xf32, #tpu.memory_space<vmem>>, %arg10: memref<256x128xf32, #tpu.memory_space<vmem>>, %arg11: memref<1x128xf32, #tpu.memory_space<vmem>>, %arg12: memref<1x128xf32, #tpu.memory_space<vmem>>, %arg13: memref<1x128xf32, #tpu.memory_space<vmem>>, %arg14: memref<4x16x128xf32, #tpu.memory_space<vmem>>) attributes {dimension_semantics = [#tpu.dimension_semantics<parallel>], iteration_bounds = array<i64: 1>, scalar_prefetch = 0 : i64, scratch_operands = 0 : i64, tpu.core_type = #tpu.core_type<tc>, window_params = [{transform_indices = @transform_0, window_bounds = array<i64: 4, 16, 128>}, {pipeline_mode = #tpu.pipeline_mode<synchronous>, transform_indices = @transform_1, window_bounds = array<i64: 128, 384>}, {pipeline_mode = #tpu.pipeline_mode<synchronous>, transform_indices = @transform_2, window_bounds = array<i64: 1, 384>}, {pipeline_mode = #tpu.pipeline_mode<synchronous>, transform_indices = @transform_3, window_bounds = array<i64: 128, 128>}, {pipeline_mode = #tpu.pipeline_mode<synchronous>, transform_indices = @transform_4, window_bounds = array<i64: 1, 128>}, {pipeline_mode = #tpu.pipeline_mode<synchronous>, transform_indices = @transform_5, window_bounds = array<i64: 1, 128>}, {pipeline_mode = #tpu.pipeline_mode<synchronous>, transform_indices = @transform_6, window_bounds = array<i64: 1, 128>}, {pipeline_mode = #tpu.pipeline_mode<synchronous>, transform_indices = @transform_7, window_bounds = array<i64: 128, 256>}, {pipeline_mode = #tpu.pipeline_mode<synchronous>, transform_indices = @transform_8, window_bounds = array<i64: 1, 256>}, {pipeline_mode = #tpu.pipeline_mode<synchronous>, transform_indices = @transform_9, window_bounds = array<i64: 256, 128>}, {pipeline_mode = #tpu.pipeline_mode<synchronous>, transform_indices = @transform_10, window_bounds = array<i64: 1, 128>}, {pipeline_mode = #tpu.pipeline_mode<synchronous>, transform_indices = @transform_11, window_bounds = array<i64: 1, 128>}, {pipeline_mode = #tpu.pipeline_mode<synchronous>, transform_indices = @transform_12, window_bounds = array<i64: 1, 128>}, {transform_indices = @transform_13, window_bounds = array<i64: 4, 16, 128>}]} {
    %c0 = arith.constant 0 : index
    %c0_0 = arith.constant 0 : index
    %c0_1 = arith.constant 0 : index
    %0 = vector.load %arg1[%c0, %c0_0, %c0_1] : memref<4x16x128xf32, #tpu.memory_space<vmem>>, vector<4x16x128xf32>
    %1 = vector.shape_cast %0 : vector<4x16x128xf32> to vector<64x128xf32>
    %c0_2 = arith.constant 0 : index
    %c0_3 = arith.constant 0 : index
    %2 = vector.load %arg2[%c0_2, %c0_3] : memref<128x384xf32, #tpu.memory_space<vmem>>, vector<128x384xf32>
    %cst = arith.constant dense<0.000000e+00> : vector<64x384xf32>
    %3 = tpu.matmul %1, %2, %cst {dimension_numbers = #tpu.dot_dimension_numbers<[1], [0], [0], [1], [0, 0, 1, 1], [], []>} : vector<64x128xf32>, vector<128x384xf32>, vector<64x384xf32> -> vector<64x384xf32>
    %c0_4 = arith.constant 0 : index
    %c0_5 = arith.constant 0 : index
    %4 = vector.load %arg3[%c0_4, %c0_5] : memref<1x384xf32, #tpu.memory_space<vmem>>, vector<1x384xf32>
    %5 = vector.shape_cast %4 : vector<1x384xf32> to vector<384xf32>
    %6 = vector.shape_cast %5 : vector<384xf32> to vector<1x384xf32>
    %7 = vector.broadcast %6 : vector<1x384xf32> to vector<64x384xf32>
    %8 = arith.addf %3, %7 : vector<64x384xf32>
    %9 = vector.extract_strided_slice %8 {offsets = [0, 0], sizes = [64, 128], strides = [1, 1]} : vector<64x384xf32> to vector<64x128xf32>
    %10 = vector.extract_strided_slice %9 {offsets = [0, 0], sizes = [64, 32], strides = [1, 1]} : vector<64x128xf32> to vector<64x32xf32>
    %11 = vector.shape_cast %10 : vector<64x32xf32> to vector<4x16x32xf32>
    %12 = vector.extract_strided_slice %9 {offsets = [0, 32], sizes = [64, 32], strides = [1, 1]} : vector<64x128xf32> to vector<64x32xf32>
    %13 = vector.shape_cast %12 : vector<64x32xf32> to vector<4x16x32xf32>
    %14 = vector.extract_strided_slice %9 {offsets = [0, 64], sizes = [64, 32], strides = [1, 1]} : vector<64x128xf32> to vector<64x32xf32>
    %15 = vector.shape_cast %14 : vector<64x32xf32> to vector<4x16x32xf32>
    %16 = vector.extract_strided_slice %9 {offsets = [0, 96], sizes = [64, 32], strides = [1, 1]} : vector<64x128xf32> to vector<64x32xf32>
    %17 = vector.shape_cast %16 : vector<64x32xf32> to vector<4x16x32xf32>
    %18 = tpu.concatenate %11, %13, %15, %17 in 0 : vector<4x16x32xf32>, vector<4x16x32xf32>, vector<4x16x32xf32>, vector<4x16x32xf32> -> vector<16x16x32xf32>
    %19 = vector.extract_strided_slice %8 {offsets = [0, 128], sizes = [64, 128], strides = [1, 1]} : vector<64x384xf32> to vector<64x128xf32>
    %20 = vector.extract_strided_slice %19 {offsets = [0, 0], sizes = [64, 32], strides = [1, 1]} : vector<64x128xf32> to vector<64x32xf32>
    %21 = vector.shape_cast %20 : vector<64x32xf32> to vector<4x16x32xf32>
    %22 = vector.extract_strided_slice %19 {offsets = [0, 32], sizes = [64, 32], strides = [1, 1]} : vector<64x128xf32> to vector<64x32xf32>
    %23 = vector.shape_cast %22 : vector<64x32xf32> to vector<4x16x32xf32>
    %24 = vector.extract_strided_slice %19 {offsets = [0, 64], sizes = [64, 32], strides = [1, 1]} : vector<64x128xf32> to vector<64x32xf32>
    %25 = vector.shape_cast %24 : vector<64x32xf32> to vector<4x16x32xf32>
    %26 = vector.extract_strided_slice %19 {offsets = [0, 96], sizes = [64, 32], strides = [1, 1]} : vector<64x128xf32> to vector<64x32xf32>
    %27 = vector.shape_cast %26 : vector<64x32xf32> to vector<4x16x32xf32>
    %28 = tpu.concatenate %21, %23, %25, %27 in 0 : vector<4x16x32xf32>, vector<4x16x32xf32>, vector<4x16x32xf32>, vector<4x16x32xf32> -> vector<16x16x32xf32>
    %29 = vector.extract_strided_slice %8 {offsets = [0, 256], sizes = [64, 128], strides = [1, 1]} : vector<64x384xf32> to vector<64x128xf32>
    %30 = vector.extract_strided_slice %29 {offsets = [0, 0], sizes = [64, 32], strides = [1, 1]} : vector<64x128xf32> to vector<64x32xf32>
    %31 = vector.shape_cast %30 : vector<64x32xf32> to vector<4x16x32xf32>
    %32 = vector.extract_strided_slice %29 {offsets = [0, 32], sizes = [64, 32], strides = [1, 1]} : vector<64x128xf32> to vector<64x32xf32>
    %33 = vector.shape_cast %32 : vector<64x32xf32> to vector<4x16x32xf32>
    %34 = vector.extract_strided_slice %29 {offsets = [0, 64], sizes = [64, 32], strides = [1, 1]} : vector<64x128xf32> to vector<64x32xf32>
    %35 = vector.shape_cast %34 : vector<64x32xf32> to vector<4x16x32xf32>
    %36 = vector.extract_strided_slice %29 {offsets = [0, 96], sizes = [64, 32], strides = [1, 1]} : vector<64x128xf32> to vector<64x32xf32>
    %37 = vector.shape_cast %36 : vector<64x32xf32> to vector<4x16x32xf32>
    %38 = tpu.concatenate %31, %33, %35, %37 in 0 : vector<4x16x32xf32>, vector<4x16x32xf32>, vector<4x16x32xf32>, vector<4x16x32xf32> -> vector<16x16x32xf32>
    "tpu.trace_start"() <{level = 10 : i32, message = "gqd,gkd->gqk"}> : () -> ()
    %cst_6 = arith.constant dense<0.000000e+00> : vector<16x16x16xf32>
    %39 = tpu.matmul %18, %28, %cst_6 {dimension_numbers = #tpu.dot_dimension_numbers<[2], [2], [1], [1], [0, 0, 0, 1, 1, 1], [0], [0]>} : vector<16x16x32xf32>, vector<16x16x32xf32>, vector<16x16x16xf32> -> vector<16x16x16xf32>
    "tpu.trace_stop"() : () -> ()
    %cst_7 = arith.constant dense<0xFF800000> : vector<16x16xf32>
    %40 = vector.multi_reduction <maximumf>, %39, %cst_7 [2] : vector<16x16x16xf32> to vector<16x16xf32>
    %41 = vector.shape_cast %40 : vector<16x16xf32> to vector<16x16x1xf32>
    %42 = vector.broadcast %41 : vector<16x16x1xf32> to vector<16x16x16xf32>
    %43 = arith.subf %39, %42 : vector<16x16x16xf32>
    %44 = math.exp %43 : vector<16x16x16xf32>
    %cst_8 = arith.constant dense<0.000000e+00> : vector<16x16xf32>
    %45 = vector.multi_reduction <add>, %44, %cst_8 [2] : vector<16x16x16xf32> to vector<16x16xf32>
    %46 = vector.shape_cast %45 : vector<16x16xf32> to vector<16x16x1xf32>
    %cst_9 = arith.constant 1.000000e+00 : f32
    %47 = vector.broadcast %cst_9 : f32 to vector<16x16x1xf32>
    %48 = arith.divf %47, %46 : vector<16x16x1xf32>
    "tpu.trace_start"() <{level = 10 : i32, message = "gqk,gkd->gqd"}> : () -> ()
    %cst_10 = arith.constant dense<0.000000e+00> : vector<16x16x32xf32>
    %49 = tpu.matmul %44, %38, %cst_10 {dimension_numbers = #tpu.dot_dimension_numbers<[2], [1], [1], [2], [0, 0, 0, 1, 1, 2], [0], [0]>} : vector<16x16x16xf32>, vector<16x16x32xf32>, vector<16x16x32xf32> -> vector<16x16x32xf32>
    "tpu.trace_stop"() : () -> ()
    %50 = vector.broadcast %48 : vector<16x16x1xf32> to vector<16x16x32xf32>
    %51 = arith.mulf %49, %50 : vector<16x16x32xf32>
    %52 = vector.extract_strided_slice %51 {offsets = [0, 0, 0], sizes = [4, 16, 32], strides = [1, 1, 1]} : vector<16x16x32xf32> to vector<4x16x32xf32>
    %53 = vector.shape_cast %52 : vector<4x16x32xf32> to vector<64x32xf32>
    %54 = vector.extract_strided_slice %51 {offsets = [4, 0, 0], sizes = [4, 16, 32], strides = [1, 1, 1]} : vector<16x16x32xf32> to vector<4x16x32xf32>
    %55 = vector.shape_cast %54 : vector<4x16x32xf32> to vector<64x32xf32>
    %56 = vector.extract_strided_slice %51 {offsets = [8, 0, 0], sizes = [4, 16, 32], strides = [1, 1, 1]} : vector<16x16x32xf32> to vector<4x16x32xf32>
    %57 = vector.shape_cast %56 : vector<4x16x32xf32> to vector<64x32xf32>
    %58 = vector.extract_strided_slice %51 {offsets = [12, 0, 0], sizes = [4, 16, 32], strides = [1, 1, 1]} : vector<16x16x32xf32> to vector<4x16x32xf32>
    %59 = vector.shape_cast %58 : vector<4x16x32xf32> to vector<64x32xf32>
    %60 = tpu.concatenate %53, %55, %57, %59 in 1 : vector<64x32xf32>, vector<64x32xf32>, vector<64x32xf32>, vector<64x32xf32> -> vector<64x128xf32>
    %c0_11 = arith.constant 0 : index
    %c0_12 = arith.constant 0 : index
    %61 = vector.load %arg4[%c0_11, %c0_12] : memref<128x128xf32, #tpu.memory_space<vmem>>, vector<128x128xf32>
    %cst_13 = arith.constant dense<0.000000e+00> : vector<64x128xf32>
    %62 = tpu.matmul %60, %61, %cst_13 {dimension_numbers = #tpu.dot_dimension_numbers<[1], [0], [0], [1], [0, 0, 1, 1], [], []>} : vector<64x128xf32>, vector<128x128xf32>, vector<64x128xf32> -> vector<64x128xf32>
    %c0_14 = arith.constant 0 : index
    %c0_15 = arith.constant 0 : index
    %63 = vector.load %arg5[%c0_14, %c0_15] : memref<1x128xf32, #tpu.memory_space<vmem>>, vector<1x128xf32>
    %64 = vector.shape_cast %63 : vector<1x128xf32> to vector<128xf32>
    %65 = vector.shape_cast %64 : vector<128xf32> to vector<1x128xf32>
    %66 = vector.broadcast %65 : vector<1x128xf32> to vector<64x128xf32>
    %67 = arith.addf %62, %66 : vector<64x128xf32>
    %68 = arith.addf %1, %67 : vector<64x128xf32>
    %cst_16 = arith.constant dense<0.000000e+00> : vector<64xf32>
    %69 = vector.multi_reduction <add>, %68, %cst_16 [1] : vector<64x128xf32> to vector<64xf32>
    %70 = vector.shape_cast %69 : vector<64xf32> to vector<64x1xf32>
    %cst_17 = arith.constant 1.280000e+02 : f32
    %71 = vector.broadcast %cst_17 : f32 to vector<64x1xf32>
    %72 = arith.divf %70, %71 : vector<64x1xf32>
    %73 = vector.broadcast %72 : vector<64x1xf32> to vector<64x128xf32>
    %74 = arith.subf %68, %73 : vector<64x128xf32>
    %75 = vector.broadcast %72 : vector<64x1xf32> to vector<64x128xf32>
    %76 = arith.subf %68, %75 : vector<64x128xf32>
    %77 = arith.mulf %74, %76 : vector<64x128xf32>
    %cst_18 = arith.constant dense<0.000000e+00> : vector<64xf32>
    %78 = vector.multi_reduction <add>, %77, %cst_18 [1] : vector<64x128xf32> to vector<64xf32>
    %79 = vector.shape_cast %78 : vector<64xf32> to vector<64x1xf32>
    %cst_19 = arith.constant 1.280000e+02 : f32
    %80 = vector.broadcast %cst_19 : f32 to vector<64x1xf32>
    %81 = arith.divf %79, %80 : vector<64x1xf32>
    %82 = vector.broadcast %72 : vector<64x1xf32> to vector<64x128xf32>
    %83 = arith.subf %68, %82 : vector<64x128xf32>
    %cst_20 = arith.constant 9.99999974E-6 : f32
    %84 = vector.broadcast %cst_20 : f32 to vector<64x1xf32>
    %85 = arith.addf %81, %84 : vector<64x1xf32>
    %86 = math.rsqrt %85 : vector<64x1xf32>
    %87 = vector.broadcast %86 : vector<64x1xf32> to vector<64x128xf32>
    %88 = arith.mulf %83, %87 : vector<64x128xf32>
    %c0_21 = arith.constant 0 : index
    %c0_22 = arith.constant 0 : index
    %89 = vector.load %arg6[%c0_21, %c0_22] : memref<1x128xf32, #tpu.memory_space<vmem>>, vector<1x128xf32>
    %90 = vector.shape_cast %89 : vector<1x128xf32> to vector<128xf32>
    %91 = vector.shape_cast %90 : vector<128xf32> to vector<1x128xf32>
    %92 = vector.broadcast %91 : vector<1x128xf32> to vector<64x128xf32>
    %93 = arith.mulf %88, %92 : vector<64x128xf32>
    %c0_23 = arith.constant 0 : index
    %c0_24 = arith.constant 0 : index
    %94 = vector.load %arg7[%c0_23, %c0_24] : memref<1x128xf32, #tpu.memory_space<vmem>>, vector<1x128xf32>
    %95 = vector.shape_cast %94 : vector<1x128xf32> to vector<128xf32>
    %96 = vector.shape_cast %95 : vector<128xf32> to vector<1x128xf32>
    %97 = vector.broadcast %96 : vector<1x128xf32> to vector<64x128xf32>
    %98 = arith.addf %93, %97 : vector<64x128xf32>
    %c0_25 = arith.constant 0 : index
    %c0_26 = arith.constant 0 : index
    %99 = vector.load %arg8[%c0_25, %c0_26] : memref<128x256xf32, #tpu.memory_space<vmem>>, vector<128x256xf32>
    %cst_27 = arith.constant dense<0.000000e+00> : vector<64x256xf32>
    %100 = tpu.matmul %98, %99, %cst_27 {dimension_numbers = #tpu.dot_dimension_numbers<[1], [0], [0], [1], [0, 0, 1, 1], [], []>} : vector<64x128xf32>, vector<128x256xf32>, vector<64x256xf32> -> vector<64x256xf32>
    %c0_28 = arith.constant 0 : index
    %c0_29 = arith.constant 0 : index
    %101 = vector.load %arg9[%c0_28, %c0_29] : memref<1x256xf32, #tpu.memory_space<vmem>>, vector<1x256xf32>
    %102 = vector.shape_cast %101 : vector<1x256xf32> to vector<256xf32>
    %103 = vector.shape_cast %102 : vector<256xf32> to vector<1x256xf32>
    %104 = vector.broadcast %103 : vector<1x256xf32> to vector<64x256xf32>
    %105 = arith.addf %100, %104 : vector<64x256xf32>
    %cst_30 = arith.constant 0.000000e+00 : f32
    %106 = vector.broadcast %cst_30 : f32 to vector<64x256xf32>
    %107 = arith.maximumf %105, %106 : vector<64x256xf32>
    %c0_31 = arith.constant 0 : index
    %c0_32 = arith.constant 0 : index
    %108 = vector.load %arg10[%c0_31, %c0_32] : memref<256x128xf32, #tpu.memory_space<vmem>>, vector<256x128xf32>
    %cst_33 = arith.constant dense<0.000000e+00> : vector<64x128xf32>
    %109 = tpu.matmul %107, %108, %cst_33 {dimension_numbers = #tpu.dot_dimension_numbers<[1], [0], [0], [1], [0, 0, 1, 1], [], []>} : vector<64x256xf32>, vector<256x128xf32>, vector<64x128xf32> -> vector<64x128xf32>
    %c0_34 = arith.constant 0 : index
    %c0_35 = arith.constant 0 : index
    %110 = vector.load %arg11[%c0_34, %c0_35] : memref<1x128xf32, #tpu.memory_space<vmem>>, vector<1x128xf32>
    %111 = vector.shape_cast %110 : vector<1x128xf32> to vector<128xf32>
    %112 = vector.shape_cast %111 : vector<128xf32> to vector<1x128xf32>
    %113 = vector.broadcast %112 : vector<1x128xf32> to vector<64x128xf32>
    %114 = arith.addf %109, %113 : vector<64x128xf32>
    %115 = arith.addf %98, %114 : vector<64x128xf32>
    %cst_36 = arith.constant dense<0.000000e+00> : vector<64xf32>
    %116 = vector.multi_reduction <add>, %115, %cst_36 [1] : vector<64x128xf32> to vector<64xf32>
    %117 = vector.shape_cast %116 : vector<64xf32> to vector<64x1xf32>
    %cst_37 = arith.constant 1.280000e+02 : f32
    %118 = vector.broadcast %cst_37 : f32 to vector<64x1xf32>
    %119 = arith.divf %117, %118 : vector<64x1xf32>
    %120 = vector.broadcast %119 : vector<64x1xf32> to vector<64x128xf32>
    %121 = arith.subf %115, %120 : vector<64x128xf32>
    %122 = vector.broadcast %119 : vector<64x1xf32> to vector<64x128xf32>
    %123 = arith.subf %115, %122 : vector<64x128xf32>
    %124 = arith.mulf %121, %123 : vector<64x128xf32>
    %cst_38 = arith.constant dense<0.000000e+00> : vector<64xf32>
    %125 = vector.multi_reduction <add>, %124, %cst_38 [1] : vector<64x128xf32> to vector<64xf32>
    %126 = vector.shape_cast %125 : vector<64xf32> to vector<64x1xf32>
    %cst_39 = arith.constant 1.280000e+02 : f32
    %127 = vector.broadcast %cst_39 : f32 to vector<64x1xf32>
    %128 = arith.divf %126, %127 : vector<64x1xf32>
    %129 = vector.broadcast %119 : vector<64x1xf32> to vector<64x128xf32>
    %130 = arith.subf %115, %129 : vector<64x128xf32>
    %cst_40 = arith.constant 9.99999974E-6 : f32
    %131 = vector.broadcast %cst_40 : f32 to vector<64x1xf32>
    %132 = arith.addf %128, %131 : vector<64x1xf32>
    %133 = math.rsqrt %132 : vector<64x1xf32>
    %134 = vector.broadcast %133 : vector<64x1xf32> to vector<64x128xf32>
    %135 = arith.mulf %130, %134 : vector<64x128xf32>
    %c0_41 = arith.constant 0 : index
    %c0_42 = arith.constant 0 : index
    %136 = vector.load %arg12[%c0_41, %c0_42] : memref<1x128xf32, #tpu.memory_space<vmem>>, vector<1x128xf32>
    %137 = vector.shape_cast %136 : vector<1x128xf32> to vector<128xf32>
    %138 = vector.shape_cast %137 : vector<128xf32> to vector<1x128xf32>
    %139 = vector.broadcast %138 : vector<1x128xf32> to vector<64x128xf32>
    %140 = arith.mulf %135, %139 : vector<64x128xf32>
    %c0_43 = arith.constant 0 : index
    %c0_44 = arith.constant 0 : index
    %141 = vector.load %arg13[%c0_43, %c0_44] : memref<1x128xf32, #tpu.memory_space<vmem>>, vector<1x128xf32>
    %142 = vector.shape_cast %141 : vector<1x128xf32> to vector<128xf32>
    %143 = vector.shape_cast %142 : vector<128xf32> to vector<1x128xf32>
    %144 = vector.broadcast %143 : vector<1x128xf32> to vector<64x128xf32>
    %145 = arith.addf %140, %144 : vector<64x128xf32>
    %146 = vector.shape_cast %145 : vector<64x128xf32> to vector<4x16x128xf32>
    %c0_45 = arith.constant 0 : index
    %c0_46 = arith.constant 0 : index
    %c0_47 = arith.constant 0 : index
    %147 = vector.load %arg14[%c0_45, %c0_46, %c0_47] : memref<4x16x128xf32, #tpu.memory_space<vmem>>, vector<4x16x128xf32>
    tpu.vector_store %arg14[%c0_45, %c0_46, %c0_47], %146 {strides = array<i32>} : memref<4x16x128xf32, #tpu.memory_space<vmem>>, vector<4x16x128xf32>,
    return
  }
  func.func @transform_0(%arg0: i32) -> (i32, i32, i32) {
    %c0_i32 = arith.constant 0 : i32
    %c0_i32_0 = arith.constant 0 : i32
    %c0_i32_1 = arith.constant 0 : i32
    return %arg0, %c0_i32, %c0_i32_0 : i32, i32, i32
  }
  func.func @transform_1(%arg0: i32) -> (i32, i32) {
    %c0_i32 = arith.constant 0 : i32
    %c0_i32_0 = arith.constant 0 : i32
    %c0_i32_1 = arith.constant 0 : i32
    return %c0_i32, %c0_i32_0 : i32, i32
  }
  func.func @transform_2(%arg0: i32) -> (i32, i32) {
    %c0_i32 = arith.constant 0 : i32
    %c0_i32_0 = arith.constant 0 : i32
    %c0_i32_1 = arith.constant 0 : i32
    return %c0_i32, %c0_i32_0 : i32, i32
  }
  func.func @transform_3(%arg0: i32) -> (i32, i32) {
    %c0_i32 = arith.constant 0 : i32
    %c0_i32_0 = arith.constant 0 : i32
    %c0_i32_1 = arith.constant 0 : i32
    return %c0_i32, %c0_i32_0 : i32, i32
  }
  func.func @transform_4(%arg0: i32) -> (i32, i32) {
    %c0_i32 = arith.constant 0 : i32
    %c0_i32_0 = arith.constant 0 : i32
    %c0_i32_1 = arith.constant 0 : i32
    return %c0_i32, %c0_i32_0 : i32, i32
  }
  func.func @transform_5(%arg0: i32) -> (i32, i32) {
    %c0_i32 = arith.constant 0 : i32
    %c0_i32_0 = arith.constant 0 : i32
    %c0_i32_1 = arith.constant 0 : i32
    return %c0_i32, %c0_i32_0 : i32, i32
  }
  func.func @transform_6(%arg0: i32) -> (i32, i32) {
    %c0_i32 = arith.constant 0 : i32
    %c0_i32_0 = arith.constant 0 : i32
    %c0_i32_1 = arith.constant 0 : i32
    return %c0_i32, %c0_i32_0 : i32, i32
  }
  func.func @transform_7(%arg0: i32) -> (i32, i32) {
    %c0_i32 = arith.constant 0 : i32
    %c0_i32_0 = arith.constant 0 : i32
    %c0_i32_1 = arith.constant 0 : i32
    return %c0_i32, %c0_i32_0 : i32, i32
  }
  func.func @transform_8(%arg0: i32) -> (i32, i32) {
    %c0_i32 = arith.constant 0 : i32
    %c0_i32_0 = arith.constant 0 : i32
    %c0_i32_1 = arith.constant 0 : i32
    return %c0_i32, %c0_i32_0 : i32, i32
  }
  func.func @transform_9(%arg0: i32) -> (i32, i32) {
    %c0_i32 = arith.constant 0 : i32
    %c0_i32_0 = arith.constant 0 : i32
    %c0_i32_1 = arith.constant 0 : i32
    return %c0_i32, %c0_i32_0 : i32, i32
  }
  func.func @transform_10(%arg0: i32) -> (i32, i32) {
    %c0_i32 = arith.constant 0 : i32
    %c0_i32_0 = arith.constant 0 : i32
    %c0_i32_1 = arith.constant 0 : i32
    return %c0_i32, %c0_i32_0 : i32, i32
  }
  func.func @transform_11(%arg0: i32) -> (i32, i32) {
    %c0_i32 = arith.constant 0 : i32
    %c0_i32_0 = arith.constant 0 : i32
    %c0_i32_1 = arith.constant 0 : i32
    return %c0_i32, %c0_i32_0 : i32, i32
  }
  func.func @transform_12(%arg0: i32) -> (i32, i32) {
    %c0_i32 = arith.constant 0 : i32
    %c0_i32_0 = arith.constant 0 : i32
    %c0_i32_1 = arith.constant 0 : i32
    return %c0_i32, %c0_i32_0 : i32, i32
  }
  func.func @transform_13(%arg0: i32) -> (i32, i32, i32) {
    %c0_i32 = arith.constant 0 : i32
    %c0_i32_0 = arith.constant 0 : i32
    %c0_i32_1 = arith.constant 0 : i32
    return %arg0, %c0_i32, %c0_i32_0 : i32, i32, i32
  }
}

</mosaic_0001>

<llo_original>
// kernel: tpu_custom_call.1
$region0: #{tpu_custom_call.1}
  #allocation0 [shape = 'u32[]', space=smem, size = 0x4, offset = 0x4, fixed_abs, tag = 'smem constant byte address 0x4 - core index']
  #allocation1 [shape = 'u32[72,128]{1,0:T(1,128)}', space=vmem, size = 0x9000, scoped, tag = 'internal scratch']
  %s0 = inlined_call_operand.hbm [shape: f32[4,16,128], index: 0, kind: input, shape index: {}]
  %s1 = inlined_call_operand.hbm [shape: f32[128,384], index: 1, kind: input, shape index: {}]
  %s2 = inlined_call_operand.hbm [shape: f32[1,384], index: 2, kind: input, shape index: {}]
  %s3 = inlined_call_operand.hbm [shape: f32[128,128], index: 3, kind: input, shape index: {}]
  %s4 = inlined_call_operand.vmem [shape: f32[1,128], index: 4, kind: input, shape index: {}]
  %s5 = inlined_call_operand.vmem [shape: f32[1,128], index: 5, kind: input, shape index: {}]
  %s6 = inlined_call_operand.vmem [shape: f32[1,128], index: 6, kind: input, shape index: {}]
  %s7 = inlined_call_operand.hbm [shape: f32[128,256], index: 7, kind: input, shape index: {}]
  %s8 = inlined_call_operand.vmem [shape: f32[1,256], index: 8, kind: input, shape index: {}]
  %s9 = inlined_call_operand.hbm [shape: f32[256,128], index: 9, kind: input, shape index: {}]
  %s10 = inlined_call_operand.vmem [shape: f32[1,128], index: 10, kind: input, shape index: {}]
  %s11 = inlined_call_operand.vmem [shape: f32[1,128], index: 11, kind: input, shape index: {}]
  %s12 = inlined_call_operand.vmem [shape: f32[1,128], index: 12, kind: input, shape index: {}]
  %s13 = inlined_call_operand.hbm [shape: f32[4,16,128], index: 13, kind: output, shape index: {}]
  %s14 = sld [smem:[#allocation0]]
  $region86: #{tpu_custom_call.1} parent=0
    _
  %s16 = ssub.s32 1, %s14
  %s17 = scalar_select 0, %s16, %s14
  $region1: #{tpu_custom_call.1} parent=0
    #allocation2 [shape = 'u8[32768]{0}', space=vmem, size = 0x8000, scoped, tag = 'input window, operand 0, single buffered']
    #allocation3 [shape = 's32[1]{0}', space=sflag, size = 0x4, scoped, tag = 'scoped memory for tpu_custom_call.1']
    #allocation4 [shape = 's32[1]{0}', space=sflag, size = 0x4, scoped, tag = 'scoped memory for tpu_custom_call.1']
    #allocation5 [shape = 'u8[196608]{0}', space=vmem, size = 0x30000, scoped, tag = 'input window, operand 1, single buffered']
    #allocation6 [shape = 's32[1]{0}', space=sflag, size = 0x4, scoped, tag = 'scoped memory for tpu_custom_call.1']
    #allocation7 [shape = 'u8[1536]{0}', space=vmem, size = 0x800, scoped, tag = 'input window, operand 2, single buffered']
    #allocation8 [shape = 'u8[65536]{0}', space=vmem, size = 0x10000, scoped, tag = 'input window, operand 3, single buffered']
    #allocation9 [shape = 's32[1]{0}', space=sflag, size = 0x4, scoped, tag = 'scoped memory for tpu_custom_call.1']
    #allocation10 [shape = 'u8[131072]{0}', space=vmem, size = 0x20000, scoped, tag = 'input window, operand 7, single buffered']
    #allocation11 [shape = 'u8[131072]{0}', space=vmem, size = 0x20000, scoped, tag = 'input window, operand 9, single buffered']
    #allocation12 [shape = 's32[1]{0}', space=sflag, size = 0x4, scoped, tag = 'scoped memory for tpu_custom_call.1']
    #allocation13 [shape = 'u8[32768]{0}', space=vmem, size = 0x8000, scoped, tag = 'output window, operand 0, single buffered']
    %18 = vsyncpa [#allocation3], 0
    %19 = vsyncpa [#allocation6], 0
    %20 = vsyncpa [#allocation9], 0
    %21 = vsyncpa [#allocation12], 0
    %22 = vsyncpa [#allocation4], 0
    // Predicated region
    $region2: #{tpu_custom_call.1} parent=1 // pred_check
      _
    $region3: #{tpu_custom_call.1} parent=1 // pred_check_branch
      %24 = sbr.rel (0) target = $region5
    $region4: #{tpu_custom_call.1} parent=1 // pred_region
      %26 = vsyncadd [#allocation3], 0
      %s27 = sshll.u32 %s0, 4
      %s28 = int_to_ptr.hbm [resolvable:$true] %s27
      %s29 = sshll.u32 [#allocation2], 4
      %s30 = int_to_ptr.vmem [resolvable:$true] %s29
      %35 = dma.hbm_to_vmem [thread:$0]  %s28, 1024, %s30, [#allocation3], 128, 128, 8
    $region5: #{tpu_custom_call.1} parent=1 // pred_fallthru
      _
    // Predicated region
    $region6: #{tpu_custom_call.1} parent=1 // pred_check
      _
    $region7: #{tpu_custom_call.1} parent=1 // pred_check_branch
      %37 = sbr.rel (0) target = $region9
    $region8: #{tpu_custom_call.1} parent=1 // pred_region
      %39 = vsyncadd [#allocation6], 0
      %s40 = sshll.u32 %s1, 4
      %s41 = int_to_ptr.hbm [resolvable:$true] %s40
      %s42 = sshll.u32 [#allocation5], 4
      %s43 = int_to_ptr.vmem [resolvable:$true] %s42
      %48 = dma.hbm_to_vmem [thread:$0]  %s41, 6144, %s43, [#allocation6], 384, 384, 24
    $region9: #{tpu_custom_call.1} parent=1 // pred_fallthru
      _
    // Predicated region
    $region10: #{tpu_custom_call.1} parent=1 // pred_check
      _
    $region11: #{tpu_custom_call.1} parent=1 // pred_check_branch
      %50 = sbr.rel (0) target = $region13
    $region12: #{tpu_custom_call.1} parent=1 // pred_region
      %52 = vsyncadd [#allocation6], 0
      %s54 = sshll.u32 %s2, 4
      %s55 = int_to_ptr.hbm [resolvable:$true] %s54
      %s56 = sshll.u32 [#allocation7], 4
      %s57 = int_to_ptr.vmem [resolvable:$true] %s56
      %59 = dma.hbm_to_vmem [thread:$0]  %s55, 48, %s57, [#allocation6]
    $region13: #{tpu_custom_call.1} parent=1 // pred_fallthru
      _
    // Predicated region
    $region14: #{tpu_custom_call.1} parent=1 // pred_check
      _
    $region15: #{tpu_custom_call.1} parent=1 // pred_check_branch
      %61 = sbr.rel (0) target = $region17
    $region16: #{tpu_custom_call.1} parent=1 // pred_region
      %63 = vsyncadd [#allocation9], 0
      %s64 = sshll.u32 %s3, 4
      %s65 = int_to_ptr.hbm [resolvable:$true] %s64
      %s66 = sshll.u32 [#allocation8], 4
      %s67 = int_to_ptr.vmem [resolvable:$true] %s66
      %72 = dma.hbm_to_vmem [thread:$0]  %s65, 2048, %s67, [#allocation9], 128, 128, 8
    $region17: #{tpu_custom_call.1} parent=1 // pred_fallthru
      _
    // Predicated region
    $region18: #{tpu_custom_call.1} parent=1 // pred_check
      _
    $region19: #{tpu_custom_call.1} parent=1 // pred_check_branch
      %74 = sbr.rel (0) target = $region21
    $region20: #{tpu_custom_call.1} parent=1 // pred_region
      _
    $region21: #{tpu_custom_call.1} parent=1 // pred_fallthru
      _
    // Predicated region
    $region22: #{tpu_custom_call.1} parent=1 // pred_check
      _
    $region23: #{tpu_custom_call.1} parent=1 // pred_check_branch
      %76 = sbr.rel (0) target = $region25
    $region24: #{tpu_custom_call.1} parent=1 // pred_region
      _
    $region25: #{tpu_custom_call.1} parent=1 // pred_fallthru
      _
    // Predicated region
    $region26: #{tpu_custom_call.1} parent=1 // pred_check
      _
    $region27: #{tpu_custom_call.1} parent=1 // pred_check_branch
      %78 = sbr.rel (0) target = $region29
    $region28: #{tpu_custom_call.1} parent=1 // pred_region
      _
    $region29: #{tpu_custom_call.1} parent=1 // pred_fallthru
      _
    // Predicated region
    $region30: #{tpu_custom_call.1} parent=1 // pred_check
      _
    $region31: #{tpu_custom_call.1} parent=1 // pred_check_branch
      %80 = sbr.rel (0) target = $region33
    $region32: #{tpu_custom_call.1} parent=1 // pred_region
      %82 = vsyncadd [#allocation9], 0
      %s83 = sshll.u32 %s7, 4
      %s84 = int_to_ptr.hbm [resolvable:$true] %s83
      %s85 = sshll.u32 [#allocation10], 4
      %s86 = int_to_ptr.vmem [resolvable:$true] %s85
      %91 = dma.hbm_to_vmem [thread:$0]  %s84, 4096, %s86, [#allocation9], 256, 256, 16
    $region33: #{tpu_custom_call.1} parent=1 // pred_fallthru
      _
    // Predicated region
    $region34: #{tpu_custom_call.1} parent=1 // pred_check
      _
    $region35: #{tpu_custom_call.1} parent=1 // pred_check_branch
      %93 = sbr.rel (0) target = $region37
    $region36: #{tpu_custom_call.1} parent=1 // pred_region
      _
    $region37: #{tpu_custom_call.1} parent=1 // pred_fallthru
      _
    // Predicated region
    $region38: #{tpu_custom_call.1} parent=1 // pred_check
      _
    $region39: #{tpu_custom_call.1} parent=1 // pred_check_branch
      %95 = sbr.rel (0) target = $region41
    $region40: #{tpu_custom_call.1} parent=1 // pred_region
      %97 = vsyncadd [#allocation12], 0
      %s98 = sshll.u32 %s9, 4
      %s99 = int_to_ptr.hbm [resolvable:$true] %s98
      %s100 = sshll.u32 [#allocation11], 4
      %s101 = int_to_ptr.vmem [resolvable:$true] %s100
      %106 = dma.hbm_to_vmem [thread:$0]  %s99, 4096, %s101, [#allocation12], 128, 128, 8
    $region41: #{tpu_custom_call.1} parent=1 // pred_fallthru
      _
    // Predicated region
    $region42: #{tpu_custom_call.1} parent=1 // pred_check
      _
    $region43: #{tpu_custom_call.1} parent=1 // pred_check_branch
      %108 = sbr.rel (0) target = $region45
    $region44: #{tpu_custom_call.1} parent=1 // pred_region
      _
    $region45: #{tpu_custom_call.1} parent=1 // pred_fallthru
      _
    // Predicated region
    $region46: #{tpu_custom_call.1} parent=1 // pred_check
      _
    $region47: #{tpu_custom_call.1} parent=1 // pred_check_branch
      %110 = sbr.rel (0) target = $region49
    $region48: #{tpu_custom_call.1} parent=1 // pred_region
      _
    $region49: #{tpu_custom_call.1} parent=1 // pred_fallthru
      _
    // Predicated region
    $region50: #{tpu_custom_call.1} parent=1 // pred_check
      _
    $region51: #{tpu_custom_call.1} parent=1 // pred_check_branch
      %112 = sbr.rel (0) target = $region53
    $region52: #{tpu_custom_call.1} parent=1 // pred_region
      _
    $region53: #{tpu_custom_call.1} parent=1 // pred_fallthru
      _
    // Predicated region
    $region54: #{tpu_custom_call.1} parent=1 // pred_check
      _
    $region55: #{tpu_custom_call.1} parent=1 // pred_check_branch
      %114 = sbr.rel (0) target = $region57
    $region56: #{tpu_custom_call.1} parent=1 // pred_region
      %116 = dma.done [#allocation3], 1024
    $region57: #{tpu_custom_call.1} parent=1 // pred_fallthru
      _
    // Predicated region
    $region58: #{tpu_custom_call.1} parent=1 // pred_check
      _
    $region59: #{tpu_custom_call.1} parent=1 // pred_check_branch
      %118 = sbr.rel (0) target = $region61
    $region60: #{tpu_custom_call.1} parent=1 // pred_region
      %120 = dma.done [#allocation6], 6144
    $region61: #{tpu_custom_call.1} parent=1 // pred_fallthru
      _
    // Predicated region
    $region62: #{tpu_custom_call.1} parent=1 // pred_check
      _
    $region63: #{tpu_custom_call.1} parent=1 // pred_check_branch
      %122 = sbr.rel (0) target = $region65
    $region64: #{tpu_custom_call.1} parent=1 // pred_region
      %124 = dma.done [#allocation6], 48
    $region65: #{tpu_custom_call.1} parent=1 // pred_fallthru
      _
    // Predicated region
    $region66: #{tpu_custom_call.1} parent=1 // pred_check
      _
    $region67: #{tpu_custom_call.1} parent=1 // pred_check_branch
      %126 = sbr.rel (0) target = $region69
    $region68: #{tpu_custom_call.1} parent=1 // pred_region
      %128 = dma.done [#allocation9], 2048
    $region69: #{tpu_custom_call.1} parent=1 // pred_fallthru
      _
    // Predicated region
    $region70: #{tpu_custom_call.1} parent=1 // pred_check
      _
    $region71: #{tpu_custom_call.1} parent=1 // pred_check_branch
      %130 = sbr.rel (0) target = $region73
    $region72: #{tpu_custom_call.1} parent=1 // pred_region
      %132 = dma.done [#allocation9], 4096
    $region73: #{tpu_custom_call.1} parent=1 // pred_fallthru
      _
    // Predicated region
    $region74: #{tpu_custom_call.1} parent=1 // pred_check
      _
    $region75: #{tpu_custom_call.1} parent=1 // pred_check_branch
      %134 = sbr.rel (0) target = $region77
    $region76: #{tpu_custom_call.1} parent=1 // pred_region
      %136 = dma.done [#allocation12], 4096
    $region77: #{tpu_custom_call.1} parent=1 // pred_fallthru
      _
    %v137 = vld [vmem:[#allocation2] sm:$0xff]
    %v138 = vld [vmem:[#allocation2 + $0x8] sm:$0xff]
    %v139 = vld [vmem:[#allocation2 + $0x10] sm:$0xff]
    %v140 = vld [vmem:[#allocation2 + $0x18] sm:$0xff]
    %v141 = vld [vmem:[#allocation2 + $0x20] sm:$0xff]
    %v142 = vld [vmem:[#allocation2 + $0x28] sm:$0xff]
    %v143 = vld [vmem:[#allocation2 + $0x30] sm:$0xff]
    %v144 = vld [vmem:[#allocation2 + $0x38] sm:$0xff]
    %v145 = vld [vmem:[#allocation5] sm:$0xff]
    %v146 = vld [vmem:[#allocation5 + $0x8] sm:$0xff]
    %v147 = vld [vmem:[#allocation5 + $0x10] sm:$0xff]
    %v148 = vld [vmem:[#allocation5 + $0x18] sm:$0xff]
    %v149 = vld [vmem:[#allocation5 + $0x20] sm:$0xff]
    %v150 = vld [vmem:[#allocation5 + $0x28] sm:$0xff]
    %v151 = vld [vmem:[#allocation5 + $0x30] sm:$0xff]
    %v152 = vld [vmem:[#allocation5 + $0x38] sm:$0xff]
    %v153 = vld [vmem:[#allocation5 + $0x40] sm:$0xff]
    %v154 = vld [vmem:[#allocation5 + $0x48] sm:$0xff]
    %v155 = vld [vmem:[#allocation5 + $0x50] sm:$0xff]
    %v156 = vld [vmem:[#allocation5 + $0x58] sm:$0xff]
    %v157 = vld [vmem:[#allocation5 + $0x60] sm:$0xff]
    %v158 = vld [vmem:[#allocation5 + $0x68] sm:$0xff]
    %v159 = vld [vmem:[#allocation5 + $0x70] sm:$0xff]
    %v160 = vld [vmem:[#allocation5 + $0x78] sm:$0xff]
    %v161 = vld [vmem:[#allocation5 + $0x80] sm:$0xff]
    %v162 = vld [vmem:[#allocation5 + $0x88] sm:$0xff]
    %v163 = vld [vmem:[#allocation5 + $0x90] sm:$0xff]
    %v164 = vld [vmem:[#allocation5 + $0x98] sm:$0xff]
    %v165 = vld [vmem:[#allocation5 + $0xa0] sm:$0xff]
    %v166 = vld [vmem:[#allocation5 + $0xa8] sm:$0xff]
    %v167 = vld [vmem:[#allocation5 + $0xb0] sm:$0xff]
    %v168 = vld [vmem:[#allocation5 + $0xb8] sm:$0xff]
    %v169 = vld [vmem:[#allocation5 + $0xc0] sm:$0xff]
    %v170 = vld [vmem:[#allocation5 + $0xc8] sm:$0xff]
    %v171 = vld [vmem:[#allocation5 + $0xd0] sm:$0xff]
    %v172 = vld [vmem:[#allocation5 + $0xd8] sm:$0xff]
    %v173 = vld [vmem:[#allocation5 + $0xe0] sm:$0xff]
    %v174 = vld [vmem:[#allocation5 + $0xe8] sm:$0xff]
    %v175 = vld [vmem:[#allocation5 + $0xf0] sm:$0xff]
    %v176 = vld [vmem:[#allocation5 + $0xf8] sm:$0xff]
    %v177 = vld [vmem:[#allocation5 + $0x100] sm:$0xff]
    %v178 = vld [vmem:[#allocation5 + $0x108] sm:$0xff]
    %v179 = vld [vmem:[#allocation5 + $0x110] sm:$0xff]
    %v180 = vld [vmem:[#allocation5 + $0x118] sm:$0xff]
    %v181 = vld [vmem:[#allocation5 + $0x120] sm:$0xff]
    %v182 = vld [vmem:[#allocation5 + $0x128] sm:$0xff]
    %v183 = vld [vmem:[#allocation5 + $0x130] sm:$0xff]
    %v184 = vld [vmem:[#allocation5 + $0x138] sm:$0xff]
    %v185 = vld [vmem:[#allocation5 + $0x140] sm:$0xff]
    %v186 = vld [vmem:[#allocation5 + $0x148] sm:$0xff]
    %v187 = vld [vmem:[#allocation5 + $0x150] sm:$0xff]
    %v188 = vld [vmem:[#allocation5 + $0x158] sm:$0xff]
    %v189 = vld [vmem:[#allocation5 + $0x160] sm:$0xff]
    %v190 = vld [vmem:[#allocation5 + $0x168] sm:$0xff]
    %v191 = vld [vmem:[#allocation5 + $0x170] sm:$0xff]
    %v192 = vld [vmem:[#allocation5 + $0x178] sm:$0xff]
    %v193 = vld [vmem:[#allocation7] sm:$0x7]
    %v195 = vperm.slane %v193, 0
    %v196 = vperm.slane %v193, 1
    %v197 = vperm.slane %v193, 2
    %201 = vmatpush.msra.mxu0 %v190
    %202 = vmatpush.msra.mxu0 %v187
    %203 = vmatpush.msra.mxu0 %v184
    %204 = vmatpush.msra.mxu0 %v181
    %205 = vmatpush.msra.mxu0 %v178
    %206 = vmatpush.msra.mxu0 %v175
    %207 = vmatpush.msra.mxu0 %v172
    %208 = vmatpush.msra.mxu0 %v169
    %209 = vmatpush.msra.mxu0 %v166
    %210 = vmatpush.msra.mxu0 %v163
    %211 = vmatpush.msra.mxu0 %v160
    %212 = vmatpush.msra.mxu0 %v157
    %213 = vmatpush.msra.mxu0 %v154
    %214 = vmatpush.msra.mxu0 %v151
    %215 = vmatpush.msra.mxu0 %v148
    %216 = vmatpush.msra.mxu0 %v145
    %217 = vmatmul.f32.gmra.mxu0 %v137
    %v218 = vpop.f32.mrf.mxu0
    %v219 = vadd.f32 %v195, %v218
    %220 = vmatmul.f32.gmra.mxu0 %v138
    %v221 = vpop.f32.mrf.mxu0
    %v222 = vadd.f32 %v195, %v221
    %223 = vmatmul.f32.gmra.mxu0 %v139
    %v224 = vpop.f32.mrf.mxu0
    %v225 = vadd.f32 %v195, %v224
    %226 = vmatmul.f32.gmra.mxu0 %v140
    %v227 = vpop.f32.mrf.mxu0
    %v228 = vadd.f32 %v195, %v227
    %229 = vmatmul.f32.gmra.mxu0 %v141
    %v230 = vpop.f32.mrf.mxu0
    %v231 = vadd.f32 %v195, %v230
    %232 = vmatmul.f32.gmra.mxu0 %v142
    %v233 = vpop.f32.mrf.mxu0
    %v234 = vadd.f32 %v195, %v233
    %235 = vmatmul.f32.gmra.mxu0 %v143
    %v236 = vpop.f32.mrf.mxu0
    %v237 = vadd.f32 %v195, %v236
    %238 = vmatmul.f32.gmra.mxu0 %v144
    %v239 = vpop.f32.mrf.mxu0
    %v240 = vadd.f32 %v195, %v239
    %241 = vdwg.mxu0
    %242 = vmatpush.msra.mxu0 %v191
    %243 = vmatpush.msra.mxu0 %v188
    %244 = vmatpush.msra.mxu0 %v185
    %245 = vmatpush.msra.mxu0 %v182
    %246 = vmatpush.msra.mxu0 %v179
    %247 = vmatpush.msra.mxu0 %v176
    %248 = vmatpush.msra.mxu0 %v173
    %249 = vmatpush.msra.mxu0 %v170
    %250 = vmatpush.msra.mxu0 %v167
    %251 = vmatpush.msra.mxu0 %v164
    %252 = vmatpush.msra.mxu0 %v161
    %253 = vmatpush.msra.mxu0 %v158
    %254 = vmatpush.msra.mxu0 %v155
    %255 = vmatpush.msra.mxu0 %v152
    %256 = vmatpush.msra.mxu0 %v149
    %257 = vmatpush.msra.mxu0 %v146
    %258 = vmatmul.f32.gmra.mxu0 %v137
    %v259 = vpop.f32.mrf.mxu0
    %v260 = vadd.f32 %v196, %v259
    %261 = vmatmul.f32.gmra.mxu0 %v138
    %v262 = vpop.f32.mrf.mxu0
    %v263 = vadd.f32 %v196, %v262
    %264 = vmatmul.f32.gmra.mxu0 %v139
    %v265 = vpop.f32.mrf.mxu0
    %v266 = vadd.f32 %v196, %v265
    %267 = vmatmul.f32.gmra.mxu0 %v140
    %v268 = vpop.f32.mrf.mxu0
    %v269 = vadd.f32 %v196, %v268
    %270 = vmatmul.f32.gmra.mxu0 %v141
    %v271 = vpop.f32.mrf.mxu0
    %v272 = vadd.f32 %v196, %v271
    %273 = vmatmul.f32.gmra.mxu0 %v142
    %v274 = vpop.f32.mrf.mxu0
    %v275 = vadd.f32 %v196, %v274
    %276 = vmatmul.f32.gmra.mxu0 %v143
    %v277 = vpop.f32.mrf.mxu0
    %v278 = vadd.f32 %v196, %v277
    %279 = vmatmul.f32.gmra.mxu0 %v144
    %v280 = vpop.f32.mrf.mxu0
    %v281 = vadd.f32 %v196, %v280
    %282 = vdwg.mxu0
    %283 = vmatpush.msra.mxu0 %v192
    %284 = vmatpush.msra.mxu0 %v189
    %285 = vmatpush.msra.mxu0 %v186
    %286 = vmatpush.msra.mxu0 %v183
    %287 = vmatpush.msra.mxu0 %v180
    %288 = vmatpush.msra.mxu0 %v177
    %289 = vmatpush.msra.mxu0 %v174
    %290 = vmatpush.msra.mxu0 %v171
    %291 = vmatpush.msra.mxu0 %v168
    %292 = vmatpush.msra.mxu0 %v165
    %293 = vmatpush.msra.mxu0 %v162
    %294 = vmatpush.msra.mxu0 %v159
    %295 = vmatpush.msra.mxu0 %v156
    %296 = vmatpush.msra.mxu0 %v153
    %297 = vmatpush.msra.mxu0 %v150
    %298 = vmatpush.msra.mxu0 %v147
    %299 = vmatmul.f32.gmra.mxu0 %v137
    %v300 = vpop.f32.mrf.mxu0
    %v301 = vadd.f32 %v197, %v300
    %302 = vmatmul.f32.gmra.mxu0 %v138
    %v303 = vpop.f32.mrf.mxu0
    %v304 = vadd.f32 %v197, %v303
    %305 = vmatmul.f32.gmra.mxu0 %v139
    %v306 = vpop.f32.mrf.mxu0
    %v307 = vadd.f32 %v197, %v306
    %308 = vmatmul.f32.gmra.mxu0 %v140
    %v309 = vpop.f32.mrf.mxu0
    %v310 = vadd.f32 %v197, %v309
    %311 = vmatmul.f32.gmra.mxu0 %v141
    %v312 = vpop.f32.mrf.mxu0
    %v313 = vadd.f32 %v197, %v312
    %314 = vmatmul.f32.gmra.mxu0 %v142
    %v315 = vpop.f32.mrf.mxu0
    %v316 = vadd.f32 %v197, %v315
    %317 = vmatmul.f32.gmra.mxu0 %v143
    %v318 = vpop.f32.mrf.mxu0
    %v319 = vadd.f32 %v197, %v318
    %320 = vmatmul.f32.gmra.mxu0 %v144
    %v321 = vpop.f32.mrf.mxu0
    %v322 = vadd.f32 %v197, %v321
    %323 = vdwg.mxu0
    %332 = vrot.lane.b32.xlu0 %v219, 96
    %v333 = vpop.permute.xlu0 %332
    %334 = vrot.lane.b32.xlu0 %v222, 96
    %v335 = vpop.permute.xlu0 %334
    %336 = vrot.lane.b32.xlu0 %v225, 96
    %v337 = vpop.permute.xlu0 %336
    %338 = vrot.lane.b32.xlu0 %v228, 96
    %v339 = vpop.permute.xlu0 %338
    %340 = vrot.lane.b32.xlu0 %v231, 96
    %v341 = vpop.permute.xlu0 %340
    %342 = vrot.lane.b32.xlu0 %v234, 96
    %v343 = vpop.permute.xlu0 %342
    %344 = vrot.lane.b32.xlu0 %v237, 96
    %v345 = vpop.permute.xlu0 %344
    %346 = vrot.lane.b32.xlu0 %v240, 96
    %v347 = vpop.permute.xlu0 %346
    %348 = vrot.lane.b32.xlu0 %v219, 64
    %v349 = vpop.permute.xlu0 %348
    %350 = vrot.lane.b32.xlu0 %v222, 64
    %v351 = vpop.permute.xlu0 %350
    %352 = vrot.lane.b32.xlu0 %v225, 64
    %v353 = vpop.permute.xlu0 %352
    %354 = vrot.lane.b32.xlu0 %v228, 64
    %v355 = vpop.permute.xlu0 %354
    %356 = vrot.lane.b32.xlu0 %v231, 64
    %v357 = vpop.permute.xlu0 %356
    %358 = vrot.lane.b32.xlu0 %v234, 64
    %v359 = vpop.permute.xlu0 %358
    %360 = vrot.lane.b32.xlu0 %v237, 64
    %v361 = vpop.permute.xlu0 %360
    %362 = vrot.lane.b32.xlu0 %v240, 64
    %v363 = vpop.permute.xlu0 %362
    %364 = vrot.lane.b32.xlu0 %v219, 32
    %v365 = vpop.permute.xlu0 %364
    %366 = vrot.lane.b32.xlu0 %v222, 32
    %v367 = vpop.permute.xlu0 %366
    %368 = vrot.lane.b32.xlu0 %v225, 32
    %v369 = vpop.permute.xlu0 %368
    %370 = vrot.lane.b32.xlu0 %v228, 32
    %v371 = vpop.permute.xlu0 %370
    %372 = vrot.lane.b32.xlu0 %v231, 32
    %v373 = vpop.permute.xlu0 %372
    %374 = vrot.lane.b32.xlu0 %v234, 32
    %v375 = vpop.permute.xlu0 %374
    %376 = vrot.lane.b32.xlu0 %v237, 32
    %v377 = vpop.permute.xlu0 %376
    %378 = vrot.lane.b32.xlu0 %v240, 32
    %v379 = vpop.permute.xlu0 %378
    %388 = vrot.lane.b32.xlu0 %v260, 96
    %v389 = vpop.permute.xlu0 %388
    %390 = vrot.lane.b32.xlu0 %v263, 96
    %v391 = vpop.permute.xlu0 %390
    %392 = vrot.lane.b32.xlu0 %v266, 96
    %v393 = vpop.permute.xlu0 %392
    %394 = vrot.lane.b32.xlu0 %v269, 96
    %v395 = vpop.permute.xlu0 %394
    %396 = vrot.lane.b32.xlu0 %v272, 96
    %v397 = vpop.permute.xlu0 %396
    %398 = vrot.lane.b32.xlu0 %v275, 96
    %v399 = vpop.permute.xlu0 %398
    %400 = vrot.lane.b32.xlu0 %v278, 96
    %v401 = vpop.permute.xlu0 %400
    %402 = vrot.lane.b32.xlu0 %v281, 96
    %v403 = vpop.permute.xlu0 %402
    %404 = vrot.lane.b32.xlu0 %v260, 64
    %v405 = vpop.permute.xlu0 %404
    %406 = vrot.lane.b32.xlu0 %v263, 64
    %v407 = vpop.permute.xlu0 %406
    %408 = vrot.lane.b32.xlu0 %v266, 64
    %v409 = vpop.permute.xlu0 %408
    %410 = vrot.lane.b32.xlu0 %v269, 64
    %v411 = vpop.permute.xlu0 %410
    %412 = vrot.lane.b32.xlu0 %v272, 64
    %v413 = vpop.permute.xlu0 %412
    %414 = vrot.lane.b32.xlu0 %v275, 64
    %v415 = vpop.permute.xlu0 %414
    %416 = vrot.lane.b32.xlu0 %v278, 64
    %v417 = vpop.permute.xlu0 %416
    %418 = vrot.lane.b32.xlu0 %v281, 64
    %v419 = vpop.permute.xlu0 %418
    %420 = vrot.lane.b32.xlu0 %v260, 32
    %v421 = vpop.permute.xlu0 %420
    %422 = vrot.lane.b32.xlu0 %v263, 32
    %v423 = vpop.permute.xlu0 %422
    %424 = vrot.lane.b32.xlu0 %v266, 32
    %v425 = vpop.permute.xlu0 %424
    %426 = vrot.lane.b32.xlu0 %v269, 32
    %v427 = vpop.permute.xlu0 %426
    %428 = vrot.lane.b32.xlu0 %v272, 32
    %v429 = vpop.permute.xlu0 %428
    %430 = vrot.lane.b32.xlu0 %v275, 32
    %v431 = vpop.permute.xlu0 %430
    %432 = vrot.lane.b32.xlu0 %v278, 32
    %v433 = vpop.permute.xlu0 %432
    %434 = vrot.lane.b32.xlu0 %v281, 32
    %v435 = vpop.permute.xlu0 %434
    %444 = vrot.lane.b32.xlu0 %v301, 96
    %v445 = vpop.permute.xlu0 %444
    %446 = vrot.lane.b32.xlu0 %v304, 96
    %v447 = vpop.permute.xlu0 %446
    %448 = vrot.lane.b32.xlu0 %v307, 96
    %v449 = vpop.permute.xlu0 %448
    %450 = vrot.lane.b32.xlu0 %v310, 96
    %v451 = vpop.permute.xlu0 %450
    %452 = vrot.lane.b32.xlu0 %v313, 96
    %v453 = vpop.permute.xlu0 %452
    %454 = vrot.lane.b32.xlu0 %v316, 96
    %v455 = vpop.permute.xlu0 %454
    %456 = vrot.lane.b32.xlu0 %v319, 96
    %v457 = vpop.permute.xlu0 %456
    %458 = vrot.lane.b32.xlu0 %v322, 96
    %v459 = vpop.permute.xlu0 %458
    %468 = vrot.lane.b32.xlu0 %v301, 64
    %v469 = vpop.permute.xlu0 %468
    %470 = vrot.lane.b32.xlu0 %v304, 64
    %v471 = vpop.permute.xlu0 %470
    %472 = vrot.lane.b32.xlu0 %v307, 64
    %v473 = vpop.permute.xlu0 %472
    %474 = vrot.lane.b32.xlu0 %v310, 64
    %v475 = vpop.permute.xlu0 %474
    %476 = vrot.lane.b32.xlu0 %v313, 64
    %v477 = vpop.permute.xlu0 %476
    %478 = vrot.lane.b32.xlu0 %v316, 64
    %v479 = vpop.permute.xlu0 %478
    %480 = vrot.lane.b32.xlu0 %v319, 64
    %v481 = vpop.permute.xlu0 %480
    %482 = vrot.lane.b32.xlu0 %v322, 64
    %v483 = vpop.permute.xlu0 %482
    %492 = vrot.lane.b32.xlu0 %v301, 32
    %v493 = vpop.permute.xlu0 %492
    %494 = vrot.lane.b32.xlu0 %v304, 32
    %v495 = vpop.permute.xlu0 %494
    %496 = vrot.lane.b32.xlu0 %v307, 32
    %v497 = vpop.permute.xlu0 %496
    %498 = vrot.lane.b32.xlu0 %v310, 32
    %v499 = vpop.permute.xlu0 %498
    %500 = vrot.lane.b32.xlu0 %v313, 32
    %v501 = vpop.permute.xlu0 %500
    %502 = vrot.lane.b32.xlu0 %v316, 32
    %v503 = vpop.permute.xlu0 %502
    %504 = vrot.lane.b32.xlu0 %v319, 32
    %v505 = vpop.permute.xlu0 %504
    %506 = vrot.lane.b32.xlu0 %v322, 32
    %v507 = vpop.permute.xlu0 %506
    %vm516 = vcmask 261120
    %v517 = vsel %vm516, %v219, 0
    %v519 = vsel %vm516, %v222, 0
    %v521 = vsel %vm516, %v260, 0
    %v523 = vsel %vm516, %v263, 0
    %525 = vmatpush.xpose.msra.mxu0 0.0
    %526 = vmatpush.xpose.msra.mxu0 0.0
    %527 = vmatpush.xpose.msra.mxu0 0.0
    %528 = vmatpush.xpose.msra.mxu0 0.0
    %529 = vmatpush.xpose.msra.mxu0 0.0
    %530 = vmatpush.xpose.msra.mxu0 0.0
    %531 = vmatpush.xpose.msra.mxu0 0.0
    %532 = vmatpush.xpose.msra.mxu0 0.0
    %533 = vmatpush.xpose.msra.mxu0 0.0
    %534 = vmatpush.xpose.msra.mxu0 0.0
    %535 = vmatpush.xpose.msra.mxu0 0.0
    %536 = vmatpush.xpose.msra.mxu0 0.0
    %537 = vmatpush.xpose.msra.mxu0 0.0
    %538 = vmatpush.xpose.msra.mxu0 0.0
    %539 = vmatpush.xpose.msra.mxu0 %v523
    %540 = vmatpush.xpose.msra.mxu0 %v521
    %541 = vmatmul.f32.gmra.mxu0 %v517
    %v542 = vpop.f32.mrf.mxu0
    %v543 = vadd.f32 0.0, %v542
    %544 = vmatmul.f32.gmra.mxu0 %v519
    %v545 = vpop.f32.mrf.mxu0
    %v546 = vadd.f32 0.0, %v545
    %547 = vdwg.mxu0
    %v548 = vsel %vm516, %v225, 0
    %v550 = vsel %vm516, %v228, 0
    %v552 = vsel %vm516, %v266, 0
    %v554 = vsel %vm516, %v269, 0
    %556 = vmatpush.xpose.msra.mxu0 0.0
    %557 = vmatpush.xpose.msra.mxu0 0.0
    %558 = vmatpush.xpose.msra.mxu0 0.0
    %559 = vmatpush.xpose.msra.mxu0 0.0
    %560 = vmatpush.xpose.msra.mxu0 0.0
    %561 = vmatpush.xpose.msra.mxu0 0.0
    %562 = vmatpush.xpose.msra.mxu0 0.0
    %563 = vmatpush.xpose.msra.mxu0 0.0
    %564 = vmatpush.xpose.msra.mxu0 0.0
    %565 = vmatpush.xpose.msra.mxu0 0.0
    %566 = vmatpush.xpose.msra.mxu0 0.0
    %567 = vmatpush.xpose.msra.mxu0 0.0
    %568 = vmatpush.xpose.msra.mxu0 0.0
    %569 = vmatpush.xpose.msra.mxu0 0.0
    %570 = vmatpush.xpose.msra.mxu0 %v554
    %571 = vmatpush.xpose.msra.mxu0 %v552
    %572 = vmatmul.f32.gmra.mxu0 %v548
    %v573 = vpop.f32.mrf.mxu0
    %v574 = vadd.f32 0.0, %v573
    %575 = vmatmul.f32.gmra.mxu0 %v550
    %v576 = vpop.f32.mrf.mxu0
    %v577 = vadd.f32 0.0, %v576
    %578 = vdwg.mxu0
    %v579 = vsel %vm516, %v231, 0
    %v581 = vsel %vm516, %v234, 0
    %v583 = vsel %vm516, %v272, 0
    %v585 = vsel %vm516, %v275, 0
    %587 = vmatpush.xpose.msra.mxu0 0.0
    %588 = vmatpush.xpose.msra.mxu0 0.0
    %589 = vmatpush.xpose.msra.mxu0 0.0
    %590 = vmatpush.xpose.msra.mxu0 0.0
    %591 = vmatpush.xpose.msra.mxu0 0.0
    %592 = vmatpush.xpose.msra.mxu0 0.0
    %593 = vmatpush.xpose.msra.mxu0 0.0
    %594 = vmatpush.xpose.msra.mxu0 0.0
    %595 = vmatpush.xpose.msra.mxu0 0.0
    %596 = vmatpush.xpose.msra.mxu0 0.0
    %597 = vmatpush.xpose.msra.mxu0 0.0
    %598 = vmatpush.xpose.msra.mxu0 0.0
    %599 = vmatpush.xpose.msra.mxu0 0.0
    %600 = vmatpush.xpose.msra.mxu0 0.0
    %601 = vmatpush.xpose.msra.mxu0 %v585
    %602 = vmatpush.xpose.msra.mxu0 %v583
    %603 = vmatmul.f32.gmra.mxu0 %v579
    %v604 = vpop.f32.mrf.mxu0
    %v605 = vadd.f32 0.0, %v604
    %606 = vmatmul.f32.gmra.mxu0 %v581
    %v607 = vpop.f32.mrf.mxu0
    %v608 = vadd.f32 0.0, %v607
    %609 = vdwg.mxu0
    %v610 = vsel %vm516, %v237, 0
    %v612 = vsel %vm516, %v240, 0
    %v614 = vsel %vm516, %v278, 0
    %v616 = vsel %vm516, %v281, 0
    %618 = vmatpush.xpose.msra.mxu0 0.0
    %619 = vmatpush.xpose.msra.mxu0 0.0
    %620 = vmatpush.xpose.msra.mxu0 0.0
    %621 = vmatpush.xpose.msra.mxu0 0.0
    %622 = vmatpush.xpose.msra.mxu0 0.0
    %623 = vmatpush.xpose.msra.mxu0 0.0
    %624 = vmatpush.xpose.msra.mxu0 0.0
    %625 = vmatpush.xpose.msra.mxu0 0.0
    %626 = vmatpush.xpose.msra.mxu0 0.0
    %627 = vmatpush.xpose.msra.mxu0 0.0
    %628 = vmatpush.xpose.msra.mxu0 0.0
    %629 = vmatpush.xpose.msra.mxu0 0.0
    %630 = vmatpush.xpose.msra.mxu0 0.0
    %631 = vmatpush.xpose.msra.mxu0 0.0
    %632 = vmatpush.xpose.msra.mxu0 %v616
    %633 = vmatpush.xpose.msra.mxu0 %v614
    %634 = vmatmul.f32.gmra.mxu0 %v610
    %v635 = vpop.f32.mrf.mxu0
    %v636 = vadd.f32 0.0, %v635
    %637 = vmatmul.f32.gmra.mxu0 %v612
    %v638 = vpop.f32.mrf.mxu0
    %v639 = vadd.f32 0.0, %v638
    %640 = vdwg.mxu0
    %v641 = vsel %vm516, %v333, 0
    %v643 = vsel %vm516, %v335, 0
    %v645 = vsel %vm516, %v389, 0
    %v647 = vsel %vm516, %v391, 0
    %649 = vmatpush.xpose.msra.mxu0 0.0
    %650 = vmatpush.xpose.msra.mxu0 0.0
    %651 = vmatpush.xpose.msra.mxu0 0.0
    %652 = vmatpush.xpose.msra.mxu0 0.0
    %653 = vmatpush.xpose.msra.mxu0 0.0
    %654 = vmatpush.xpose.msra.mxu0 0.0
    %655 = vmatpush.xpose.msra.mxu0 0.0
    %656 = vmatpush.xpose.msra.mxu0 0.0
    %657 = vmatpush.xpose.msra.mxu0 0.0
    %658 = vmatpush.xpose.msra.mxu0 0.0
    %659 = vmatpush.xpose.msra.mxu0 0.0
    %660 = vmatpush.xpose.msra.mxu0 0.0
    %661 = vmatpush.xpose.msra.mxu0 0.0
    %662 = vmatpush.xpose.msra.mxu0 0.0
    %663 = vmatpush.xpose.msra.mxu0 %v647
    %664 = vmatpush.xpose.msra.mxu0 %v645
    %665 = vmatmul.f32.gmra.mxu0 %v641
    %v666 = vpop.f32.mrf.mxu0
    %v667 = vadd.f32 0.0, %v666
    %668 = vmatmul.f32.gmra.mxu0 %v643
    %v669 = vpop.f32.mrf.mxu0
    %v670 = vadd.f32 0.0, %v669
    %671 = vdwg.mxu0
    %v672 = vsel %vm516, %v337, 0
    %v674 = vsel %vm516, %v339, 0
    %v676 = vsel %vm516, %v393, 0
    %v678 = vsel %vm516, %v395, 0
    %680 = vmatpush.xpose.msra.mxu0 0.0
    %681 = vmatpush.xpose.msra.mxu0 0.0
    %682 = vmatpush.xpose.msra.mxu0 0.0
    %683 = vmatpush.xpose.msra.mxu0 0.0
    %684 = vmatpush.xpose.msra.mxu0 0.0
    %685 = vmatpush.xpose.msra.mxu0 0.0
    %686 = vmatpush.xpose.msra.mxu0 0.0
    %687 = vmatpush.xpose.msra.mxu0 0.0
    %688 = vmatpush.xpose.msra.mxu0 0.0
    %689 = vmatpush.xpose.msra.mxu0 0.0
    %690 = vmatpush.xpose.msra.mxu0 0.0
    %691 = vmatpush.xpose.msra.mxu0 0.0
    %692 = vmatpush.xpose.msra.mxu0 0.0
    %693 = vmatpush.xpose.msra.mxu0 0.0
    %694 = vmatpush.xpose.msra.mxu0 %v678
    %695 = vmatpush.xpose.msra.mxu0 %v676
    %696 = vmatmul.f32.gmra.mxu0 %v672
    %v697 = vpop.f32.mrf.mxu0
    %v698 = vadd.f32 0.0, %v697
    %699 = vmatmul.f32.gmra.mxu0 %v674
    %v700 = vpop.f32.mrf.mxu0
    %v701 = vadd.f32 0.0, %v700
    %702 = vdwg.mxu0
    %v703 = vsel %vm516, %v341, 0
    %v705 = vsel %vm516, %v343, 0
    %v707 = vsel %vm516, %v397, 0
    %v709 = vsel %vm516, %v399, 0
    %711 = vmatpush.xpose.msra.mxu0 0.0
    %712 = vmatpush.xpose.msra.mxu0 0.0
    %713 = vmatpush.xpose.msra.mxu0 0.0
    %714 = vmatpush.xpose.msra.mxu0 0.0
    %715 = vmatpush.xpose.msra.mxu0 0.0
    %716 = vmatpush.xpose.msra.mxu0 0.0
    %717 = vmatpush.xpose.msra.mxu0 0.0
    %718 = vmatpush.xpose.msra.mxu0 0.0
    %719 = vmatpush.xpose.msra.mxu0 0.0
    %720 = vmatpush.xpose.msra.mxu0 0.0
    %721 = vmatpush.xpose.msra.mxu0 0.0
    %722 = vmatpush.xpose.msra.mxu0 0.0
    %723 = vmatpush.xpose.msra.mxu0 0.0
    %724 = vmatpush.xpose.msra.mxu0 0.0
    %725 = vmatpush.xpose.msra.mxu0 %v709
    %726 = vmatpush.xpose.msra.mxu0 %v707
    %727 = vmatmul.f32.gmra.mxu0 %v703
    %v728 = vpop.f32.mrf.mxu0
    %v729 = vadd.f32 0.0, %v728
    %730 = vmatmul.f32.gmra.mxu0 %v705
    %v731 = vpop.f32.mrf.mxu0
    %v732 = vadd.f32 0.0, %v731
    %733 = vdwg.mxu0
    %v734 = vsel %vm516, %v345, 0
    %v736 = vsel %vm516, %v347, 0
    %v738 = vsel %vm516, %v401, 0
    %v740 = vsel %vm516, %v403, 0
    %742 = vmatpush.xpose.msra.mxu0 0.0
    %743 = vmatpush.xpose.msra.mxu0 0.0
    %744 = vmatpush.xpose.msra.mxu0 0.0
    %745 = vmatpush.xpose.msra.mxu0 0.0
    %746 = vmatpush.xpose.msra.mxu0 0.0
    %747 = vmatpush.xpose.msra.mxu0 0.0
    %748 = vmatpush.xpose.msra.mxu0 0.0
    %749 = vmatpush.xpose.msra.mxu0 0.0
    %750 = vmatpush.xpose.msra.mxu0 0.0
    %751 = vmatpush.xpose.msra.mxu0 0.0
    %752 = vmatpush.xpose.msra.mxu0 0.0
    %753 = vmatpush.xpose.msra.mxu0 0.0
    %754 = vmatpush.xpose.msra.mxu0 0.0
    %755 = vmatpush.xpose.msra.mxu0 0.0
    %756 = vmatpush.xpose.msra.mxu0 %v740
    %757 = vmatpush.xpose.msra.mxu0 %v738
    %758 = vmatmul.f32.gmra.mxu0 %v734
    %v759 = vpop.f32.mrf.mxu0
    %v760 = vadd.f32 0.0, %v759
    %761 = vmatmul.f32.gmra.mxu0 %v736
    %v762 = vpop.f32.mrf.mxu0
    %v763 = vadd.f32 0.0, %v762
    %764 = vdwg.mxu0
    %v765 = vsel %vm516, %v349, 0
    %v767 = vsel %vm516, %v351, 0
    %v769 = vsel %vm516, %v405, 0
    %v771 = vsel %vm516, %v407, 0
    %773 = vmatpush.xpose.msra.mxu0 0.0
    %774 = vmatpush.xpose.msra.mxu0 0.0
    %775 = vmatpush.xpose.msra.mxu0 0.0
    %776 = vmatpush.xpose.msra.mxu0 0.0
    %777 = vmatpush.xpose.msra.mxu0 0.0
    %778 = vmatpush.xpose.msra.mxu0 0.0
    %779 = vmatpush.xpose.msra.mxu0 0.0
    %780 = vmatpush.xpose.msra.mxu0 0.0
    %781 = vmatpush.xpose.msra.mxu0 0.0
    %782 = vmatpush.xpose.msra.mxu0 0.0
    %783 = vmatpush.xpose.msra.mxu0 0.0
    %784 = vmatpush.xpose.msra.mxu0 0.0
    %785 = vmatpush.xpose.msra.mxu0 0.0
    %786 = vmatpush.xpose.msra.mxu0 0.0
    %787 = vmatpush.xpose.msra.mxu0 %v771
    %788 = vmatpush.xpose.msra.mxu0 %v769
    %789 = vmatmul.f32.gmra.mxu0 %v765
    %v790 = vpop.f32.mrf.mxu0
    %v791 = vadd.f32 0.0, %v790
    %792 = vmatmul.f32.gmra.mxu0 %v767
    %v793 = vpop.f32.mrf.mxu0
    %v794 = vadd.f32 0.0, %v793
    %795 = vdwg.mxu0
    %v796 = vsel %vm516, %v353, 0
    %v798 = vsel %vm516, %v355, 0
    %v800 = vsel %vm516, %v409, 0
    %v802 = vsel %vm516, %v411, 0
    %804 = vmatpush.xpose.msra.mxu0 0.0
    %805 = vmatpush.xpose.msra.mxu0 0.0
    %806 = vmatpush.xpose.msra.mxu0 0.0
    %807 = vmatpush.xpose.msra.mxu0 0.0
    %808 = vmatpush.xpose.msra.mxu0 0.0
    %809 = vmatpush.xpose.msra.mxu0 0.0
    %810 = vmatpush.xpose.msra.mxu0 0.0
    %811 = vmatpush.xpose.msra.mxu0 0.0
    %812 = vmatpush.xpose.msra.mxu0 0.0
    %813 = vmatpush.xpose.msra.mxu0 0.0
    %814 = vmatpush.xpose.msra.mxu0 0.0
    %815 = vmatpush.xpose.msra.mxu0 0.0
    %816 = vmatpush.xpose.msra.mxu0 0.0
    %817 = vmatpush.xpose.msra.mxu0 0.0
    %818 = vmatpush.xpose.msra.mxu0 %v802
    %819 = vmatpush.xpose.msra.mxu0 %v800
    %820 = vmatmul.f32.gmra.mxu0 %v796
    %v821 = vpop.f32.mrf.mxu0
    %v822 = vadd.f32 0.0, %v821
    %823 = vmatmul.f32.gmra.mxu0 %v798
    %v824 = vpop.f32.mrf.mxu0
    %v825 = vadd.f32 0.0, %v824
    %826 = vdwg.mxu0
    %v827 = vsel %vm516, %v357, 0
    %v829 = vsel %vm516, %v359, 0
    %v831 = vsel %vm516, %v413, 0
    %v833 = vsel %vm516, %v415, 0
    %835 = vmatpush.xpose.msra.mxu0 0.0
    %836 = vmatpush.xpose.msra.mxu0 0.0
    %837 = vmatpush.xpose.msra.mxu0 0.0
    %838 = vmatpush.xpose.msra.mxu0 0.0
    %839 = vmatpush.xpose.msra.mxu0 0.0
    %840 = vmatpush.xpose.msra.mxu0 0.0
    %841 = vmatpush.xpose.msra.mxu0 0.0
    %842 = vmatpush.xpose.msra.mxu0 0.0
    %843 = vmatpush.xpose.msra.mxu0 0.0
    %844 = vmatpush.xpose.msra.mxu0 0.0
    %845 = vmatpush.xpose.msra.mxu0 0.0
    %846 = vmatpush.xpose.msra.mxu0 0.0
    %847 = vmatpush.xpose.msra.mxu0 0.0
    %848 = vmatpush.xpose.msra.mxu0 0.0
    %849 = vmatpush.xpose.msra.mxu0 %v833
    %850 = vmatpush.xpose.msra.mxu0 %v831
    %851 = vmatmul.f32.gmra.mxu0 %v827
    %v852 = vpop.f32.mrf.mxu0
    %v853 = vadd.f32 0.0, %v852
    %854 = vmatmul.f32.gmra.mxu0 %v829
    %v855 = vpop.f32.mrf.mxu0
    %v856 = vadd.f32 0.0, %v855
    %857 = vdwg.mxu0
    %v858 = vsel %vm516, %v361, 0
    %v860 = vsel %vm516, %v363, 0
    %v862 = vsel %vm516, %v417, 0
    %v864 = vsel %vm516, %v419, 0
    %866 = vmatpush.xpose.msra.mxu0 0.0
    %867 = vmatpush.xpose.msra.mxu0 0.0
    %868 = vmatpush.xpose.msra.mxu0 0.0
    %869 = vmatpush.xpose.msra.mxu0 0.0
    %870 = vmatpush.xpose.msra.mxu0 0.0
    %871 = vmatpush.xpose.msra.mxu0 0.0
    %872 = vmatpush.xpose.msra.mxu0 0.0
    %873 = vmatpush.xpose.msra.mxu0 0.0
    %874 = vmatpush.xpose.msra.mxu0 0.0
    %875 = vmatpush.xpose.msra.mxu0 0.0
    %876 = vmatpush.xpose.msra.mxu0 0.0
    %877 = vmatpush.xpose.msra.mxu0 0.0
    %878 = vmatpush.xpose.msra.mxu0 0.0
    %879 = vmatpush.xpose.msra.mxu0 0.0
    %880 = vmatpush.xpose.msra.mxu0 %v864
    %881 = vmatpush.xpose.msra.mxu0 %v862
    %882 = vmatmul.f32.gmra.mxu0 %v858
    %v883 = vpop.f32.mrf.mxu0
    %v884 = vadd.f32 0.0, %v883
    %885 = vmatmul.f32.gmra.mxu0 %v860
    %v886 = vpop.f32.mrf.mxu0
    %v887 = vadd.f32 0.0, %v886
    %888 = vdwg.mxu0
    %v889 = vsel %vm516, %v365, 0
    %v891 = vsel %vm516, %v367, 0
    %v893 = vsel %vm516, %v421, 0
    %v895 = vsel %vm516, %v423, 0
    %897 = vmatpush.xpose.msra.mxu0 0.0
    %898 = vmatpush.xpose.msra.mxu0 0.0
    %899 = vmatpush.xpose.msra.mxu0 0.0
    %900 = vmatpush.xpose.msra.mxu0 0.0
    %901 = vmatpush.xpose.msra.mxu0 0.0
    %902 = vmatpush.xpose.msra.mxu0 0.0
    %903 = vmatpush.xpose.msra.mxu0 0.0
    %904 = vmatpush.xpose.msra.mxu0 0.0
    %905 = vmatpush.xpose.msra.mxu0 0.0
    %906 = vmatpush.xpose.msra.mxu0 0.0
    %907 = vmatpush.xpose.msra.mxu0 0.0
    %908 = vmatpush.xpose.msra.mxu0 0.0
    %909 = vmatpush.xpose.msra.mxu0 0.0
    %910 = vmatpush.xpose.msra.mxu0 0.0
    %911 = vmatpush.xpose.msra.mxu0 %v895
    %912 = vmatpush.xpose.msra.mxu0 %v893
    %913 = vmatmul.f32.gmra.mxu0 %v889
    %v914 = vpop.f32.mrf.mxu0
    %v915 = vadd.f32 0.0, %v914
    %916 = vmatmul.f32.gmra.mxu0 %v891
    %v917 = vpop.f32.mrf.mxu0
    %v918 = vadd.f32 0.0, %v917
    %919 = vdwg.mxu0
    %v920 = vsel %vm516, %v369, 0
    %v922 = vsel %vm516, %v371, 0
    %v924 = vsel %vm516, %v425, 0
    %v926 = vsel %vm516, %v427, 0
    %928 = vmatpush.xpose.msra.mxu0 0.0
    %929 = vmatpush.xpose.msra.mxu0 0.0
    %930 = vmatpush.xpose.msra.mxu0 0.0
    %931 = vmatpush.xpose.msra.mxu0 0.0
    %932 = vmatpush.xpose.msra.mxu0 0.0
    %933 = vmatpush.xpose.msra.mxu0 0.0
    %934 = vmatpush.xpose.msra.mxu0 0.0
    %935 = vmatpush.xpose.msra.mxu0 0.0
    %936 = vmatpush.xpose.msra.mxu0 0.0
    %937 = vmatpush.xpose.msra.mxu0 0.0
    %938 = vmatpush.xpose.msra.mxu0 0.0
    %939 = vmatpush.xpose.msra.mxu0 0.0
    %940 = vmatpush.xpose.msra.mxu0 0.0
    %941 = vmatpush.xpose.msra.mxu0 0.0
    %942 = vmatpush.xpose.msra.mxu0 %v926
    %943 = vmatpush.xpose.msra.mxu0 %v924
    %944 = vmatmul.f32.gmra.mxu0 %v920
    %v945 = vpop.f32.mrf.mxu0
    %v946 = vadd.f32 0.0, %v945
    %947 = vmatmul.f32.gmra.mxu0 %v922
    %v948 = vpop.f32.mrf.mxu0
    %v949 = vadd.f32 0.0, %v948
    %950 = vdwg.mxu0
    %v951 = vsel %vm516, %v373, 0
    %v953 = vsel %vm516, %v375, 0
    %v955 = vsel %vm516, %v429, 0
    %v957 = vsel %vm516, %v431, 0
    %959 = vmatpush.xpose.msra.mxu0 0.0
    %960 = vmatpush.xpose.msra.mxu0 0.0
    %961 = vmatpush.xpose.msra.mxu0 0.0
    %962 = vmatpush.xpose.msra.mxu0 0.0
    %963 = vmatpush.xpose.msra.mxu0 0.0
    %964 = vmatpush.xpose.msra.mxu0 0.0
    %965 = vmatpush.xpose.msra.mxu0 0.0
    %966 = vmatpush.xpose.msra.mxu0 0.0
    %967 = vmatpush.xpose.msra.mxu0 0.0
    %968 = vmatpush.xpose.msra.mxu0 0.0
    %969 = vmatpush.xpose.msra.mxu0 0.0
    %970 = vmatpush.xpose.msra.mxu0 0.0
    %971 = vmatpush.xpose.msra.mxu0 0.0
    %972 = vmatpush.xpose.msra.mxu0 0.0
    %973 = vmatpush.xpose.msra.mxu0 %v957
    %974 = vmatpush.xpose.msra.mxu0 %v955
    %975 = vmatmul.f32.gmra.mxu0 %v951
    %v976 = vpop.f32.mrf.mxu0
    %v977 = vadd.f32 0.0, %v976
    %978 = vmatmul.f32.gmra.mxu0 %v953
    %v979 = vpop.f32.mrf.mxu0
    %v980 = vadd.f32 0.0, %v979
    %981 = vdwg.mxu0
    %v982 = vsel %vm516, %v377, 0
    %v984 = vsel %vm516, %v379, 0
    %v986 = vsel %vm516, %v433, 0
    %v988 = vsel %vm516, %v435, 0
    %990 = vmatpush.xpose.msra.mxu0 0.0
    %991 = vmatpush.xpose.msra.mxu0 0.0
    %992 = vmatpush.xpose.msra.mxu0 0.0
    %993 = vmatpush.xpose.msra.mxu0 0.0
    %994 = vmatpush.xpose.msra.mxu0 0.0
    %995 = vmatpush.xpose.msra.mxu0 0.0
    %996 = vmatpush.xpose.msra.mxu0 0.0
    %997 = vmatpush.xpose.msra.mxu0 0.0
    %998 = vmatpush.xpose.msra.mxu0 0.0
    %999 = vmatpush.xpose.msra.mxu0 0.0
    %1000 = vmatpush.xpose.msra.mxu0 0.0
    %1001 = vmatpush.xpose.msra.mxu0 0.0
    %1002 = vmatpush.xpose.msra.mxu0 0.0
    %1003 = vmatpush.xpose.msra.mxu0 0.0
    %1004 = vmatpush.xpose.msra.mxu0 %v988
    %1005 = vmatpush.xpose.msra.mxu0 %v986
    %1006 = vmatmul.f32.gmra.mxu0 %v982
    %v1007 = vpop.f32.mrf.mxu0
    %v1008 = vadd.f32 0.0, %v1007
    %1009 = vmatmul.f32.gmra.mxu0 %v984
    %v1010 = vpop.f32.mrf.mxu0
    %v1011 = vadd.f32 0.0, %v1010
    %1012 = vdwg.mxu0
    %vm1013 = vcmask 130048
    %v1014 = vsel %vm1013, %v543, -inf
    %1015 = vmax.xlane.f32.xlu0 %v1014
    %v1016 = vpop.xlane.xlu0 %1015
    %v1017 = vsel %vm1013, %v546, -inf
    %1018 = vmax.xlane.f32.xlu0 %v1017
    %v1019 = vpop.xlane.xlu0 %1018
    %v1020 = vsel %vm1013, %v574, -inf
    %1021 = vmax.xlane.f32.xlu0 %v1020
    %v1022 = vpop.xlane.xlu0 %1021
    %v1023 = vsel %vm1013, %v577, -inf
    %1024 = vmax.xlane.f32.xlu0 %v1023
    %v1025 = vpop.xlane.xlu0 %1024
    %v1026 = vsel %vm1013, %v605, -inf
    %1027 = vmax.xlane.f32.xlu0 %v1026
    %v1028 = vpop.xlane.xlu0 %1027
    %v1029 = vsel %vm1013, %v608, -inf
    %1030 = vmax.xlane.f32.xlu0 %v1029
    %v1031 = vpop.xlane.xlu0 %1030
    %v1032 = vsel %vm1013, %v636, -inf
    %1033 = vmax.xlane.f32.xlu0 %v1032
    %v1034 = vpop.xlane.xlu0 %1033
    %v1035 = vsel %vm1013, %v639, -inf
    %1036 = vmax.xlane.f32.xlu0 %v1035
    %v1037 = vpop.xlane.xlu0 %1036
    %v1038 = vsel %vm1013, %v667, -inf
    %1039 = vmax.xlane.f32.xlu0 %v1038
    %v1040 = vpop.xlane.xlu0 %1039
    %v1041 = vsel %vm1013, %v670, -inf
    %1042 = vmax.xlane.f32.xlu0 %v1041
    %v1043 = vpop.xlane.xlu0 %1042
    %v1044 = vsel %vm1013, %v698, -inf
    %1045 = vmax.xlane.f32.xlu0 %v1044
    %v1046 = vpop.xlane.xlu0 %1045
    %v1047 = vsel %vm1013, %v701, -inf
    %1048 = vmax.xlane.f32.xlu0 %v1047
    %v1049 = vpop.xlane.xlu0 %1048
    %v1050 = vsel %vm1013, %v729, -inf
    %1051 = vmax.xlane.f32.xlu0 %v1050
    %v1052 = vpop.xlane.xlu0 %1051
    %v1053 = vsel %vm1013, %v732, -inf
    %1054 = vmax.xlane.f32.xlu0 %v1053
    %v1055 = vpop.xlane.xlu0 %1054
    %v1056 = vsel %vm1013, %v760, -inf
    %1057 = vmax.xlane.f32.xlu0 %v1056
    %v1058 = vpop.xlane.xlu0 %1057
    %v1059 = vsel %vm1013, %v763, -inf
    %1060 = vmax.xlane.f32.xlu0 %v1059
    %v1061 = vpop.xlane.xlu0 %1060
    %v1062 = vsel %vm1013, %v791, -inf
    %1063 = vmax.xlane.f32.xlu0 %v1062
    %v1064 = vpop.xlane.xlu0 %1063
    %v1065 = vsel %vm1013, %v794, -inf
    %1066 = vmax.xlane.f32.xlu0 %v1065
    %v1067 = vpop.xlane.xlu0 %1066
    %v1068 = vsel %vm1013, %v822, -inf
    %1069 = vmax.xlane.f32.xlu0 %v1068
    %v1070 = vpop.xlane.xlu0 %1069
    %v1071 = vsel %vm1013, %v825, -inf
    %1072 = vmax.xlane.f32.xlu0 %v1071
    %v1073 = vpop.xlane.xlu0 %1072
    %v1074 = vsel %vm1013, %v853, -inf
    %1075 = vmax.xlane.f32.xlu0 %v1074
    %v1076 = vpop.xlane.xlu0 %1075
    %v1077 = vsel %vm1013, %v856, -inf
    %1078 = vmax.xlane.f32.xlu0 %v1077
    %v1079 = vpop.xlane.xlu0 %1078
    %v1080 = vsel %vm1013, %v884, -inf
    %1081 = vmax.xlane.f32.xlu0 %v1080
    %v1082 = vpop.xlane.xlu0 %1081
    %v1083 = vsel %vm1013, %v887, -inf
    %1084 = vmax.xlane.f32.xlu0 %v1083
    %v1085 = vpop.xlane.xlu0 %1084
    %v1086 = vsel %vm1013, %v915, -inf
    %1087 = vmax.xlane.f32.xlu0 %v1086
    %v1088 = vpop.xlane.xlu0 %1087
    %v1089 = vsel %vm1013, %v918, -inf
    %1090 = vmax.xlane.f32.xlu0 %v1089
    %v1091 = vpop.xlane.xlu0 %1090
    %v1092 = vsel %vm1013, %v946, -inf
    %1093 = vmax.xlane.f32.xlu0 %v1092
    %v1094 = vpop.xlane.xlu0 %1093
    %v1095 = vsel %vm1013, %v949, -inf
    %1096 = vmax.xlane.f32.xlu0 %v1095
    %v1097 = vpop.xlane.xlu0 %1096
    %v1098 = vsel %vm1013, %v977, -inf
    %1099 = vmax.xlane.f32.xlu0 %v1098
    %v1100 = vpop.xlane.xlu0 %1099
    %v1101 = vsel %vm1013, %v980, -inf
    %1102 = vmax.xlane.f32.xlu0 %v1101
    %v1103 = vpop.xlane.xlu0 %1102
    %v1104 = vsel %vm1013, %v1008, -inf
    %1105 = vmax.xlane.f32.xlu0 %v1104
    %v1106 = vpop.xlane.xlu0 %1105
    %v1107 = vsel %vm1013, %v1011, -inf
    %1108 = vmax.xlane.f32.xlu0 %v1107
    %v1109 = vpop.xlane.xlu0 %1108
    %v1110 = vsub.f32 %v543, %v1016
    %v1111 = vsub.f32 %v546, %v1019
    %v1112 = vsub.f32 %v574, %v1022
    %v1113 = vsub.f32 %v577, %v1025
    %v1114 = vsub.f32 %v605, %v1028
    %v1115 = vsub.f32 %v608, %v1031
    %v1116 = vsub.f32 %v636, %v1034
    %v1117 = vsub.f32 %v639, %v1037
    %v1118 = vsub.f32 %v667, %v1040
    %v1119 = vsub.f32 %v670, %v1043
    %v1120 = vsub.f32 %v698, %v1046
    %v1121 = vsub.f32 %v701, %v1049
    %v1122 = vsub.f32 %v729, %v1052
    %v1123 = vsub.f32 %v732, %v1055
    %v1124 = vsub.f32 %v760, %v1058
    %v1125 = vsub.f32 %v763, %v1061
    %v1126 = vsub.f32 %v791, %v1064
    %v1127 = vsub.f32 %v794, %v1067
    %v1128 = vsub.f32 %v822, %v1070
    %v1129 = vsub.f32 %v825, %v1073
    %v1130 = vsub.f32 %v853, %v1076
    %v1131 = vsub.f32 %v856, %v1079
    %v1132 = vsub.f32 %v884, %v1082
    %v1133 = vsub.f32 %v887, %v1085
    %v1134 = vsub.f32 %v915, %v1088
    %v1135 = vsub.f32 %v918, %v1091
    %v1136 = vsub.f32 %v946, %v1094
    %v1137 = vsub.f32 %v949, %v1097
    %v1138 = vsub.f32 %v977, %v1100
    %v1139 = vsub.f32 %v980, %v1103
    %v1140 = vsub.f32 %v1008, %v1106
    %v1141 = vsub.f32 %v1011, %v1109
    %v1142 = vmul.f32 %v1110, 1.442695
    %v1143 = vpow.pop %v1142
    %v1144 = vmul.f32 %v1111, 1.442695
    %v1145 = vpow.pop %v1144
    %v1146 = vmul.f32 %v1112, 1.442695
    %v1147 = vpow.pop %v1146
    %v1148 = vmul.f32 %v1113, 1.442695
    %v1149 = vpow.pop %v1148
    %v1150 = vmul.f32 %v1114, 1.442695
    %v1151 = vpow.pop %v1150
    %v1152 = vmul.f32 %v1115, 1.442695
    %v1153 = vpow.pop %v1152
    %v1154 = vmul.f32 %v1116, 1.442695
    %v1155 = vpow.pop %v1154
    %v1156 = vmul.f32 %v1117, 1.442695
    %v1157 = vpow.pop %v1156
    %v1158 = vmul.f32 %v1118, 1.442695
    %v1159 = vpow.pop %v1158
    %v1160 = vmul.f32 %v1119, 1.442695
    %v1161 = vpow.pop %v1160
    %v1162 = vmul.f32 %v1120, 1.442695
    %v1163 = vpow.pop %v1162
    %v1164 = vmul.f32 %v1121, 1.442695
    %v1165 = vpow.pop %v1164
    %v1166 = vmul.f32 %v1122, 1.442695
    %v1167 = vpow.pop %v1166
    %v1168 = vmul.f32 %v1123, 1.442695
    %v1169 = vpow.pop %v1168
    %v1170 = vmul.f32 %v1124, 1.442695
    %v1171 = vpow.pop %v1170
    %v1172 = vmul.f32 %v1125, 1.442695
    %v1173 = vpow.pop %v1172
    %v1174 = vmul.f32 %v1126, 1.442695
    %v1175 = vpow.pop %v1174
    %v1176 = vmul.f32 %v1127, 1.442695
    %v1177 = vpow.pop %v1176
    %v1178 = vmul.f32 %v1128, 1.442695
    %v1179 = vpow.pop %v1178
    %v1180 = vmul.f32 %v1129, 1.442695
    %v1181 = vpow.pop %v1180
    %v1182 = vmul.f32 %v1130, 1.442695
    %v1183 = vpow.pop %v1182
    %v1184 = vmul.f32 %v1131, 1.442695
    %v1185 = vpow.pop %v1184
    %v1186 = vmul.f32 %v1132, 1.442695
    %v1187 = vpow.pop %v1186
    %v1188 = vmul.f32 %v1133, 1.442695
    %v1189 = vpow.pop %v1188
    %v1190 = vmul.f32 %v1134, 1.442695
    %v1191 = vpow.pop %v1190
    %v1192 = vmul.f32 %v1135, 1.442695
    %v1193 = vpow.pop %v1192
    %v1194 = vmul.f32 %v1136, 1.442695
    %v1195 = vpow.pop %v1194
    %v1196 = vmul.f32 %v1137, 1.442695
    %v1197 = vpow.pop %v1196
    %v1198 = vmul.f32 %v1138, 1.442695
    %v1199 = vpow.pop %v1198
    %v1200 = vmul.f32 %v1139, 1.442695
    %v1201 = vpow.pop %v1200
    %v1202 = vmul.f32 %v1140, 1.442695
    %v1203 = vpow.pop %v1202
    %v1204 = vmul.f32 %v1141, 1.442695
    %v1205 = vpow.pop %v1204
    %v1206 = vsel %vm1013, %v1143, 0.0
    %1207 = vadd.xlane.f32.xlu0 %v1206
    %v1208 = vpop.xlane.xlu0 %1207
    %v1209 = vsel %vm1013, %v1145, 0.0
    %1210 = vadd.xlane.f32.xlu0 %v1209
    %v1211 = vpop.xlane.xlu0 %1210
    %v1212 = vsel %vm1013, %v1147, 0.0
    %1213 = vadd.xlane.f32.xlu0 %v1212
    %v1214 = vpop.xlane.xlu0 %1213
    %v1215 = vsel %vm1013, %v1149, 0.0
    %1216 = vadd.xlane.f32.xlu0 %v1215
    %v1217 = vpop.xlane.xlu0 %1216
    %v1218 = vsel %vm1013, %v1151, 0.0
    %1219 = vadd.xlane.f32.xlu0 %v1218
    %v1220 = vpop.xlane.xlu0 %1219
    %v1221 = vsel %vm1013, %v1153, 0.0
    %1222 = vadd.xlane.f32.xlu0 %v1221
    %v1223 = vpop.xlane.xlu0 %1222
    %v1224 = vsel %vm1013, %v1155, 0.0
    %1225 = vadd.xlane.f32.xlu0 %v1224
    %v1226 = vpop.xlane.xlu0 %1225
    %v1227 = vsel %vm1013, %v1157, 0.0
    %1228 = vadd.xlane.f32.xlu0 %v1227
    %v1229 = vpop.xlane.xlu0 %1228
    %v1230 = vsel %vm1013, %v1159, 0.0
    %1231 = vadd.xlane.f32.xlu0 %v1230
    %v1232 = vpop.xlane.xlu0 %1231
    %v1233 = vsel %vm1013, %v1161, 0.0
    %1234 = vadd.xlane.f32.xlu0 %v1233
    %v1235 = vpop.xlane.xlu0 %1234
    %v1236 = vsel %vm1013, %v1163, 0.0
    %1237 = vadd.xlane.f32.xlu0 %v1236
    %v1238 = vpop.xlane.xlu0 %1237
    %v1239 = vsel %vm1013, %v1165, 0.0
    %1240 = vadd.xlane.f32.xlu0 %v1239
    %v1241 = vpop.xlane.xlu0 %1240
    %v1242 = vsel %vm1013, %v1167, 0.0
    %1243 = vadd.xlane.f32.xlu0 %v1242
    %v1244 = vpop.xlane.xlu0 %1243
    %v1245 = vsel %vm1013, %v1169, 0.0
    %1246 = vadd.xlane.f32.xlu0 %v1245
    %v1247 = vpop.xlane.xlu0 %1246
    %v1248 = vsel %vm1013, %v1171, 0.0
    %1249 = vadd.xlane.f32.xlu0 %v1248
    %v1250 = vpop.xlane.xlu0 %1249
    %v1251 = vsel %vm1013, %v1173, 0.0
    %1252 = vadd.xlane.f32.xlu0 %v1251
    %v1253 = vpop.xlane.xlu0 %1252
    %v1254 = vsel %vm1013, %v1175, 0.0
    %1255 = vadd.xlane.f32.xlu0 %v1254
    %v1256 = vpop.xlane.xlu0 %1255
    %v1257 = vsel %vm1013, %v1177, 0.0
    %1258 = vadd.xlane.f32.xlu0 %v1257
    %v1259 = vpop.xlane.xlu0 %1258
    %v1260 = vsel %vm1013, %v1179, 0.0
    %1261 = vadd.xlane.f32.xlu0 %v1260
    %v1262 = vpop.xlane.xlu0 %1261
    %v1263 = vsel %vm1013, %v1181, 0.0
    %1264 = vadd.xlane.f32.xlu0 %v1263
    %v1265 = vpop.xlane.xlu0 %1264
    %v1266 = vsel %vm1013, %v1183, 0.0
    %1267 = vadd.xlane.f32.xlu0 %v1266
    %v1268 = vpop.xlane.xlu0 %1267
    %v1269 = vsel %vm1013, %v1185, 0.0
    %1270 = vadd.xlane.f32.xlu0 %v1269
    %v1271 = vpop.xlane.xlu0 %1270
    %v1272 = vsel %vm1013, %v1187, 0.0
    %1273 = vadd.xlane.f32.xlu0 %v1272
    %v1274 = vpop.xlane.xlu0 %1273
    %v1275 = vsel %vm1013, %v1189, 0.0
    %1276 = vadd.xlane.f32.xlu0 %v1275
    %v1277 = vpop.xlane.xlu0 %1276
    %v1278 = vsel %vm1013, %v1191, 0.0
    %1279 = vadd.xlane.f32.xlu0 %v1278
    %v1280 = vpop.xlane.xlu0 %1279
    %v1281 = vsel %vm1013, %v1193, 0.0
    %1282 = vadd.xlane.f32.xlu0 %v1281
    %v1283 = vpop.xlane.xlu0 %1282
    %v1284 = vsel %vm1013, %v1195, 0.0
    %1285 = vadd.xlane.f32.xlu0 %v1284
    %v1286 = vpop.xlane.xlu0 %1285
    %v1287 = vsel %vm1013, %v1197, 0.0
    %1288 = vadd.xlane.f32.xlu0 %v1287
    %v1289 = vpop.xlane.xlu0 %1288
    %v1290 = vsel %vm1013, %v1199, 0.0
    %1291 = vadd.xlane.f32.xlu0 %v1290
    %v1292 = vpop.xlane.xlu0 %1291
    %v1293 = vsel %vm1013, %v1201, 0.0
    %1294 = vadd.xlane.f32.xlu0 %v1293
    %v1295 = vpop.xlane.xlu0 %1294
    %v1296 = vsel %vm1013, %v1203, 0.0
    %1297 = vadd.xlane.f32.xlu0 %v1296
    %v1298 = vpop.xlane.xlu0 %1297
    %v1299 = vsel %vm1013, %v1205, 0.0
    %1300 = vadd.xlane.f32.xlu0 %v1299
    %v1301 = vpop.xlane.xlu0 %1300
    %v1302 = vrcp.pop %v1208
    %v1303 = vmul.f32 %v1208, %v1302
    %v1304 = vsub.f32 1.0, %v1303
    %v1305 = vmul.f32 %v1302, %v1304
    %v1306 = vadd.f32 %v1302, %v1305
    %vm1307 = vweird.f32 %v1208
    %vm1308 = vweird.f32 %v1302
    %vm1309 = vmor %vm1307, %vm1308
    %v1310 = vsel %vm1309, %v1302, %v1306
    %v1311 = vand.u32 2147483647, %v1208
    %vm1312 = vcmp.eq.f32.partialorder %v1311, 8.507059e+37
    %v1313 = vand.u32 %v1208, 2147483648
    %v1314 = vor.u32 1.1754944e-38, %v1313
    %v1315 = vsel %vm1312, %v1314, %v1310
    %v1316 = vmul.f32 1.0, %v1315
    %v1317 = vrcp.pop %v1211
    %v1318 = vmul.f32 %v1211, %v1317
    %v1319 = vsub.f32 1.0, %v1318
    %v1320 = vmul.f32 %v1317, %v1319
    %v1321 = vadd.f32 %v1317, %v1320
    %vm1322 = vweird.f32 %v1211
    %vm1323 = vweird.f32 %v1317
    %vm1324 = vmor %vm1322, %vm1323
    %v1325 = vsel %vm1324, %v1317, %v1321
    %v1326 = vand.u32 2147483647, %v1211
    %vm1327 = vcmp.eq.f32.partialorder %v1326, 8.507059e+37
    %v1328 = vand.u32 %v1211, 2147483648
    %v1329 = vor.u32 1.1754944e-38, %v1328
    %v1330 = vsel %vm1327, %v1329, %v1325
    %v1331 = vmul.f32 1.0, %v1330
    %v1332 = vrcp.pop %v1214
    %v1333 = vmul.f32 %v1214, %v1332
    %v1334 = vsub.f32 1.0, %v1333
    %v1335 = vmul.f32 %v1332, %v1334
    %v1336 = vadd.f32 %v1332, %v1335
    %vm1337 = vweird.f32 %v1214
    %vm1338 = vweird.f32 %v1332
    %vm1339 = vmor %vm1337, %vm1338
    %v1340 = vsel %vm1339, %v1332, %v1336
    %v1341 = vand.u32 2147483647, %v1214
    %vm1342 = vcmp.eq.f32.partialorder %v1341, 8.507059e+37
    %v1343 = vand.u32 %v1214, 2147483648
    %v1344 = vor.u32 1.1754944e-38, %v1343
    %v1345 = vsel %vm1342, %v1344, %v1340
    %v1346 = vmul.f32 1.0, %v1345
    %v1347 = vrcp.pop %v1217
    %v1348 = vmul.f32 %v1217, %v1347
    %v1349 = vsub.f32 1.0, %v1348
    %v1350 = vmul.f32 %v1347, %v1349
    %v1351 = vadd.f32 %v1347, %v1350
    %vm1352 = vweird.f32 %v1217
    %vm1353 = vweird.f32 %v1347
    %vm1354 = vmor %vm1352, %vm1353
    %v1355 = vsel %vm1354, %v1347, %v1351
    %v1356 = vand.u32 2147483647, %v1217
    %vm1357 = vcmp.eq.f32.partialorder %v1356, 8.507059e+37
    %v1358 = vand.u32 %v1217, 2147483648
    %v1359 = vor.u32 1.1754944e-38, %v1358
    %v1360 = vsel %vm1357, %v1359, %v1355
    %v1361 = vmul.f32 1.0, %v1360
    %v1362 = vrcp.pop %v1220
    %v1363 = vmul.f32 %v1220, %v1362
    %v1364 = vsub.f32 1.0, %v1363
    %v1365 = vmul.f32 %v1362, %v1364
    %v1366 = vadd.f32 %v1362, %v1365
    %vm1367 = vweird.f32 %v1220
    %vm1368 = vweird.f32 %v1362
    %vm1369 = vmor %vm1367, %vm1368
    %v1370 = vsel %vm1369, %v1362, %v1366
    %v1371 = vand.u32 2147483647, %v1220
    %vm1372 = vcmp.eq.f32.partialorder %v1371, 8.507059e+37
    %v1373 = vand.u32 %v1220, 2147483648
    %v1374 = vor.u32 1.1754944e-38, %v1373
    %v1375 = vsel %vm1372, %v1374, %v1370
    %v1376 = vmul.f32 1.0, %v1375
    %v1377 = vrcp.pop %v1223
    %v1378 = vmul.f32 %v1223, %v1377
    %v1379 = vsub.f32 1.0, %v1378
    %v1380 = vmul.f32 %v1377, %v1379
    %v1381 = vadd.f32 %v1377, %v1380
    %vm1382 = vweird.f32 %v1223
    %vm1383 = vweird.f32 %v1377
    %vm1384 = vmor %vm1382, %vm1383
    %v1385 = vsel %vm1384, %v1377, %v1381
    %v1386 = vand.u32 2147483647, %v1223
    %vm1387 = vcmp.eq.f32.partialorder %v1386, 8.507059e+37
    %v1388 = vand.u32 %v1223, 2147483648
    %v1389 = vor.u32 1.1754944e-38, %v1388
    %v1390 = vsel %vm1387, %v1389, %v1385
    %v1391 = vmul.f32 1.0, %v1390
    %v1392 = vrcp.pop %v1226
    %v1393 = vmul.f32 %v1226, %v1392
    %v1394 = vsub.f32 1.0, %v1393
    %v1395 = vmul.f32 %v1392, %v1394
    %v1396 = vadd.f32 %v1392, %v1395
    %vm1397 = vweird.f32 %v1226
    %vm1398 = vweird.f32 %v1392
    %vm1399 = vmor %vm1397, %vm1398
    %v1400 = vsel %vm1399, %v1392, %v1396
    %v1401 = vand.u32 2147483647, %v1226
    %vm1402 = vcmp.eq.f32.partialorder %v1401, 8.507059e+37
    %v1403 = vand.u32 %v1226, 2147483648
    %v1404 = vor.u32 1.1754944e-38, %v1403
    %v1405 = vsel %vm1402, %v1404, %v1400
    %v1406 = vmul.f32 1.0, %v1405
    %v1407 = vrcp.pop %v1229
    %v1408 = vmul.f32 %v1229, %v1407
    %v1409 = vsub.f32 1.0, %v1408
    %v1410 = vmul.f32 %v1407, %v1409
    %v1411 = vadd.f32 %v1407, %v1410
    %vm1412 = vweird.f32 %v1229
    %vm1413 = vweird.f32 %v1407
    %vm1414 = vmor %vm1412, %vm1413
    %v1415 = vsel %vm1414, %v1407, %v1411
    %v1416 = vand.u32 2147483647, %v1229
    %vm1417 = vcmp.eq.f32.partialorder %v1416, 8.507059e+37
    %v1418 = vand.u32 %v1229, 2147483648
    %v1419 = vor.u32 1.1754944e-38, %v1418
    %v1420 = vsel %vm1417, %v1419, %v1415
    %v1421 = vmul.f32 1.0, %v1420
    %v1422 = vrcp.pop %v1232
    %v1423 = vmul.f32 %v1232, %v1422
    %v1424 = vsub.f32 1.0, %v1423
    %v1425 = vmul.f32 %v1422, %v1424
    %v1426 = vadd.f32 %v1422, %v1425
    %vm1427 = vweird.f32 %v1232
    %vm1428 = vweird.f32 %v1422
    %vm1429 = vmor %vm1427, %vm1428
    %v1430 = vsel %vm1429, %v1422, %v1426
    %v1431 = vand.u32 2147483647, %v1232
    %vm1432 = vcmp.eq.f32.partialorder %v1431, 8.507059e+37
    %v1433 = vand.u32 %v1232, 2147483648
    %v1434 = vor.u32 1.1754944e-38, %v1433
    %v1435 = vsel %vm1432, %v1434, %v1430
    %v1436 = vmul.f32 1.0, %v1435
    %v1437 = vrcp.pop %v1235
    %v1438 = vmul.f32 %v1235, %v1437
    %v1439 = vsub.f32 1.0, %v1438
    %v1440 = vmul.f32 %v1437, %v1439
    %v1441 = vadd.f32 %v1437, %v1440
    %vm1442 = vweird.f32 %v1235
    %vm1443 = vweird.f32 %v1437
    %vm1444 = vmor %vm1442, %vm1443
    %v1445 = vsel %vm1444, %v1437, %v1441
    %v1446 = vand.u32 2147483647, %v1235
    %vm1447 = vcmp.eq.f32.partialorder %v1446, 8.507059e+37
    %v1448 = vand.u32 %v1235, 2147483648
    %v1449 = vor.u32 1.1754944e-38, %v1448
    %v1450 = vsel %vm1447, %v1449, %v1445
    %v1451 = vmul.f32 1.0, %v1450
    %v1452 = vrcp.pop %v1238
    %v1453 = vmul.f32 %v1238, %v1452
    %v1454 = vsub.f32 1.0, %v1453
    %v1455 = vmul.f32 %v1452, %v1454
    %v1456 = vadd.f32 %v1452, %v1455
    %vm1457 = vweird.f32 %v1238
    %vm1458 = vweird.f32 %v1452
    %vm1459 = vmor %vm1457, %vm1458
    %v1460 = vsel %vm1459, %v1452, %v1456
    %v1461 = vand.u32 2147483647, %v1238
    %vm1462 = vcmp.eq.f32.partialorder %v1461, 8.507059e+37
    %v1463 = vand.u32 %v1238, 2147483648
    %v1464 = vor.u32 1.1754944e-38, %v1463
    %v1465 = vsel %vm1462, %v1464, %v1460
    %v1466 = vmul.f32 1.0, %v1465
    %v1467 = vrcp.pop %v1241
    %v1468 = vmul.f32 %v1241, %v1467
    %v1469 = vsub.f32 1.0, %v1468
    %v1470 = vmul.f32 %v1467, %v1469
    %v1471 = vadd.f32 %v1467, %v1470
    %vm1472 = vweird.f32 %v1241
    %vm1473 = vweird.f32 %v1467
    %vm1474 = vmor %vm1472, %vm1473
    %v1475 = vsel %vm1474, %v1467, %v1471
    %v1476 = vand.u32 2147483647, %v1241
    %vm1477 = vcmp.eq.f32.partialorder %v1476, 8.507059e+37
    %v1478 = vand.u32 %v1241, 2147483648
    %v1479 = vor.u32 1.1754944e-38, %v1478
    %v1480 = vsel %vm1477, %v1479, %v1475
    %v1481 = vmul.f32 1.0, %v1480
    %v1482 = vrcp.pop %v1244
    %v1483 = vmul.f32 %v1244, %v1482
    %v1484 = vsub.f32 1.0, %v1483
    %v1485 = vmul.f32 %v1482, %v1484
    %v1486 = vadd.f32 %v1482, %v1485
    %vm1487 = vweird.f32 %v1244
    %vm1488 = vweird.f32 %v1482
    %vm1489 = vmor %vm1487, %vm1488
    %v1490 = vsel %vm1489, %v1482, %v1486
    %v1491 = vand.u32 2147483647, %v1244
    %vm1492 = vcmp.eq.f32.partialorder %v1491, 8.507059e+37
    %v1493 = vand.u32 %v1244, 2147483648
    %v1494 = vor.u32 1.1754944e-38, %v1493
    %v1495 = vsel %vm1492, %v1494, %v1490
    %v1496 = vmul.f32 1.0, %v1495
    %v1497 = vrcp.pop %v1247
    %v1498 = vmul.f32 %v1247, %v1497
    %v1499 = vsub.f32 1.0, %v1498
    %v1500 = vmul.f32 %v1497, %v1499
    %v1501 = vadd.f32 %v1497, %v1500
    %vm1502 = vweird.f32 %v1247
    %vm1503 = vweird.f32 %v1497
    %vm1504 = vmor %vm1502, %vm1503
    %v1505 = vsel %vm1504, %v1497, %v1501
    %v1506 = vand.u32 2147483647, %v1247
    %vm1507 = vcmp.eq.f32.partialorder %v1506, 8.507059e+37
    %v1508 = vand.u32 %v1247, 2147483648
    %v1509 = vor.u32 1.1754944e-38, %v1508
    %v1510 = vsel %vm1507, %v1509, %v1505
    %v1511 = vmul.f32 1.0, %v1510
    %v1512 = vrcp.pop %v1250
    %v1513 = vmul.f32 %v1250, %v1512
    %v1514 = vsub.f32 1.0, %v1513
    %v1515 = vmul.f32 %v1512, %v1514
    %v1516 = vadd.f32 %v1512, %v1515
    %vm1517 = vweird.f32 %v1250
    %vm1518 = vweird.f32 %v1512
    %vm1519 = vmor %vm1517, %vm1518
    %v1520 = vsel %vm1519, %v1512, %v1516
    %v1521 = vand.u32 2147483647, %v1250
    %vm1522 = vcmp.eq.f32.partialorder %v1521, 8.507059e+37
    %v1523 = vand.u32 %v1250, 2147483648
    %v1524 = vor.u32 1.1754944e-38, %v1523
    %v1525 = vsel %vm1522, %v1524, %v1520
    %v1526 = vmul.f32 1.0, %v1525
    %v1527 = vrcp.pop %v1253
    %v1528 = vmul.f32 %v1253, %v1527
    %v1529 = vsub.f32 1.0, %v1528
    %v1530 = vmul.f32 %v1527, %v1529
    %v1531 = vadd.f32 %v1527, %v1530
    %vm1532 = vweird.f32 %v1253
    %vm1533 = vweird.f32 %v1527
    %vm1534 = vmor %vm1532, %vm1533
    %v1535 = vsel %vm1534, %v1527, %v1531
    %v1536 = vand.u32 2147483647, %v1253
    %vm1537 = vcmp.eq.f32.partialorder %v1536, 8.507059e+37
    %v1538 = vand.u32 %v1253, 2147483648
    %v1539 = vor.u32 1.1754944e-38, %v1538
    %v1540 = vsel %vm1537, %v1539, %v1535
    %v1541 = vmul.f32 1.0, %v1540
    %v1542 = vrcp.pop %v1256
    %v1543 = vmul.f32 %v1256, %v1542
    %v1544 = vsub.f32 1.0, %v1543
    %v1545 = vmul.f32 %v1542, %v1544
    %v1546 = vadd.f32 %v1542, %v1545
    %vm1547 = vweird.f32 %v1256
    %vm1548 = vweird.f32 %v1542
    %vm1549 = vmor %vm1547, %vm1548
    %v1550 = vsel %vm1549, %v1542, %v1546
    %v1551 = vand.u32 2147483647, %v1256
    %vm1552 = vcmp.eq.f32.partialorder %v1551, 8.507059e+37
    %v1553 = vand.u32 %v1256, 2147483648
    %v1554 = vor.u32 1.1754944e-38, %v1553
    %v1555 = vsel %vm1552, %v1554, %v1550
    %v1556 = vmul.f32 1.0, %v1555
    %v1557 = vrcp.pop %v1259
    %v1558 = vmul.f32 %v1259, %v1557
    %v1559 = vsub.f32 1.0, %v1558
    %v1560 = vmul.f32 %v1557, %v1559
    %v1561 = vadd.f32 %v1557, %v1560
    %vm1562 = vweird.f32 %v1259
    %vm1563 = vweird.f32 %v1557
    %vm1564 = vmor %vm1562, %vm1563
    %v1565 = vsel %vm1564, %v1557, %v1561
    %v1566 = vand.u32 2147483647, %v1259
    %vm1567 = vcmp.eq.f32.partialorder %v1566, 8.507059e+37
    %v1568 = vand.u32 %v1259, 2147483648
    %v1569 = vor.u32 1.1754944e-38, %v1568
    %v1570 = vsel %vm1567, %v1569, %v1565
    %v1571 = vmul.f32 1.0, %v1570
    %v1572 = vrcp.pop %v1262
    %v1573 = vmul.f32 %v1262, %v1572
    %v1574 = vsub.f32 1.0, %v1573
    %v1575 = vmul.f32 %v1572, %v1574
    %v1576 = vadd.f32 %v1572, %v1575
    %vm1577 = vweird.f32 %v1262
    %vm1578 = vweird.f32 %v1572
    %vm1579 = vmor %vm1577, %vm1578
    %v1580 = vsel %vm1579, %v1572, %v1576
    %v1581 = vand.u32 2147483647, %v1262
    %vm1582 = vcmp.eq.f32.partialorder %v1581, 8.507059e+37
    %v1583 = vand.u32 %v1262, 2147483648
    %v1584 = vor.u32 1.1754944e-38, %v1583
    %v1585 = vsel %vm1582, %v1584, %v1580
    %v1586 = vmul.f32 1.0, %v1585
    %v1587 = vrcp.pop %v1265
    %v1588 = vmul.f32 %v1265, %v1587
    %v1589 = vsub.f32 1.0, %v1588
    %v1590 = vmul.f32 %v1587, %v1589
    %v1591 = vadd.f32 %v1587, %v1590
    %vm1592 = vweird.f32 %v1265
    %vm1593 = vweird.f32 %v1587
    %vm1594 = vmor %vm1592, %vm1593
    %v1595 = vsel %vm1594, %v1587, %v1591
    %v1596 = vand.u32 2147483647, %v1265
    %vm1597 = vcmp.eq.f32.partialorder %v1596, 8.507059e+37
    %v1598 = vand.u32 %v1265, 2147483648
    %v1599 = vor.u32 1.1754944e-38, %v1598
    %v1600 = vsel %vm1597, %v1599, %v1595
    %v1601 = vmul.f32 1.0, %v1600
    %v1602 = vrcp.pop %v1268
    %v1603 = vmul.f32 %v1268, %v1602
    %v1604 = vsub.f32 1.0, %v1603
    %v1605 = vmul.f32 %v1602, %v1604
    %v1606 = vadd.f32 %v1602, %v1605
    %vm1607 = vweird.f32 %v1268
    %vm1608 = vweird.f32 %v1602
    %vm1609 = vmor %vm1607, %vm1608
    %v1610 = vsel %vm1609, %v1602, %v1606
    %v1611 = vand.u32 2147483647, %v1268
    %vm1612 = vcmp.eq.f32.partialorder %v1611, 8.507059e+37
    %v1613 = vand.u32 %v1268, 2147483648
    %v1614 = vor.u32 1.1754944e-38, %v1613
    %v1615 = vsel %vm1612, %v1614, %v1610
    %v1616 = vmul.f32 1.0, %v1615
    %v1617 = vrcp.pop %v1271
    %v1618 = vmul.f32 %v1271, %v1617
    %v1619 = vsub.f32 1.0, %v1618
    %v1620 = vmul.f32 %v1617, %v1619
    %v1621 = vadd.f32 %v1617, %v1620
    %vm1622 = vweird.f32 %v1271
    %vm1623 = vweird.f32 %v1617
    %vm1624 = vmor %vm1622, %vm1623
    %v1625 = vsel %vm1624, %v1617, %v1621
    %v1626 = vand.u32 2147483647, %v1271
    %vm1627 = vcmp.eq.f32.partialorder %v1626, 8.507059e+37
    %v1628 = vand.u32 %v1271, 2147483648
    %v1629 = vor.u32 1.1754944e-38, %v1628
    %v1630 = vsel %vm1627, %v1629, %v1625
    %v1631 = vmul.f32 1.0, %v1630
    %v1632 = vrcp.pop %v1274
    %v1633 = vmul.f32 %v1274, %v1632
    %v1634 = vsub.f32 1.0, %v1633
    %v1635 = vmul.f32 %v1632, %v1634
    %v1636 = vadd.f32 %v1632, %v1635
    %vm1637 = vweird.f32 %v1274
    %vm1638 = vweird.f32 %v1632
    %vm1639 = vmor %vm1637, %vm1638
    %v1640 = vsel %vm1639, %v1632, %v1636
    %v1641 = vand.u32 2147483647, %v1274
    %vm1642 = vcmp.eq.f32.partialorder %v1641, 8.507059e+37
    %v1643 = vand.u32 %v1274, 2147483648
    %v1644 = vor.u32 1.1754944e-38, %v1643
    %v1645 = vsel %vm1642, %v1644, %v1640
    %v1646 = vmul.f32 1.0, %v1645
    %v1647 = vrcp.pop %v1277
    %v1648 = vmul.f32 %v1277, %v1647
    %v1649 = vsub.f32 1.0, %v1648
    %v1650 = vmul.f32 %v1647, %v1649
    %v1651 = vadd.f32 %v1647, %v1650
    %vm1652 = vweird.f32 %v1277
    %vm1653 = vweird.f32 %v1647
    %vm1654 = vmor %vm1652, %vm1653
    %v1655 = vsel %vm1654, %v1647, %v1651
    %v1656 = vand.u32 2147483647, %v1277
    %vm1657 = vcmp.eq.f32.partialorder %v1656, 8.507059e+37
    %v1658 = vand.u32 %v1277, 2147483648
    %v1659 = vor.u32 1.1754944e-38, %v1658
    %v1660 = vsel %vm1657, %v1659, %v1655
    %v1661 = vmul.f32 1.0, %v1660
    %v1662 = vrcp.pop %v1280
    %v1663 = vmul.f32 %v1280, %v1662
    %v1664 = vsub.f32 1.0, %v1663
    %v1665 = vmul.f32 %v1662, %v1664
    %v1666 = vadd.f32 %v1662, %v1665
    %vm1667 = vweird.f32 %v1280
    %vm1668 = vweird.f32 %v1662
    %vm1669 = vmor %vm1667, %vm1668
    %v1670 = vsel %vm1669, %v1662, %v1666
    %v1671 = vand.u32 2147483647, %v1280
    %vm1672 = vcmp.eq.f32.partialorder %v1671, 8.507059e+37
    %v1673 = vand.u32 %v1280, 2147483648
    %v1674 = vor.u32 1.1754944e-38, %v1673
    %v1675 = vsel %vm1672, %v1674, %v1670
    %v1676 = vmul.f32 1.0, %v1675
    %v1677 = vrcp.pop %v1283
    %v1678 = vmul.f32 %v1283, %v1677
    %v1679 = vsub.f32 1.0, %v1678
    %v1680 = vmul.f32 %v1677, %v1679
    %v1681 = vadd.f32 %v1677, %v1680
    %vm1682 = vweird.f32 %v1283
    %vm1683 = vweird.f32 %v1677
    %vm1684 = vmor %vm1682, %vm1683
    %v1685 = vsel %vm1684, %v1677, %v1681
    %v1686 = vand.u32 2147483647, %v1283
    %vm1687 = vcmp.eq.f32.partialorder %v1686, 8.507059e+37
    %v1688 = vand.u32 %v1283, 2147483648
    %v1689 = vor.u32 1.1754944e-38, %v1688
    %v1690 = vsel %vm1687, %v1689, %v1685
    %v1691 = vmul.f32 1.0, %v1690
    %v1692 = vrcp.pop %v1286
    %v1693 = vmul.f32 %v1286, %v1692
    %v1694 = vsub.f32 1.0, %v1693
    %v1695 = vmul.f32 %v1692, %v1694
    %v1696 = vadd.f32 %v1692, %v1695
    %vm1697 = vweird.f32 %v1286
    %vm1698 = vweird.f32 %v1692
    %vm1699 = vmor %vm1697, %vm1698
    %v1700 = vsel %vm1699, %v1692, %v1696
    %v1701 = vand.u32 2147483647, %v1286
    %vm1702 = vcmp.eq.f32.partialorder %v1701, 8.507059e+37
    %v1703 = vand.u32 %v1286, 2147483648
    %v1704 = vor.u32 1.1754944e-38, %v1703
    %v1705 = vsel %vm1702, %v1704, %v1700
    %v1706 = vmul.f32 1.0, %v1705
    %v1707 = vrcp.pop %v1289
    %v1708 = vmul.f32 %v1289, %v1707
    %v1709 = vsub.f32 1.0, %v1708
    %v1710 = vmul.f32 %v1707, %v1709
    %v1711 = vadd.f32 %v1707, %v1710
    %vm1712 = vweird.f32 %v1289
    %vm1713 = vweird.f32 %v1707
    %vm1714 = vmor %vm1712, %vm1713
    %v1715 = vsel %vm1714, %v1707, %v1711
    %v1716 = vand.u32 2147483647, %v1289
    %vm1717 = vcmp.eq.f32.partialorder %v1716, 8.507059e+37
    %v1718 = vand.u32 %v1289, 2147483648
    %v1719 = vor.u32 1.1754944e-38, %v1718
    %v1720 = vsel %vm1717, %v1719, %v1715
    %v1721 = vmul.f32 1.0, %v1720
    %v1722 = vrcp.pop %v1292
    %v1723 = vmul.f32 %v1292, %v1722
    %v1724 = vsub.f32 1.0, %v1723
    %v1725 = vmul.f32 %v1722, %v1724
    %v1726 = vadd.f32 %v1722, %v1725
    %vm1727 = vweird.f32 %v1292
    %vm1728 = vweird.f32 %v1722
    %vm1729 = vmor %vm1727, %vm1728
    %v1730 = vsel %vm1729, %v1722, %v1726
    %v1731 = vand.u32 2147483647, %v1292
    %vm1732 = vcmp.eq.f32.partialorder %v1731, 8.507059e+37
    %v1733 = vand.u32 %v1292, 2147483648
    %v1734 = vor.u32 1.1754944e-38, %v1733
    %v1735 = vsel %vm1732, %v1734, %v1730
    %v1736 = vmul.f32 1.0, %v1735
    %v1737 = vrcp.pop %v1295
    %v1738 = vmul.f32 %v1295, %v1737
    %v1739 = vsub.f32 1.0, %v1738
    %v1740 = vmul.f32 %v1737, %v1739
    %v1741 = vadd.f32 %v1737, %v1740
    %vm1742 = vweird.f32 %v1295
    %vm1743 = vweird.f32 %v1737
    %vm1744 = vmor %vm1742, %vm1743
    %v1745 = vsel %vm1744, %v1737, %v1741
    %v1746 = vand.u32 2147483647, %v1295
    %vm1747 = vcmp.eq.f32.partialorder %v1746, 8.507059e+37
    %v1748 = vand.u32 %v1295, 2147483648
    %v1749 = vor.u32 1.1754944e-38, %v1748
    %v1750 = vsel %vm1747, %v1749, %v1745
    %v1751 = vmul.f32 1.0, %v1750
    %v1752 = vrcp.pop %v1298
    %v1753 = vmul.f32 %v1298, %v1752
    %v1754 = vsub.f32 1.0, %v1753
    %v1755 = vmul.f32 %v1752, %v1754
    %v1756 = vadd.f32 %v1752, %v1755
    %vm1757 = vweird.f32 %v1298
    %vm1758 = vweird.f32 %v1752
    %vm1759 = vmor %vm1757, %vm1758
    %v1760 = vsel %vm1759, %v1752, %v1756
    %v1761 = vand.u32 2147483647, %v1298
    %vm1762 = vcmp.eq.f32.partialorder %v1761, 8.507059e+37
    %v1763 = vand.u32 %v1298, 2147483648
    %v1764 = vor.u32 1.1754944e-38, %v1763
    %v1765 = vsel %vm1762, %v1764, %v1760
    %v1766 = vmul.f32 1.0, %v1765
    %v1767 = vrcp.pop %v1301
    %v1768 = vmul.f32 %v1301, %v1767
    %v1769 = vsub.f32 1.0, %v1768
    %v1770 = vmul.f32 %v1767, %v1769
    %v1771 = vadd.f32 %v1767, %v1770
    %vm1772 = vweird.f32 %v1301
    %vm1773 = vweird.f32 %v1767
    %vm1774 = vmor %vm1772, %vm1773
    %v1775 = vsel %vm1774, %v1767, %v1771
    %v1776 = vand.u32 2147483647, %v1301
    %vm1777 = vcmp.eq.f32.partialorder %v1776, 8.507059e+37
    %v1778 = vand.u32 %v1301, 2147483648
    %v1779 = vor.u32 1.1754944e-38, %v1778
    %v1780 = vsel %vm1777, %v1779, %v1775
    %v1781 = vmul.f32 1.0, %v1780
    %v1783 = vsel %vm1013, %v1143, 0
    %v1786 = vsel %vm1013, %v1145, 0
    %1788 = vmatpush.msra.mxu0 0.0
    %1789 = vmatpush.msra.mxu0 0.0
    %1790 = vmatpush.msra.mxu0 0.0
    %1791 = vmatpush.msra.mxu0 0.0
    %1792 = vmatpush.msra.mxu0 0.0
    %1793 = vmatpush.msra.mxu0 0.0
    %1794 = vmatpush.msra.mxu0 0.0
    %1795 = vmatpush.msra.mxu0 0.0
    %1796 = vmatpush.msra.mxu0 0.0
    %1797 = vmatpush.msra.mxu0 0.0
    %1798 = vmatpush.msra.mxu0 0.0
    %1799 = vmatpush.msra.mxu0 0.0
    %1800 = vmatpush.msra.mxu0 0.0
    %1801 = vmatpush.msra.mxu0 0.0
    %1802 = vmatpush.msra.mxu0 %v304
    %1803 = vmatpush.msra.mxu0 %v301
    %1804 = vmatmul.f32.gmra.mxu0 %v1783
    %v1805 = vpop.f32.mrf.mxu0
    %v1806 = vadd.f32 0.0, %v1805
    %1807 = vmatmul.f32.gmra.mxu0 %v1786
    %v1808 = vpop.f32.mrf.mxu0
    %v1809 = vadd.f32 0.0, %v1808
    %1810 = vdwg.mxu0
    %v1812 = vsel %vm1013, %v1147, 0
    %v1815 = vsel %vm1013, %v1149, 0
    %1817 = vmatpush.msra.mxu0 0.0
    %1818 = vmatpush.msra.mxu0 0.0
    %1819 = vmatpush.msra.mxu0 0.0
    %1820 = vmatpush.msra.mxu0 0.0
    %1821 = vmatpush.msra.mxu0 0.0
    %1822 = vmatpush.msra.mxu0 0.0
    %1823 = vmatpush.msra.mxu0 0.0
    %1824 = vmatpush.msra.mxu0 0.0
    %1825 = vmatpush.msra.mxu0 0.0
    %1826 = vmatpush.msra.mxu0 0.0
    %1827 = vmatpush.msra.mxu0 0.0
    %1828 = vmatpush.msra.mxu0 0.0
    %1829 = vmatpush.msra.mxu0 0.0
    %1830 = vmatpush.msra.mxu0 0.0
    %1831 = vmatpush.msra.mxu0 %v310
    %1832 = vmatpush.msra.mxu0 %v307
    %1833 = vmatmul.f32.gmra.mxu0 %v1812
    %v1834 = vpop.f32.mrf.mxu0
    %v1835 = vadd.f32 0.0, %v1834
    %1836 = vmatmul.f32.gmra.mxu0 %v1815
    %v1837 = vpop.f32.mrf.mxu0
    %v1838 = vadd.f32 0.0, %v1837
    %1839 = vdwg.mxu0
    %v1841 = vsel %vm1013, %v1151, 0
    %v1844 = vsel %vm1013, %v1153, 0
    %1846 = vmatpush.msra.mxu0 0.0
    %1847 = vmatpush.msra.mxu0 0.0
    %1848 = vmatpush.msra.mxu0 0.0
    %1849 = vmatpush.msra.mxu0 0.0
    %1850 = vmatpush.msra.mxu0 0.0
    %1851 = vmatpush.msra.mxu0 0.0
    %1852 = vmatpush.msra.mxu0 0.0
    %1853 = vmatpush.msra.mxu0 0.0
    %1854 = vmatpush.msra.mxu0 0.0
    %1855 = vmatpush.msra.mxu0 0.0
    %1856 = vmatpush.msra.mxu0 0.0
    %1857 = vmatpush.msra.mxu0 0.0
    %1858 = vmatpush.msra.mxu0 0.0
    %1859 = vmatpush.msra.mxu0 0.0
    %1860 = vmatpush.msra.mxu0 %v316
    %1861 = vmatpush.msra.mxu0 %v313
    %1862 = vmatmul.f32.gmra.mxu0 %v1841
    %v1863 = vpop.f32.mrf.mxu0
    %v1864 = vadd.f32 0.0, %v1863
    %1865 = vmatmul.f32.gmra.mxu0 %v1844
    %v1866 = vpop.f32.mrf.mxu0
    %v1867 = vadd.f32 0.0, %v1866
    %1868 = vdwg.mxu0
    %v1870 = vsel %vm1013, %v1155, 0
    %v1873 = vsel %vm1013, %v1157, 0
    %1875 = vmatpush.msra.mxu0 0.0
    %1876 = vmatpush.msra.mxu0 0.0
    %1877 = vmatpush.msra.mxu0 0.0
    %1878 = vmatpush.msra.mxu0 0.0
    %1879 = vmatpush.msra.mxu0 0.0
    %1880 = vmatpush.msra.mxu0 0.0
    %1881 = vmatpush.msra.mxu0 0.0
    %1882 = vmatpush.msra.mxu0 0.0
    %1883 = vmatpush.msra.mxu0 0.0
    %1884 = vmatpush.msra.mxu0 0.0
    %1885 = vmatpush.msra.mxu0 0.0
    %1886 = vmatpush.msra.mxu0 0.0
    %1887 = vmatpush.msra.mxu0 0.0
    %1888 = vmatpush.msra.mxu0 0.0
    %1889 = vmatpush.msra.mxu0 %v322
    %1890 = vmatpush.msra.mxu0 %v319
    %1891 = vmatmul.f32.gmra.mxu0 %v1870
    %v1892 = vpop.f32.mrf.mxu0
    %v1893 = vadd.f32 0.0, %v1892
    %1894 = vmatmul.f32.gmra.mxu0 %v1873
    %v1895 = vpop.f32.mrf.mxu0
    %v1896 = vadd.f32 0.0, %v1895
    %1897 = vdwg.mxu0
    %v1899 = vsel %vm1013, %v1159, 0
    %v1902 = vsel %vm1013, %v1161, 0
    %1904 = vmatpush.msra.mxu0 0.0
    %1905 = vmatpush.msra.mxu0 0.0
    %1906 = vmatpush.msra.mxu0 0.0
    %1907 = vmatpush.msra.mxu0 0.0
    %1908 = vmatpush.msra.mxu0 0.0
    %1909 = vmatpush.msra.mxu0 0.0
    %1910 = vmatpush.msra.mxu0 0.0
    %1911 = vmatpush.msra.mxu0 0.0
    %1912 = vmatpush.msra.mxu0 0.0
    %1913 = vmatpush.msra.mxu0 0.0
    %1914 = vmatpush.msra.mxu0 0.0
    %1915 = vmatpush.msra.mxu0 0.0
    %1916 = vmatpush.msra.mxu0 0.0
    %1917 = vmatpush.msra.mxu0 0.0
    %1918 = vmatpush.msra.mxu0 %v447
    %1919 = vmatpush.msra.mxu0 %v445
    %1920 = vmatmul.f32.gmra.mxu0 %v1899
    %v1921 = vpop.f32.mrf.mxu0
    %v1922 = vadd.f32 0.0, %v1921
    %1923 = vmatmul.f32.gmra.mxu0 %v1902
    %v1924 = vpop.f32.mrf.mxu0
    %v1925 = vadd.f32 0.0, %v1924
    %1926 = vdwg.mxu0
    %v1928 = vsel %vm1013, %v1163, 0
    %v1931 = vsel %vm1013, %v1165, 0
    %1933 = vmatpush.msra.mxu0 0.0
    %1934 = vmatpush.msra.mxu0 0.0
    %1935 = vmatpush.msra.mxu0 0.0
    %1936 = vmatpush.msra.mxu0 0.0
    %1937 = vmatpush.msra.mxu0 0.0
    %1938 = vmatpush.msra.mxu0 0.0
    %1939 = vmatpush.msra.mxu0 0.0
    %1940 = vmatpush.msra.mxu0 0.0
    %1941 = vmatpush.msra.mxu0 0.0
    %1942 = vmatpush.msra.mxu0 0.0
    %1943 = vmatpush.msra.mxu0 0.0
    %1944 = vmatpush.msra.mxu0 0.0
    %1945 = vmatpush.msra.mxu0 0.0
    %1946 = vmatpush.msra.mxu0 0.0
    %1947 = vmatpush.msra.mxu0 %v451
    %1948 = vmatpush.msra.mxu0 %v449
    %1949 = vmatmul.f32.gmra.mxu0 %v1928
    %v1950 = vpop.f32.mrf.mxu0
    %v1951 = vadd.f32 0.0, %v1950
    %1952 = vmatmul.f32.gmra.mxu0 %v1931
    %v1953 = vpop.f32.mrf.mxu0
    %v1954 = vadd.f32 0.0, %v1953
    %1955 = vdwg.mxu0
    %v1957 = vsel %vm1013, %v1167, 0
    %v1960 = vsel %vm1013, %v1169, 0
    %1962 = vmatpush.msra.mxu0 0.0
    %1963 = vmatpush.msra.mxu0 0.0
    %1964 = vmatpush.msra.mxu0 0.0
    %1965 = vmatpush.msra.mxu0 0.0
    %1966 = vmatpush.msra.mxu0 0.0
    %1967 = vmatpush.msra.mxu0 0.0
    %1968 = vmatpush.msra.mxu0 0.0
    %1969 = vmatpush.msra.mxu0 0.0
    %1970 = vmatpush.msra.mxu0 0.0
    %1971 = vmatpush.msra.mxu0 0.0
    %1972 = vmatpush.msra.mxu0 0.0
    %1973 = vmatpush.msra.mxu0 0.0
    %1974 = vmatpush.msra.mxu0 0.0
    %1975 = vmatpush.msra.mxu0 0.0
    %1976 = vmatpush.msra.mxu0 %v455
    %1977 = vmatpush.msra.mxu0 %v453
    %1978 = vmatmul.f32.gmra.mxu0 %v1957
    %v1979 = vpop.f32.mrf.mxu0
    %v1980 = vadd.f32 0.0, %v1979
    %1981 = vmatmul.f32.gmra.mxu0 %v1960
    %v1982 = vpop.f32.mrf.mxu0
    %v1983 = vadd.f32 0.0, %v1982
    %1984 = vdwg.mxu0
    %v1986 = vsel %vm1013, %v1171, 0
    %v1989 = vsel %vm1013, %v1173, 0
    %1991 = vmatpush.msra.mxu0 0.0
    %1992 = vmatpush.msra.mxu0 0.0
    %1993 = vmatpush.msra.mxu0 0.0
    %1994 = vmatpush.msra.mxu0 0.0
    %1995 = vmatpush.msra.mxu0 0.0
    %1996 = vmatpush.msra.mxu0 0.0
    %1997 = vmatpush.msra.mxu0 0.0
    %1998 = vmatpush.msra.mxu0 0.0
    %1999 = vmatpush.msra.mxu0 0.0
    %2000 = vmatpush.msra.mxu0 0.0
    %2001 = vmatpush.msra.mxu0 0.0
    %2002 = vmatpush.msra.mxu0 0.0
    %2003 = vmatpush.msra.mxu0 0.0
    %2004 = vmatpush.msra.mxu0 0.0
    %2005 = vmatpush.msra.mxu0 %v459
    %2006 = vmatpush.msra.mxu0 %v457
    %2007 = vmatmul.f32.gmra.mxu0 %v1986
    %v2008 = vpop.f32.mrf.mxu0
    %v2009 = vadd.f32 0.0, %v2008
    %2010 = vmatmul.f32.gmra.mxu0 %v1989
    %v2011 = vpop.f32.mrf.mxu0
    %v2012 = vadd.f32 0.0, %v2011
    %2013 = vdwg.mxu0
    %v2015 = vsel %vm1013, %v1175, 0
    %v2018 = vsel %vm1013, %v1177, 0
    %2020 = vmatpush.msra.mxu0 0.0
    %2021 = vmatpush.msra.mxu0 0.0
    %2022 = vmatpush.msra.mxu0 0.0
    %2023 = vmatpush.msra.mxu0 0.0
    %2024 = vmatpush.msra.mxu0 0.0
    %2025 = vmatpush.msra.mxu0 0.0
    %2026 = vmatpush.msra.mxu0 0.0
    %2027 = vmatpush.msra.mxu0 0.0
    %2028 = vmatpush.msra.mxu0 0.0
    %2029 = vmatpush.msra.mxu0 0.0
    %2030 = vmatpush.msra.mxu0 0.0
    %2031 = vmatpush.msra.mxu0 0.0
    %2032 = vmatpush.msra.mxu0 0.0
    %2033 = vmatpush.msra.mxu0 0.0
    %2034 = vmatpush.msra.mxu0 %v471
    %2035 = vmatpush.msra.mxu0 %v469
    %2036 = vmatmul.f32.gmra.mxu0 %v2015
    %v2037 = vpop.f32.mrf.mxu0
    %v2038 = vadd.f32 0.0, %v2037
    %2039 = vmatmul.f32.gmra.mxu0 %v2018
    %v2040 = vpop.f32.mrf.mxu0
    %v2041 = vadd.f32 0.0, %v2040
    %2042 = vdwg.mxu0
    %v2044 = vsel %vm1013, %v1179, 0
    %v2047 = vsel %vm1013, %v1181, 0
    %2049 = vmatpush.msra.mxu0 0.0
    %2050 = vmatpush.msra.mxu0 0.0
    %2051 = vmatpush.msra.mxu0 0.0
    %2052 = vmatpush.msra.mxu0 0.0
    %2053 = vmatpush.msra.mxu0 0.0
    %2054 = vmatpush.msra.mxu0 0.0
    %2055 = vmatpush.msra.mxu0 0.0
    %2056 = vmatpush.msra.mxu0 0.0
    %2057 = vmatpush.msra.mxu0 0.0
    %2058 = vmatpush.msra.mxu0 0.0
    %2059 = vmatpush.msra.mxu0 0.0
    %2060 = vmatpush.msra.mxu0 0.0
    %2061 = vmatpush.msra.mxu0 0.0
    %2062 = vmatpush.msra.mxu0 0.0
    %2063 = vmatpush.msra.mxu0 %v475
    %2064 = vmatpush.msra.mxu0 %v473
    %2065 = vmatmul.f32.gmra.mxu0 %v2044
    %v2066 = vpop.f32.mrf.mxu0
    %v2067 = vadd.f32 0.0, %v2066
    %2068 = vmatmul.f32.gmra.mxu0 %v2047
    %v2069 = vpop.f32.mrf.mxu0
    %v2070 = vadd.f32 0.0, %v2069
    %2071 = vdwg.mxu0
    %v2073 = vsel %vm1013, %v1183, 0
    %v2076 = vsel %vm1013, %v1185, 0
    %2078 = vmatpush.msra.mxu0 0.0
    %2079 = vmatpush.msra.mxu0 0.0
    %2080 = vmatpush.msra.mxu0 0.0
    %2081 = vmatpush.msra.mxu0 0.0
    %2082 = vmatpush.msra.mxu0 0.0
    %2083 = vmatpush.msra.mxu0 0.0
    %2084 = vmatpush.msra.mxu0 0.0
    %2085 = vmatpush.msra.mxu0 0.0
    %2086 = vmatpush.msra.mxu0 0.0
    %2087 = vmatpush.msra.mxu0 0.0
    %2088 = vmatpush.msra.mxu0 0.0
    %2089 = vmatpush.msra.mxu0 0.0
    %2090 = vmatpush.msra.mxu0 0.0
    %2091 = vmatpush.msra.mxu0 0.0
    %2092 = vmatpush.msra.mxu0 %v479
    %2093 = vmatpush.msra.mxu0 %v477
    %2094 = vmatmul.f32.gmra.mxu0 %v2073
    %v2095 = vpop.f32.mrf.mxu0
    %v2096 = vadd.f32 0.0, %v2095
    %2097 = vmatmul.f32.gmra.mxu0 %v2076
    %v2098 = vpop.f32.mrf.mxu0
    %v2099 = vadd.f32 0.0, %v2098
    %2100 = vdwg.mxu0
    %v2102 = vsel %vm1013, %v1187, 0
    %v2105 = vsel %vm1013, %v1189, 0
    %2107 = vmatpush.msra.mxu0 0.0
    %2108 = vmatpush.msra.mxu0 0.0
    %2109 = vmatpush.msra.mxu0 0.0
    %2110 = vmatpush.msra.mxu0 0.0
    %2111 = vmatpush.msra.mxu0 0.0
    %2112 = vmatpush.msra.mxu0 0.0
    %2113 = vmatpush.msra.mxu0 0.0
    %2114 = vmatpush.msra.mxu0 0.0
    %2115 = vmatpush.msra.mxu0 0.0
    %2116 = vmatpush.msra.mxu0 0.0
    %2117 = vmatpush.msra.mxu0 0.0
    %2118 = vmatpush.msra.mxu0 0.0
    %2119 = vmatpush.msra.mxu0 0.0
    %2120 = vmatpush.msra.mxu0 0.0
    %2121 = vmatpush.msra.mxu0 %v483
    %2122 = vmatpush.msra.mxu0 %v481
    %2123 = vmatmul.f32.gmra.mxu0 %v2102
    %v2124 = vpop.f32.mrf.mxu0
    %v2125 = vadd.f32 0.0, %v2124
    %2126 = vmatmul.f32.gmra.mxu0 %v2105
    %v2127 = vpop.f32.mrf.mxu0
    %v2128 = vadd.f32 0.0, %v2127
    %2129 = vdwg.mxu0
    %v2131 = vsel %vm1013, %v1191, 0
    %v2134 = vsel %vm1013, %v1193, 0
    %2136 = vmatpush.msra.mxu0 0.0
    %2137 = vmatpush.msra.mxu0 0.0
    %2138 = vmatpush.msra.mxu0 0.0
    %2139 = vmatpush.msra.mxu0 0.0
    %2140 = vmatpush.msra.mxu0 0.0
    %2141 = vmatpush.msra.mxu0 0.0
    %2142 = vmatpush.msra.mxu0 0.0
    %2143 = vmatpush.msra.mxu0 0.0
    %2144 = vmatpush.msra.mxu0 0.0
    %2145 = vmatpush.msra.mxu0 0.0
    %2146 = vmatpush.msra.mxu0 0.0
    %2147 = vmatpush.msra.mxu0 0.0
    %2148 = vmatpush.msra.mxu0 0.0
    %2149 = vmatpush.msra.mxu0 0.0
    %2150 = vmatpush.msra.mxu0 %v495
    %2151 = vmatpush.msra.mxu0 %v493
    %2152 = vmatmul.f32.gmra.mxu0 %v2131
    %v2153 = vpop.f32.mrf.mxu0
    %v2154 = vadd.f32 0.0, %v2153
    %2155 = vmatmul.f32.gmra.mxu0 %v2134
    %v2156 = vpop.f32.mrf.mxu0
    %v2157 = vadd.f32 0.0, %v2156
    %2158 = vdwg.mxu0
    %v2160 = vsel %vm1013, %v1195, 0
    %v2163 = vsel %vm1013, %v1197, 0
    %2165 = vmatpush.msra.mxu0 0.0
    %2166 = vmatpush.msra.mxu0 0.0
    %2167 = vmatpush.msra.mxu0 0.0
    %2168 = vmatpush.msra.mxu0 0.0
    %2169 = vmatpush.msra.mxu0 0.0
    %2170 = vmatpush.msra.mxu0 0.0
    %2171 = vmatpush.msra.mxu0 0.0
    %2172 = vmatpush.msra.mxu0 0.0
    %2173 = vmatpush.msra.mxu0 0.0
    %2174 = vmatpush.msra.mxu0 0.0
    %2175 = vmatpush.msra.mxu0 0.0
    %2176 = vmatpush.msra.mxu0 0.0
    %2177 = vmatpush.msra.mxu0 0.0
    %2178 = vmatpush.msra.mxu0 0.0
    %2179 = vmatpush.msra.mxu0 %v499
    %2180 = vmatpush.msra.mxu0 %v497
    %2181 = vmatmul.f32.gmra.mxu0 %v2160
    %v2182 = vpop.f32.mrf.mxu0
    %v2183 = vadd.f32 0.0, %v2182
    %2184 = vmatmul.f32.gmra.mxu0 %v2163
    %v2185 = vpop.f32.mrf.mxu0
    %v2186 = vadd.f32 0.0, %v2185
    %2187 = vdwg.mxu0
    %v2189 = vsel %vm1013, %v1199, 0
    %v2192 = vsel %vm1013, %v1201, 0
    %2194 = vmatpush.msra.mxu0 0.0
    %2195 = vmatpush.msra.mxu0 0.0
    %2196 = vmatpush.msra.mxu0 0.0
    %2197 = vmatpush.msra.mxu0 0.0
    %2198 = vmatpush.msra.mxu0 0.0
    %2199 = vmatpush.msra.mxu0 0.0
    %2200 = vmatpush.msra.mxu0 0.0
    %2201 = vmatpush.msra.mxu0 0.0
    %2202 = vmatpush.msra.mxu0 0.0
    %2203 = vmatpush.msra.mxu0 0.0
    %2204 = vmatpush.msra.mxu0 0.0
    %2205 = vmatpush.msra.mxu0 0.0
    %2206 = vmatpush.msra.mxu0 0.0
    %2207 = vmatpush.msra.mxu0 0.0
    %2208 = vmatpush.msra.mxu0 %v503
    %2209 = vmatpush.msra.mxu0 %v501
    %2210 = vmatmul.f32.gmra.mxu0 %v2189
    %v2211 = vpop.f32.mrf.mxu0
    %v2212 = vadd.f32 0.0, %v2211
    %2213 = vmatmul.f32.gmra.mxu0 %v2192
    %v2214 = vpop.f32.mrf.mxu0
    %v2215 = vadd.f32 0.0, %v2214
    %2216 = vdwg.mxu0
    %v2218 = vsel %vm1013, %v1203, 0
    %v2221 = vsel %vm1013, %v1205, 0
    %2223 = vmatpush.msra.mxu0 0.0
    %2224 = vmatpush.msra.mxu0 0.0
    %2225 = vmatpush.msra.mxu0 0.0
    %2226 = vmatpush.msra.mxu0 0.0
    %2227 = vmatpush.msra.mxu0 0.0
    %2228 = vmatpush.msra.mxu0 0.0
    %2229 = vmatpush.msra.mxu0 0.0
    %2230 = vmatpush.msra.mxu0 0.0
    %2231 = vmatpush.msra.mxu0 0.0
    %2232 = vmatpush.msra.mxu0 0.0
    %2233 = vmatpush.msra.mxu0 0.0
    %2234 = vmatpush.msra.mxu0 0.0
    %2235 = vmatpush.msra.mxu0 0.0
    %2236 = vmatpush.msra.mxu0 0.0
    %2237 = vmatpush.msra.mxu0 %v507
    %2238 = vmatpush.msra.mxu0 %v505
    %2239 = vmatmul.f32.gmra.mxu0 %v2218
    %v2240 = vpop.f32.mrf.mxu0
    %v2241 = vadd.f32 0.0, %v2240
    %2242 = vmatmul.f32.gmra.mxu0 %v2221
    %v2243 = vpop.f32.mrf.mxu0
    %v2244 = vadd.f32 0.0, %v2243
    %2245 = vdwg.mxu0
    %v2246 = vmul.f32 %v1806, %v1316
    %v2247 = vmul.f32 %v1809, %v1331
    %v2248 = vmul.f32 %v1835, %v1346
    %v2249 = vmul.f32 %v1838, %v1361
    %v2250 = vmul.f32 %v1864, %v1376
    %v2251 = vmul.f32 %v1867, %v1391
    %v2252 = vmul.f32 %v1893, %v1406
    %v2253 = vmul.f32 %v1896, %v1421
    %v2254 = vmul.f32 %v1922, %v1436
    %v2255 = vmul.f32 %v1925, %v1451
    %v2256 = vmul.f32 %v1951, %v1466
    %v2257 = vmul.f32 %v1954, %v1481
    %v2258 = vmul.f32 %v1980, %v1496
    %v2259 = vmul.f32 %v1983, %v1511
    %v2260 = vmul.f32 %v2009, %v1526
    %v2261 = vmul.f32 %v2012, %v1541
    %v2262 = vmul.f32 %v2038, %v1556
    %v2263 = vmul.f32 %v2041, %v1571
    %v2264 = vmul.f32 %v2067, %v1586
    %v2265 = vmul.f32 %v2070, %v1601
    %v2266 = vmul.f32 %v2096, %v1616
    %v2267 = vmul.f32 %v2099, %v1631
    %v2268 = vmul.f32 %v2125, %v1646
    %v2269 = vmul.f32 %v2128, %v1661
    %v2270 = vmul.f32 %v2154, %v1676
    %v2271 = vmul.f32 %v2157, %v1691
    %v2272 = vmul.f32 %v2183, %v1706
    %v2273 = vmul.f32 %v2186, %v1721
    %v2274 = vmul.f32 %v2212, %v1736
    %v2275 = vmul.f32 %v2215, %v1751
    %v2276 = vmul.f32 %v2241, %v1766
    %v2277 = vmul.f32 %v2244, %v1781
    %2286 = vrot.lane.b32.xlu0 %v2254, 32
    %v2287 = vpop.permute.xlu0 %2286
    %2288 = vrot.lane.b32.xlu0 %v2255, 32
    %v2289 = vpop.permute.xlu0 %2288
    %2290 = vrot.lane.b32.xlu0 %v2256, 32
    %v2291 = vpop.permute.xlu0 %2290
    %2292 = vrot.lane.b32.xlu0 %v2257, 32
    %v2293 = vpop.permute.xlu0 %2292
    %2294 = vrot.lane.b32.xlu0 %v2258, 32
    %v2295 = vpop.permute.xlu0 %2294
    %2296 = vrot.lane.b32.xlu0 %v2259, 32
    %v2297 = vpop.permute.xlu0 %2296
    %2298 = vrot.lane.b32.xlu0 %v2260, 32
    %v2299 = vpop.permute.xlu0 %2298
    %2300 = vrot.lane.b32.xlu0 %v2261, 32
    %v2301 = vpop.permute.xlu0 %2300
    %2318 = vrot.lane.b32.xlu0 %v2262, 64
    %v2319 = vpop.permute.xlu0 %2318
    %2320 = vrot.lane.b32.xlu0 %v2263, 64
    %v2321 = vpop.permute.xlu0 %2320
    %2322 = vrot.lane.b32.xlu0 %v2264, 64
    %v2323 = vpop.permute.xlu0 %2322
    %2324 = vrot.lane.b32.xlu0 %v2265, 64
    %v2325 = vpop.permute.xlu0 %2324
    %2326 = vrot.lane.b32.xlu0 %v2266, 64
    %v2327 = vpop.permute.xlu0 %2326
    %2328 = vrot.lane.b32.xlu0 %v2267, 64
    %v2329 = vpop.permute.xlu0 %2328
    %2330 = vrot.lane.b32.xlu0 %v2268, 64
    %v2331 = vpop.permute.xlu0 %2330
    %2332 = vrot.lane.b32.xlu0 %v2269, 64
    %v2333 = vpop.permute.xlu0 %2332
    %2350 = vrot.lane.b32.xlu0 %v2270, 96
    %v2351 = vpop.permute.xlu0 %2350
    %2352 = vrot.lane.b32.xlu0 %v2271, 96
    %v2353 = vpop.permute.xlu0 %2352
    %2354 = vrot.lane.b32.xlu0 %v2272, 96
    %v2355 = vpop.permute.xlu0 %2354
    %2356 = vrot.lane.b32.xlu0 %v2273, 96
    %v2357 = vpop.permute.xlu0 %2356
    %2358 = vrot.lane.b32.xlu0 %v2274, 96
    %v2359 = vpop.permute.xlu0 %2358
    %2360 = vrot.lane.b32.xlu0 %v2275, 96
    %v2361 = vpop.permute.xlu0 %2360
    %2362 = vrot.lane.b32.xlu0 %v2276, 96
    %v2363 = vpop.permute.xlu0 %2362
    %2364 = vrot.lane.b32.xlu0 %v2277, 96
    %v2365 = vpop.permute.xlu0 %2364
    %v2374 = vsel %vm516, %v2246, %v2287
    %v2375 = vsel %vm516, %v2247, %v2289
    %v2376 = vsel %vm516, %v2248, %v2291
    %v2377 = vsel %vm516, %v2249, %v2293
    %v2378 = vsel %vm516, %v2250, %v2295
    %v2379 = vsel %vm516, %v2251, %v2297
    %v2380 = vsel %vm516, %v2252, %v2299
    %v2381 = vsel %vm516, %v2253, %v2301
    %vm2382 = vcmask 523264
    %v2383 = vsel %vm2382, %v2374, %v2319
    %v2384 = vsel %vm2382, %v2375, %v2321
    %v2385 = vsel %vm2382, %v2376, %v2323
    %v2386 = vsel %vm2382, %v2377, %v2325
    %v2387 = vsel %vm2382, %v2378, %v2327
    %v2388 = vsel %vm2382, %v2379, %v2329
    %v2389 = vsel %vm2382, %v2380, %v2331
    %v2390 = vsel %vm2382, %v2381, %v2333
    %vm2391 = vcmask 785408
    %v2392 = vsel %vm2391, %v2383, %v2351
    %v2393 = vsel %vm2391, %v2384, %v2353
    %v2394 = vsel %vm2391, %v2385, %v2355
    %v2395 = vsel %vm2391, %v2386, %v2357
    %v2396 = vsel %vm2391, %v2387, %v2359
    %v2397 = vsel %vm2391, %v2388, %v2361
    %v2398 = vsel %vm2391, %v2389, %v2363
    %v2399 = vsel %vm2391, %v2390, %v2365
    %v2400 = vld [vmem:[#allocation8] sm:$0xff]
    %v2401 = vld [vmem:[#allocation8 + $0x8] sm:$0xff]
    %v2402 = vld [vmem:[#allocation8 + $0x10] sm:$0xff]
    %v2403 = vld [vmem:[#allocation8 + $0x18] sm:$0xff]
    %v2404 = vld [vmem:[#allocation8 + $0x20] sm:$0xff]
    %v2405 = vld [vmem:[#allocation8 + $0x28] sm:$0xff]
    %v2406 = vld [vmem:[#allocation8 + $0x30] sm:$0xff]
    %v2407 = vld [vmem:[#allocation8 + $0x38] sm:$0xff]
    %v2408 = vld [vmem:[#allocation8 + $0x40] sm:$0xff]
    %v2409 = vld [vmem:[#allocation8 + $0x48] sm:$0xff]
    %v2410 = vld [vmem:[#allocation8 + $0x50] sm:$0xff]
    %v2411 = vld [vmem:[#allocation8 + $0x58] sm:$0xff]
    %v2412 = vld [vmem:[#allocation8 + $0x60] sm:$0xff]
    %v2413 = vld [vmem:[#allocation8 + $0x68] sm:$0xff]
    %v2414 = vld [vmem:[#allocation8 + $0x70] sm:$0xff]
    %v2415 = vld [vmem:[#allocation8 + $0x78] sm:$0xff]
    %v2416 = vld [vmem:[%s4] sm:$0x1]
    %v2418 = vperm.slane %v2416, 0
    %2420 = vmatpush.msra.mxu0 %v2415
    %2421 = vmatpush.msra.mxu0 %v2414
    %2422 = vmatpush.msra.mxu0 %v2413
    %2423 = vmatpush.msra.mxu0 %v2412
    %2424 = vmatpush.msra.mxu0 %v2411
    %2425 = vmatpush.msra.mxu0 %v2410
    %2426 = vmatpush.msra.mxu0 %v2409
    %2427 = vmatpush.msra.mxu0 %v2408
    %2428 = vmatpush.msra.mxu0 %v2407
    %2429 = vmatpush.msra.mxu0 %v2406
    %2430 = vmatpush.msra.mxu0 %v2405
    %2431 = vmatpush.msra.mxu0 %v2404
    %2432 = vmatpush.msra.mxu0 %v2403
    %2433 = vmatpush.msra.mxu0 %v2402
    %2434 = vmatpush.msra.mxu0 %v2401
    %2435 = vmatpush.msra.mxu0 %v2400
    %2436 = vmatmul.f32.gmra.mxu0 %v2392
    %v2437 = vpop.f32.mrf.mxu0
    %v2438 = vadd.f32 %v2418, %v2437
    %2439 = vmatmul.f32.gmra.mxu0 %v2393
    %v2440 = vpop.f32.mrf.mxu0
    %v2441 = vadd.f32 %v2418, %v2440
    %2442 = vmatmul.f32.gmra.mxu0 %v2394
    %v2443 = vpop.f32.mrf.mxu0
    %v2444 = vadd.f32 %v2418, %v2443
    %2445 = vmatmul.f32.gmra.mxu0 %v2395
    %v2446 = vpop.f32.mrf.mxu0
    %v2447 = vadd.f32 %v2418, %v2446
    %2448 = vmatmul.f32.gmra.mxu0 %v2396
    %v2449 = vpop.f32.mrf.mxu0
    %v2450 = vadd.f32 %v2418, %v2449
    %2451 = vmatmul.f32.gmra.mxu0 %v2397
    %v2452 = vpop.f32.mrf.mxu0
    %v2453 = vadd.f32 %v2418, %v2452
    %2454 = vmatmul.f32.gmra.mxu0 %v2398
    %v2455 = vpop.f32.mrf.mxu0
    %v2456 = vadd.f32 %v2418, %v2455
    %2457 = vmatmul.f32.gmra.mxu0 %v2399
    %v2458 = vpop.f32.mrf.mxu0
    %v2459 = vadd.f32 %v2418, %v2458
    %2460 = vdwg.mxu0
    %v2461 = vadd.f32 %v137, %v2438
    %v2462 = vadd.f32 %v138, %v2441
    %v2463 = vadd.f32 %v139, %v2444
    %v2464 = vadd.f32 %v140, %v2447
    %v2465 = vadd.f32 %v141, %v2450
    %v2466 = vadd.f32 %v142, %v2453
    %v2467 = vadd.f32 %v143, %v2456
    %v2468 = vadd.f32 %v144, %v2459
    %2469 = vadd.xlane.f32.xlu0 %v2461
    %v2470 = vpop.xlane.xlu0 %2469
    %2471 = vadd.xlane.f32.xlu0 %v2462
    %v2472 = vpop.xlane.xlu0 %2471
    %2473 = vadd.xlane.f32.xlu0 %v2463
    %v2474 = vpop.xlane.xlu0 %2473
    %2475 = vadd.xlane.f32.xlu0 %v2464
    %v2476 = vpop.xlane.xlu0 %2475
    %2477 = vadd.xlane.f32.xlu0 %v2465
    %v2478 = vpop.xlane.xlu0 %2477
    %2479 = vadd.xlane.f32.xlu0 %v2466
    %v2480 = vpop.xlane.xlu0 %2479
    %2481 = vadd.xlane.f32.xlu0 %v2467
    %v2482 = vpop.xlane.xlu0 %2481
    %2483 = vadd.xlane.f32.xlu0 %v2468
    %v2484 = vpop.xlane.xlu0 %2483
    %v2485 = vrcp.pop 128.0
    %v2486 = vmul.f32 128.0, %v2485
    %v2487 = vsub.f32 1.0, %v2486
    %v2488 = vmul.f32 %v2485, %v2487
    %v2489 = vadd.f32 %v2485, %v2488
    %vm2490 = vweird.f32 %v2485
    %v2491 = vsel %vm2490, %v2485, %v2489
    %v2492 = vmul.f32 %v2470, %v2491
    %v2493 = vmul.f32 %v2472, %v2491
    %v2494 = vmul.f32 %v2474, %v2491
    %v2495 = vmul.f32 %v2476, %v2491
    %v2496 = vmul.f32 %v2478, %v2491
    %v2497 = vmul.f32 %v2480, %v2491
    %v2498 = vmul.f32 %v2482, %v2491
    %v2499 = vmul.f32 %v2484, %v2491
    %v2500 = vsub.f32 %v2461, %v2492
    %v2501 = vsub.f32 %v2462, %v2493
    %v2502 = vsub.f32 %v2463, %v2494
    %v2503 = vsub.f32 %v2464, %v2495
    %v2504 = vsub.f32 %v2465, %v2496
    %v2505 = vsub.f32 %v2466, %v2497
    %v2506 = vsub.f32 %v2467, %v2498
    %v2507 = vsub.f32 %v2468, %v2499
    %v2508 = vmul.f32 %v2500, %v2500
    %v2509 = vmul.f32 %v2501, %v2501
    %v2510 = vmul.f32 %v2502, %v2502
    %v2511 = vmul.f32 %v2503, %v2503
    %v2512 = vmul.f32 %v2504, %v2504
    %v2513 = vmul.f32 %v2505, %v2505
    %v2514 = vmul.f32 %v2506, %v2506
    %v2515 = vmul.f32 %v2507, %v2507
    %2516 = vadd.xlane.f32.xlu0 %v2508
    %v2517 = vpop.xlane.xlu0 %2516
    %2518 = vadd.xlane.f32.xlu0 %v2509
    %v2519 = vpop.xlane.xlu0 %2518
    %2520 = vadd.xlane.f32.xlu0 %v2510
    %v2521 = vpop.xlane.xlu0 %2520
    %2522 = vadd.xlane.f32.xlu0 %v2511
    %v2523 = vpop.xlane.xlu0 %2522
    %2524 = vadd.xlane.f32.xlu0 %v2512
    %v2525 = vpop.xlane.xlu0 %2524
    %2526 = vadd.xlane.f32.xlu0 %v2513
    %v2527 = vpop.xlane.xlu0 %2526
    %2528 = vadd.xlane.f32.xlu0 %v2514
    %v2529 = vpop.xlane.xlu0 %2528
    %2530 = vadd.xlane.f32.xlu0 %v2515
    %v2531 = vpop.xlane.xlu0 %2530
    %v2532 = vmul.f32 %v2517, %v2491
    %v2533 = vmul.f32 %v2519, %v2491
    %v2534 = vmul.f32 %v2521, %v2491
    %v2535 = vmul.f32 %v2523, %v2491
    %v2536 = vmul.f32 %v2525, %v2491
    %v2537 = vmul.f32 %v2527, %v2491
    %v2538 = vmul.f32 %v2529, %v2491
    %v2539 = vmul.f32 %v2531, %v2491
    %v2540 = vadd.f32 %v2532, 1e-05
    %v2541 = vadd.f32 %v2533, 1e-05
    %v2542 = vadd.f32 %v2534, 1e-05
    %v2543 = vadd.f32 %v2535, 1e-05
    %v2544 = vadd.f32 %v2536, 1e-05
    %v2545 = vadd.f32 %v2537, 1e-05
    %v2546 = vadd.f32 %v2538, 1e-05
    %v2547 = vadd.f32 %v2539, 1e-05
    %v2548 = vrsqrt.pop %v2540
    %v2549 = vmul.f32 %v2548, %v2540
    %v2550 = vmul.f32 %v2549, %v2548
    %v2551 = vmul.f32 0.5, %v2550
    %v2552 = vsub.f32 1.5, %v2551
    %v2553 = vmul.f32 %v2548, %v2552
    %vm2554 = vweird.f32 %v2540
    %vm2555 = vweird.f32 %v2548
    %vm2556 = vmor %vm2554, %vm2555
    %v2557 = vsel %vm2556, %v2548, %v2553
    %v2558 = vrsqrt.pop %v2541
    %v2559 = vmul.f32 %v2558, %v2541
    %v2560 = vmul.f32 %v2559, %v2558
    %v2561 = vmul.f32 0.5, %v2560
    %v2562 = vsub.f32 1.5, %v2561
    %v2563 = vmul.f32 %v2558, %v2562
    %vm2564 = vweird.f32 %v2541
    %vm2565 = vweird.f32 %v2558
    %vm2566 = vmor %vm2564, %vm2565
    %v2567 = vsel %vm2566, %v2558, %v2563
    %v2568 = vrsqrt.pop %v2542
    %v2569 = vmul.f32 %v2568, %v2542
    %v2570 = vmul.f32 %v2569, %v2568
    %v2571 = vmul.f32 0.5, %v2570
    %v2572 = vsub.f32 1.5, %v2571
    %v2573 = vmul.f32 %v2568, %v2572
    %vm2574 = vweird.f32 %v2542
    %vm2575 = vweird.f32 %v2568
    %vm2576 = vmor %vm2574, %vm2575
    %v2577 = vsel %vm2576, %v2568, %v2573
    %v2578 = vrsqrt.pop %v2543
    %v2579 = vmul.f32 %v2578, %v2543
    %v2580 = vmul.f32 %v2579, %v2578
    %v2581 = vmul.f32 0.5, %v2580
    %v2582 = vsub.f32 1.5, %v2581
    %v2583 = vmul.f32 %v2578, %v2582
    %vm2584 = vweird.f32 %v2543
    %vm2585 = vweird.f32 %v2578
    %vm2586 = vmor %vm2584, %vm2585
    %v2587 = vsel %vm2586, %v2578, %v2583
    %v2588 = vrsqrt.pop %v2544
    %v2589 = vmul.f32 %v2588, %v2544
    %v2590 = vmul.f32 %v2589, %v2588
    %v2591 = vmul.f32 0.5, %v2590
    %v2592 = vsub.f32 1.5, %v2591
    %v2593 = vmul.f32 %v2588, %v2592
    %vm2594 = vweird.f32 %v2544
    %vm2595 = vweird.f32 %v2588
    %vm2596 = vmor %vm2594, %vm2595
    %v2597 = vsel %vm2596, %v2588, %v2593
    %v2598 = vrsqrt.pop %v2545
    %v2599 = vmul.f32 %v2598, %v2545
    %v2600 = vmul.f32 %v2599, %v2598
    %v2601 = vmul.f32 0.5, %v2600
    %v2602 = vsub.f32 1.5, %v2601
    %v2603 = vmul.f32 %v2598, %v2602
    %vm2604 = vweird.f32 %v2545
    %vm2605 = vweird.f32 %v2598
    %vm2606 = vmor %vm2604, %vm2605
    %v2607 = vsel %vm2606, %v2598, %v2603
    %v2608 = vrsqrt.pop %v2546
    %v2609 = vmul.f32 %v2608, %v2546
    %v2610 = vmul.f32 %v2609, %v2608
    %v2611 = vmul.f32 0.5, %v2610
    %v2612 = vsub.f32 1.5, %v2611
    %v2613 = vmul.f32 %v2608, %v2612
    %vm2614 = vweird.f32 %v2546
    %vm2615 = vweird.f32 %v2608
    %vm2616 = vmor %vm2614, %vm2615
    %v2617 = vsel %vm2616, %v2608, %v2613
    %v2618 = vrsqrt.pop %v2547
    %v2619 = vmul.f32 %v2618, %v2547
    %v2620 = vmul.f32 %v2619, %v2618
    %v2621 = vmul.f32 0.5, %v2620
    %v2622 = vsub.f32 1.5, %v2621
    %v2623 = vmul.f32 %v2618, %v2622
    %vm2624 = vweird.f32 %v2547
    %vm2625 = vweird.f32 %v2618
    %vm2626 = vmor %vm2624, %vm2625
    %v2627 = vsel %vm2626, %v2618, %v2623
    %v2628 = vmul.f32 %v2500, %v2557
    %v2629 = vmul.f32 %v2501, %v2567
    %v2630 = vmul.f32 %v2502, %v2577
    %v2631 = vmul.f32 %v2503, %v2587
    %v2632 = vmul.f32 %v2504, %v2597
    %v2633 = vmul.f32 %v2505, %v2607
    %v2634 = vmul.f32 %v2506, %v2617
    %v2635 = vmul.f32 %v2507, %v2627
    %v2636 = vld [vmem:[%s5] sm:$0x1]
    %v2638 = vperm.slane %v2636, 0
    %v2640 = vmul.f32 %v2628, %v2638
    %v2641 = vmul.f32 %v2629, %v2638
    %v2642 = vmul.f32 %v2630, %v2638
    %v2643 = vmul.f32 %v2631, %v2638
    %v2644 = vmul.f32 %v2632, %v2638
    %v2645 = vmul.f32 %v2633, %v2638
    %v2646 = vmul.f32 %v2634, %v2638
    %v2647 = vmul.f32 %v2635, %v2638
    %v2648 = vld [vmem:[%s6] sm:$0x1]
    %v2650 = vperm.slane %v2648, 0
    %v2652 = vadd.f32 %v2640, %v2650
    %v2653 = vadd.f32 %v2641, %v2650
    %v2654 = vadd.f32 %v2642, %v2650
    %v2655 = vadd.f32 %v2643, %v2650
    %v2656 = vadd.f32 %v2644, %v2650
    %v2657 = vadd.f32 %v2645, %v2650
    %v2658 = vadd.f32 %v2646, %v2650
    %v2659 = vadd.f32 %v2647, %v2650
    %v2660 = vld [vmem:[#allocation10] sm:$0xff]
    %v2661 = vld [vmem:[#allocation10 + $0x8] sm:$0xff]
    %v2662 = vld [vmem:[#allocation10 + $0x10] sm:$0xff]
    %v2663 = vld [vmem:[#allocation10 + $0x18] sm:$0xff]
    %v2664 = vld [vmem:[#allocation10 + $0x20] sm:$0xff]
    %v2665 = vld [vmem:[#allocation10 + $0x28] sm:$0xff]
    %v2666 = vld [vmem:[#allocation10 + $0x30] sm:$0xff]
    %v2667 = vld [vmem:[#allocation10 + $0x38] sm:$0xff]
    %v2668 = vld [vmem:[#allocation10 + $0x40] sm:$0xff]
    %v2669 = vld [vmem:[#allocation10 + $0x48] sm:$0xff]
    %v2670 = vld [vmem:[#allocation10 + $0x50] sm:$0xff]
    %v2671 = vld [vmem:[#allocation10 + $0x58] sm:$0xff]
    %v2672 = vld [vmem:[#allocation10 + $0x60] sm:$0xff]
    %v2673 = vld [vmem:[#allocation10 + $0x68] sm:$0xff]
    %v2674 = vld [vmem:[#allocation10 + $0x70] sm:$0xff]
    %v2675 = vld [vmem:[#allocation10 + $0x78] sm:$0xff]
    %v2676 = vld [vmem:[#allocation10 + $0x80] sm:$0xff]
    %v2677 = vld [vmem:[#allocation10 + $0x88] sm:$0xff]
    %v2678 = vld [vmem:[#allocation10 + $0x90] sm:$0xff]
    %v2679 = vld [vmem:[#allocation10 + $0x98] sm:$0xff]
    %v2680 = vld [vmem:[#allocation10 + $0xa0] sm:$0xff]
    %v2681 = vld [vmem:[#allocation10 + $0xa8] sm:$0xff]
    %v2682 = vld [vmem:[#allocation10 + $0xb0] sm:$0xff]
    %v2683 = vld [vmem:[#allocation10 + $0xb8] sm:$0xff]
    %v2684 = vld [vmem:[#allocation10 + $0xc0] sm:$0xff]
    %v2685 = vld [vmem:[#allocation10 + $0xc8] sm:$0xff]
    %v2686 = vld [vmem:[#allocation10 + $0xd0] sm:$0xff]
    %v2687 = vld [vmem:[#allocation10 + $0xd8] sm:$0xff]
    %v2688 = vld [vmem:[#allocation10 + $0xe0] sm:$0xff]
    %v2689 = vld [vmem:[#allocation10 + $0xe8] sm:$0xff]
    %v2690 = vld [vmem:[#allocation10 + $0xf0] sm:$0xff]
    %v2691 = vld [vmem:[#allocation10 + $0xf8] sm:$0xff]
    %v2692 = vld [vmem:[%s8] sm:$0x3]
    %v2694 = vperm.slane %v2692, 0
    %v2695 = vperm.slane %v2692, 1
    %2698 = vmatpush.msra.mxu0 %v2690
    %2699 = vmatpush.msra.mxu0 %v2688
    %2700 = vmatpush.msra.mxu0 %v2686
    %2701 = vmatpush.msra.mxu0 %v2684
    %2702 = vmatpush.msra.mxu0 %v2682
    %2703 = vmatpush.msra.mxu0 %v2680
    %2704 = vmatpush.msra.mxu0 %v2678
    %2705 = vmatpush.msra.mxu0 %v2676
    %2706 = vmatpush.msra.mxu0 %v2674
    %2707 = vmatpush.msra.mxu0 %v2672
    %2708 = vmatpush.msra.mxu0 %v2670
    %2709 = vmatpush.msra.mxu0 %v2668
    %2710 = vmatpush.msra.mxu0 %v2666
    %2711 = vmatpush.msra.mxu0 %v2664
    %2712 = vmatpush.msra.mxu0 %v2662
    %2713 = vmatpush.msra.mxu0 %v2660
    %2714 = vmatmul.f32.gmra.mxu0 %v2652
    %v2715 = vpop.f32.mrf.mxu0
    %v2716 = vadd.f32 %v2694, %v2715
    %2717 = vmatmul.f32.gmra.mxu0 %v2653
    %v2718 = vpop.f32.mrf.mxu0
    %v2719 = vadd.f32 %v2694, %v2718
    %2720 = vmatmul.f32.gmra.mxu0 %v2654
    %v2721 = vpop.f32.mrf.mxu0
    %v2722 = vadd.f32 %v2694, %v2721
    %2723 = vmatmul.f32.gmra.mxu0 %v2655
    %v2724 = vpop.f32.mrf.mxu0
    %v2725 = vadd.f32 %v2694, %v2724
    %2726 = vmatmul.f32.gmra.mxu0 %v2656
    %v2727 = vpop.f32.mrf.mxu0
    %v2728 = vadd.f32 %v2694, %v2727
    %2729 = vmatmul.f32.gmra.mxu0 %v2657
    %v2730 = vpop.f32.mrf.mxu0
    %v2731 = vadd.f32 %v2694, %v2730
    %2732 = vmatmul.f32.gmra.mxu0 %v2658
    %v2733 = vpop.f32.mrf.mxu0
    %v2734 = vadd.f32 %v2694, %v2733
    %2735 = vmatmul.f32.gmra.mxu0 %v2659
    %v2736 = vpop.f32.mrf.mxu0
    %v2737 = vadd.f32 %v2694, %v2736
    %2738 = vdwg.mxu0
    %2739 = vmatpush.msra.mxu0 %v2691
    %2740 = vmatpush.msra.mxu0 %v2689
    %2741 = vmatpush.msra.mxu0 %v2687
    %2742 = vmatpush.msra.mxu0 %v2685
    %2743 = vmatpush.msra.mxu0 %v2683
    %2744 = vmatpush.msra.mxu0 %v2681
    %2745 = vmatpush.msra.mxu0 %v2679
    %2746 = vmatpush.msra.mxu0 %v2677
    %2747 = vmatpush.msra.mxu0 %v2675
    %2748 = vmatpush.msra.mxu0 %v2673
    %2749 = vmatpush.msra.mxu0 %v2671
    %2750 = vmatpush.msra.mxu0 %v2669
    %2751 = vmatpush.msra.mxu0 %v2667
    %2752 = vmatpush.msra.mxu0 %v2665
    %2753 = vmatpush.msra.mxu0 %v2663
    %2754 = vmatpush.msra.mxu0 %v2661
    %2755 = vmatmul.f32.gmra.mxu0 %v2652
    %v2756 = vpop.f32.mrf.mxu0
    %v2757 = vadd.f32 %v2695, %v2756
    %2758 = vmatmul.f32.gmra.mxu0 %v2653
    %v2759 = vpop.f32.mrf.mxu0
    %v2760 = vadd.f32 %v2695, %v2759
    %2761 = vmatmul.f32.gmra.mxu0 %v2654
    %v2762 = vpop.f32.mrf.mxu0
    %v2763 = vadd.f32 %v2695, %v2762
    %2764 = vmatmul.f32.gmra.mxu0 %v2655
    %v2765 = vpop.f32.mrf.mxu0
    %v2766 = vadd.f32 %v2695, %v2765
    %2767 = vmatmul.f32.gmra.mxu0 %v2656
    %v2768 = vpop.f32.mrf.mxu0
    %v2769 = vadd.f32 %v2695, %v2768
    %2770 = vmatmul.f32.gmra.mxu0 %v2657
    %v2771 = vpop.f32.mrf.mxu0
    %v2772 = vadd.f32 %v2695, %v2771
    %2773 = vmatmul.f32.gmra.mxu0 %v2658
    %v2774 = vpop.f32.mrf.mxu0
    %v2775 = vadd.f32 %v2695, %v2774
    %2776 = vmatmul.f32.gmra.mxu0 %v2659
    %v2777 = vpop.f32.mrf.mxu0
    %v2778 = vadd.f32 %v2695, %v2777
    %2779 = vdwg.mxu0
    %v2780 = vmax.f32 %v2716, 0.0
    %v2781 = vmax.f32 %v2757, 0.0
    %v2782 = vmax.f32 %v2719, 0.0
    %v2783 = vmax.f32 %v2760, 0.0
    %v2784 = vmax.f32 %v2722, 0.0
    %v2785 = vmax.f32 %v2763, 0.0
    %v2786 = vmax.f32 %v2725, 0.0
    %v2787 = vmax.f32 %v2766, 0.0
    %v2788 = vmax.f32 %v2728, 0.0
    %v2789 = vmax.f32 %v2769, 0.0
    %v2790 = vmax.f32 %v2731, 0.0
    %v2791 = vmax.f32 %v2772, 0.0
    %v2792 = vmax.f32 %v2734, 0.0
    %v2793 = vmax.f32 %v2775, 0.0
    %v2794 = vmax.f32 %v2737, 0.0
    %v2795 = vmax.f32 %v2778, 0.0
    %v2796 = vld [vmem:[#allocation11] sm:$0xff]
    %v2797 = vld [vmem:[#allocation11 + $0x8] sm:$0xff]
    %v2798 = vld [vmem:[#allocation11 + $0x10] sm:$0xff]
    %v2799 = vld [vmem:[#allocation11 + $0x18] sm:$0xff]
    %v2800 = vld [vmem:[#allocation11 + $0x20] sm:$0xff]
    %v2801 = vld [vmem:[#allocation11 + $0x28] sm:$0xff]
    %v2802 = vld [vmem:[#allocation11 + $0x30] sm:$0xff]
    %v2803 = vld [vmem:[#allocation11 + $0x38] sm:$0xff]
    %v2804 = vld [vmem:[#allocation11 + $0x40] sm:$0xff]
    %v2805 = vld [vmem:[#allocation11 + $0x48] sm:$0xff]
    %v2806 = vld [vmem:[#allocation11 + $0x50] sm:$0xff]
    %v2807 = vld [vmem:[#allocation11 + $0x58] sm:$0xff]
    %v2808 = vld [vmem:[#allocation11 + $0x60] sm:$0xff]
    %v2809 = vld [vmem:[#allocation11 + $0x68] sm:$0xff]
    %v2810 = vld [vmem:[#allocation11 + $0x70] sm:$0xff]
    %v2811 = vld [vmem:[#allocation11 + $0x78] sm:$0xff]
    %v2812 = vld [vmem:[#allocation11 + $0x80] sm:$0xff]
    %v2813 = vld [vmem:[#allocation11 + $0x88] sm:$0xff]
    %v2814 = vld [vmem:[#allocation11 + $0x90] sm:$0xff]
    %v2815 = vld [vmem:[#allocation11 + $0x98] sm:$0xff]
    %v2816 = vld [vmem:[#allocation11 + $0xa0] sm:$0xff]
    %v2817 = vld [vmem:[#allocation11 + $0xa8] sm:$0xff]
    %v2818 = vld [vmem:[#allocation11 + $0xb0] sm:$0xff]
    %v2819 = vld [vmem:[#allocation11 + $0xb8] sm:$0xff]
    %v2820 = vld [vmem:[#allocation11 + $0xc0] sm:$0xff]
    %v2821 = vld [vmem:[#allocation11 + $0xc8] sm:$0xff]
    %v2822 = vld [vmem:[#allocation11 + $0xd0] sm:$0xff]
    %v2823 = vld [vmem:[#allocation11 + $0xd8] sm:$0xff]
    %v2824 = vld [vmem:[#allocation11 + $0xe0] sm:$0xff]
    %v2825 = vld [vmem:[#allocation11 + $0xe8] sm:$0xff]
    %v2826 = vld [vmem:[#allocation11 + $0xf0] sm:$0xff]
    %v2827 = vld [vmem:[#allocation11 + $0xf8] sm:$0xff]
    %v2828 = vld [vmem:[%s10] sm:$0x1]
    %v2830 = vperm.slane %v2828, 0
    %2832 = vmatpush.msra.mxu0 %v2811
    %2833 = vmatpush.msra.mxu0 %v2810
    %2834 = vmatpush.msra.mxu0 %v2809
    %2835 = vmatpush.msra.mxu0 %v2808
    %2836 = vmatpush.msra.mxu0 %v2807
    %2837 = vmatpush.msra.mxu0 %v2806
    %2838 = vmatpush.msra.mxu0 %v2805
    %2839 = vmatpush.msra.mxu0 %v2804
    %2840 = vmatpush.msra.mxu0 %v2803
    %2841 = vmatpush.msra.mxu0 %v2802
    %2842 = vmatpush.msra.mxu0 %v2801
    %2843 = vmatpush.msra.mxu0 %v2800
    %2844 = vmatpush.msra.mxu0 %v2799
    %2845 = vmatpush.msra.mxu0 %v2798
    %2846 = vmatpush.msra.mxu0 %v2797
    %2847 = vmatpush.msra.mxu0 %v2796
    %2848 = vmatmul.f32.gmra.mxu0 %v2780
    %v2849 = vpop.f32.mrf.mxu0
    %v2850 = vadd.f32 %v2830, %v2849
    %2851 = vmatmul.f32.gmra.mxu0 %v2782
    %v2852 = vpop.f32.mrf.mxu0
    %v2853 = vadd.f32 %v2830, %v2852
    %2854 = vmatmul.f32.gmra.mxu0 %v2784
    %v2855 = vpop.f32.mrf.mxu0
    %v2856 = vadd.f32 %v2830, %v2855
    %2857 = vmatmul.f32.gmra.mxu0 %v2786
    %v2858 = vpop.f32.mrf.mxu0
    %v2859 = vadd.f32 %v2830, %v2858
    %2860 = vmatmul.f32.gmra.mxu0 %v2788
    %v2861 = vpop.f32.mrf.mxu0
    %v2862 = vadd.f32 %v2830, %v2861
    %2863 = vmatmul.f32.gmra.mxu0 %v2790
    %v2864 = vpop.f32.mrf.mxu0
    %v2865 = vadd.f32 %v2830, %v2864
    %2866 = vmatmul.f32.gmra.mxu0 %v2792
    %v2867 = vpop.f32.mrf.mxu0
    %v2868 = vadd.f32 %v2830, %v2867
    %2869 = vmatmul.f32.gmra.mxu0 %v2794
    %v2870 = vpop.f32.mrf.mxu0
    %v2871 = vadd.f32 %v2830, %v2870
    %2872 = vdwg.mxu0
    %2873 = vmatpush.msra.mxu0 %v2827
    %2874 = vmatpush.msra.mxu0 %v2826
    %2875 = vmatpush.msra.mxu0 %v2825
    %2876 = vmatpush.msra.mxu0 %v2824
    %2877 = vmatpush.msra.mxu0 %v2823
    %2878 = vmatpush.msra.mxu0 %v2822
    %2879 = vmatpush.msra.mxu0 %v2821
    %2880 = vmatpush.msra.mxu0 %v2820
    %2881 = vmatpush.msra.mxu0 %v2819
    %2882 = vmatpush.msra.mxu0 %v2818
    %2883 = vmatpush.msra.mxu0 %v2817
    %2884 = vmatpush.msra.mxu0 %v2816
    %2885 = vmatpush.msra.mxu0 %v2815
    %2886 = vmatpush.msra.mxu0 %v2814
    %2887 = vmatpush.msra.mxu0 %v2813
    %2888 = vmatpush.msra.mxu0 %v2812
    %2889 = vmatmul.f32.gmra.mxu0 %v2781
    %v2890 = vpop.f32.mrf.mxu0
    %v2891 = vadd.f32 %v2850, %v2890
    %2892 = vmatmul.f32.gmra.mxu0 %v2783
    %v2893 = vpop.f32.mrf.mxu0
    %v2894 = vadd.f32 %v2853, %v2893
    %2895 = vmatmul.f32.gmra.mxu0 %v2785
    %v2896 = vpop.f32.mrf.mxu0
    %v2897 = vadd.f32 %v2856, %v2896
    %2898 = vmatmul.f32.gmra.mxu0 %v2787
    %v2899 = vpop.f32.mrf.mxu0
    %v2900 = vadd.f32 %v2859, %v2899
    %2901 = vmatmul.f32.gmra.mxu0 %v2789
    %v2902 = vpop.f32.mrf.mxu0
    %v2903 = vadd.f32 %v2862, %v2902
    %2904 = vmatmul.f32.gmra.mxu0 %v2791
    %v2905 = vpop.f32.mrf.mxu0
    %v2906 = vadd.f32 %v2865, %v2905
    %2907 = vmatmul.f32.gmra.mxu0 %v2793
    %v2908 = vpop.f32.mrf.mxu0
    %v2909 = vadd.f32 %v2868, %v2908
    %2910 = vmatmul.f32.gmra.mxu0 %v2795
    %v2911 = vpop.f32.mrf.mxu0
    %v2912 = vadd.f32 %v2871, %v2911
    %2913 = vdwg.mxu0
    %v2914 = vadd.f32 %v2652, %v2891
    %v2915 = vadd.f32 %v2653, %v2894
    %v2916 = vadd.f32 %v2654, %v2897
    %v2917 = vadd.f32 %v2655, %v2900
    %v2918 = vadd.f32 %v2656, %v2903
    %v2919 = vadd.f32 %v2657, %v2906
    %v2920 = vadd.f32 %v2658, %v2909
    %v2921 = vadd.f32 %v2659, %v2912
    %2922 = vadd.xlane.f32.xlu0 %v2914
    %v2923 = vpop.xlane.xlu0 %2922
    %2924 = vadd.xlane.f32.xlu0 %v2915
    %v2925 = vpop.xlane.xlu0 %2924
    %2926 = vadd.xlane.f32.xlu0 %v2916
    %v2927 = vpop.xlane.xlu0 %2926
    %2928 = vadd.xlane.f32.xlu0 %v2917
    %v2929 = vpop.xlane.xlu0 %2928
    %2930 = vadd.xlane.f32.xlu0 %v2918
    %v2931 = vpop.xlane.xlu0 %2930
    %2932 = vadd.xlane.f32.xlu0 %v2919
    %v2933 = vpop.xlane.xlu0 %2932
    %2934 = vadd.xlane.f32.xlu0 %v2920
    %v2935 = vpop.xlane.xlu0 %2934
    %2936 = vadd.xlane.f32.xlu0 %v2921
    %v2937 = vpop.xlane.xlu0 %2936
    %v2938 = vmul.f32 %v2923, %v2491
    %v2939 = vmul.f32 %v2925, %v2491
    %v2940 = vmul.f32 %v2927, %v2491
    %v2941 = vmul.f32 %v2929, %v2491
    %v2942 = vmul.f32 %v2931, %v2491
    %v2943 = vmul.f32 %v2933, %v2491
    %v2944 = vmul.f32 %v2935, %v2491
    %v2945 = vmul.f32 %v2937, %v2491
    %v2946 = vsub.f32 %v2914, %v2938
    %v2947 = vsub.f32 %v2915, %v2939
    %v2948 = vsub.f32 %v2916, %v2940
    %v2949 = vsub.f32 %v2917, %v2941
    %v2950 = vsub.f32 %v2918, %v2942
    %v2951 = vsub.f32 %v2919, %v2943
    %v2952 = vsub.f32 %v2920, %v2944
    %v2953 = vsub.f32 %v2921, %v2945
    %v2954 = vmul.f32 %v2946, %v2946
    %v2955 = vmul.f32 %v2947, %v2947
    %v2956 = vmul.f32 %v2948, %v2948
    %v2957 = vmul.f32 %v2949, %v2949
    %v2958 = vmul.f32 %v2950, %v2950
    %v2959 = vmul.f32 %v2951, %v2951
    %v2960 = vmul.f32 %v2952, %v2952
    %v2961 = vmul.f32 %v2953, %v2953
    %2962 = vadd.xlane.f32.xlu0 %v2954
    %v2963 = vpop.xlane.xlu0 %2962
    %2964 = vadd.xlane.f32.xlu0 %v2955
    %v2965 = vpop.xlane.xlu0 %2964
    %2966 = vadd.xlane.f32.xlu0 %v2956
    %v2967 = vpop.xlane.xlu0 %2966
    %2968 = vadd.xlane.f32.xlu0 %v2957
    %v2969 = vpop.xlane.xlu0 %2968
    %2970 = vadd.xlane.f32.xlu0 %v2958
    %v2971 = vpop.xlane.xlu0 %2970
    %2972 = vadd.xlane.f32.xlu0 %v2959
    %v2973 = vpop.xlane.xlu0 %2972
    %2974 = vadd.xlane.f32.xlu0 %v2960
    %v2975 = vpop.xlane.xlu0 %2974
    %2976 = vadd.xlane.f32.xlu0 %v2961
    %v2977 = vpop.xlane.xlu0 %2976
    %v2978 = vmul.f32 %v2963, %v2491
    %v2979 = vmul.f32 %v2965, %v2491
    %v2980 = vmul.f32 %v2967, %v2491
    %v2981 = vmul.f32 %v2969, %v2491
    %v2982 = vmul.f32 %v2971, %v2491
    %v2983 = vmul.f32 %v2973, %v2491
    %v2984 = vmul.f32 %v2975, %v2491
    %v2985 = vmul.f32 %v2977, %v2491
    %v2986 = vadd.f32 %v2978, 1e-05
    %v2987 = vadd.f32 %v2979, 1e-05
    %v2988 = vadd.f32 %v2980, 1e-05
    %v2989 = vadd.f32 %v2981, 1e-05
    %v2990 = vadd.f32 %v2982, 1e-05
    %v2991 = vadd.f32 %v2983, 1e-05
    %v2992 = vadd.f32 %v2984, 1e-05
    %v2993 = vadd.f32 %v2985, 1e-05
    %v2994 = vrsqrt.pop %v2986
    %v2995 = vmul.f32 %v2994, %v2986
    %v2996 = vmul.f32 %v2995, %v2994
    %v2997 = vmul.f32 0.5, %v2996
    %v2998 = vsub.f32 1.5, %v2997
    %v2999 = vmul.f32 %v2994, %v2998
    %vm3000 = vweird.f32 %v2986
    %vm3001 = vweird.f32 %v2994
    %vm3002 = vmor %vm3000, %vm3001
    %v3003 = vsel %vm3002, %v2994, %v2999
    %v3004 = vrsqrt.pop %v2987
    %v3005 = vmul.f32 %v3004, %v2987
    %v3006 = vmul.f32 %v3005, %v3004
    %v3007 = vmul.f32 0.5, %v3006
    %v3008 = vsub.f32 1.5, %v3007
    %v3009 = vmul.f32 %v3004, %v3008
    %vm3010 = vweird.f32 %v2987
    %vm3011 = vweird.f32 %v3004
    %vm3012 = vmor %vm3010, %vm3011
    %v3013 = vsel %vm3012, %v3004, %v3009
    %v3014 = vrsqrt.pop %v2988
    %v3015 = vmul.f32 %v3014, %v2988
    %v3016 = vmul.f32 %v3015, %v3014
    %v3017 = vmul.f32 0.5, %v3016
    %v3018 = vsub.f32 1.5, %v3017
    %v3019 = vmul.f32 %v3014, %v3018
    %vm3020 = vweird.f32 %v2988
    %vm3021 = vweird.f32 %v3014
    %vm3022 = vmor %vm3020, %vm3021
    %v3023 = vsel %vm3022, %v3014, %v3019
    %v3024 = vrsqrt.pop %v2989
    %v3025 = vmul.f32 %v3024, %v2989
    %v3026 = vmul.f32 %v3025, %v3024
    %v3027 = vmul.f32 0.5, %v3026
    %v3028 = vsub.f32 1.5, %v3027
    %v3029 = vmul.f32 %v3024, %v3028
    %vm3030 = vweird.f32 %v2989
    %vm3031 = vweird.f32 %v3024
    %vm3032 = vmor %vm3030, %vm3031
    %v3033 = vsel %vm3032, %v3024, %v3029
    %v3034 = vrsqrt.pop %v2990
    %v3035 = vmul.f32 %v3034, %v2990
    %v3036 = vmul.f32 %v3035, %v3034
    %v3037 = vmul.f32 0.5, %v3036
    %v3038 = vsub.f32 1.5, %v3037
    %v3039 = vmul.f32 %v3034, %v3038
    %vm3040 = vweird.f32 %v2990
    %vm3041 = vweird.f32 %v3034
    %vm3042 = vmor %vm3040, %vm3041
    %v3043 = vsel %vm3042, %v3034, %v3039
    %v3044 = vrsqrt.pop %v2991
    %v3045 = vmul.f32 %v3044, %v2991
    %v3046 = vmul.f32 %v3045, %v3044
    %v3047 = vmul.f32 0.5, %v3046
    %v3048 = vsub.f32 1.5, %v3047
    %v3049 = vmul.f32 %v3044, %v3048
    %vm3050 = vweird.f32 %v2991
    %vm3051 = vweird.f32 %v3044
    %vm3052 = vmor %vm3050, %vm3051
    %v3053 = vsel %vm3052, %v3044, %v3049
    %v3054 = vrsqrt.pop %v2992
    %v3055 = vmul.f32 %v3054, %v2992
    %v3056 = vmul.f32 %v3055, %v3054
    %v3057 = vmul.f32 0.5, %v3056
    %v3058 = vsub.f32 1.5, %v3057
    %v3059 = vmul.f32 %v3054, %v3058
    %vm3060 = vweird.f32 %v2992
    %vm3061 = vweird.f32 %v3054
    %vm3062 = vmor %vm3060, %vm3061
    %v3063 = vsel %vm3062, %v3054, %v3059
    %v3064 = vrsqrt.pop %v2993
    %v3065 = vmul.f32 %v3064, %v2993
    %v3066 = vmul.f32 %v3065, %v3064
    %v3067 = vmul.f32 0.5, %v3066
    %v3068 = vsub.f32 1.5, %v3067
    %v3069 = vmul.f32 %v3064, %v3068
    %vm3070 = vweird.f32 %v2993
    %vm3071 = vweird.f32 %v3064
    %vm3072 = vmor %vm3070, %vm3071
    %v3073 = vsel %vm3072, %v3064, %v3069
    %v3074 = vmul.f32 %v2946, %v3003
    %v3075 = vmul.f32 %v2947, %v3013
    %v3076 = vmul.f32 %v2948, %v3023
    %v3077 = vmul.f32 %v2949, %v3033
    %v3078 = vmul.f32 %v2950, %v3043
    %v3079 = vmul.f32 %v2951, %v3053
    %v3080 = vmul.f32 %v2952, %v3063
    %v3081 = vmul.f32 %v2953, %v3073
    %v3082 = vld [vmem:[%s11] sm:$0x1]
    %v3084 = vperm.slane %v3082, 0
    %v3086 = vmul.f32 %v3074, %v3084
    %v3087 = vmul.f32 %v3075, %v3084
    %v3088 = vmul.f32 %v3076, %v3084
    %v3089 = vmul.f32 %v3077, %v3084
    %v3090 = vmul.f32 %v3078, %v3084
    %v3091 = vmul.f32 %v3079, %v3084
    %v3092 = vmul.f32 %v3080, %v3084
    %v3093 = vmul.f32 %v3081, %v3084
    %v3094 = vld [vmem:[%s12] sm:$0x1]
    %v3096 = vperm.slane %v3094, 0
    %v3098 = vadd.f32 %v3086, %v3096
    %v3099 = vadd.f32 %v3087, %v3096
    %v3100 = vadd.f32 %v3088, %v3096
    %v3101 = vadd.f32 %v3089, %v3096
    %v3102 = vadd.f32 %v3090, %v3096
    %v3103 = vadd.f32 %v3091, %v3096
    %v3104 = vadd.f32 %v3092, %v3096
    %v3105 = vadd.f32 %v3093, %v3096
    %3106 = vst [vmem:[#allocation13] sm:$0xff] %v3098
    %3107 = vst [vmem:[#allocation13 + $0x8] sm:$0xff] %v3099
    %3108 = vst [vmem:[#allocation13 + $0x10] sm:$0xff] %v3100
    %3109 = vst [vmem:[#allocation13 + $0x18] sm:$0xff] %v3101
    %3110 = vst [vmem:[#allocation13 + $0x20] sm:$0xff] %v3102
    %3111 = vst [vmem:[#allocation13 + $0x28] sm:$0xff] %v3103
    %3112 = vst [vmem:[#allocation13 + $0x30] sm:$0xff] %v3104
    %3113 = vst [vmem:[#allocation13 + $0x38] sm:$0xff] %v3105
    // Predicated region
    $region78: #{tpu_custom_call.1} parent=1 // pred_check
      _
    $region79: #{tpu_custom_call.1} parent=1 // pred_check_branch
      %3115 = sbr.rel (0) target = $region81
    $region80: #{tpu_custom_call.1} parent=1 // pred_region
      %3117 = vsyncadd [#allocation4], 0
      %s3118 = sshll.u32 [#allocation13], 4
      %s3119 = int_to_ptr.vmem [resolvable:$true] %s3118
      %s3120 = sshll.u32 %s13, 4
      %s3121 = int_to_ptr.hbm [resolvable:$true] %s3120
      %3126 = dma.vmem_to_hbm [thread:$0]  %s3119, 1024, %s3121, [#allocation4], 128, 128, 8
    $region81: #{tpu_custom_call.1} parent=1 // pred_fallthru
      _
    // Predicated region
    $region82: #{tpu_custom_call.1} parent=1 // pred_check
      _
    $region83: #{tpu_custom_call.1} parent=1 // pred_check_branch
      %3128 = sbr.rel (0) target = $region85
    $region84: #{tpu_custom_call.1} parent=1 // pred_region
      %3130 = dma.done [#allocation4], 1024
    $region85: #{tpu_custom_call.1} parent=1 // pred_fallthru
      _
    %3131 = vsyncpa [#allocation3], 1
    %3132 = vsyncpa [#allocation6], 1
    %3133 = vsyncpa [#allocation9], 1
    %3134 = vsyncpa [#allocation12], 1
    %3135 = vsyncpa [#allocation4], 1

// kernel: tpu_custom_call.1
$region0: #{tpu_custom_call.1}
  #allocation0 [shape = 'u32[]', space=smem, size = 0x4, offset = 0x4, fixed_abs, tag = 'smem constant byte address 0x4 - core index']
  #allocation1 [shape = 'u32[72,128]{1,0:T(1,128)}', space=vmem, size = 0x9000, scoped, tag = 'internal scratch']
  %s0 = inlined_call_operand.hbm [shape: f32[4,16,128], index: 0, kind: input, shape index: {}]
  %s1 = inlined_call_operand.hbm [shape: f32[128,384], index: 1, kind: input, shape index: {}]
  %s2 = inlined_call_operand.hbm [shape: f32[1,384], index: 2, kind: input, shape index: {}]
  %s3 = inlined_call_operand.hbm [shape: f32[128,128], index: 3, kind: input, shape index: {}]
  %s4 = inlined_call_operand.vmem [shape: f32[1,128], index: 4, kind: input, shape index: {}]
  %s5 = inlined_call_operand.vmem [shape: f32[1,128], index: 5, kind: input, shape index: {}]
  %s6 = inlined_call_operand.vmem [shape: f32[1,128], index: 6, kind: input, shape index: {}]
  %s7 = inlined_call_operand.hbm [shape: f32[128,256], index: 7, kind: input, shape index: {}]
  %s8 = inlined_call_operand.vmem [shape: f32[1,256], index: 8, kind: input, shape index: {}]
  %s9 = inlined_call_operand.hbm [shape: f32[256,128], index: 9, kind: input, shape index: {}]
  %s10 = inlined_call_operand.vmem [shape: f32[1,128], index: 10, kind: input, shape index: {}]
  %s11 = inlined_call_operand.vmem [shape: f32[1,128], index: 11, kind: input, shape index: {}]
  %s12 = inlined_call_operand.vmem [shape: f32[1,128], index: 12, kind: input, shape index: {}]
  %s13 = inlined_call_operand.hbm [shape: f32[4,16,128], index: 13, kind: output, shape index: {}]
  %s14 = sld [smem:[#allocation0]]
  $region86: #{tpu_custom_call.1} parent=0
    _
  %s16 = ssub.s32 1, %s14
  %s17 = scalar_select 0, %s16, %s14
  $region1: #{tpu_custom_call.1} parent=0
    #allocation2 [shape = 'u8[32768]{0}', space=vmem, size = 0x8000, scoped, tag = 'input window, operand 0, single buffered']
    #allocation3 [shape = 's32[1]{0}', space=sflag, size = 0x4, scoped, tag = 'scoped memory for tpu_custom_call.1']
    #allocation4 [shape = 's32[1]{0}', space=sflag, size = 0x4, scoped, tag = 'scoped memory for tpu_custom_call.1']
    #allocation5 [shape = 'u8[196608]{0}', space=vmem, size = 0x30000, scoped, tag = 'input window, operand 1, single buffered']
    #allocation6 [shape = 's32[1]{0}', space=sflag, size = 0x4, scoped, tag = 'scoped memory for tpu_custom_call.1']
    #allocation7 [shape = 'u8[1536]{0}', space=vmem, size = 0x800, scoped, tag = 'input window, operand 2, single buffered']
    #allocation8 [shape = 'u8[65536]{0}', space=vmem, size = 0x10000, scoped, tag = 'input window, operand 3, single buffered']
    #allocation9 [shape = 's32[1]{0}', space=sflag, size = 0x4, scoped, tag = 'scoped memory for tpu_custom_call.1']
    #allocation10 [shape = 'u8[131072]{0}', space=vmem, size = 0x20000, scoped, tag = 'input window, operand 7, single buffered']
    #allocation11 [shape = 'u8[131072]{0}', space=vmem, size = 0x20000, scoped, tag = 'input window, operand 9, single buffered']
    #allocation12 [shape = 's32[1]{0}', space=sflag, size = 0x4, scoped, tag = 'scoped memory for tpu_custom_call.1']
    #allocation13 [shape = 'u8[32768]{0}', space=vmem, size = 0x8000, scoped, tag = 'output window, operand 0, single buffered']
    %18 = vsyncpa [#allocation3], 0
    %19 = vsyncpa [#allocation6], 0
    %20 = vsyncpa [#allocation9], 0
    %21 = vsyncpa [#allocation12], 0
    %22 = vsyncpa [#allocation4], 0
    // Predicated region
    $region2: #{tpu_custom_call.1} parent=1 // pred_check
      _
    $region3: #{tpu_custom_call.1} parent=1 // pred_check_branch
      %24 = sbr.rel (0) target = $region5
    $region4: #{tpu_custom_call.1} parent=1 // pred_region
      %26 = vsyncadd [#allocation3], 0
      %s27 = sshll.u32 %s0, 4
      %s28 = int_to_ptr.hbm [resolvable:$true] %s27
      %s29 = sshll.u32 [#allocation2], 4
      %s30 = int_to_ptr.vmem [resolvable:$true] %s29
      %35 = dma.hbm_to_vmem [thread:$0]  %s28, 1024, %s30, [#allocation3], 128, 128, 8
    $region5: #{tpu_custom_call.1} parent=1 // pred_fallthru
      _
    // Predicated region
    $region6: #{tpu_custom_call.1} parent=1 // pred_check
      _
    $region7: #{tpu_custom_call.1} parent=1 // pred_check_branch
      %37 = sbr.rel (0) target = $region9
    $region8: #{tpu_custom_call.1} parent=1 // pred_region
      %39 = vsyncadd [#allocation6], 0
      %s40 = sshll.u32 %s1, 4
      %s41 = int_to_ptr.hbm [resolvable:$true] %s40
      %s42 = sshll.u32 [#allocation5], 4
      %s43 = int_to_ptr.vmem [resolvable:$true] %s42
      %48 = dma.hbm_to_vmem [thread:$0]  %s41, 6144, %s43, [#allocation6], 384, 384, 24
    $region9: #{tpu_custom_call.1} parent=1 // pred_fallthru
      _
    // Predicated region
    $region10: #{tpu_custom_call.1} parent=1 // pred_check
      _
    $region11: #{tpu_custom_call.1} parent=1 // pred_check_branch
      %50 = sbr.rel (0) target = $region13
    $region12: #{tpu_custom_call.1} parent=1 // pred_region
      %52 = vsyncadd [#allocation6], 0
      %s54 = sshll.u32 %s2, 4
      %s55 = int_to_ptr.hbm [resolvable:$true] %s54
      %s56 = sshll.u32 [#allocation7], 4
      %s57 = int_to_ptr.vmem [resolvable:$true] %s56
      %59 = dma.hbm_to_vmem [thread:$0]  %s55, 48, %s57, [#allocation6]
    $region13: #{tpu_custom_call.1} parent=1 // pred_fallthru
      _
    // Predicated region
    $region14: #{tpu_custom_call.1} parent=1 // pred_check
      _
    $region15: #{tpu_custom_call.1} parent=1 // pred_check_branch
      %61 = sbr.rel (0) target = $region17
    $region16: #{tpu_custom_call.1} parent=1 // pred_region
      %63 = vsyncadd [#allocation9], 0
      %s64 = sshll.u32 %s3, 4
      %s65 = int_to_ptr.hbm [resolvable:$true] %s64
      %s66 = sshll.u32 [#allocation8], 4
      %s67 = int_to_ptr.vmem [resolvable:$true] %s66
      %72 = dma.hbm_to_vmem [thread:$0]  %s65, 2048, %s67, [#allocation9], 128, 128, 8
    $region17: #{tpu_custom_call.1} parent=1 // pred_fallthru
      _
    // Predicated region
    $region18: #{tpu_custom_call.1} parent=1 // pred_check
      _
    $region19: #{tpu_custom_call.1} parent=1 // pred_check_branch
      %74 = sbr.rel (0) target = $region21
    $region20: #{tpu_custom_call.1} parent=1 // pred_region
      _
    $region21: #{tpu_custom_call.1} parent=1 // pred_fallthru
      _
    // Predicated region
    $region22: #{tpu_custom_call.1} parent=1 // pred_check
      _
    $region23: #{tpu_custom_call.1} parent=1 // pred_check_branch
      %76 = sbr.rel (0) target = $region25
    $region24: #{tpu_custom_call.1} parent=1 // pred_region
      _
    $region25: #{tpu_custom_call.1} parent=1 // pred_fallthru
      _
    // Predicated region
    $region26: #{tpu_custom_call.1} parent=1 // pred_check
      _
    $region27: #{tpu_custom_call.1} parent=1 // pred_check_branch
      %78 = sbr.rel (0) target = $region29
    $region28: #{tpu_custom_call.1} parent=1 // pred_region
      _
    $region29: #{tpu_custom_call.1} parent=1 // pred_fallthru
      _
    // Predicated region
    $region30: #{tpu_custom_call.1} parent=1 // pred_check
      _
    $region31: #{tpu_custom_call.1} parent=1 // pred_check_branch
      %80 = sbr.rel (0) target = $region33
    $region32: #{tpu_custom_call.1} parent=1 // pred_region
      %82 = vsyncadd [#allocation9], 0
      %s83 = sshll.u32 %s7, 4
      %s84 = int_to_ptr.hbm [resolvable:$true] %s83
      %s85 = sshll.u32 [#allocation10], 4
      %s86 = int_to_ptr.vmem [resolvable:$true] %s85
      %91 = dma.hbm_to_vmem [thread:$0]  %s84, 4096, %s86, [#allocation9], 256, 256, 16
    $region33: #{tpu_custom_call.1} parent=1 // pred_fallthru
      _
    // Predicated region
    $region34: #{tpu_custom_call.1} parent=1 // pred_check
      _
    $region35: #{tpu_custom_call.1} parent=1 // pred_check_branch
      %93 = sbr.rel (0) target = $region37
    $region36: #{tpu_custom_call.1} parent=1 // pred_region
      _
    $region37: #{tpu_custom_call.1} parent=1 // pred_fallthru
      _
    // Predicated region
    $region38: #{tpu_custom_call.1} parent=1 // pred_check
      _
    $region39: #{tpu_custom_call.1} parent=1 // pred_check_branch
      %95 = sbr.rel (0) target = $region41
    $region40: #{tpu_custom_call.1} parent=1 // pred_region
      %97 = vsyncadd [#allocation12], 0
      %s98 = sshll.u32 %s9, 4
      %s99 = int_to_ptr.hbm [resolvable:$true] %s98
      %s100 = sshll.u32 [#allocation11], 4
      %s101 = int_to_ptr.vmem [resolvable:$true] %s100
      %106 = dma.hbm_to_vmem [thread:$0]  %s99, 4096, %s101, [#allocation12], 128, 128, 8
    $region41: #{tpu_custom_call.1} parent=1 // pred_fallthru
      _
    // Predicated region
    $region42: #{tpu_custom_call.1} parent=1 // pred_check
      _
    $region43: #{tpu_custom_call.1} parent=1 // pred_check_branch
      %108 = sbr.rel (0) target = $region45
    $region44: #{tpu_custom_call.1} parent=1 // pred_region
      _
    $region45: #{tpu_custom_call.1} parent=1 // pred_fallthru
      _
    // Predicated region
    $region46: #{tpu_custom_call.1} parent=1 // pred_check
      _
    $region47: #{tpu_custom_call.1} parent=1 // pred_check_branch
      %110 = sbr.rel (0) target = $region49
    $region48: #{tpu_custom_call.1} parent=1 // pred_region
      _
    $region49: #{tpu_custom_call.1} parent=1 // pred_fallthru
      _
    // Predicated region
    $region50: #{tpu_custom_call.1} parent=1 // pred_check
      _
    $region51: #{tpu_custom_call.1} parent=1 // pred_check_branch
      %112 = sbr.rel (0) target = $region53
    $region52: #{tpu_custom_call.1} parent=1 // pred_region
      _
    $region53: #{tpu_custom_call.1} parent=1 // pred_fallthru
      _
    // Predicated region
    $region54: #{tpu_custom_call.1} parent=1 // pred_check
      _
    $region55: #{tpu_custom_call.1} parent=1 // pred_check_branch
      %114 = sbr.rel (0) target = $region57
    $region56: #{tpu_custom_call.1} parent=1 // pred_region
      %116 = dma.done [#allocation3], 1024
    $region57: #{tpu_custom_call.1} parent=1 // pred_fallthru
      _
    // Predicated region
    $region58: #{tpu_custom_call.1} parent=1 // pred_check
      _
    $region59: #{tpu_custom_call.1} parent=1 // pred_check_branch
      %118 = sbr.rel (0) target = $region61
    $region60: #{tpu_custom_call.1} parent=1 // pred_region
      %120 = dma.done [#allocation6], 6144
    $region61: #{tpu_custom_call.1} parent=1 // pred_fallthru
      _
    // Predicated region
    $region62: #{tpu_custom_call.1} parent=1 // pred_check
      _
    $region63: #{tpu_custom_call.1} parent=1 // pred_check_branch
      %122 = sbr.rel (0) target = $region65
    $region64: #{tpu_custom_call.1} parent=1 // pred_region
      %124 = dma.done [#allocation6], 48
    $region65: #{tpu_custom_call.1} parent=1 // pred_fallthru
      _
    // Predicated region
    $region66: #{tpu_custom_call.1} parent=1 // pred_check
      _
    $region67: #{tpu_custom_call.1} parent=1 // pred_check_branch
      %126 = sbr.rel (0) target = $region69
    $region68: #{tpu_custom_call.1} parent=1 // pred_region
      %128 = dma.done [#allocation9], 2048
    $region69: #{tpu_custom_call.1} parent=1 // pred_fallthru
      _
    // Predicated region
    $region70: #{tpu_custom_call.1} parent=1 // pred_check
      _
    $region71: #{tpu_custom_call.1} parent=1 // pred_check_branch
      %130 = sbr.rel (0) target = $region73
    $region72: #{tpu_custom_call.1} parent=1 // pred_region
      %132 = dma.done [#allocation9], 4096
    $region73: #{tpu_custom_call.1} parent=1 // pred_fallthru
      _
    // Predicated region
    $region74: #{tpu_custom_call.1} parent=1 // pred_check
      _
    $region75: #{tpu_custom_call.1} parent=1 // pred_check_branch
      %134 = sbr.rel (0) target = $region77
    $region76: #{tpu_custom_call.1} parent=1 // pred_region
      %136 = dma.done [#allocation12], 4096
    $region77: #{tpu_custom_call.1} parent=1 // pred_fallthru
      _
    %v137 = vld [vmem:[#allocation2] sm:$0xff]
    %v138 = vld [vmem:[#allocation2 + $0x8] sm:$0xff]
    %v139 = vld [vmem:[#allocation2 + $0x10] sm:$0xff]
    %v140 = vld [vmem:[#allocation2 + $0x18] sm:$0xff]
    %v141 = vld [vmem:[#allocation2 + $0x20] sm:$0xff]
    %v142 = vld [vmem:[#allocation2 + $0x28] sm:$0xff]
    %v143 = vld [vmem:[#allocation2 + $0x30] sm:$0xff]
    %v144 = vld [vmem:[#allocation2 + $0x38] sm:$0xff]
    %v145 = vld [vmem:[#allocation5] sm:$0xff]
    %v146 = vld [vmem:[#allocation5 + $0x8] sm:$0xff]
    %v147 = vld [vmem:[#allocation5 + $0x10] sm:$0xff]
    %v148 = vld [vmem:[#allocation5 + $0x18] sm:$0xff]
    %v149 = vld [vmem:[#allocation5 + $0x20] sm:$0xff]
    %v150 = vld [vmem:[#allocation5 + $0x28] sm:$0xff]
    %v151 = vld [vmem:[#allocation5 + $0x30] sm:$0xff]
    %v152 = vld [vmem:[#allocation5 + $0x38] sm:$0xff]
    %v153 = vld [vmem:[#allocation5 + $0x40] sm:$0xff]
    %v154 = vld [vmem:[#allocation5 + $0x48] sm:$0xff]
    %v155 = vld [vmem:[#allocation5 + $0x50] sm:$0xff]
    %v156 = vld [vmem:[#allocation5 + $0x58] sm:$0xff]
    %v157 = vld [vmem:[#allocation5 + $0x60] sm:$0xff]
    %v158 = vld [vmem:[#allocation5 + $0x68] sm:$0xff]
    %v159 = vld [vmem:[#allocation5 + $0x70] sm:$0xff]
    %v160 = vld [vmem:[#allocation5 + $0x78] sm:$0xff]
    %v161 = vld [vmem:[#allocation5 + $0x80] sm:$0xff]
    %v162 = vld [vmem:[#allocation5 + $0x88] sm:$0xff]
    %v163 = vld [vmem:[#allocation5 + $0x90] sm:$0xff]
    %v164 = vld [vmem:[#allocation5 + $0x98] sm:$0xff]
    %v165 = vld [vmem:[#allocation5 + $0xa0] sm:$0xff]
    %v166 = vld [vmem:[#allocation5 + $0xa8] sm:$0xff]
    %v167 = vld [vmem:[#allocation5 + $0xb0] sm:$0xff]
    %v168 = vld [vmem:[#allocation5 + $0xb8] sm:$0xff]
    %v169 = vld [vmem:[#allocation5 + $0xc0] sm:$0xff]
    %v170 = vld [vmem:[#allocation5 + $0xc8] sm:$0xff]
    %v171 = vld [vmem:[#allocation5 + $0xd0] sm:$0xff]
    %v172 = vld [vmem:[#allocation5 + $0xd8] sm:$0xff]
    %v173 = vld [vmem:[#allocation5 + $0xe0] sm:$0xff]
    %v174 = vld [vmem:[#allocation5 + $0xe8] sm:$0xff]
    %v175 = vld [vmem:[#allocation5 + $0xf0] sm:$0xff]
    %v176 = vld [vmem:[#allocation5 + $0xf8] sm:$0xff]
    %v177 = vld [vmem:[#allocation5 + $0x100] sm:$0xff]
    %v178 = vld [vmem:[#allocation5 + $0x108] sm:$0xff]
    %v179 = vld [vmem:[#allocation5 + $0x110] sm:$0xff]
    %v180 = vld [vmem:[#allocation5 + $0x118] sm:$0xff]
    %v181 = vld [vmem:[#allocation5 + $0x120] sm:$0xff]
    %v182 = vld [vmem:[#allocation5 + $0x128] sm:$0xff]
    %v183 = vld [vmem:[#allocation5 + $0x130] sm:$0xff]
    %v184 = vld [vmem:[#allocation5 + $0x138] sm:$0xff]
    %v185 = vld [vmem:[#allocation5 + $0x140] sm:$0xff]
    %v186 = vld [vmem:[#allocation5 + $0x148] sm:$0xff]
    %v187 = vld [vmem:[#allocation5 + $0x150] sm:$0xff]
    %v188 = vld [vmem:[#allocation5 + $0x158] sm:$0xff]
    %v189 = vld [vmem:[#allocation5 + $0x160] sm:$0xff]
    %v190 = vld [vmem:[#allocation5 + $0x168] sm:$0xff]
    %v191 = vld [vmem:[#allocation5 + $0x170] sm:$0xff]
    %v192 = vld [vmem:[#allocation5 + $0x178] sm:$0xff]
    %v193 = vld [vmem:[#allocation7] sm:$0x7]
    %v195 = vperm.slane %v193, 0
    %v196 = vperm.slane %v193, 1
    %v197 = vperm.slane %v193, 2
    %201 = vmatpush.msra.mxu0 %v190
    %202 = vmatpush.msra.mxu0 %v187
    %203 = vmatpush.msra.mxu0 %v184
    %204 = vmatpush.msra.mxu0 %v181
    %205 = vmatpush.msra.mxu0 %v178
    %206 = vmatpush.msra.mxu0 %v175
    %207 = vmatpush.msra.mxu0 %v172
    %208 = vmatpush.msra.mxu0 %v169
    %209 = vmatpush.msra.mxu0 %v166
    %210 = vmatpush.msra.mxu0 %v163
    %211 = vmatpush.msra.mxu0 %v160
    %212 = vmatpush.msra.mxu0 %v157
    %213 = vmatpush.msra.mxu0 %v154
    %214 = vmatpush.msra.mxu0 %v151
    %215 = vmatpush.msra.mxu0 %v148
    %216 = vmatpush.msra.mxu0 %v145
    %217 = vmatmul.f32.gmra.mxu0 %v137
    %v218 = vpop.f32.mrf.mxu0
    %v219 = vadd.f32 %v195, %v218
    %220 = vmatmul.f32.gmra.mxu0 %v138
    %v221 = vpop.f32.mrf.mxu0
    %v222 = vadd.f32 %v195, %v221
    %223 = vmatmul.f32.gmra.mxu0 %v139
    %v224 = vpop.f32.mrf.mxu0
    %v225 = vadd.f32 %v195, %v224
    %226 = vmatmul.f32.gmra.mxu0 %v140
    %v227 = vpop.f32.mrf.mxu0
    %v228 = vadd.f32 %v195, %v227
    %229 = vmatmul.f32.gmra.mxu0 %v141
    %v230 = vpop.f32.mrf.mxu0
    %v231 = vadd.f32 %v195, %v230
    %232 = vmatmul.f32.gmra.mxu0 %v142
    %v233 = vpop.f32.mrf.mxu0
    %v234 = vadd.f32 %v195, %v233
    %235 = vmatmul.f32.gmra.mxu0 %v143
    %v236 = vpop.f32.mrf.mxu0
    %v237 = vadd.f32 %v195, %v236
    %238 = vmatmul.f32.gmra.mxu0 %v144
    %v239 = vpop.f32.mrf.mxu0
    %v240 = vadd.f32 %v195, %v239
    %241 = vdwg.mxu0
    %242 = vmatpush.msra.mxu0 %v191
    %243 = vmatpush.msra.mxu0 %v188
    %244 = vmatpush.msra.mxu0 %v185
    %245 = vmatpush.msra.mxu0 %v182
    %246 = vmatpush.msra.mxu0 %v179
    %247 = vmatpush.msra.mxu0 %v176
    %248 = vmatpush.msra.mxu0 %v173
    %249 = vmatpush.msra.mxu0 %v170
    %250 = vmatpush.msra.mxu0 %v167
    %251 = vmatpush.msra.mxu0 %v164
    %252 = vmatpush.msra.mxu0 %v161
    %253 = vmatpush.msra.mxu0 %v158
    %254 = vmatpush.msra.mxu0 %v155
    %255 = vmatpush.msra.mxu0 %v152
    %256 = vmatpush.msra.mxu0 %v149
    %257 = vmatpush.msra.mxu0 %v146
    %258 = vmatmul.f32.gmra.mxu0 %v137
    %v259 = vpop.f32.mrf.mxu0
    %v260 = vadd.f32 %v196, %v259
    %261 = vmatmul.f32.gmra.mxu0 %v138
    %v262 = vpop.f32.mrf.mxu0
    %v263 = vadd.f32 %v196, %v262
    %264 = vmatmul.f32.gmra.mxu0 %v139
    %v265 = vpop.f32.mrf.mxu0
    %v266 = vadd.f32 %v196, %v265
    %267 = vmatmul.f32.gmra.mxu0 %v140
    %v268 = vpop.f32.mrf.mxu0
    %v269 = vadd.f32 %v196, %v268
    %270 = vmatmul.f32.gmra.mxu0 %v141
    %v271 = vpop.f32.mrf.mxu0
    %v272 = vadd.f32 %v196, %v271
    %273 = vmatmul.f32.gmra.mxu0 %v142
    %v274 = vpop.f32.mrf.mxu0
    %v275 = vadd.f32 %v196, %v274
    %276 = vmatmul.f32.gmra.mxu0 %v143
    %v277 = vpop.f32.mrf.mxu0
    %v278 = vadd.f32 %v196, %v277
    %279 = vmatmul.f32.gmra.mxu0 %v144
    %v280 = vpop.f32.mrf.mxu0
    %v281 = vadd.f32 %v196, %v280
    %282 = vdwg.mxu0
    %283 = vmatpush.msra.mxu0 %v192
    %284 = vmatpush.msra.mxu0 %v189
    %285 = vmatpush.msra.mxu0 %v186
    %286 = vmatpush.msra.mxu0 %v183
    %287 = vmatpush.msra.mxu0 %v180
    %288 = vmatpush.msra.mxu0 %v177
    %289 = vmatpush.msra.mxu0 %v174
    %290 = vmatpush.msra.mxu0 %v171
    %291 = vmatpush.msra.mxu0 %v168
    %292 = vmatpush.msra.mxu0 %v165
    %293 = vmatpush.msra.mxu0 %v162
    %294 = vmatpush.msra.mxu0 %v159
    %295 = vmatpush.msra.mxu0 %v156
    %296 = vmatpush.msra.mxu0 %v153
    %297 = vmatpush.msra.mxu0 %v150
    %298 = vmatpush.msra.mxu0 %v147
    %299 = vmatmul.f32.gmra.mxu0 %v137
    %v300 = vpop.f32.mrf.mxu0
    %v301 = vadd.f32 %v197, %v300
    %302 = vmatmul.f32.gmra.mxu0 %v138
    %v303 = vpop.f32.mrf.mxu0
    %v304 = vadd.f32 %v197, %v303
    %305 = vmatmul.f32.gmra.mxu0 %v139
    %v306 = vpop.f32.mrf.mxu0
    %v307 = vadd.f32 %v197, %v306
    %308 = vmatmul.f32.gmra.mxu0 %v140
    %v309 = vpop.f32.mrf.mxu0
    %v310 = vadd.f32 %v197, %v309
    %311 = vmatmul.f32.gmra.mxu0 %v141
    %v312 = vpop.f32.mrf.mxu0
    %v313 = vadd.f32 %v197, %v312
    %314 = vmatmul.f32.gmra.mxu0 %v142
    %v315 = vpop.f32.mrf.mxu0
    %v316 = vadd.f32 %v197, %v315
    %317 = vmatmul.f32.gmra.mxu0 %v143
    %v318 = vpop.f32.mrf.mxu0
    %v319 = vadd.f32 %v197, %v318
    %320 = vmatmul.f32.gmra.mxu0 %v144
    %v321 = vpop.f32.mrf.mxu0
    %v322 = vadd.f32 %v197, %v321
    %323 = vdwg.mxu0
    %332 = vrot.lane.b32.xlu0 %v219, 96
    %v333 = vpop.permute.xlu0 %332
    %334 = vrot.lane.b32.xlu0 %v222, 96
    %v335 = vpop.permute.xlu0 %334
    %336 = vrot.lane.b32.xlu0 %v225, 96
    %v337 = vpop.permute.xlu0 %336
    %338 = vrot.lane.b32.xlu0 %v228, 96
    %v339 = vpop.permute.xlu0 %338
    %340 = vrot.lane.b32.xlu0 %v231, 96
    %v341 = vpop.permute.xlu0 %340
    %342 = vrot.lane.b32.xlu0 %v234, 96
    %v343 = vpop.permute.xlu0 %342
    %344 = vrot.lane.b32.xlu0 %v237, 96
    %v345 = vpop.permute.xlu0 %344
    %346 = vrot.lane.b32.xlu0 %v240, 96
    %v347 = vpop.permute.xlu0 %346
    %348 = vrot.lane.b32.xlu0 %v219, 64
    %v349 = vpop.permute.xlu0 %348
    %350 = vrot.lane.b32.xlu0 %v222, 64
    %v351 = vpop.permute.xlu0 %350
    %352 = vrot.lane.b32.xlu0 %v225, 64
    %v353 = vpop.permute.xlu0 %352
    %354 = vrot.lane.b32.xlu0 %v228, 64
    %v355 = vpop.permute.xlu0 %354
    %356 = vrot.lane.b32.xlu0 %v231, 64
    %v357 = vpop.permute.xlu0 %356
    %358 = vrot.lane.b32.xlu0 %v234, 64
    %v359 = vpop.permute.xlu0 %358
    %360 = vrot.lane.b32.xlu0 %v237, 64
    %v361 = vpop.permute.xlu0 %360
    %362 = vrot.lane.b32.xlu0 %v240, 64
    %v363 = vpop.permute.xlu0 %362
    %364 = vrot.lane.b32.xlu0 %v219, 32
    %v365 = vpop.permute.xlu0 %364
    %366 = vrot.lane.b32.xlu0 %v222, 32
    %v367 = vpop.permute.xlu0 %366
    %368 = vrot.lane.b32.xlu0 %v225, 32
    %v369 = vpop.permute.xlu0 %368
    %370 = vrot.lane.b32.xlu0 %v228, 32
    %v371 = vpop.permute.xlu0 %370
    %372 = vrot.lane.b32.xlu0 %v231, 32
    %v373 = vpop.permute.xlu0 %372
    %374 = vrot.lane.b32.xlu0 %v234, 32
    %v375 = vpop.permute.xlu0 %374
    %376 = vrot.lane.b32.xlu0 %v237, 32
    %v377 = vpop.permute.xlu0 %376
    %378 = vrot.lane.b32.xlu0 %v240, 32
    %v379 = vpop.permute.xlu0 %378
    %388 = vrot.lane.b32.xlu0 %v260, 96
    %v389 = vpop.permute.xlu0 %388
    %390 = vrot.lane.b32.xlu0 %v263, 96
    %v391 = vpop.permute.xlu0 %390
    %392 = vrot.lane.b32.xlu0 %v266, 96
    %v393 = vpop.permute.xlu0 %392
    %394 = vrot.lane.b32.xlu0 %v269, 96
    %v395 = vpop.permute.xlu0 %394
    %396 = vrot.lane.b32.xlu0 %v272, 96
    %v397 = vpop.permute.xlu0 %396
    %398 = vrot.lane.b32.xlu0 %v275, 96
    %v399 = vpop.permute.xlu0 %398
    %400 = vrot.lane.b32.xlu0 %v278, 96
    %v401 = vpop.permute.xlu0 %400
    %402 = vrot.lane.b32.xlu0 %v281, 96
    %v403 = vpop.permute.xlu0 %402
    %404 = vrot.lane.b32.xlu0 %v260, 64
    %v405 = vpop.permute.xlu0 %404
    %406 = vrot.lane.b32.xlu0 %v263, 64
    %v407 = vpop.permute.xlu0 %406
    %408 = vrot.lane.b32.xlu0 %v266, 64
    %v409 = vpop.permute.xlu0 %408
    %410 = vrot.lane.b32.xlu0 %v269, 64
    %v411 = vpop.permute.xlu0 %410
    %412 = vrot.lane.b32.xlu0 %v272, 64
    %v413 = vpop.permute.xlu0 %412
    %414 = vrot.lane.b32.xlu0 %v275, 64
    %v415 = vpop.permute.xlu0 %414
    %416 = vrot.lane.b32.xlu0 %v278, 64
    %v417 = vpop.permute.xlu0 %416
    %418 = vrot.lane.b32.xlu0 %v281, 64
    %v419 = vpop.permute.xlu0 %418
    %420 = vrot.lane.b32.xlu0 %v260, 32
    %v421 = vpop.permute.xlu0 %420
    %422 = vrot.lane.b32.xlu0 %v263, 32
    %v423 = vpop.permute.xlu0 %422
    %424 = vrot.lane.b32.xlu0 %v266, 32
    %v425 = vpop.permute.xlu0 %424
    %426 = vrot.lane.b32.xlu0 %v269, 32
    %v427 = vpop.permute.xlu0 %426
    %428 = vrot.lane.b32.xlu0 %v272, 32
    %v429 = vpop.permute.xlu0 %428
    %430 = vrot.lane.b32.xlu0 %v275, 32
    %v431 = vpop.permute.xlu0 %430
    %432 = vrot.lane.b32.xlu0 %v278, 32
    %v433 = vpop.permute.xlu0 %432
    %434 = vrot.lane.b32.xlu0 %v281, 32
    %v435 = vpop.permute.xlu0 %434
    %444 = vrot.lane.b32.xlu0 %v301, 96
    %v445 = vpop.permute.xlu0 %444
    %446 = vrot.lane.b32.xlu0 %v304, 96
    %v447 = vpop.permute.xlu0 %446
    %448 = vrot.lane.b32.xlu0 %v307, 96
    %v449 = vpop.permute.xlu0 %448
    %450 = vrot.lane.b32.xlu0 %v310, 96
    %v451 = vpop.permute.xlu0 %450
    %452 = vrot.lane.b32.xlu0 %v313, 96
    %v453 = vpop.permute.xlu0 %452
    %454 = vrot.lane.b32.xlu0 %v316, 96
    %v455 = vpop.permute.xlu0 %454
    %456 = vrot.lane.b32.xlu0 %v319, 96
    %v457 = vpop.permute.xlu0 %456
    %458 = vrot.lane.b32.xlu0 %v322, 96
    %v459 = vpop.permute.xlu0 %458
    %468 = vrot.lane.b32.xlu0 %v301, 64
    %v469 = vpop.permute.xlu0 %468
    %470 = vrot.lane.b32.xlu0 %v304, 64
    %v471 = vpop.permute.xlu0 %470
    %472 = vrot.lane.b32.xlu0 %v307, 64
    %v473 = vpop.permute.xlu0 %472
    %474 = vrot.lane.b32.xlu0 %v310, 64
    %v475 = vpop.permute.xlu0 %474
    %476 = vrot.lane.b32.xlu0 %v313, 64
    %v477 = vpop.permute.xlu0 %476
    %478 = vrot.lane.b32.xlu0 %v316, 64
    %v479 = vpop.permute.xlu0 %478
    %480 = vrot.lane.b32.xlu0 %v319, 64
    %v481 = vpop.permute.xlu0 %480
    %482 = vrot.lane.b32.xlu0 %v322, 64
    %v483 = vpop.permute.xlu0 %482
    %492 = vrot.lane.b32.xlu0 %v301, 32
    %v493 = vpop.permute.xlu0 %492
    %494 = vrot.lane.b32.xlu0 %v304, 32
    %v495 = vpop.permute.xlu0 %494
    %496 = vrot.lane.b32.xlu0 %v307, 32
    %v497 = vpop.permute.xlu0 %496
    %498 = vrot.lane.b32.xlu0 %v310, 32
    %v499 = vpop.permute.xlu0 %498
    %500 = vrot.lane.b32.xlu0 %v313, 32
    %v501 = vpop.permute.xlu0 %500
    %502 = vrot.lane.b32.xlu0 %v316, 32
    %v503 = vpop.permute.xlu0 %502
    %504 = vrot.lane.b32.xlu0 %v319, 32
    %v505 = vpop.permute.xlu0 %504
    %506 = vrot.lane.b32.xlu0 %v322, 32
    %v507 = vpop.permute.xlu0 %506
    %vm516 = vcmask 261120
    %v517 = vsel %vm516, %v219, 0
    %v519 = vsel %vm516, %v222, 0
    %v521 = vsel %vm516, %v260, 0
    %v523 = vsel %vm516, %v263, 0
    %525 = vmatpush.xpose.msra.mxu0 0.0
    %526 = vmatpush.xpose.msra.mxu0 0.0
    %527 = vmatpush.xpose.msra.mxu0 0.0
    %528 = vmatpush.xpose.msra.mxu0 0.0
    %529 = vmatpush.xpose.msra.mxu0 0.0
    %530 = vmatpush.xpose.msra.mxu0 0.0
    %531 = vmatpush.xpose.msra.mxu0 0.0
    %532 = vmatpush.xpose.msra.mxu0 0.0
    %533 = vmatpush.xpose.msra.mxu0 0.0
    %534 = vmatpush.xpose.msra.mxu0 0.0
    %535 = vmatpush.xpose.msra.mxu0 0.0
    %536 = vmatpush.xpose.msra.mxu0 0.0
    %537 = vmatpush.xpose.msra.mxu0 0.0
    %538 = vmatpush.xpose.msra.mxu0 0.0
    %539 = vmatpush.xpose.msra.mxu0 %v523
    %540 = vmatpush.xpose.msra.mxu0 %v521
    %541 = vmatmul.f32.gmra.mxu0 %v517
    %v542 = vpop.f32.mrf.mxu0
    %v543 = vadd.f32 0.0, %v542
    %544 = vmatmul.f32.gmra.mxu0 %v519
    %v545 = vpop.f32.mrf.mxu0
    %v546 = vadd.f32 0.0, %v545
    %547 = vdwg.mxu0
    %v548 = vsel %vm516, %v225, 0
    %v550 = vsel %vm516, %v228, 0
    %v552 = vsel %vm516, %v266, 0
    %v554 = vsel %vm516, %v269, 0
    %556 = vmatpush.xpose.msra.mxu0 0.0
    %557 = vmatpush.xpose.msra.mxu0 0.0
    %558 = vmatpush.xpose.msra.mxu0 0.0
    %559 = vmatpush.xpose.msra.mxu0 0.0
    %560 = vmatpush.xpose.msra.mxu0 0.0
    %561 = vmatpush.xpose.msra.mxu0 0.0
    %562 = vmatpush.xpose.msra.mxu0 0.0
    %563 = vmatpush.xpose.msra.mxu0 0.0
    %564 = vmatpush.xpose.msra.mxu0 0.0
    %565 = vmatpush.xpose.msra.mxu0 0.0
    %566 = vmatpush.xpose.msra.mxu0 0.0
    %567 = vmatpush.xpose.msra.mxu0 0.0
    %568 = vmatpush.xpose.msra.mxu0 0.0
    %569 = vmatpush.xpose.msra.mxu0 0.0
    %570 = vmatpush.xpose.msra.mxu0 %v554
    %571 = vmatpush.xpose.msra.mxu0 %v552
    %572 = vmatmul.f32.gmra.mxu0 %v548
    %v573 = vpop.f32.mrf.mxu0
    %v574 = vadd.f32 0.0, %v573
    %575 = vmatmul.f32.gmra.mxu0 %v550
    %v576 = vpop.f32.mrf.mxu0
    %v577 = vadd.f32 0.0, %v576
    %578 = vdwg.mxu0
    %v579 = vsel %vm516, %v231, 0
    %v581 = vsel %vm516, %v234, 0
    %v583 = vsel %vm516, %v272, 0
    %v585 = vsel %vm516, %v275, 0
    %587 = vmatpush.xpose.msra.mxu0 0.0
    %588 = vmatpush.xpose.msra.mxu0 0.0
    %589 = vmatpush.xpose.msra.mxu0 0.0
    %590 = vmatpush.xpose.msra.mxu0 0.0
    %591 = vmatpush.xpose.msra.mxu0 0.0
    %592 = vmatpush.xpose.msra.mxu0 0.0
    %593 = vmatpush.xpose.msra.mxu0 0.0
    %594 = vmatpush.xpose.msra.mxu0 0.0
    %595 = vmatpush.xpose.msra.mxu0 0.0
    %596 = vmatpush.xpose.msra.mxu0 0.0
    %597 = vmatpush.xpose.msra.mxu0 0.0
    %598 = vmatpush.xpose.msra.mxu0 0.0
    %599 = vmatpush.xpose.msra.mxu0 0.0
    %600 = vmatpush.xpose.msra.mxu0 0.0
    %601 = vmatpush.xpose.msra.mxu0 %v585
    %602 = vmatpush.xpose.msra.mxu0 %v583
    %603 = vmatmul.f32.gmra.mxu0 %v579
    %v604 = vpop.f32.mrf.mxu0
    %v605 = vadd.f32 0.0, %v604
    %606 = vmatmul.f32.gmra.mxu0 %v581
    %v607 = vpop.f32.mrf.mxu0
    %v608 = vadd.f32 0.0, %v607
    %609 = vdwg.mxu0
    %v610 = vsel %vm516, %v237, 0
    %v612 = vsel %vm516, %v240, 0
    %v614 = vsel %vm516, %v278, 0
    %v616 = vsel %vm516, %v281, 0
    %618 = vmatpush.xpose.msra.mxu0 0.0
    %619 = vmatpush.xpose.msra.mxu0 0.0
    %620 = vmatpush.xpose.msra.mxu0 0.0
    %621 = vmatpush.xpose.msra.mxu0 0.0
    %622 = vmatpush.xpose.msra.mxu0 0.0
    %623 = vmatpush.xpose.msra.mxu0 0.0
    %624 = vmatpush.xpose.msra.mxu0 0.0
    %625 = vmatpush.xpose.msra.mxu0 0.0
    %626 = vmatpush.xpose.msra.mxu0 0.0
    %627 = vmatpush.xpose.msra.mxu0 0.0
    %628 = vmatpush.xpose.msra.mxu0 0.0
    %629 = vmatpush.xpose.msra.mxu0 0.0
    %630 = vmatpush.xpose.msra.mxu0 0.0
    %631 = vmatpush.xpose.msra.mxu0 0.0
    %632 = vmatpush.xpose.msra.mxu0 %v616
    %633 = vmatpush.xpose.msra.mxu0 %v614
    %634 = vmatmul.f32.gmra.mxu0 %v610
    %v635 = vpop.f32.mrf.mxu0
    %v636 = vadd.f32 0.0, %v635
    %637 = vmatmul.f32.gmra.mxu0 %v612
    %v638 = vpop.f32.mrf.mxu0
    %v639 = vadd.f32 0.0, %v638
    %640 = vdwg.mxu0
    %v641 = vsel %vm516, %v333, 0
    %v643 = vsel %vm516, %v335, 0
    %v645 = vsel %vm516, %v389, 0
    %v647 = vsel %vm516, %v391, 0
    %649 = vmatpush.xpose.msra.mxu0 0.0
    %650 = vmatpush.xpose.msra.mxu0 0.0
    %651 = vmatpush.xpose.msra.mxu0 0.0
    %652 = vmatpush.xpose.msra.mxu0 0.0
    %653 = vmatpush.xpose.msra.mxu0 0.0
    %654 = vmatpush.xpose.msra.mxu0 0.0
    %655 = vmatpush.xpose.msra.mxu0 0.0
    %656 = vmatpush.xpose.msra.mxu0 0.0
    %657 = vmatpush.xpose.msra.mxu0 0.0
    %658 = vmatpush.xpose.msra.mxu0 0.0
    %659 = vmatpush.xpose.msra.mxu0 0.0
    %660 = vmatpush.xpose.msra.mxu0 0.0
    %661 = vmatpush.xpose.msra.mxu0 0.0
    %662 = vmatpush.xpose.msra.mxu0 0.0
    %663 = vmatpush.xpose.msra.mxu0 %v647
    %664 = vmatpush.xpose.msra.mxu0 %v645
    %665 = vmatmul.f32.gmra.mxu0 %v641
    %v666 = vpop.f32.mrf.mxu0
    %v667 = vadd.f32 0.0, %v666
    %668 = vmatmul.f32.gmra.mxu0 %v643
    %v669 = vpop.f32.mrf.mxu0
    %v670 = vadd.f32 0.0, %v669
    %671 = vdwg.mxu0
    %v672 = vsel %vm516, %v337, 0
    %v674 = vsel %vm516, %v339, 0
    %v676 = vsel %vm516, %v393, 0
    %v678 = vsel %vm516, %v395, 0
    %680 = vmatpush.xpose.msra.mxu0 0.0
    %681 = vmatpush.xpose.msra.mxu0 0.0
    %682 = vmatpush.xpose.msra.mxu0 0.0
    %683 = vmatpush.xpose.msra.mxu0 0.0
    %684 = vmatpush.xpose.msra.mxu0 0.0
    %685 = vmatpush.xpose.msra.mxu0 0.0
    %686 = vmatpush.xpose.msra.mxu0 0.0
    %687 = vmatpush.xpose.msra.mxu0 0.0
    %688 = vmatpush.xpose.msra.mxu0 0.0
    %689 = vmatpush.xpose.msra.mxu0 0.0
    %690 = vmatpush.xpose.msra.mxu0 0.0
    %691 = vmatpush.xpose.msra.mxu0 0.0
    %692 = vmatpush.xpose.msra.mxu0 0.0
    %693 = vmatpush.xpose.msra.mxu0 0.0
    %694 = vmatpush.xpose.msra.mxu0 %v678
    %695 = vmatpush.xpose.msra.mxu0 %v676
    %696 = vmatmul.f32.gmra.mxu0 %v672
    %v697 = vpop.f32.mrf.mxu0
    %v698 = vadd.f32 0.0, %v697
    %699 = vmatmul.f32.gmra.mxu0 %v674
    %v700 = vpop.f32.mrf.mxu0
    %v701 = vadd.f32 0.0, %v700
    %702 = vdwg.mxu0
    %v703 = vsel %vm516, %v341, 0
    %v705 = vsel %vm516, %v343, 0
    %v707 = vsel %vm516, %v397, 0
    %v709 = vsel %vm516, %v399, 0
    %711 = vmatpush.xpose.msra.mxu0 0.0
    %712 = vmatpush.xpose.msra.mxu0 0.0
    %713 = vmatpush.xpose.msra.mxu0 0.0
    %714 = vmatpush.xpose.msra.mxu0 0.0
    %715 = vmatpush.xpose.msra.mxu0 0.0
    %716 = vmatpush.xpose.msra.mxu0 0.0
    %717 = vmatpush.xpose.msra.mxu0 0.0
    %718 = vmatpush.xpose.msra.mxu0 0.0
    %719 = vmatpush.xpose.msra.mxu0 0.0
    %720 = vmatpush.xpose.msra.mxu0 0.0
    %721 = vmatpush.xpose.msra.mxu0 0.0
    %722 = vmatpush.xpose.msra.mxu0 0.0
    %723 = vmatpush.xpose.msra.mxu0 0.0
    %724 = vmatpush.xpose.msra.mxu0 0.0
    %725 = vmatpush.xpose.msra.mxu0 %v709
    %726 = vmatpush.xpose.msra.mxu0 %v707
    %727 = vmatmul.f32.gmra.mxu0 %v703
    %v728 = vpop.f32.mrf.mxu0
    %v729 = vadd.f32 0.0, %v728
    %730 = vmatmul.f32.gmra.mxu0 %v705
    %v731 = vpop.f32.mrf.mxu0
    %v732 = vadd.f32 0.0, %v731
    %733 = vdwg.mxu0
    %v734 = vsel %vm516, %v345, 0
    %v736 = vsel %vm516, %v347, 0
    %v738 = vsel %vm516, %v401, 0
    %v740 = vsel %vm516, %v403, 0
    %742 = vmatpush.xpose.msra.mxu0 0.0
    %743 = vmatpush.xpose.msra.mxu0 0.0
    %744 = vmatpush.xpose.msra.mxu0 0.0
    %745 = vmatpush.xpose.msra.mxu0 0.0
    %746 = vmatpush.xpose.msra.mxu0 0.0
    %747 = vmatpush.xpose.msra.mxu0 0.0
    %748 = vmatpush.xpose.msra.mxu0 0.0
    %749 = vmatpush.xpose.msra.mxu0 0.0
    %750 = vmatpush.xpose.msra.mxu0 0.0
    %751 = vmatpush.xpose.msra.mxu0 0.0
    %752 = vmatpush.xpose.msra.mxu0 0.0
    %753 = vmatpush.xpose.msra.mxu0 0.0
    %754 = vmatpush.xpose.msra.mxu0 0.0
    %755 = vmatpush.xpose.msra.mxu0 0.0
    %756 = vmatpush.xpose.msra.mxu0 %v740
    %757 = vmatpush.xpose.msra.mxu0 %v738
    %758 = vmatmul.f32.gmra.mxu0 %v734
    %v759 = vpop.f32.mrf.mxu0
    %v760 = vadd.f32 0.0, %v759
    %761 = vmatmul.f32.gmra.mxu0 %v736
    %v762 = vpop.f32.mrf.mxu0
    %v763 = vadd.f32 0.0, %v762
    %764 = vdwg.mxu0
    %v765 = vsel %vm516, %v349, 0
    %v767 = vsel %vm516, %v351, 0
    %v769 = vsel %vm516, %v405, 0
    %v771 = vsel %vm516, %v407, 0
    %773 = vmatpush.xpose.msra.mxu0 0.0
    %774 = vmatpush.xpose.msra.mxu0 0.0
    %775 = vmatpush.xpose.msra.mxu0 0.0
    %776 = vmatpush.xpose.msra.mxu0 0.0
    %777 = vmatpush.xpose.msra.mxu0 0.0
    %778 = vmatpush.xpose.msra.mxu0 0.0
    %779 = vmatpush.xpose.msra.mxu0 0.0
    %780 = vmatpush.xpose.msra.mxu0 0.0
    %781 = vmatpush.xpose.msra.mxu0 0.0
    %782 = vmatpush.xpose.msra.mxu0 0.0
    %783 = vmatpush.xpose.msra.mxu0 0.0
    %784 = vmatpush.xpose.msra.mxu0 0.0
    %785 = vmatpush.xpose.msra.mxu0 0.0
    %786 = vmatpush.xpose.msra.mxu0 0.0
    %787 = vmatpush.xpose.msra.mxu0 %v771
    %788 = vmatpush.xpose.msra.mxu0 %v769
    %789 = vmatmul.f32.gmra.mxu0 %v765
    %v790 = vpop.f32.mrf.mxu0
    %v791 = vadd.f32 0.0, %v790
    %792 = vmatmul.f32.gmra.mxu0 %v767
    %v793 = vpop.f32.mrf.mxu0
    %v794 = vadd.f32 0.0, %v793
    %795 = vdwg.mxu0
    %v796 = vsel %vm516, %v353, 0
    %v798 = vsel %vm516, %v355, 0
    %v800 = vsel %vm516, %v409, 0
    %v802 = vsel %vm516, %v411, 0
    %804 = vmatpush.xpose.msra.mxu0 0.0
    %805 = vmatpush.xpose.msra.mxu0 0.0
    %806 = vmatpush.xpose.msra.mxu0 0.0
    %807 = vmatpush.xpose.msra.mxu0 0.0
    %808 = vmatpush.xpose.msra.mxu0 0.0
    %809 = vmatpush.xpose.msra.mxu0 0.0
    %810 = vmatpush.xpose.msra.mxu0 0.0
    %811 = vmatpush.xpose.msra.mxu0 0.0
    %812 = vmatpush.xpose.msra.mxu0 0.0
    %813 = vmatpush.xpose.msra.mxu0 0.0
    %814 = vmatpush.xpose.msra.mxu0 0.0
    %815 = vmatpush.xpose.msra.mxu0 0.0
    %816 = vmatpush.xpose.msra.mxu0 0.0
    %817 = vmatpush.xpose.msra.mxu0 0.0
    %818 = vmatpush.xpose.msra.mxu0 %v802
    %819 = vmatpush.xpose.msra.mxu0 %v800
    %820 = vmatmul.f32.gmra.mxu0 %v796
    %v821 = vpop.f32.mrf.mxu0
    %v822 = vadd.f32 0.0, %v821
    %823 = vmatmul.f32.gmra.mxu0 %v798
    %v824 = vpop.f32.mrf.mxu0
    %v825 = vadd.f32 0.0, %v824
    %826 = vdwg.mxu0
    %v827 = vsel %vm516, %v357, 0
    %v829 = vsel %vm516, %v359, 0
    %v831 = vsel %vm516, %v413, 0
    %v833 = vsel %vm516, %v415, 0
    %835 = vmatpush.xpose.msra.mxu0 0.0
    %836 = vmatpush.xpose.msra.mxu0 0.0
    %837 = vmatpush.xpose.msra.mxu0 0.0
    %838 = vmatpush.xpose.msra.mxu0 0.0
    %839 = vmatpush.xpose.msra.mxu0 0.0
    %840 = vmatpush.xpose.msra.mxu0 0.0
    %841 = vmatpush.xpose.msra.mxu0 0.0
    %842 = vmatpush.xpose.msra.mxu0 0.0
    %843 = vmatpush.xpose.msra.mxu0 0.0
    %844 = vmatpush.xpose.msra.mxu0 0.0
    %845 = vmatpush.xpose.msra.mxu0 0.0
    %846 = vmatpush.xpose.msra.mxu0 0.0
    %847 = vmatpush.xpose.msra.mxu0 0.0
    %848 = vmatpush.xpose.msra.mxu0 0.0
    %849 = vmatpush.xpose.msra.mxu0 %v833
    %850 = vmatpush.xpose.msra.mxu0 %v831
    %851 = vmatmul.f32.gmra.mxu0 %v827
    %v852 = vpop.f32.mrf.mxu0
    %v853 = vadd.f32 0.0, %v852
    %854 = vmatmul.f32.gmra.mxu0 %v829
    %v855 = vpop.f32.mrf.mxu0
    %v856 = vadd.f32 0.0, %v855
    %857 = vdwg.mxu0
    %v858 = vsel %vm516, %v361, 0
    %v860 = vsel %vm516, %v363, 0
    %v862 = vsel %vm516, %v417, 0
    %v864 = vsel %vm516, %v419, 0
    %866 = vmatpush.xpose.msra.mxu0 0.0
    %867 = vmatpush.xpose.msra.mxu0 0.0
    %868 = vmatpush.xpose.msra.mxu0 0.0
    %869 = vmatpush.xpose.msra.mxu0 0.0
    %870 = vmatpush.xpose.msra.mxu0 0.0
    %871 = vmatpush.xpose.msra.mxu0 0.0
    %872 = vmatpush.xpose.msra.mxu0 0.0
    %873 = vmatpush.xpose.msra.mxu0 0.0
    %874 = vmatpush.xpose.msra.mxu0 0.0
    %875 = vmatpush.xpose.msra.mxu0 0.0
    %876 = vmatpush.xpose.msra.mxu0 0.0
    %877 = vmatpush.xpose.msra.mxu0 0.0
    %878 = vmatpush.xpose.msra.mxu0 0.0
    %879 = vmatpush.xpose.msra.mxu0 0.0
    %880 = vmatpush.xpose.msra.mxu0 %v864
    %881 = vmatpush.xpose.msra.mxu0 %v862
    %882 = vmatmul.f32.gmra.mxu0 %v858
    %v883 = vpop.f32.mrf.mxu0
    %v884 = vadd.f32 0.0, %v883
    %885 = vmatmul.f32.gmra.mxu0 %v860
    %v886 = vpop.f32.mrf.mxu0
    %v887 = vadd.f32 0.0, %v886
    %888 = vdwg.mxu0
    %v889 = vsel %vm516, %v365, 0
    %v891 = vsel %vm516, %v367, 0
    %v893 = vsel %vm516, %v421, 0
    %v895 = vsel %vm516, %v423, 0
    %897 = vmatpush.xpose.msra.mxu0 0.0
    %898 = vmatpush.xpose.msra.mxu0 0.0
    %899 = vmatpush.xpose.msra.mxu0 0.0
    %900 = vmatpush.xpose.msra.mxu0 0.0
    %901 = vmatpush.xpose.msra.mxu0 0.0
    %902 = vmatpush.xpose.msra.mxu0 0.0
    %903 = vmatpush.xpose.msra.mxu0 0.0
    %904 = vmatpush.xpose.msra.mxu0 0.0
    %905 = vmatpush.xpose.msra.mxu0 0.0
    %906 = vmatpush.xpose.msra.mxu0 0.0
    %907 = vmatpush.xpose.msra.mxu0 0.0
    %908 = vmatpush.xpose.msra.mxu0 0.0
    %909 = vmatpush.xpose.msra.mxu0 0.0
    %910 = vmatpush.xpose.msra.mxu0 0.0
    %911 = vmatpush.xpose.msra.mxu0 %v895
    %912 = vmatpush.xpose.msra.mxu0 %v893
    %913 = vmatmul.f32.gmra.mxu0 %v889
    %v914 = vpop.f32.mrf.mxu0
    %v915 = vadd.f32 0.0, %v914
    %916 = vmatmul.f32.gmra.mxu0 %v891
    %v917 = vpop.f32.mrf.mxu0
    %v918 = vadd.f32 0.0, %v917
    %919 = vdwg.mxu0
    %v920 = vsel %vm516, %v369, 0
    %v922 = vsel %vm516, %v371, 0
    %v924 = vsel %vm516, %v425, 0
    %v926 = vsel %vm516, %v427, 0
    %928 = vmatpush.xpose.msra.mxu0 0.0
    %929 = vmatpush.xpose.msra.mxu0 0.0
    %930 = vmatpush.xpose.msra.mxu0 0.0
    %931 = vmatpush.xpose.msra.mxu0 0.0
    %932 = vmatpush.xpose.msra.mxu0 0.0
    %933 = vmatpush.xpose.msra.mxu0 0.0
    %934 = vmatpush.xpose.msra.mxu0 0.0
    %935 = vmatpush.xpose.msra.mxu0 0.0
    %936 = vmatpush.xpose.msra.mxu0 0.0
    %937 = vmatpush.xpose.msra.mxu0 0.0
    %938 = vmatpush.xpose.msra.mxu0 0.0
    %939 = vmatpush.xpose.msra.mxu0 0.0
    %940 = vmatpush.xpose.msra.mxu0 0.0
    %941 = vmatpush.xpose.msra.mxu0 0.0
    %942 = vmatpush.xpose.msra.mxu0 %v926
    %943 = vmatpush.xpose.msra.mxu0 %v924
    %944 = vmatmul.f32.gmra.mxu0 %v920
    %v945 = vpop.f32.mrf.mxu0
    %v946 = vadd.f32 0.0, %v945
    %947 = vmatmul.f32.gmra.mxu0 %v922
    %v948 = vpop.f32.mrf.mxu0
    %v949 = vadd.f32 0.0, %v948
    %950 = vdwg.mxu0
    %v951 = vsel %vm516, %v373, 0
    %v953 = vsel %vm516, %v375, 0
    %v955 = vsel %vm516, %v429, 0
    %v957 = vsel %vm516, %v431, 0
    %959 = vmatpush.xpose.msra.mxu0 0.0
    %960 = vmatpush.xpose.msra.mxu0 0.0
    %961 = vmatpush.xpose.msra.mxu0 0.0
    %962 = vmatpush.xpose.msra.mxu0 0.0
    %963 = vmatpush.xpose.msra.mxu0 0.0
    %964 = vmatpush.xpose.msra.mxu0 0.0
    %965 = vmatpush.xpose.msra.mxu0 0.0
    %966 = vmatpush.xpose.msra.mxu0 0.0
    %967 = vmatpush.xpose.msra.mxu0 0.0
    %968 = vmatpush.xpose.msra.mxu0 0.0
    %969 = vmatpush.xpose.msra.mxu0 0.0
    %970 = vmatpush.xpose.msra.mxu0 0.0
    %971 = vmatpush.xpose.msra.mxu0 0.0
    %972 = vmatpush.xpose.msra.mxu0 0.0
    %973 = vmatpush.xpose.msra.mxu0 %v957
    %974 = vmatpush.xpose.msra.mxu0 %v955
    %975 = vmatmul.f32.gmra.mxu0 %v951
    %v976 = vpop.f32.mrf.mxu0
    %v977 = vadd.f32 0.0, %v976
    %978 = vmatmul.f32.gmra.mxu0 %v953
    %v979 = vpop.f32.mrf.mxu0
    %v980 = vadd.f32 0.0, %v979
    %981 = vdwg.mxu0
    %v982 = vsel %vm516, %v377, 0
    %v984 = vsel %vm516, %v379, 0
    %v986 = vsel %vm516, %v433, 0
    %v988 = vsel %vm516, %v435, 0
    %990 = vmatpush.xpose.msra.mxu0 0.0
    %991 = vmatpush.xpose.msra.mxu0 0.0
    %992 = vmatpush.xpose.msra.mxu0 0.0
    %993 = vmatpush.xpose.msra.mxu0 0.0
    %994 = vmatpush.xpose.msra.mxu0 0.0
    %995 = vmatpush.xpose.msra.mxu0 0.0
    %996 = vmatpush.xpose.msra.mxu0 0.0
    %997 = vmatpush.xpose.msra.mxu0 0.0
    %998 = vmatpush.xpose.msra.mxu0 0.0
    %999 = vmatpush.xpose.msra.mxu0 0.0
    %1000 = vmatpush.xpose.msra.mxu0 0.0
    %1001 = vmatpush.xpose.msra.mxu0 0.0
    %1002 = vmatpush.xpose.msra.mxu0 0.0
    %1003 = vmatpush.xpose.msra.mxu0 0.0
    %1004 = vmatpush.xpose.msra.mxu0 %v988
    %1005 = vmatpush.xpose.msra.mxu0 %v986
    %1006 = vmatmul.f32.gmra.mxu0 %v982
    %v1007 = vpop.f32.mrf.mxu0
    %v1008 = vadd.f32 0.0, %v1007
    %1009 = vmatmul.f32.gmra.mxu0 %v984
    %v1010 = vpop.f32.mrf.mxu0
    %v1011 = vadd.f32 0.0, %v1010
    %1012 = vdwg.mxu0
    %vm1013 = vcmask 130048
    %v1014 = vsel %vm1013, %v543, -inf
    %1015 = vmax.xlane.f32.xlu0 %v1014
    %v1016 = vpop.xlane.xlu0 %1015
    %v1017 = vsel %vm1013, %v546, -inf
    %1018 = vmax.xlane.f32.xlu0 %v1017
    %v1019 = vpop.xlane.xlu0 %1018
    %v1020 = vsel %vm1013, %v574, -inf
    %1021 = vmax.xlane.f32.xlu0 %v1020
    %v1022 = vpop.xlane.xlu0 %1021
    %v1023 = vsel %vm1013, %v577, -inf
    %1024 = vmax.xlane.f32.xlu0 %v1023
    %v1025 = vpop.xlane.xlu0 %1024
    %v1026 = vsel %vm1013, %v605, -inf
    %1027 = vmax.xlane.f32.xlu0 %v1026
    %v1028 = vpop.xlane.xlu0 %1027
    %v1029 = vsel %vm1013, %v608, -inf
    %1030 = vmax.xlane.f32.xlu0 %v1029
    %v1031 = vpop.xlane.xlu0 %1030
    %v1032 = vsel %vm1013, %v636, -inf
    %1033 = vmax.xlane.f32.xlu0 %v1032
    %v1034 = vpop.xlane.xlu0 %1033
    %v1035 = vsel %vm1013, %v639, -inf
    %1036 = vmax.xlane.f32.xlu0 %v1035
    %v1037 = vpop.xlane.xlu0 %1036
    %v1038 = vsel %vm1013, %v667, -inf
    %1039 = vmax.xlane.f32.xlu0 %v1038
    %v1040 = vpop.xlane.xlu0 %1039
    %v1041 = vsel %vm1013, %v670, -inf
    %1042 = vmax.xlane.f32.xlu0 %v1041
    %v1043 = vpop.xlane.xlu0 %1042
    %v1044 = vsel %vm1013, %v698, -inf
    %1045 = vmax.xlane.f32.xlu0 %v1044
    %v1046 = vpop.xlane.xlu0 %1045
    %v1047 = vsel %vm1013, %v701, -inf
    %1048 = vmax.xlane.f32.xlu0 %v1047
    %v1049 = vpop.xlane.xlu0 %1048
    %v1050 = vsel %vm1013, %v729, -inf
    %1051 = vmax.xlane.f32.xlu0 %v1050
    %v1052 = vpop.xlane.xlu0 %1051
    %v1053 = vsel %vm1013, %v732, -inf
    %1054 = vmax.xlane.f32.xlu0 %v1053
    %v1055 = vpop.xlane.xlu0 %1054
    %v1056 = vsel %vm1013, %v760, -inf
    %1057 = vmax.xlane.f32.xlu0 %v1056
    %v1058 = vpop.xlane.xlu0 %1057
    %v1059 = vsel %vm1013, %v763, -inf
    %1060 = vmax.xlane.f32.xlu0 %v1059
    %v1061 = vpop.xlane.xlu0 %1060
    %v1062 = vsel %vm1013, %v791, -inf
    %1063 = vmax.xlane.f32.xlu0 %v1062
    %v1064 = vpop.xlane.xlu0 %1063
    %v1065 = vsel %vm1013, %v794, -inf
    %1066 = vmax.xlane.f32.xlu0 %v1065
    %v1067 = vpop.xlane.xlu0 %1066
    %v1068 = vsel %vm1013, %v822, -inf
    %1069 = vmax.xlane.f32.xlu0 %v1068
    %v1070 = vpop.xlane.xlu0 %1069
    %v1071 = vsel %vm1013, %v825, -inf
    %1072 = vmax.xlane.f32.xlu0 %v1071
    %v1073 = vpop.xlane.xlu0 %1072
    %v1074 = vsel %vm1013, %v853, -inf
    %1075 = vmax.xlane.f32.xlu0 %v1074
    %v1076 = vpop.xlane.xlu0 %1075
    %v1077 = vsel %vm1013, %v856, -inf
    %1078 = vmax.xlane.f32.xlu0 %v1077
    %v1079 = vpop.xlane.xlu0 %1078
    %v1080 = vsel %vm1013, %v884, -inf
    %1081 = vmax.xlane.f32.xlu0 %v1080
    %v1082 = vpop.xlane.xlu0 %1081
    %v1083 = vsel %vm1013, %v887, -inf
    %1084 = vmax.xlane.f32.xlu0 %v1083
    %v1085 = vpop.xlane.xlu0 %1084
    %v1086 = vsel %vm1013, %v915, -inf
    %1087 = vmax.xlane.f32.xlu0 %v1086
    %v1088 = vpop.xlane.xlu0 %1087
    %v1089 = vsel %vm1013, %v918, -inf
    %1090 = vmax.xlane.f32.xlu0 %v1089
    %v1091 = vpop.xlane.xlu0 %1090
    %v1092 = vsel %vm1013, %v946, -inf
    %1093 = vmax.xlane.f32.xlu0 %v1092
    %v1094 = vpop.xlane.xlu0 %1093
    %v1095 = vsel %vm1013, %v949, -inf
    %1096 = vmax.xlane.f32.xlu0 %v1095
    %v1097 = vpop.xlane.xlu0 %1096
    %v1098 = vsel %vm1013, %v977, -inf
    %1099 = vmax.xlane.f32.xlu0 %v1098
    %v1100 = vpop.xlane.xlu0 %1099
    %v1101 = vsel %vm1013, %v980, -inf
    %1102 = vmax.xlane.f32.xlu0 %v1101
    %v1103 = vpop.xlane.xlu0 %1102
    %v1104 = vsel %vm1013, %v1008, -inf
    %1105 = vmax.xlane.f32.xlu0 %v1104
    %v1106 = vpop.xlane.xlu0 %1105
    %v1107 = vsel %vm1013, %v1011, -inf
    %1108 = vmax.xlane.f32.xlu0 %v1107
    %v1109 = vpop.xlane.xlu0 %1108
    %v1110 = vsub.f32 %v543, %v1016
    %v1111 = vsub.f32 %v546, %v1019
    %v1112 = vsub.f32 %v574, %v1022
    %v1113 = vsub.f32 %v577, %v1025
    %v1114 = vsub.f32 %v605, %v1028
    %v1115 = vsub.f32 %v608, %v1031
    %v1116 = vsub.f32 %v636, %v1034
    %v1117 = vsub.f32 %v639, %v1037
    %v1118 = vsub.f32 %v667, %v1040
    %v1119 = vsub.f32 %v670, %v1043
    %v1120 = vsub.f32 %v698, %v1046
    %v1121 = vsub.f32 %v701, %v1049
    %v1122 = vsub.f32 %v729, %v1052
    %v1123 = vsub.f32 %v732, %v1055
    %v1124 = vsub.f32 %v760, %v1058
    %v1125 = vsub.f32 %v763, %v1061
    %v1126 = vsub.f32 %v791, %v1064
    %v1127 = vsub.f32 %v794, %v1067
    %v1128 = vsub.f32 %v822, %v1070
    %v1129 = vsub.f32 %v825, %v1073
    %v1130 = vsub.f32 %v853, %v1076
    %v1131 = vsub.f32 %v856, %v1079
    %v1132 = vsub.f32 %v884, %v1082
    %v1133 = vsub.f32 %v887, %v1085
    %v1134 = vsub.f32 %v915, %v1088
    %v1135 = vsub.f32 %v918, %v1091
    %v1136 = vsub.f32 %v946, %v1094
    %v1137 = vsub.f32 %v949, %v1097
    %v1138 = vsub.f32 %v977, %v1100
    %v1139 = vsub.f32 %v980, %v1103
    %v1140 = vsub.f32 %v1008, %v1106
    %v1141 = vsub.f32 %v1011, %v1109
    %v1142 = vmul.f32 %v1110, 1.442695
    %v1143 = vpow.pop %v1142
    %v1144 = vmul.f32 %v1111, 1.442695
    %v1145 = vpow.pop %v1144
    %v1146 = vmul.f32 %v1112, 1.442695
    %v1147 = vpow.pop %v1146
    %v1148 = vmul.f32 %v1113, 1.442695
    %v1149 = vpow.pop %v1148
    %v1150 = vmul.f32 %v1114, 1.442695
    %v1151 = vpow.pop %v1150
    %v1152 = vmul.f32 %v1115, 1.442695
    %v1153 = vpow.pop %v1152
    %v1154 = vmul.f32 %v1116, 1.442695
    %v1155 = vpow.pop %v1154
    %v1156 = vmul.f32 %v1117, 1.442695
    %v1157 = vpow.pop %v1156
    %v1158 = vmul.f32 %v1118, 1.442695
    %v1159 = vpow.pop %v1158
    %v1160 = vmul.f32 %v1119, 1.442695
    %v1161 = vpow.pop %v1160
    %v1162 = vmul.f32 %v1120, 1.442695
    %v1163 = vpow.pop %v1162
    %v1164 = vmul.f32 %v1121, 1.442695
    %v1165 = vpow.pop %v1164
    %v1166 = vmul.f32 %v1122, 1.442695
    %v1167 = vpow.pop %v1166
    %v1168 = vmul.f32 %v1123, 1.442695
    %v1169 = vpow.pop %v1168
    %v1170 = vmul.f32 %v1124, 1.442695
    %v1171 = vpow.pop %v1170
    %v1172 = vmul.f32 %v1125, 1.442695
    %v1173 = vpow.pop %v1172
    %v1174 = vmul.f32 %v1126, 1.442695
    %v1175 = vpow.pop %v1174
    %v1176 = vmul.f32 %v1127, 1.442695
    %v1177 = vpow.pop %v1176
    %v1178 = vmul.f32 %v1128, 1.442695
    %v1179 = vpow.pop %v1178
    %v1180 = vmul.f32 %v1129, 1.442695
    %v1181 = vpow.pop %v1180
    %v1182 = vmul.f32 %v1130, 1.442695
    %v1183 = vpow.pop %v1182
    %v1184 = vmul.f32 %v1131, 1.442695
    %v1185 = vpow.pop %v1184
    %v1186 = vmul.f32 %v1132, 1.442695
    %v1187 = vpow.pop %v1186
    %v1188 = vmul.f32 %v1133, 1.442695
    %v1189 = vpow.pop %v1188
    %v1190 = vmul.f32 %v1134, 1.442695
    %v1191 = vpow.pop %v1190
    %v1192 = vmul.f32 %v1135, 1.442695
    %v1193 = vpow.pop %v1192
    %v1194 = vmul.f32 %v1136, 1.442695
    %v1195 = vpow.pop %v1194
    %v1196 = vmul.f32 %v1137, 1.442695
    %v1197 = vpow.pop %v1196
    %v1198 = vmul.f32 %v1138, 1.442695
    %v1199 = vpow.pop %v1198
    %v1200 = vmul.f32 %v1139, 1.442695
    %v1201 = vpow.pop %v1200
    %v1202 = vmul.f32 %v1140, 1.442695
    %v1203 = vpow.pop %v1202
    %v1204 = vmul.f32 %v1141, 1.442695
    %v1205 = vpow.pop %v1204
    %v1206 = vsel %vm1013, %v1143, 0.0
    %1207 = vadd.xlane.f32.xlu0 %v1206
    %v1208 = vpop.xlane.xlu0 %1207
    %v1209 = vsel %vm1013, %v1145, 0.0
    %1210 = vadd.xlane.f32.xlu0 %v1209
    %v1211 = vpop.xlane.xlu0 %1210
    %v1212 = vsel %vm1013, %v1147, 0.0
    %1213 = vadd.xlane.f32.xlu0 %v1212
    %v1214 = vpop.xlane.xlu0 %1213
    %v1215 = vsel %vm1013, %v1149, 0.0
    %1216 = vadd.xlane.f32.xlu0 %v1215
    %v1217 = vpop.xlane.xlu0 %1216
    %v1218 = vsel %vm1013, %v1151, 0.0
    %1219 = vadd.xlane.f32.xlu0 %v1218
    %v1220 = vpop.xlane.xlu0 %1219
    %v1221 = vsel %vm1013, %v1153, 0.0
    %1222 = vadd.xlane.f32.xlu0 %v1221
    %v1223 = vpop.xlane.xlu0 %1222
    %v1224 = vsel %vm1013, %v1155, 0.0
    %1225 = vadd.xlane.f32.xlu0 %v1224
    %v1226 = vpop.xlane.xlu0 %1225
    %v1227 = vsel %vm1013, %v1157, 0.0
    %1228 = vadd.xlane.f32.xlu0 %v1227
    %v1229 = vpop.xlane.xlu0 %1228
    %v1230 = vsel %vm1013, %v1159, 0.0
    %1231 = vadd.xlane.f32.xlu0 %v1230
    %v1232 = vpop.xlane.xlu0 %1231
    %v1233 = vsel %vm1013, %v1161, 0.0
    %1234 = vadd.xlane.f32.xlu0 %v1233
    %v1235 = vpop.xlane.xlu0 %1234
    %v1236 = vsel %vm1013, %v1163, 0.0
    %1237 = vadd.xlane.f32.xlu0 %v1236
    %v1238 = vpop.xlane.xlu0 %1237
    %v1239 = vsel %vm1013, %v1165, 0.0
    %1240 = vadd.xlane.f32.xlu0 %v1239
    %v1241 = vpop.xlane.xlu0 %1240
    %v1242 = vsel %vm1013, %v1167, 0.0
    %1243 = vadd.xlane.f32.xlu0 %v1242
    %v1244 = vpop.xlane.xlu0 %1243
    %v1245 = vsel %vm1013, %v1169, 0.0
    %1246 = vadd.xlane.f32.xlu0 %v1245
    %v1247 = vpop.xlane.xlu0 %1246
    %v1248 = vsel %vm1013, %v1171, 0.0
    %1249 = vadd.xlane.f32.xlu0 %v1248
    %v1250 = vpop.xlane.xlu0 %1249
    %v1251 = vsel %vm1013, %v1173, 0.0
    %1252 = vadd.xlane.f32.xlu0 %v1251
    %v1253 = vpop.xlane.xlu0 %1252
    %v1254 = vsel %vm1013, %v1175, 0.0
    %1255 = vadd.xlane.f32.xlu0 %v1254
    %v1256 = vpop.xlane.xlu0 %1255
    %v1257 = vsel %vm1013, %v1177, 0.0
    %1258 = vadd.xlane.f32.xlu0 %v1257
    %v1259 = vpop.xlane.xlu0 %1258
    %v1260 = vsel %vm1013, %v1179, 0.0
    %1261 = vadd.xlane.f32.xlu0 %v1260
    %v1262 = vpop.xlane.xlu0 %1261
    %v1263 = vsel %vm1013, %v1181, 0.0
    %1264 = vadd.xlane.f32.xlu0 %v1263
    %v1265 = vpop.xlane.xlu0 %1264
    %v1266 = vsel %vm1013, %v1183, 0.0
    %1267 = vadd.xlane.f32.xlu0 %v1266
    %v1268 = vpop.xlane.xlu0 %1267
    %v1269 = vsel %vm1013, %v1185, 0.0
    %1270 = vadd.xlane.f32.xlu0 %v1269
    %v1271 = vpop.xlane.xlu0 %1270
    %v1272 = vsel %vm1013, %v1187, 0.0
    %1273 = vadd.xlane.f32.xlu0 %v1272
    %v1274 = vpop.xlane.xlu0 %1273
    %v1275 = vsel %vm1013, %v1189, 0.0
    %1276 = vadd.xlane.f32.xlu0 %v1275
    %v1277 = vpop.xlane.xlu0 %1276
    %v1278 = vsel %vm1013, %v1191, 0.0
    %1279 = vadd.xlane.f32.xlu0 %v1278
    %v1280 = vpop.xlane.xlu0 %1279
    %v1281 = vsel %vm1013, %v1193, 0.0
    %1282 = vadd.xlane.f32.xlu0 %v1281
    %v1283 = vpop.xlane.xlu0 %1282
    %v1284 = vsel %vm1013, %v1195, 0.0
    %1285 = vadd.xlane.f32.xlu0 %v1284
    %v1286 = vpop.xlane.xlu0 %1285
    %v1287 = vsel %vm1013, %v1197, 0.0
    %1288 = vadd.xlane.f32.xlu0 %v1287
    %v1289 = vpop.xlane.xlu0 %1288
    %v1290 = vsel %vm1013, %v1199, 0.0
    %1291 = vadd.xlane.f32.xlu0 %v1290
    %v1292 = vpop.xlane.xlu0 %1291
    %v1293 = vsel %vm1013, %v1201, 0.0
    %1294 = vadd.xlane.f32.xlu0 %v1293
    %v1295 = vpop.xlane.xlu0 %1294
    %v1296 = vsel %vm1013, %v1203, 0.0
    %1297 = vadd.xlane.f32.xlu0 %v1296
    %v1298 = vpop.xlane.xlu0 %1297
    %v1299 = vsel %vm1013, %v1205, 0.0
    %1300 = vadd.xlane.f32.xlu0 %v1299
    %v1301 = vpop.xlane.xlu0 %1300
    %v1302 = vrcp.pop %v1208
    %v1303 = vmul.f32 %v1208, %v1302
    %v1304 = vsub.f32 1.0, %v1303
    %v1305 = vmul.f32 %v1302, %v1304
    %v1306 = vadd.f32 %v1302, %v1305
    %vm1307 = vweird.f32 %v1208
    %vm1308 = vweird.f32 %v1302
    %vm1309 = vmor %vm1307, %vm1308
    %v1310 = vsel %vm1309, %v1302, %v1306
    %v1311 = vand.u32 2147483647, %v1208
    %vm1312 = vcmp.eq.f32.partialorder %v1311, 8.507059e+37
    %v1313 = vand.u32 %v1208, 2147483648
    %v1314 = vor.u32 1.1754944e-38, %v1313
    %v1315 = vsel %vm1312, %v1314, %v1310
    %v1316 = vmul.f32 1.0, %v1315
    %v1317 = vrcp.pop %v1211
    %v1318 = vmul.f32 %v1211, %v1317
    %v1319 = vsub.f32 1.0, %v1318
    %v1320 = vmul.f32 %v1317, %v1319
    %v1321 = vadd.f32 %v1317, %v1320
    %vm1322 = vweird.f32 %v1211
    %vm1323 = vweird.f32 %v1317
    %vm1324 = vmor %vm1322, %vm1323
    %v1325 = vsel %vm1324, %v1317, %v1321
    %v1326 = vand.u32 2147483647, %v1211
    %vm1327 = vcmp.eq.f32.partialorder %v1326, 8.507059e+37
    %v1328 = vand.u32 %v1211, 2147483648
    %v1329 = vor.u32 1.1754944e-38, %v1328
    %v1330 = vsel %vm1327, %v1329, %v1325
    %v1331 = vmul.f32 1.0, %v1330
    %v1332 = vrcp.pop %v1214
    %v1333 = vmul.f32 %v1214, %v1332
    %v1334 = vsub.f32 1.0, %v1333
    %v1335 = vmul.f32 %v1332, %v1334
    %v1336 = vadd.f32 %v1332, %v1335
    %vm1337 = vweird.f32 %v1214
    %vm1338 = vweird.f32 %v1332
    %vm1339 = vmor %vm1337, %vm1338
    %v1340 = vsel %vm1339, %v1332, %v1336
    %v1341 = vand.u32 2147483647, %v1214
    %vm1342 = vcmp.eq.f32.partialorder %v1341, 8.507059e+37
    %v1343 = vand.u32 %v1214, 2147483648
    %v1344 = vor.u32 1.1754944e-38, %v1343
    %v1345 = vsel %vm1342, %v1344, %v1340
    %v1346 = vmul.f32 1.0, %v1345
    %v1347 = vrcp.pop %v1217
    %v1348 = vmul.f32 %v1217, %v1347
    %v1349 = vsub.f32 1.0, %v1348
    %v1350 = vmul.f32 %v1347, %v1349
    %v1351 = vadd.f32 %v1347, %v1350
    %vm1352 = vweird.f32 %v1217
    %vm1353 = vweird.f32 %v1347
    %vm1354 = vmor %vm1352, %vm1353
    %v1355 = vsel %vm1354, %v1347, %v1351
    %v1356 = vand.u32 2147483647, %v1217
    %vm1357 = vcmp.eq.f32.partialorder %v1356, 8.507059e+37
    %v1358 = vand.u32 %v1217, 2147483648
    %v1359 = vor.u32 1.1754944e-38, %v1358
    %v1360 = vsel %vm1357, %v1359, %v1355
    %v1361 = vmul.f32 1.0, %v1360
    %v1362 = vrcp.pop %v1220
    %v1363 = vmul.f32 %v1220, %v1362
    %v1364 = vsub.f32 1.0, %v1363
    %v1365 = vmul.f32 %v1362, %v1364
    %v1366 = vadd.f32 %v1362, %v1365
    %vm1367 = vweird.f32 %v1220
    %vm1368 = vweird.f32 %v1362
    %vm1369 = vmor %vm1367, %vm1368
    %v1370 = vsel %vm1369, %v1362, %v1366
    %v1371 = vand.u32 2147483647, %v1220
    %vm1372 = vcmp.eq.f32.partialorder %v1371, 8.507059e+37
    %v1373 = vand.u32 %v1220, 2147483648
    %v1374 = vor.u32 1.1754944e-38, %v1373
    %v1375 = vsel %vm1372, %v1374, %v1370
    %v1376 = vmul.f32 1.0, %v1375
    %v1377 = vrcp.pop %v1223
    %v1378 = vmul.f32 %v1223, %v1377
    %v1379 = vsub.f32 1.0, %v1378
    %v1380 = vmul.f32 %v1377, %v1379
    %v1381 = vadd.f32 %v1377, %v1380
    %vm1382 = vweird.f32 %v1223
    %vm1383 = vweird.f32 %v1377
    %vm1384 = vmor %vm1382, %vm1383
    %v1385 = vsel %vm1384, %v1377, %v1381
    %v1386 = vand.u32 2147483647, %v1223
    %vm1387 = vcmp.eq.f32.partialorder %v1386, 8.507059e+37
    %v1388 = vand.u32 %v1223, 2147483648
    %v1389 = vor.u32 1.1754944e-38, %v1388
    %v1390 = vsel %vm1387, %v1389, %v1385
    %v1391 = vmul.f32 1.0, %v1390
    %v1392 = vrcp.pop %v1226
    %v1393 = vmul.f32 %v1226, %v1392
    %v1394 = vsub.f32 1.0, %v1393
    %v1395 = vmul.f32 %v1392, %v1394
    %v1396 = vadd.f32 %v1392, %v1395
    %vm1397 = vweird.f32 %v1226
    %vm1398 = vweird.f32 %v1392
    %vm1399 = vmor %vm1397, %vm1398
    %v1400 = vsel %vm1399, %v1392, %v1396
    %v1401 = vand.u32 2147483647, %v1226
    %vm1402 = vcmp.eq.f32.partialorder %v1401, 8.507059e+37
    %v1403 = vand.u32 %v1226, 2147483648
    %v1404 = vor.u32 1.1754944e-38, %v1403
    %v1405 = vsel %vm1402, %v1404, %v1400
    %v1406 = vmul.f32 1.0, %v1405
    %v1407 = vrcp.pop %v1229
    %v1408 = vmul.f32 %v1229, %v1407
    %v1409 = vsub.f32 1.0, %v1408
    %v1410 = vmul.f32 %v1407, %v1409
    %v1411 = vadd.f32 %v1407, %v1410
    %vm1412 = vweird.f32 %v1229
    %vm1413 = vweird.f32 %v1407
    %vm1414 = vmor %vm1412, %vm1413
    %v1415 = vsel %vm1414, %v1407, %v1411
    %v1416 = vand.u32 2147483647, %v1229
    %vm1417 = vcmp.eq.f32.partialorder %v1416, 8.507059e+37
    %v1418 = vand.u32 %v1229, 2147483648
    %v1419 = vor.u32 1.1754944e-38, %v1418
    %v1420 = vsel %vm1417, %v1419, %v1415
    %v1421 = vmul.f32 1.0, %v1420
    %v1422 = vrcp.pop %v1232
    %v1423 = vmul.f32 %v1232, %v1422
    %v1424 = vsub.f32 1.0, %v1423
    %v1425 = vmul.f32 %v1422, %v1424
    %v1426 = vadd.f32 %v1422, %v1425
    %vm1427 = vweird.f32 %v1232
    %vm1428 = vweird.f32 %v1422
    %vm1429 = vmor %vm1427, %vm1428
    %v1430 = vsel %vm1429, %v1422, %v1426
    %v1431 = vand.u32 2147483647, %v1232
    %vm1432 = vcmp.eq.f32.partialorder %v1431, 8.507059e+37
    %v1433 = vand.u32 %v1232, 2147483648
    %v1434 = vor.u32 1.1754944e-38, %v1433
    %v1435 = vsel %vm1432, %v1434, %v1430
    %v1436 = vmul.f32 1.0, %v1435
    %v1437 = vrcp.pop %v1235
    %v1438 = vmul.f32 %v1235, %v1437
    %v1439 = vsub.f32 1.0, %v1438
    %v1440 = vmul.f32 %v1437, %v1439
    %v1441 = vadd.f32 %v1437, %v1440
    %vm1442 = vweird.f32 %v1235
    %vm1443 = vweird.f32 %v1437
    %vm1444 = vmor %vm1442, %vm1443
    %v1445 = vsel %vm1444, %v1437, %v1441
    %v1446 = vand.u32 2147483647, %v1235
    %vm1447 = vcmp.eq.f32.partialorder %v1446, 8.507059e+37
    %v1448 = vand.u32 %v1235, 2147483648
    %v1449 = vor.u32 1.1754944e-38, %v1448
    %v1450 = vsel %vm1447, %v1449, %v1445
    %v1451 = vmul.f32 1.0, %v1450
    %v1452 = vrcp.pop %v1238
    %v1453 = vmul.f32 %v1238, %v1452
    %v1454 = vsub.f32 1.0, %v1453
    %v1455 = vmul.f32 %v1452, %v1454
    %v1456 = vadd.f32 %v1452, %v1455
    %vm1457 = vweird.f32 %v1238
    %vm1458 = vweird.f32 %v1452
    %vm1459 = vmor %vm1457, %vm1458
    %v1460 = vsel %vm1459, %v1452, %v1456
    %v1461 = vand.u32 2147483647, %v1238
    %vm1462 = vcmp.eq.f32.partialorder %v1461, 8.507059e+37
    %v1463 = vand.u32 %v1238, 2147483648
    %v1464 = vor.u32 1.1754944e-38, %v1463
    %v1465 = vsel %vm1462, %v1464, %v1460
    %v1466 = vmul.f32 1.0, %v1465
    %v1467 = vrcp.pop %v1241
    %v1468 = vmul.f32 %v1241, %v1467
    %v1469 = vsub.f32 1.0, %v1468
    %v1470 = vmul.f32 %v1467, %v1469
    %v1471 = vadd.f32 %v1467, %v1470
    %vm1472 = vweird.f32 %v1241
    %vm1473 = vweird.f32 %v1467
    %vm1474 = vmor %vm1472, %vm1473
    %v1475 = vsel %vm1474, %v1467, %v1471
    %v1476 = vand.u32 2147483647, %v1241
    %vm1477 = vcmp.eq.f32.partialorder %v1476, 8.507059e+37
    %v1478 = vand.u32 %v1241, 2147483648
    %v1479 = vor.u32 1.1754944e-38, %v1478
    %v1480 = vsel %vm1477, %v1479, %v1475
    %v1481 = vmul.f32 1.0, %v1480
    %v1482 = vrcp.pop %v1244
    %v1483 = vmul.f32 %v1244, %v1482
    %v1484 = vsub.f32 1.0, %v1483
    %v1485 = vmul.f32 %v1482, %v1484
    %v1486 = vadd.f32 %v1482, %v1485
    %vm1487 = vweird.f32 %v1244
    %vm1488 = vweird.f32 %v1482
    %vm1489 = vmor %vm1487, %vm1488
    %v1490 = vsel %vm1489, %v1482, %v1486
    %v1491 = vand.u32 2147483647, %v1244
    %vm1492 = vcmp.eq.f32.partialorder %v1491, 8.507059e+37
    %v1493 = vand.u32 %v1244, 2147483648
    %v1494 = vor.u32 1.1754944e-38, %v1493
    %v1495 = vsel %vm1492, %v1494, %v1490
    %v1496 = vmul.f32 1.0, %v1495
    %v1497 = vrcp.pop %v1247
    %v1498 = vmul.f32 %v1247, %v1497
    %v1499 = vsub.f32 1.0, %v1498
    %v1500 = vmul.f32 %v1497, %v1499
    %v1501 = vadd.f32 %v1497, %v1500
    %vm1502 = vweird.f32 %v1247
    %vm1503 = vweird.f32 %v1497
    %vm1504 = vmor %vm1502, %vm1503
    %v1505 = vsel %vm1504, %v1497, %v1501
    %v1506 = vand.u32 2147483647, %v1247
    %vm1507 = vcmp.eq.f32.partialorder %v1506, 8.507059e+37
    %v1508 = vand.u32 %v1247, 2147483648
    %v1509 = vor.u32 1.1754944e-38, %v1508
    %v1510 = vsel %vm1507, %v1509, %v1505
    %v1511 = vmul.f32 1.0, %v1510
    %v1512 = vrcp.pop %v1250
    %v1513 = vmul.f32 %v1250, %v1512
    %v1514 = vsub.f32 1.0, %v1513
    %v1515 = vmul.f32 %v1512, %v1514
    %v1516 = vadd.f32 %v1512, %v1515
    %vm1517 = vweird.f32 %v1250
    %vm1518 = vweird.f32 %v1512
    %vm1519 = vmor %vm1517, %vm1518
    %v1520 = vsel %vm1519, %v1512, %v1516
    %v1521 = vand.u32 2147483647, %v1250
    %vm1522 = vcmp.eq.f32.partialorder %v1521, 8.507059e+37
    %v1523 = vand.u32 %v1250, 2147483648
    %v1524 = vor.u32 1.1754944e-38, %v1523
    %v1525 = vsel %vm1522, %v1524, %v1520
    %v1526 = vmul.f32 1.0, %v1525
    %v1527 = vrcp.pop %v1253
    %v1528 = vmul.f32 %v1253, %v1527
    %v1529 = vsub.f32 1.0, %v1528
    %v1530 = vmul.f32 %v1527, %v1529
    %v1531 = vadd.f32 %v1527, %v1530
    %vm1532 = vweird.f32 %v1253
    %vm1533 = vweird.f32 %v1527
    %vm1534 = vmor %vm1532, %vm1533
    %v1535 = vsel %vm1534, %v1527, %v1531
    %v1536 = vand.u32 2147483647, %v1253
    %vm1537 = vcmp.eq.f32.partialorder %v1536, 8.507059e+37
    %v1538 = vand.u32 %v1253, 2147483648
    %v1539 = vor.u32 1.1754944e-38, %v1538
    %v1540 = vsel %vm1537, %v1539, %v1535
    %v1541 = vmul.f32 1.0, %v1540
    %v1542 = vrcp.pop %v1256
    %v1543 = vmul.f32 %v1256, %v1542
    %v1544 = vsub.f32 1.0, %v1543
    %v1545 = vmul.f32 %v1542, %v1544
    %v1546 = vadd.f32 %v1542, %v1545
    %vm1547 = vweird.f32 %v1256
    %vm1548 = vweird.f32 %v1542
    %vm1549 = vmor %vm1547, %vm1548
    %v1550 = vsel %vm1549, %v1542, %v1546
    %v1551 = vand.u32 2147483647, %v1256
    %vm1552 = vcmp.eq.f32.partialorder %v1551, 8.507059e+37
    %v1553 = vand.u32 %v1256, 2147483648
    %v1554 = vor.u32 1.1754944e-38, %v1553
    %v1555 = vsel %vm1552, %v1554, %v1550
    %v1556 = vmul.f32 1.0, %v1555
    %v1557 = vrcp.pop %v1259
    %v1558 = vmul.f32 %v1259, %v1557
    %v1559 = vsub.f32 1.0, %v1558
    %v1560 = vmul.f32 %v1557, %v1559
    %v1561 = vadd.f32 %v1557, %v1560
    %vm1562 = vweird.f32 %v1259
    %vm1563 = vweird.f32 %v1557
    %vm1564 = vmor %vm1562, %vm1563
    %v1565 = vsel %vm1564, %v1557, %v1561
    %v1566 = vand.u32 2147483647, %v1259
    %vm1567 = vcmp.eq.f32.partialorder %v1566, 8.507059e+37
    %v1568 = vand.u32 %v1259, 2147483648
    %v1569 = vor.u32 1.1754944e-38, %v1568
    %v1570 = vsel %vm1567, %v1569, %v1565
    %v1571 = vmul.f32 1.0, %v1570
    %v1572 = vrcp.pop %v1262
    %v1573 = vmul.f32 %v1262, %v1572
    %v1574 = vsub.f32 1.0, %v1573
    %v1575 = vmul.f32 %v1572, %v1574
    %v1576 = vadd.f32 %v1572, %v1575
    %vm1577 = vweird.f32 %v1262
    %vm1578 = vweird.f32 %v1572
    %vm1579 = vmor %vm1577, %vm1578
    %v1580 = vsel %vm1579, %v1572, %v1576
    %v1581 = vand.u32 2147483647, %v1262
    %vm1582 = vcmp.eq.f32.partialorder %v1581, 8.507059e+37
    %v1583 = vand.u32 %v1262, 2147483648
    %v1584 = vor.u32 1.1754944e-38, %v1583
    %v1585 = vsel %vm1582, %v1584, %v1580
    %v1586 = vmul.f32 1.0, %v1585
    %v1587 = vrcp.pop %v1265
    %v1588 = vmul.f32 %v1265, %v1587
    %v1589 = vsub.f32 1.0, %v1588
    %v1590 = vmul.f32 %v1587, %v1589
    %v1591 = vadd.f32 %v1587, %v1590
    %vm1592 = vweird.f32 %v1265
    %vm1593 = vweird.f32 %v1587
    %vm1594 = vmor %vm1592, %vm1593
    %v1595 = vsel %vm1594, %v1587, %v1591
    %v1596 = vand.u32 2147483647, %v1265
    %vm1597 = vcmp.eq.f32.partialorder %v1596, 8.507059e+37
    %v1598 = vand.u32 %v1265, 2147483648
    %v1599 = vor.u32 1.1754944e-38, %v1598
    %v1600 = vsel %vm1597, %v1599, %v1595
    %v1601 = vmul.f32 1.0, %v1600
    %v1602 = vrcp.pop %v1268
    %v1603 = vmul.f32 %v1268, %v1602
    %v1604 = vsub.f32 1.0, %v1603
    %v1605 = vmul.f32 %v1602, %v1604
    %v1606 = vadd.f32 %v1602, %v1605
    %vm1607 = vweird.f32 %v1268
    %vm1608 = vweird.f32 %v1602
    %vm1609 = vmor %vm1607, %vm1608
    %v1610 = vsel %vm1609, %v1602, %v1606
    %v1611 = vand.u32 2147483647, %v1268
    %vm1612 = vcmp.eq.f32.partialorder %v1611, 8.507059e+37
    %v1613 = vand.u32 %v1268, 2147483648
    %v1614 = vor.u32 1.1754944e-38, %v1613
    %v1615 = vsel %vm1612, %v1614, %v1610
    %v1616 = vmul.f32 1.0, %v1615
    %v1617 = vrcp.pop %v1271
    %v1618 = vmul.f32 %v1271, %v1617
    %v1619 = vsub.f32 1.0, %v1618
    %v1620 = vmul.f32 %v1617, %v1619
    %v1621 = vadd.f32 %v1617, %v1620
    %vm1622 = vweird.f32 %v1271
    %vm1623 = vweird.f32 %v1617
    %vm1624 = vmor %vm1622, %vm1623
    %v1625 = vsel %vm1624, %v1617, %v1621
    %v1626 = vand.u32 2147483647, %v1271
    %vm1627 = vcmp.eq.f32.partialorder %v1626, 8.507059e+37
    %v1628 = vand.u32 %v1271, 2147483648
    %v1629 = vor.u32 1.1754944e-38, %v1628
    %v1630 = vsel %vm1627, %v1629, %v1625
    %v1631 = vmul.f32 1.0, %v1630
    %v1632 = vrcp.pop %v1274
    %v1633 = vmul.f32 %v1274, %v1632
    %v1634 = vsub.f32 1.0, %v1633
    %v1635 = vmul.f32 %v1632, %v1634
    %v1636 = vadd.f32 %v1632, %v1635
    %vm1637 = vweird.f32 %v1274
    %vm1638 = vweird.f32 %v1632
    %vm1639 = vmor %vm1637, %vm1638
    %v1640 = vsel %vm1639, %v1632, %v1636
    %v1641 = vand.u32 2147483647, %v1274
    %vm1642 = vcmp.eq.f32.partialorder %v1641, 8.507059e+37
    %v1643 = vand.u32 %v1274, 2147483648
    %v1644 = vor.u32 1.1754944e-38, %v1643
    %v1645 = vsel %vm1642, %v1644, %v1640
    %v1646 = vmul.f32 1.0, %v1645
    %v1647 = vrcp.pop %v1277
    %v1648 = vmul.f32 %v1277, %v1647
    %v1649 = vsub.f32 1.0, %v1648
    %v1650 = vmul.f32 %v1647, %v1649
    %v1651 = vadd.f32 %v1647, %v1650
    %vm1652 = vweird.f32 %v1277
    %vm1653 = vweird.f32 %v1647
    %vm1654 = vmor %vm1652, %vm1653
    %v1655 = vsel %vm1654, %v1647, %v1651
    %v1656 = vand.u32 2147483647, %v1277
    %vm1657 = vcmp.eq.f32.partialorder %v1656, 8.507059e+37
    %v1658 = vand.u32 %v1277, 2147483648
    %v1659 = vor.u32 1.1754944e-38, %v1658
    %v1660 = vsel %vm1657, %v1659, %v1655
    %v1661 = vmul.f32 1.0, %v1660
    %v1662 = vrcp.pop %v1280
    %v1663 = vmul.f32 %v1280, %v1662
    %v1664 = vsub.f32 1.0, %v1663
    %v1665 = vmul.f32 %v1662, %v1664
    %v1666 = vadd.f32 %v1662, %v1665
    %vm1667 = vweird.f32 %v1280
    %vm1668 = vweird.f32 %v1662
    %vm1669 = vmor %vm1667, %vm1668
    %v1670 = vsel %vm1669, %v1662, %v1666
    %v1671 = vand.u32 2147483647, %v1280
    %vm1672 = vcmp.eq.f32.partialorder %v1671, 8.507059e+37
    %v1673 = vand.u32 %v1280, 2147483648
    %v1674 = vor.u32 1.1754944e-38, %v1673
    %v1675 = vsel %vm1672, %v1674, %v1670
    %v1676 = vmul.f32 1.0, %v1675
    %v1677 = vrcp.pop %v1283
    %v1678 = vmul.f32 %v1283, %v1677
    %v1679 = vsub.f32 1.0, %v1678
    %v1680 = vmul.f32 %v1677, %v1679
    %v1681 = vadd.f32 %v1677, %v1680
    %vm1682 = vweird.f32 %v1283
    %vm1683 = vweird.f32 %v1677
    %vm1684 = vmor %vm1682, %vm1683
    %v1685 = vsel %vm1684, %v1677, %v1681
    %v1686 = vand.u32 2147483647, %v1283
    %vm1687 = vcmp.eq.f32.partialorder %v1686, 8.507059e+37
    %v1688 = vand.u32 %v1283, 2147483648
    %v1689 = vor.u32 1.1754944e-38, %v1688
    %v1690 = vsel %vm1687, %v1689, %v1685
    %v1691 = vmul.f32 1.0, %v1690
    %v1692 = vrcp.pop %v1286
    %v1693 = vmul.f32 %v1286, %v1692
    %v1694 = vsub.f32 1.0, %v1693
    %v1695 = vmul.f32 %v1692, %v1694
    %v1696 = vadd.f32 %v1692, %v1695
    %vm1697 = vweird.f32 %v1286
    %vm1698 = vweird.f32 %v1692
    %vm1699 = vmor %vm1697, %vm1698
    %v1700 = vsel %vm1699, %v1692, %v1696
    %v1701 = vand.u32 2147483647, %v1286
    %vm1702 = vcmp.eq.f32.partialorder %v1701, 8.507059e+37
    %v1703 = vand.u32 %v1286, 2147483648
    %v1704 = vor.u32 1.1754944e-38, %v1703
    %v1705 = vsel %vm1702, %v1704, %v1700
    %v1706 = vmul.f32 1.0, %v1705
    %v1707 = vrcp.pop %v1289
    %v1708 = vmul.f32 %v1289, %v1707
    %v1709 = vsub.f32 1.0, %v1708
    %v1710 = vmul.f32 %v1707, %v1709
    %v1711 = vadd.f32 %v1707, %v1710
    %vm1712 = vweird.f32 %v1289
    %vm1713 = vweird.f32 %v1707
    %vm1714 = vmor %vm1712, %vm1713
    %v1715 = vsel %vm1714, %v1707, %v1711
    %v1716 = vand.u32 2147483647, %v1289
    %vm1717 = vcmp.eq.f32.partialorder %v1716, 8.507059e+37
    %v1718 = vand.u32 %v1289, 2147483648
    %v1719 = vor.u32 1.1754944e-38, %v1718
    %v1720 = vsel %vm1717, %v1719, %v1715
    %v1721 = vmul.f32 1.0, %v1720
    %v1722 = vrcp.pop %v1292
    %v1723 = vmul.f32 %v1292, %v1722
    %v1724 = vsub.f32 1.0, %v1723
    %v1725 = vmul.f32 %v1722, %v1724
    %v1726 = vadd.f32 %v1722, %v1725
    %vm1727 = vweird.f32 %v1292
    %vm1728 = vweird.f32 %v1722
    %vm1729 = vmor %vm1727, %vm1728
    %v1730 = vsel %vm1729, %v1722, %v1726
    %v1731 = vand.u32 2147483647, %v1292
    %vm1732 = vcmp.eq.f32.partialorder %v1731, 8.507059e+37
    %v1733 = vand.u32 %v1292, 2147483648
    %v1734 = vor.u32 1.1754944e-38, %v1733
    %v1735 = vsel %vm1732, %v1734, %v1730
    %v1736 = vmul.f32 1.0, %v1735
    %v1737 = vrcp.pop %v1295
    %v1738 = vmul.f32 %v1295, %v1737
    %v1739 = vsub.f32 1.0, %v1738
    %v1740 = vmul.f32 %v1737, %v1739
    %v1741 = vadd.f32 %v1737, %v1740
    %vm1742 = vweird.f32 %v1295
    %vm1743 = vweird.f32 %v1737
    %vm1744 = vmor %vm1742, %vm1743
    %v1745 = vsel %vm1744, %v1737, %v1741
    %v1746 = vand.u32 2147483647, %v1295
    %vm1747 = vcmp.eq.f32.partialorder %v1746, 8.507059e+37
    %v1748 = vand.u32 %v1295, 2147483648
    %v1749 = vor.u32 1.1754944e-38, %v1748
    %v1750 = vsel %vm1747, %v1749, %v1745
    %v1751 = vmul.f32 1.0, %v1750
    %v1752 = vrcp.pop %v1298
    %v1753 = vmul.f32 %v1298, %v1752
    %v1754 = vsub.f32 1.0, %v1753
    %v1755 = vmul.f32 %v1752, %v1754
    %v1756 = vadd.f32 %v1752, %v1755
    %vm1757 = vweird.f32 %v1298
    %vm1758 = vweird.f32 %v1752
    %vm1759 = vmor %vm1757, %vm1758
    %v1760 = vsel %vm1759, %v1752, %v1756
    %v1761 = vand.u32 2147483647, %v1298
    %vm1762 = vcmp.eq.f32.partialorder %v1761, 8.507059e+37
    %v1763 = vand.u32 %v1298, 2147483648
    %v1764 = vor.u32 1.1754944e-38, %v1763
    %v1765 = vsel %vm1762, %v1764, %v1760
    %v1766 = vmul.f32 1.0, %v1765
    %v1767 = vrcp.pop %v1301
    %v1768 = vmul.f32 %v1301, %v1767
    %v1769 = vsub.f32 1.0, %v1768
    %v1770 = vmul.f32 %v1767, %v1769
    %v1771 = vadd.f32 %v1767, %v1770
    %vm1772 = vweird.f32 %v1301
    %vm1773 = vweird.f32 %v1767
    %vm1774 = vmor %vm1772, %vm1773
    %v1775 = vsel %vm1774, %v1767, %v1771
    %v1776 = vand.u32 2147483647, %v1301
    %vm1777 = vcmp.eq.f32.partialorder %v1776, 8.507059e+37
    %v1778 = vand.u32 %v1301, 2147483648
    %v1779 = vor.u32 1.1754944e-38, %v1778
    %v1780 = vsel %vm1777, %v1779, %v1775
    %v1781 = vmul.f32 1.0, %v1780
    %v1783 = vsel %vm1013, %v1143, 0
    %v1786 = vsel %vm1013, %v1145, 0
    %1788 = vmatpush.msra.mxu0 0.0
    %1789 = vmatpush.msra.mxu0 0.0
    %1790 = vmatpush.msra.mxu0 0.0
    %1791 = vmatpush.msra.mxu0 0.0
    %1792 = vmatpush.msra.mxu0 0.0
    %1793 = vmatpush.msra.mxu0 0.0
    %1794 = vmatpush.msra.mxu0 0.0
    %1795 = vmatpush.msra.mxu0 0.0
    %1796 = vmatpush.msra.mxu0 0.0
    %1797 = vmatpush.msra.mxu0 0.0
    %1798 = vmatpush.msra.mxu0 0.0
    %1799 = vmatpush.msra.mxu0 0.0
    %1800 = vmatpush.msra.mxu0 0.0
    %1801 = vmatpush.msra.mxu0 0.0
    %1802 = vmatpush.msra.mxu0 %v304
    %1803 = vmatpush.msra.mxu0 %v301
    %1804 = vmatmul.f32.gmra.mxu0 %v1783
    %v1805 = vpop.f32.mrf.mxu0
    %v1806 = vadd.f32 0.0, %v1805
    %1807 = vmatmul.f32.gmra.mxu0 %v1786
    %v1808 = vpop.f32.mrf.mxu0
    %v1809 = vadd.f32 0.0, %v1808
    %1810 = vdwg.mxu0
    %v1812 = vsel %vm1013, %v1147, 0
    %v1815 = vsel %vm1013, %v1149, 0
    %1817 = vmatpush.msra.mxu0 0.0
    %1818 = vmatpush.msra.mxu0 0.0
    %1819 = vmatpush.msra.mxu0 0.0
    %1820 = vmatpush.msra.mxu0 0.0
    %1821 = vmatpush.msra.mxu0 0.0
    %1822 = vmatpush.msra.mxu0 0.0
    %1823 = vmatpush.msra.mxu0 0.0
    %1824 = vmatpush.msra.mxu0 0.0
    %1825 = vmatpush.msra.mxu0 0.0
    %1826 = vmatpush.msra.mxu0 0.0
    %1827 = vmatpush.msra.mxu0 0.0
    %1828 = vmatpush.msra.mxu0 0.0
    %1829 = vmatpush.msra.mxu0 0.0
    %1830 = vmatpush.msra.mxu0 0.0
    %1831 = vmatpush.msra.mxu0 %v310
    %1832 = vmatpush.msra.mxu0 %v307
    %1833 = vmatmul.f32.gmra.mxu0 %v1812
    %v1834 = vpop.f32.mrf.mxu0
    %v1835 = vadd.f32 0.0, %v1834
    %1836 = vmatmul.f32.gmra.mxu0 %v1815
    %v1837 = vpop.f32.mrf.mxu0
    %v1838 = vadd.f32 0.0, %v1837
    %1839 = vdwg.mxu0
    %v1841 = vsel %vm1013, %v1151, 0
    %v1844 = vsel %vm1013, %v1153, 0
    %1846 = vmatpush.msra.mxu0 0.0
    %1847 = vmatpush.msra.mxu0 0.0
    %1848 = vmatpush.msra.mxu0 0.0
    %1849 = vmatpush.msra.mxu0 0.0
    %1850 = vmatpush.msra.mxu0 0.0
    %1851 = vmatpush.msra.mxu0 0.0
    %1852 = vmatpush.msra.mxu0 0.0
    %1853 = vmatpush.msra.mxu0 0.0
    %1854 = vmatpush.msra.mxu0 0.0
    %1855 = vmatpush.msra.mxu0 0.0
    %1856 = vmatpush.msra.mxu0 0.0
    %1857 = vmatpush.msra.mxu0 0.0
    %1858 = vmatpush.msra.mxu0 0.0
    %1859 = vmatpush.msra.mxu0 0.0
    %1860 = vmatpush.msra.mxu0 %v316
    %1861 = vmatpush.msra.mxu0 %v313
    %1862 = vmatmul.f32.gmra.mxu0 %v1841
    %v1863 = vpop.f32.mrf.mxu0
    %v1864 = vadd.f32 0.0, %v1863
    %1865 = vmatmul.f32.gmra.mxu0 %v1844
    %v1866 = vpop.f32.mrf.mxu0
    %v1867 = vadd.f32 0.0, %v1866
    %1868 = vdwg.mxu0
    %v1870 = vsel %vm1013, %v1155, 0
    %v1873 = vsel %vm1013, %v1157, 0
    %1875 = vmatpush.msra.mxu0 0.0
    %1876 = vmatpush.msra.mxu0 0.0
    %1877 = vmatpush.msra.mxu0 0.0
    %1878 = vmatpush.msra.mxu0 0.0
    %1879 = vmatpush.msra.mxu0 0.0
    %1880 = vmatpush.msra.mxu0 0.0
    %1881 = vmatpush.msra.mxu0 0.0
    %1882 = vmatpush.msra.mxu0 0.0
    %1883 = vmatpush.msra.mxu0 0.0
    %1884 = vmatpush.msra.mxu0 0.0
    %1885 = vmatpush.msra.mxu0 0.0
    %1886 = vmatpush.msra.mxu0 0.0
    %1887 = vmatpush.msra.mxu0 0.0
    %1888 = vmatpush.msra.mxu0 0.0
    %1889 = vmatpush.msra.mxu0 %v322
    %1890 = vmatpush.msra.mxu0 %v319
    %1891 = vmatmul.f32.gmra.mxu0 %v1870
    %v1892 = vpop.f32.mrf.mxu0
    %v1893 = vadd.f32 0.0, %v1892
    %1894 = vmatmul.f32.gmra.mxu0 %v1873
    %v1895 = vpop.f32.mrf.mxu0
    %v1896 = vadd.f32 0.0, %v1895
    %1897 = vdwg.mxu0
    %v1899 = vsel %vm1013, %v1159, 0
    %v1902 = vsel %vm1013, %v1161, 0
    %1904 = vmatpush.msra.mxu0 0.0
    %1905 = vmatpush.msra.mxu0 0.0
    %1906 = vmatpush.msra.mxu0 0.0
    %1907 = vmatpush.msra.mxu0 0.0
    %1908 = vmatpush.msra.mxu0 0.0
    %1909 = vmatpush.msra.mxu0 0.0
    %1910 = vmatpush.msra.mxu0 0.0
    %1911 = vmatpush.msra.mxu0 0.0
    %1912 = vmatpush.msra.mxu0 0.0
    %1913 = vmatpush.msra.mxu0 0.0
    %1914 = vmatpush.msra.mxu0 0.0
    %1915 = vmatpush.msra.mxu0 0.0
    %1916 = vmatpush.msra.mxu0 0.0
    %1917 = vmatpush.msra.mxu0 0.0
    %1918 = vmatpush.msra.mxu0 %v447
    %1919 = vmatpush.msra.mxu0 %v445
    %1920 = vmatmul.f32.gmra.mxu0 %v1899
    %v1921 = vpop.f32.mrf.mxu0
    %v1922 = vadd.f32 0.0, %v1921
    %1923 = vmatmul.f32.gmra.mxu0 %v1902
    %v1924 = vpop.f32.mrf.mxu0
    %v1925 = vadd.f32 0.0, %v1924
    %1926 = vdwg.mxu0
    %v1928 = vsel %vm1013, %v1163, 0
    %v1931 = vsel %vm1013, %v1165, 0
    %1933 = vmatpush.msra.mxu0 0.0
    %1934 = vmatpush.msra.mxu0 0.0
    %1935 = vmatpush.msra.mxu0 0.0
    %1936 = vmatpush.msra.mxu0 0.0
    %1937 = vmatpush.msra.mxu0 0.0
    %1938 = vmatpush.msra.mxu0 0.0
    %1939 = vmatpush.msra.mxu0 0.0
    %1940 = vmatpush.msra.mxu0 0.0
    %1941 = vmatpush.msra.mxu0 0.0
    %1942 = vmatpush.msra.mxu0 0.0
    %1943 = vmatpush.msra.mxu0 0.0
    %1944 = vmatpush.msra.mxu0 0.0
    %1945 = vmatpush.msra.mxu0 0.0
    %1946 = vmatpush.msra.mxu0 0.0
    %1947 = vmatpush.msra.mxu0 %v451
    %1948 = vmatpush.msra.mxu0 %v449
    %1949 = vmatmul.f32.gmra.mxu0 %v1928
    %v1950 = vpop.f32.mrf.mxu0
    %v1951 = vadd.f32 0.0, %v1950
    %1952 = vmatmul.f32.gmra.mxu0 %v1931
    %v1953 = vpop.f32.mrf.mxu0
    %v1954 = vadd.f32 0.0, %v1953
    %1955 = vdwg.mxu0
    %v1957 = vsel %vm1013, %v1167, 0
    %v1960 = vsel %vm1013, %v1169, 0
    %1962 = vmatpush.msra.mxu0 0.0
    %1963 = vmatpush.msra.mxu0 0.0
    %1964 = vmatpush.msra.mxu0 0.0
    %1965 = vmatpush.msra.mxu0 0.0
    %1966 = vmatpush.msra.mxu0 0.0
    %1967 = vmatpush.msra.mxu0 0.0
    %1968 = vmatpush.msra.mxu0 0.0
    %1969 = vmatpush.msra.mxu0 0.0
    %1970 = vmatpush.msra.mxu0 0.0
    %1971 = vmatpush.msra.mxu0 0.0
    %1972 = vmatpush.msra.mxu0 0.0
    %1973 = vmatpush.msra.mxu0 0.0
    %1974 = vmatpush.msra.mxu0 0.0
    %1975 = vmatpush.msra.mxu0 0.0
    %1976 = vmatpush.msra.mxu0 %v455
    %1977 = vmatpush.msra.mxu0 %v453
    %1978 = vmatmul.f32.gmra.mxu0 %v1957
    %v1979 = vpop.f32.mrf.mxu0
    %v1980 = vadd.f32 0.0, %v1979
    %1981 = vmatmul.f32.gmra.mxu0 %v1960
    %v1982 = vpop.f32.mrf.mxu0
    %v1983 = vadd.f32 0.0, %v1982
    %1984 = vdwg.mxu0
    %v1986 = vsel %vm1013, %v1171, 0
    %v1989 = vsel %vm1013, %v1173, 0
    %1991 = vmatpush.msra.mxu0 0.0
    %1992 = vmatpush.msra.mxu0 0.0
    %1993 = vmatpush.msra.mxu0 0.0
    %1994 = vmatpush.msra.mxu0 0.0
    %1995 = vmatpush.msra.mxu0 0.0
    %1996 = vmatpush.msra.mxu0 0.0
    %1997 = vmatpush.msra.mxu0 0.0
    %1998 = vmatpush.msra.mxu0 0.0
    %1999 = vmatpush.msra.mxu0 0.0
    %2000 = vmatpush.msra.mxu0 0.0
    %2001 = vmatpush.msra.mxu0 0.0
    %2002 = vmatpush.msra.mxu0 0.0
    %2003 = vmatpush.msra.mxu0 0.0
    %2004 = vmatpush.msra.mxu0 0.0
    %2005 = vmatpush.msra.mxu0 %v459
    %2006 = vmatpush.msra.mxu0 %v457
    %2007 = vmatmul.f32.gmra.mxu0 %v1986
    %v2008 = vpop.f32.mrf.mxu0
    %v2009 = vadd.f32 0.0, %v2008
    %2010 = vmatmul.f32.gmra.mxu0 %v1989
    %v2011 = vpop.f32.mrf.mxu0
    %v2012 = vadd.f32 0.0, %v2011
    %2013 = vdwg.mxu0
    %v2015 = vsel %vm1013, %v1175, 0
    %v2018 = vsel %vm1013, %v1177, 0
    %2020 = vmatpush.msra.mxu0 0.0
    %2021 = vmatpush.msra.mxu0 0.0
    %2022 = vmatpush.msra.mxu0 0.0
    %2023 = vmatpush.msra.mxu0 0.0
    %2024 = vmatpush.msra.mxu0 0.0
    %2025 = vmatpush.msra.mxu0 0.0
    %2026 = vmatpush.msra.mxu0 0.0
    %2027 = vmatpush.msra.mxu0 0.0
    %2028 = vmatpush.msra.mxu0 0.0
    %2029 = vmatpush.msra.mxu0 0.0
    %2030 = vmatpush.msra.mxu0 0.0
    %2031 = vmatpush.msra.mxu0 0.0
    %2032 = vmatpush.msra.mxu0 0.0
    %2033 = vmatpush.msra.mxu0 0.0
    %2034 = vmatpush.msra.mxu0 %v471
    %2035 = vmatpush.msra.mxu0 %v469
    %2036 = vmatmul.f32.gmra.mxu0 %v2015
    %v2037 = vpop.f32.mrf.mxu0
    %v2038 = vadd.f32 0.0, %v2037
    %2039 = vmatmul.f32.gmra.mxu0 %v2018
    %v2040 = vpop.f32.mrf.mxu0
    %v2041 = vadd.f32 0.0, %v2040
    %2042 = vdwg.mxu0
    %v2044 = vsel %vm1013, %v1179, 0
    %v2047 = vsel %vm1013, %v1181, 0
    %2049 = vmatpush.msra.mxu0 0.0
    %2050 = vmatpush.msra.mxu0 0.0
    %2051 = vmatpush.msra.mxu0 0.0
    %2052 = vmatpush.msra.mxu0 0.0
    %2053 = vmatpush.msra.mxu0 0.0
    %2054 = vmatpush.msra.mxu0 0.0
    %2055 = vmatpush.msra.mxu0 0.0
    %2056 = vmatpush.msra.mxu0 0.0
    %2057 = vmatpush.msra.mxu0 0.0
    %2058 = vmatpush.msra.mxu0 0.0
    %2059 = vmatpush.msra.mxu0 0.0
    %2060 = vmatpush.msra.mxu0 0.0
    %2061 = vmatpush.msra.mxu0 0.0
    %2062 = vmatpush.msra.mxu0 0.0
    %2063 = vmatpush.msra.mxu0 %v475
    %2064 = vmatpush.msra.mxu0 %v473
    %2065 = vmatmul.f32.gmra.mxu0 %v2044
    %v2066 = vpop.f32.mrf.mxu0
    %v2067 = vadd.f32 0.0, %v2066
    %2068 = vmatmul.f32.gmra.mxu0 %v2047
    %v2069 = vpop.f32.mrf.mxu0
    %v2070 = vadd.f32 0.0, %v2069
    %2071 = vdwg.mxu0
    %v2073 = vsel %vm1013, %v1183, 0
    %v2076 = vsel %vm1013, %v1185, 0
    %2078 = vmatpush.msra.mxu0 0.0
    %2079 = vmatpush.msra.mxu0 0.0
    %2080 = vmatpush.msra.mxu0 0.0
    %2081 = vmatpush.msra.mxu0 0.0
    %2082 = vmatpush.msra.mxu0 0.0
    %2083 = vmatpush.msra.mxu0 0.0
    %2084 = vmatpush.msra.mxu0 0.0
    %2085 = vmatpush.msra.mxu0 0.0
    %2086 = vmatpush.msra.mxu0 0.0
    %2087 = vmatpush.msra.mxu0 0.0
    %2088 = vmatpush.msra.mxu0 0.0
    %2089 = vmatpush.msra.mxu0 0.0
    %2090 = vmatpush.msra.mxu0 0.0
    %2091 = vmatpush.msra.mxu0 0.0
    %2092 = vmatpush.msra.mxu0 %v479
    %2093 = vmatpush.msra.mxu0 %v477
    %2094 = vmatmul.f32.gmra.mxu0 %v2073
    %v2095 = vpop.f32.mrf.mxu0
    %v2096 = vadd.f32 0.0, %v2095
    %2097 = vmatmul.f32.gmra.mxu0 %v2076
    %v2098 = vpop.f32.mrf.mxu0
    %v2099 = vadd.f32 0.0, %v2098
    %2100 = vdwg.mxu0
    %v2102 = vsel %vm1013, %v1187, 0
    %v2105 = vsel %vm1013, %v1189, 0
    %2107 = vmatpush.msra.mxu0 0.0
    %2108 = vmatpush.msra.mxu0 0.0
    %2109 = vmatpush.msra.mxu0 0.0
    %2110 = vmatpush.msra.mxu0 0.0
    %2111 = vmatpush.msra.mxu0 0.0
    %2112 = vmatpush.msra.mxu0 0.0
    %2113 = vmatpush.msra.mxu0 0.0
    %2114 = vmatpush.msra.mxu0 0.0
    %2115 = vmatpush.msra.mxu0 0.0
    %2116 = vmatpush.msra.mxu0 0.0
    %2117 = vmatpush.msra.mxu0 0.0
    %2118 = vmatpush.msra.mxu0 0.0
    %2119 = vmatpush.msra.mxu0 0.0
    %2120 = vmatpush.msra.mxu0 0.0
    %2121 = vmatpush.msra.mxu0 %v483
    %2122 = vmatpush.msra.mxu0 %v481
    %2123 = vmatmul.f32.gmra.mxu0 %v2102
    %v2124 = vpop.f32.mrf.mxu0
    %v2125 = vadd.f32 0.0, %v2124
    %2126 = vmatmul.f32.gmra.mxu0 %v2105
    %v2127 = vpop.f32.mrf.mxu0
    %v2128 = vadd.f32 0.0, %v2127
    %2129 = vdwg.mxu0
    %v2131 = vsel %vm1013, %v1191, 0
    %v2134 = vsel %vm1013, %v1193, 0
    %2136 = vmatpush.msra.mxu0 0.0
    %2137 = vmatpush.msra.mxu0 0.0
    %2138 = vmatpush.msra.mxu0 0.0
    %2139 = vmatpush.msra.mxu0 0.0
    %2140 = vmatpush.msra.mxu0 0.0
    %2141 = vmatpush.msra.mxu0 0.0
    %2142 = vmatpush.msra.mxu0 0.0
    %2143 = vmatpush.msra.mxu0 0.0
    %2144 = vmatpush.msra.mxu0 0.0
    %2145 = vmatpush.msra.mxu0 0.0
    %2146 = vmatpush.msra.mxu0 0.0
    %2147 = vmatpush.msra.mxu0 0.0
    %2148 = vmatpush.msra.mxu0 0.0
    %2149 = vmatpush.msra.mxu0 0.0
    %2150 = vmatpush.msra.mxu0 %v495
    %2151 = vmatpush.msra.mxu0 %v493
    %2152 = vmatmul.f32.gmra.mxu0 %v2131
    %v2153 = vpop.f32.mrf.mxu0
    %v2154 = vadd.f32 0.0, %v2153
    %2155 = vmatmul.f32.gmra.mxu0 %v2134
    %v2156 = vpop.f32.mrf.mxu0
    %v2157 = vadd.f32 0.0, %v2156
    %2158 = vdwg.mxu0
    %v2160 = vsel %vm1013, %v1195, 0
    %v2163 = vsel %vm1013, %v1197, 0
    %2165 = vmatpush.msra.mxu0 0.0
    %2166 = vmatpush.msra.mxu0 0.0
    %2167 = vmatpush.msra.mxu0 0.0
    %2168 = vmatpush.msra.mxu0 0.0
    %2169 = vmatpush.msra.mxu0 0.0
    %2170 = vmatpush.msra.mxu0 0.0
    %2171 = vmatpush.msra.mxu0 0.0
    %2172 = vmatpush.msra.mxu0 0.0
    %2173 = vmatpush.msra.mxu0 0.0
    %2174 = vmatpush.msra.mxu0 0.0
    %2175 = vmatpush.msra.mxu0 0.0
    %2176 = vmatpush.msra.mxu0 0.0
    %2177 = vmatpush.msra.mxu0 0.0
    %2178 = vmatpush.msra.mxu0 0.0
    %2179 = vmatpush.msra.mxu0 %v499
    %2180 = vmatpush.msra.mxu0 %v497
    %2181 = vmatmul.f32.gmra.mxu0 %v2160
    %v2182 = vpop.f32.mrf.mxu0
    %v2183 = vadd.f32 0.0, %v2182
    %2184 = vmatmul.f32.gmra.mxu0 %v2163
    %v2185 = vpop.f32.mrf.mxu0
    %v2186 = vadd.f32 0.0, %v2185
    %2187 = vdwg.mxu0
    %v2189 = vsel %vm1013, %v1199, 0
    %v2192 = vsel %vm1013, %v1201, 0
    %2194 = vmatpush.msra.mxu0 0.0
    %2195 = vmatpush.msra.mxu0 0.0
    %2196 = vmatpush.msra.mxu0 0.0
    %2197 = vmatpush.msra.mxu0 0.0
    %2198 = vmatpush.msra.mxu0 0.0
    %2199 = vmatpush.msra.mxu0 0.0
    %2200 = vmatpush.msra.mxu0 0.0
    %2201 = vmatpush.msra.mxu0 0.0
    %2202 = vmatpush.msra.mxu0 0.0
    %2203 = vmatpush.msra.mxu0 0.0
    %2204 = vmatpush.msra.mxu0 0.0
    %2205 = vmatpush.msra.mxu0 0.0
    %2206 = vmatpush.msra.mxu0 0.0
    %2207 = vmatpush.msra.mxu0 0.0
    %2208 = vmatpush.msra.mxu0 %v503
    %2209 = vmatpush.msra.mxu0 %v501
    %2210 = vmatmul.f32.gmra.mxu0 %v2189
    %v2211 = vpop.f32.mrf.mxu0
    %v2212 = vadd.f32 0.0, %v2211
    %2213 = vmatmul.f32.gmra.mxu0 %v2192
    %v2214 = vpop.f32.mrf.mxu0
    %v2215 = vadd.f32 0.0, %v2214
    %2216 = vdwg.mxu0
    %v2218 = vsel %vm1013, %v1203, 0
    %v2221 = vsel %vm1013, %v1205, 0
    %2223 = vmatpush.msra.mxu0 0.0
    %2224 = vmatpush.msra.mxu0 0.0
    %2225 = vmatpush.msra.mxu0 0.0
    %2226 = vmatpush.msra.mxu0 0.0
    %2227 = vmatpush.msra.mxu0 0.0
    %2228 = vmatpush.msra.mxu0 0.0
    %2229 = vmatpush.msra.mxu0 0.0
    %2230 = vmatpush.msra.mxu0 0.0
    %2231 = vmatpush.msra.mxu0 0.0
    %2232 = vmatpush.msra.mxu0 0.0
    %2233 = vmatpush.msra.mxu0 0.0
    %2234 = vmatpush.msra.mxu0 0.0
    %2235 = vmatpush.msra.mxu0 0.0
    %2236 = vmatpush.msra.mxu0 0.0
    %2237 = vmatpush.msra.mxu0 %v507
    %2238 = vmatpush.msra.mxu0 %v505
    %2239 = vmatmul.f32.gmra.mxu0 %v2218
    %v2240 = vpop.f32.mrf.mxu0
    %v2241 = vadd.f32 0.0, %v2240
    %2242 = vmatmul.f32.gmra.mxu0 %v2221
    %v2243 = vpop.f32.mrf.mxu0
    %v2244 = vadd.f32 0.0, %v2243
    %2245 = vdwg.mxu0
    %v2246 = vmul.f32 %v1806, %v1316
    %v2247 = vmul.f32 %v1809, %v1331
    %v2248 = vmul.f32 %v1835, %v1346
    %v2249 = vmul.f32 %v1838, %v1361
    %v2250 = vmul.f32 %v1864, %v1376
    %v2251 = vmul.f32 %v1867, %v1391
    %v2252 = vmul.f32 %v1893, %v1406
    %v2253 = vmul.f32 %v1896, %v1421
    %v2254 = vmul.f32 %v1922, %v1436
    %v2255 = vmul.f32 %v1925, %v1451
    %v2256 = vmul.f32 %v1951, %v1466
    %v2257 = vmul.f32 %v1954, %v1481
    %v2258 = vmul.f32 %v1980, %v1496
    %v2259 = vmul.f32 %v1983, %v1511
    %v2260 = vmul.f32 %v2009, %v1526
    %v2261 = vmul.f32 %v2012, %v1541
    %v2262 = vmul.f32 %v2038, %v1556
    %v2263 = vmul.f32 %v2041, %v1571
    %v2264 = vmul.f32 %v2067, %v1586
    %v2265 = vmul.f32 %v2070, %v1601
    %v2266 = vmul.f32 %v2096, %v1616
    %v2267 = vmul.f32 %v2099, %v1631
    %v2268 = vmul.f32 %v2125, %v1646
    %v2269 = vmul.f32 %v2128, %v1661
    %v2270 = vmul.f32 %v2154, %v1676
    %v2271 = vmul.f32 %v2157, %v1691
    %v2272 = vmul.f32 %v2183, %v1706
    %v2273 = vmul.f32 %v2186, %v1721
    %v2274 = vmul.f32 %v2212, %v1736
    %v2275 = vmul.f32 %v2215, %v1751
    %v2276 = vmul.f32 %v2241, %v1766
    %v2277 = vmul.f32 %v2244, %v1781
    %2286 = vrot.lane.b32.xlu0 %v2254, 32
    %v2287 = vpop.permute.xlu0 %2286
    %2288 = vrot.lane.b32.xlu0 %v2255, 32
    %v2289 = vpop.permute.xlu0 %2288
    %2290 = vrot.lane.b32.xlu0 %v2256, 32
    %v2291 = vpop.permute.xlu0 %2290
    %2292 = vrot.lane.b32.xlu0 %v2257, 32
    %v2293 = vpop.permute.xlu0 %2292
    %2294 = vrot.lane.b32.xlu0 %v2258, 32
    %v2295 = vpop.permute.xlu0 %2294
    %2296 = vrot.lane.b32.xlu0 %v2259, 32
    %v2297 = vpop.permute.xlu0 %2296
    %2298 = vrot.lane.b32.xlu0 %v2260, 32
    %v2299 = vpop.permute.xlu0 %2298
    %2300 = vrot.lane.b32.xlu0 %v2261, 32
    %v2301 = vpop.permute.xlu0 %2300
    %2318 = vrot.lane.b32.xlu0 %v2262, 64
    %v2319 = vpop.permute.xlu0 %2318
    %2320 = vrot.lane.b32.xlu0 %v2263, 64
    %v2321 = vpop.permute.xlu0 %2320
    %2322 = vrot.lane.b32.xlu0 %v2264, 64
    %v2323 = vpop.permute.xlu0 %2322
    %2324 = vrot.lane.b32.xlu0 %v2265, 64
    %v2325 = vpop.permute.xlu0 %2324
    %2326 = vrot.lane.b32.xlu0 %v2266, 64
    %v2327 = vpop.permute.xlu0 %2326
    %2328 = vrot.lane.b32.xlu0 %v2267, 64
    %v2329 = vpop.permute.xlu0 %2328
    %2330 = vrot.lane.b32.xlu0 %v2268, 64
    %v2331 = vpop.permute.xlu0 %2330
    %2332 = vrot.lane.b32.xlu0 %v2269, 64
    %v2333 = vpop.permute.xlu0 %2332
    %2350 = vrot.lane.b32.xlu0 %v2270, 96
    %v2351 = vpop.permute.xlu0 %2350
    %2352 = vrot.lane.b32.xlu0 %v2271, 96
    %v2353 = vpop.permute.xlu0 %2352
    %2354 = vrot.lane.b32.xlu0 %v2272, 96
    %v2355 = vpop.permute.xlu0 %2354
    %2356 = vrot.lane.b32.xlu0 %v2273, 96
    %v2357 = vpop.permute.xlu0 %2356
    %2358 = vrot.lane.b32.xlu0 %v2274, 96
    %v2359 = vpop.permute.xlu0 %2358
    %2360 = vrot.lane.b32.xlu0 %v2275, 96
    %v2361 = vpop.permute.xlu0 %2360
    %2362 = vrot.lane.b32.xlu0 %v2276, 96
    %v2363 = vpop.permute.xlu0 %2362
    %2364 = vrot.lane.b32.xlu0 %v2277, 96
    %v2365 = vpop.permute.xlu0 %2364
    %v2374 = vsel %vm516, %v2246, %v2287
    %v2375 = vsel %vm516, %v2247, %v2289
    %v2376 = vsel %vm516, %v2248, %v2291
    %v2377 = vsel %vm516, %v2249, %v2293
    %v2378 = vsel %vm516, %v2250, %v2295
    %v2379 = vsel %vm516, %v2251, %v2297
    %v2380 = vsel %vm516, %v2252, %v2299
    %v2381 = vsel %vm516, %v2253, %v2301
    %vm2382 = vcmask 523264
    %v2383 = vsel %vm2382, %v2374, %v2319
    %v2384 = vsel %vm2382, %v2375, %v2321
    %v2385 = vsel %vm2382, %v2376, %v2323
    %v2386 = vsel %vm2382, %v2377, %v2325
    %v2387 = vsel %vm2382, %v2378, %v2327
    %v2388 = vsel %vm2382, %v2379, %v2329
    %v2389 = vsel %vm2382, %v2380, %v2331
    %v2390 = vsel %vm2382, %v2381, %v2333
    %vm2391 = vcmask 785408
    %v2392 = vsel %vm2391, %v2383, %v2351
    %v2393 = vsel %vm2391, %v2384, %v2353
    %v2394 = vsel %vm2391, %v2385, %v2355
    %v2395 = vsel %vm2391, %v2386, %v2357
    %v2396 = vsel %vm2391, %v2387, %v2359
    %v2397 = vsel %vm2391, %v2388, %v2361
    %v2398 = vsel %vm2391, %v2389, %v2363
    %v2399 = vsel %vm2391, %v2390, %v2365
    %v2400 = vld [vmem:[#allocation8] sm:$0xff]
    %v2401 = vld [vmem:[#allocation8 + $0x8] sm:$0xff]
    %v2402 = vld [vmem:[#allocation8 + $0x10] sm:$0xff]
    %v2403 = vld [vmem:[#allocation8 + $0x18] sm:$0xff]
    %v2404 = vld [vmem:[#allocation8 + $0x20] sm:$0xff]
    %v2405 = vld [vmem:[#allocation8 + $0x28] sm:$0xff]
    %v2406 = vld [vmem:[#allocation8 + $0x30] sm:$0xff]
    %v2407 = vld [vmem:[#allocation8 + $0x38] sm:$0xff]
    %v2408 = vld [vmem:[#allocation8 + $0x40] sm:$0xff]
    %v2409 = vld [vmem:[#allocation8 + $0x48] sm:$0xff]
    %v2410 = vld [vmem:[#allocation8 + $0x50] sm:$0xff]
    %v2411 = vld [vmem:[#allocation8 + $0x58] sm:$0xff]
    %v2412 = vld [vmem:[#allocation8 + $0x60] sm:$0xff]
    %v2413 = vld [vmem:[#allocation8 + $0x68] sm:$0xff]
    %v2414 = vld [vmem:[#allocation8 + $0x70] sm:$0xff]
    %v2415 = vld [vmem:[#allocation8 + $0x78] sm:$0xff]
    %v2416 = vld [vmem:[%s4] sm:$0x1]
    %v2418 = vperm.slane %v2416, 0
    %2420 = vmatpush.msra.mxu0 %v2415
    %2421 = vmatpush.msra.mxu0 %v2414
    %2422 = vmatpush.msra.mxu0 %v2413
    %2423 = vmatpush.msra.mxu0 %v2412
    %2424 = vmatpush.msra.mxu0 %v2411
    %2425 = vmatpush.msra.mxu0 %v2410
    %2426 = vmatpush.msra.mxu0 %v2409
    %2427 = vmatpush.msra.mxu0 %v2408
    %2428 = vmatpush.msra.mxu0 %v2407
    %2429 = vmatpush.msra.mxu0 %v2406
    %2430 = vmatpush.msra.mxu0 %v2405
    %2431 = vmatpush.msra.mxu0 %v2404
    %2432 = vmatpush.msra.mxu0 %v2403
    %2433 = vmatpush.msra.mxu0 %v2402
    %2434 = vmatpush.msra.mxu0 %v2401
    %2435 = vmatpush.msra.mxu0 %v2400
    %2436 = vmatmul.f32.gmra.mxu0 %v2392
    %v2437 = vpop.f32.mrf.mxu0
    %v2438 = vadd.f32 %v2418, %v2437
    %2439 = vmatmul.f32.gmra.mxu0 %v2393
    %v2440 = vpop.f32.mrf.mxu0
    %v2441 = vadd.f32 %v2418, %v2440
    %2442 = vmatmul.f32.gmra.mxu0 %v2394
    %v2443 = vpop.f32.mrf.mxu0
    %v2444 = vadd.f32 %v2418, %v2443
    %2445 = vmatmul.f32.gmra.mxu0 %v2395
    %v2446 = vpop.f32.mrf.mxu0
    %v2447 = vadd.f32 %v2418, %v2446
    %2448 = vmatmul.f32.gmra.mxu0 %v2396
    %v2449 = vpop.f32.mrf.mxu0
    %v2450 = vadd.f32 %v2418, %v2449
    %2451 = vmatmul.f32.gmra.mxu0 %v2397
    %v2452 = vpop.f32.mrf.mxu0
    %v2453 = vadd.f32 %v2418, %v2452
    %2454 = vmatmul.f32.gmra.mxu0 %v2398
    %v2455 = vpop.f32.mrf.mxu0
    %v2456 = vadd.f32 %v2418, %v2455
    %2457 = vmatmul.f32.gmra.mxu0 %v2399
    %v2458 = vpop.f32.mrf.mxu0
    %v2459 = vadd.f32 %v2418, %v2458
    %2460 = vdwg.mxu0
    %v2461 = vadd.f32 %v137, %v2438
    %v2462 = vadd.f32 %v138, %v2441
    %v2463 = vadd.f32 %v139, %v2444
    %v2464 = vadd.f32 %v140, %v2447
    %v2465 = vadd.f32 %v141, %v2450
    %v2466 = vadd.f32 %v142, %v2453
    %v2467 = vadd.f32 %v143, %v2456
    %v2468 = vadd.f32 %v144, %v2459
    %2469 = vadd.xlane.f32.xlu0 %v2461
    %v2470 = vpop.xlane.xlu0 %2469
    %2471 = vadd.xlane.f32.xlu0 %v2462
    %v2472 = vpop.xlane.xlu0 %2471
    %2473 = vadd.xlane.f32.xlu0 %v2463
    %v2474 = vpop.xlane.xlu0 %2473
    %2475 = vadd.xlane.f32.xlu0 %v2464
    %v2476 = vpop.xlane.xlu0 %2475
    %2477 = vadd.xlane.f32.xlu0 %v2465
    %v2478 = vpop.xlane.xlu0 %2477
    %2479 = vadd.xlane.f32.xlu0 %v2466
    %v2480 = vpop.xlane.xlu0 %2479
    %2481 = vadd.xlane.f32.xlu0 %v2467
    %v2482 = vpop.xlane.xlu0 %2481
    %2483 = vadd.xlane.f32.xlu0 %v2468
    %v2484 = vpop.xlane.xlu0 %2483
    %v2485 = vrcp.pop 128.0
    %v2486 = vmul.f32 128.0, %v2485
    %v2487 = vsub.f32 1.0, %v2486
    %v2488 = vmul.f32 %v2485, %v2487
    %v2489 = vadd.f32 %v2485, %v2488
    %vm2490 = vweird.f32 %v2485
    %v2491 = vsel %vm2490, %v2485, %v2489
    %v2492 = vmul.f32 %v2470, %v2491
    %v2493 = vmul.f32 %v2472, %v2491
    %v2494 = vmul.f32 %v2474, %v2491
    %v2495 = vmul.f32 %v2476, %v2491
    %v2496 = vmul.f32 %v2478, %v2491
    %v2497 = vmul.f32 %v2480, %v2491
    %v2498 = vmul.f32 %v2482, %v2491
    %v2499 = vmul.f32 %v2484, %v2491
    %v2500 = vsub.f32 %v2461, %v2492
    %v2501 = vsub.f32 %v2462, %v2493
    %v2502 = vsub.f32 %v2463, %v2494
    %v2503 = vsub.f32 %v2464, %v2495
    %v2504 = vsub.f32 %v2465, %v2496
    %v2505 = vsub.f32 %v2466, %v2497
    %v2506 = vsub.f32 %v2467, %v2498
    %v2507 = vsub.f32 %v2468, %v2499
    %v2508 = vmul.f32 %v2500, %v2500
    %v2509 = vmul.f32 %v2501, %v2501
    %v2510 = vmul.f32 %v2502, %v2502
    %v2511 = vmul.f32 %v2503, %v2503
    %v2512 = vmul.f32 %v2504, %v2504
    %v2513 = vmul.f32 %v2505, %v2505
    %v2514 = vmul.f32 %v2506, %v2506
    %v2515 = vmul.f32 %v2507, %v2507
    %2516 = vadd.xlane.f32.xlu0 %v2508
    %v2517 = vpop.xlane.xlu0 %2516
    %2518 = vadd.xlane.f32.xlu0 %v2509
    %v2519 = vpop.xlane.xlu0 %2518
    %2520 = vadd.xlane.f32.xlu0 %v2510
    %v2521 = vpop.xlane.xlu0 %2520
    %2522 = vadd.xlane.f32.xlu0 %v2511
    %v2523 = vpop.xlane.xlu0 %2522
    %2524 = vadd.xlane.f32.xlu0 %v2512
    %v2525 = vpop.xlane.xlu0 %2524
    %2526 = vadd.xlane.f32.xlu0 %v2513
    %v2527 = vpop.xlane.xlu0 %2526
    %2528 = vadd.xlane.f32.xlu0 %v2514
    %v2529 = vpop.xlane.xlu0 %2528
    %2530 = vadd.xlane.f32.xlu0 %v2515
    %v2531 = vpop.xlane.xlu0 %2530
    %v2532 = vmul.f32 %v2517, %v2491
    %v2533 = vmul.f32 %v2519, %v2491
    %v2534 = vmul.f32 %v2521, %v2491
    %v2535 = vmul.f32 %v2523, %v2491
    %v2536 = vmul.f32 %v2525, %v2491
    %v2537 = vmul.f32 %v2527, %v2491
    %v2538 = vmul.f32 %v2529, %v2491
    %v2539 = vmul.f32 %v2531, %v2491
    %v2540 = vadd.f32 %v2532, 1e-05
    %v2541 = vadd.f32 %v2533, 1e-05
    %v2542 = vadd.f32 %v2534, 1e-05
    %v2543 = vadd.f32 %v2535, 1e-05
    %v2544 = vadd.f32 %v2536, 1e-05
    %v2545 = vadd.f32 %v2537, 1e-05
    %v2546 = vadd.f32 %v2538, 1e-05
    %v2547 = vadd.f32 %v2539, 1e-05
    %v2548 = vrsqrt.pop %v2540
    %v2549 = vmul.f32 %v2548, %v2540
    %v2550 = vmul.f32 %v2549, %v2548
    %v2551 = vmul.f32 0.5, %v2550
    %v2552 = vsub.f32 1.5, %v2551
    %v2553 = vmul.f32 %v2548, %v2552
    %vm2554 = vweird.f32 %v2540
    %vm2555 = vweird.f32 %v2548
    %vm2556 = vmor %vm2554, %vm2555
    %v2557 = vsel %vm2556, %v2548, %v2553
    %v2558 = vrsqrt.pop %v2541
    %v2559 = vmul.f32 %v2558, %v2541
    %v2560 = vmul.f32 %v2559, %v2558
    %v2561 = vmul.f32 0.5, %v2560
    %v2562 = vsub.f32 1.5, %v2561
    %v2563 = vmul.f32 %v2558, %v2562
    %vm2564 = vweird.f32 %v2541
    %vm2565 = vweird.f32 %v2558
    %vm2566 = vmor %vm2564, %vm2565
    %v2567 = vsel %vm2566, %v2558, %v2563
    %v2568 = vrsqrt.pop %v2542
    %v2569 = vmul.f32 %v2568, %v2542
    %v2570 = vmul.f32 %v2569, %v2568
    %v2571 = vmul.f32 0.5, %v2570
    %v2572 = vsub.f32 1.5, %v2571
    %v2573 = vmul.f32 %v2568, %v2572
    %vm2574 = vweird.f32 %v2542
    %vm2575 = vweird.f32 %v2568
    %vm2576 = vmor %vm2574, %vm2575
    %v2577 = vsel %vm2576, %v2568, %v2573
    %v2578 = vrsqrt.pop %v2543
    %v2579 = vmul.f32 %v2578, %v2543
    %v2580 = vmul.f32 %v2579, %v2578
    %v2581 = vmul.f32 0.5, %v2580
    %v2582 = vsub.f32 1.5, %v2581
    %v2583 = vmul.f32 %v2578, %v2582
    %vm2584 = vweird.f32 %v2543
    %vm2585 = vweird.f32 %v2578
    %vm2586 = vmor %vm2584, %vm2585
    %v2587 = vsel %vm2586, %v2578, %v2583
    %v2588 = vrsqrt.pop %v2544
    %v2589 = vmul.f32 %v2588, %v2544
    %v2590 = vmul.f32 %v2589, %v2588
    %v2591 = vmul.f32 0.5, %v2590
    %v2592 = vsub.f32 1.5, %v2591
    %v2593 = vmul.f32 %v2588, %v2592
    %vm2594 = vweird.f32 %v2544
    %vm2595 = vweird.f32 %v2588
    %vm2596 = vmor %vm2594, %vm2595
    %v2597 = vsel %vm2596, %v2588, %v2593
    %v2598 = vrsqrt.pop %v2545
    %v2599 = vmul.f32 %v2598, %v2545
    %v2600 = vmul.f32 %v2599, %v2598
    %v2601 = vmul.f32 0.5, %v2600
    %v2602 = vsub.f32 1.5, %v2601
    %v2603 = vmul.f32 %v2598, %v2602
    %vm2604 = vweird.f32 %v2545
    %vm2605 = vweird.f32 %v2598
    %vm2606 = vmor %vm2604, %vm2605
    %v2607 = vsel %vm2606, %v2598, %v2603
    %v2608 = vrsqrt.pop %v2546
    %v2609 = vmul.f32 %v2608, %v2546
    %v2610 = vmul.f32 %v2609, %v2608
    %v2611 = vmul.f32 0.5, %v2610
    %v2612 = vsub.f32 1.5, %v2611
    %v2613 = vmul.f32 %v2608, %v2612
    %vm2614 = vweird.f32 %v2546
    %vm2615 = vweird.f32 %v2608
    %vm2616 = vmor %vm2614, %vm2615
    %v2617 = vsel %vm2616, %v2608, %v2613
    %v2618 = vrsqrt.pop %v2547
    %v2619 = vmul.f32 %v2618, %v2547
    %v2620 = vmul.f32 %v2619, %v2618
    %v2621 = vmul.f32 0.5, %v2620
    %v2622 = vsub.f32 1.5, %v2621
    %v2623 = vmul.f32 %v2618, %v2622
    %vm2624 = vweird.f32 %v2547
    %vm2625 = vweird.f32 %v2618
    %vm2626 = vmor %vm2624, %vm2625
    %v2627 = vsel %vm2626, %v2618, %v2623
    %v2628 = vmul.f32 %v2500, %v2557
    %v2629 = vmul.f32 %v2501, %v2567
    %v2630 = vmul.f32 %v2502, %v2577
    %v2631 = vmul.f32 %v2503, %v2587
    %v2632 = vmul.f32 %v2504, %v2597
    %v2633 = vmul.f32 %v2505, %v2607
    %v2634 = vmul.f32 %v2506, %v2617
    %v2635 = vmul.f32 %v2507, %v2627
    %v2636 = vld [vmem:[%s5] sm:$0x1]
    %v2638 = vperm.slane %v2636, 0
    %v2640 = vmul.f32 %v2628, %v2638
    %v2641 = vmul.f32 %v2629, %v2638
    %v2642 = vmul.f32 %v2630, %v2638
    %v2643 = vmul.f32 %v2631, %v2638
    %v2644 = vmul.f32 %v2632, %v2638
    %v2645 = vmul.f32 %v2633, %v2638
    %v2646 = vmul.f32 %v2634, %v2638
    %v2647 = vmul.f32 %v2635, %v2638
    %v2648 = vld [vmem:[%s6] sm:$0x1]
    %v2650 = vperm.slane %v2648, 0
    %v2652 = vadd.f32 %v2640, %v2650
    %v2653 = vadd.f32 %v2641, %v2650
    %v2654 = vadd.f32 %v2642, %v2650
    %v2655 = vadd.f32 %v2643, %v2650
    %v2656 = vadd.f32 %v2644, %v2650
    %v2657 = vadd.f32 %v2645, %v2650
    %v2658 = vadd.f32 %v2646, %v2650
    %v2659 = vadd.f32 %v2647, %v2650
    %v2660 = vld [vmem:[#allocation10] sm:$0xff]
    %v2661 = vld [vmem:[#allocation10 + $0x8] sm:$0xff]
    %v2662 = vld [vmem:[#allocation10 + $0x10] sm:$0xff]
    %v2663 = vld [vmem:[#allocation10 + $0x18] sm:$0xff]
    %v2664 = vld [vmem:[#allocation10 + $0x20] sm:$0xff]
    %v2665 = vld [vmem:[#allocation10 + $0x28] sm:$0xff]
    %v2666 = vld [vmem:[#allocation10 + $0x30] sm:$0xff]
    %v2667 = vld [vmem:[#allocation10 + $0x38] sm:$0xff]
    %v2668 = vld [vmem:[#allocation10 + $0x40] sm:$0xff]
    %v2669 = vld [vmem:[#allocation10 + $0x48] sm:$0xff]
    %v2670 = vld [vmem:[#allocation10 + $0x50] sm:$0xff]
    %v2671 = vld [vmem:[#allocation10 + $0x58] sm:$0xff]
    %v2672 = vld [vmem:[#allocation10 + $0x60] sm:$0xff]
    %v2673 = vld [vmem:[#allocation10 + $0x68] sm:$0xff]
    %v2674 = vld [vmem:[#allocation10 + $0x70] sm:$0xff]
    %v2675 = vld [vmem:[#allocation10 + $0x78] sm:$0xff]
    %v2676 = vld [vmem:[#allocation10 + $0x80] sm:$0xff]
    %v2677 = vld [vmem:[#allocation10 + $0x88] sm:$0xff]
    %v2678 = vld [vmem:[#allocation10 + $0x90] sm:$0xff]
    %v2679 = vld [vmem:[#allocation10 + $0x98] sm:$0xff]
    %v2680 = vld [vmem:[#allocation10 + $0xa0] sm:$0xff]
    %v2681 = vld [vmem:[#allocation10 + $0xa8] sm:$0xff]
    %v2682 = vld [vmem:[#allocation10 + $0xb0] sm:$0xff]
    %v2683 = vld [vmem:[#allocation10 + $0xb8] sm:$0xff]
    %v2684 = vld [vmem:[#allocation10 + $0xc0] sm:$0xff]
    %v2685 = vld [vmem:[#allocation10 + $0xc8] sm:$0xff]
    %v2686 = vld [vmem:[#allocation10 + $0xd0] sm:$0xff]
    %v2687 = vld [vmem:[#allocation10 + $0xd8] sm:$0xff]
    %v2688 = vld [vmem:[#allocation10 + $0xe0] sm:$0xff]
    %v2689 = vld [vmem:[#allocation10 + $0xe8] sm:$0xff]
    %v2690 = vld [vmem:[#allocation10 + $0xf0] sm:$0xff]
    %v2691 = vld [vmem:[#allocation10 + $0xf8] sm:$0xff]
    %v2692 = vld [vmem:[%s8] sm:$0x3]
    %v2694 = vperm.slane %v2692, 0
    %v2695 = vperm.slane %v2692, 1
    %2698 = vmatpush.msra.mxu0 %v2690
    %2699 = vmatpush.msra.mxu0 %v2688
    %2700 = vmatpush.msra.mxu0 %v2686
    %2701 = vmatpush.msra.mxu0 %v2684
    %2702 = vmatpush.msra.mxu0 %v2682
    %2703 = vmatpush.msra.mxu0 %v2680
    %2704 = vmatpush.msra.mxu0 %v2678
    %2705 = vmatpush.msra.mxu0 %v2676
    %2706 = vmatpush.msra.mxu0 %v2674
    %2707 = vmatpush.msra.mxu0 %v2672
    %2708 = vmatpush.msra.mxu0 %v2670
    %2709 = vmatpush.msra.mxu0 %v2668
    %2710 = vmatpush.msra.mxu0 %v2666
    %2711 = vmatpush.msra.mxu0 %v2664
    %2712 = vmatpush.msra.mxu0 %v2662
    %2713 = vmatpush.msra.mxu0 %v2660
    %2714 = vmatmul.f32.gmra.mxu0 %v2652
    %v2715 = vpop.f32.mrf.mxu0
    %v2716 = vadd.f32 %v2694, %v2715
    %2717 = vmatmul.f32.gmra.mxu0 %v2653
    %v2718 = vpop.f32.mrf.mxu0
    %v2719 = vadd.f32 %v2694, %v2718
    %2720 = vmatmul.f32.gmra.mxu0 %v2654
    %v2721 = vpop.f32.mrf.mxu0
    %v2722 = vadd.f32 %v2694, %v2721
    %2723 = vmatmul.f32.gmra.mxu0 %v2655
    %v2724 = vpop.f32.mrf.mxu0
    %v2725 = vadd.f32 %v2694, %v2724
    %2726 = vmatmul.f32.gmra.mxu0 %v2656
    %v2727 = vpop.f32.mrf.mxu0
    %v2728 = vadd.f32 %v2694, %v2727
    %2729 = vmatmul.f32.gmra.mxu0 %v2657
    %v2730 = vpop.f32.mrf.mxu0
    %v2731 = vadd.f32 %v2694, %v2730
    %2732 = vmatmul.f32.gmra.mxu0 %v2658
    %v2733 = vpop.f32.mrf.mxu0
    %v2734 = vadd.f32 %v2694, %v2733
    %2735 = vmatmul.f32.gmra.mxu0 %v2659
    %v2736 = vpop.f32.mrf.mxu0
    %v2737 = vadd.f32 %v2694, %v2736
    %2738 = vdwg.mxu0
    %2739 = vmatpush.msra.mxu0 %v2691
    %2740 = vmatpush.msra.mxu0 %v2689
    %2741 = vmatpush.msra.mxu0 %v2687
    %2742 = vmatpush.msra.mxu0 %v2685
    %2743 = vmatpush.msra.mxu0 %v2683
    %2744 = vmatpush.msra.mxu0 %v2681
    %2745 = vmatpush.msra.mxu0 %v2679
    %2746 = vmatpush.msra.mxu0 %v2677
    %2747 = vmatpush.msra.mxu0 %v2675
    %2748 = vmatpush.msra.mxu0 %v2673
    %2749 = vmatpush.msra.mxu0 %v2671
    %2750 = vmatpush.msra.mxu0 %v2669
    %2751 = vmatpush.msra.mxu0 %v2667
    %2752 = vmatpush.msra.mxu0 %v2665
    %2753 = vmatpush.msra.mxu0 %v2663
    %2754 = vmatpush.msra.mxu0 %v2661
    %2755 = vmatmul.f32.gmra.mxu0 %v2652
    %v2756 = vpop.f32.mrf.mxu0
    %v2757 = vadd.f32 %v2695, %v2756
    %2758 = vmatmul.f32.gmra.mxu0 %v2653
    %v2759 = vpop.f32.mrf.mxu0
    %v2760 = vadd.f32 %v2695, %v2759
    %2761 = vmatmul.f32.gmra.mxu0 %v2654
    %v2762 = vpop.f32.mrf.mxu0
    %v2763 = vadd.f32 %v2695, %v2762
    %2764 = vmatmul.f32.gmra.mxu0 %v2655
    %v2765 = vpop.f32.mrf.mxu0
    %v2766 = vadd.f32 %v2695, %v2765
    %2767 = vmatmul.f32.gmra.mxu0 %v2656
    %v2768 = vpop.f32.mrf.mxu0
    %v2769 = vadd.f32 %v2695, %v2768
    %2770 = vmatmul.f32.gmra.mxu0 %v2657
    %v2771 = vpop.f32.mrf.mxu0
    %v2772 = vadd.f32 %v2695, %v2771
    %2773 = vmatmul.f32.gmra.mxu0 %v2658
    %v2774 = vpop.f32.mrf.mxu0
    %v2775 = vadd.f32 %v2695, %v2774
    %2776 = vmatmul.f32.gmra.mxu0 %v2659
    %v2777 = vpop.f32.mrf.mxu0
    %v2778 = vadd.f32 %v2695, %v2777
    %2779 = vdwg.mxu0
    %v2780 = vmax.f32 %v2716, 0.0
    %v2781 = vmax.f32 %v2757, 0.0
    %v2782 = vmax.f32 %v2719, 0.0
    %v2783 = vmax.f32 %v2760, 0.0
    %v2784 = vmax.f32 %v2722, 0.0
    %v2785 = vmax.f32 %v2763, 0.0
    %v2786 = vmax.f32 %v2725, 0.0
    %v2787 = vmax.f32 %v2766, 0.0
    %v2788 = vmax.f32 %v2728, 0.0
    %v2789 = vmax.f32 %v2769, 0.0
    %v2790 = vmax.f32 %v2731, 0.0
    %v2791 = vmax.f32 %v2772, 0.0
    %v2792 = vmax.f32 %v2734, 0.0
    %v2793 = vmax.f32 %v2775, 0.0
    %v2794 = vmax.f32 %v2737, 0.0
    %v2795 = vmax.f32 %v2778, 0.0
    %v2796 = vld [vmem:[#allocation11] sm:$0xff]
    %v2797 = vld [vmem:[#allocation11 + $0x8] sm:$0xff]
    %v2798 = vld [vmem:[#allocation11 + $0x10] sm:$0xff]
    %v2799 = vld [vmem:[#allocation11 + $0x18] sm:$0xff]
    %v2800 = vld [vmem:[#allocation11 + $0x20] sm:$0xff]
    %v2801 = vld [vmem:[#allocation11 + $0x28] sm:$0xff]
    %v2802 = vld [vmem:[#allocation11 + $0x30] sm:$0xff]
    %v2803 = vld [vmem:[#allocation11 + $0x38] sm:$0xff]
    %v2804 = vld [vmem:[#allocation11 + $0x40] sm:$0xff]
    %v2805 = vld [vmem:[#allocation11 + $0x48] sm:$0xff]
    %v2806 = vld [vmem:[#allocation11 + $0x50] sm:$0xff]
    %v2807 = vld [vmem:[#allocation11 + $0x58] sm:$0xff]
    %v2808 = vld [vmem:[#allocation11 + $0x60] sm:$0xff]
    %v2809 = vld [vmem:[#allocation11 + $0x68] sm:$0xff]
    %v2810 = vld [vmem:[#allocation11 + $0x70] sm:$0xff]
    %v2811 = vld [vmem:[#allocation11 + $0x78] sm:$0xff]
    %v2812 = vld [vmem:[#allocation11 + $0x80] sm:$0xff]
    %v2813 = vld [vmem:[#allocation11 + $0x88] sm:$0xff]
    %v2814 = vld [vmem:[#allocation11 + $0x90] sm:$0xff]
    %v2815 = vld [vmem:[#allocation11 + $0x98] sm:$0xff]
    %v2816 = vld [vmem:[#allocation11 + $0xa0] sm:$0xff]
    %v2817 = vld [vmem:[#allocation11 + $0xa8] sm:$0xff]
    %v2818 = vld [vmem:[#allocation11 + $0xb0] sm:$0xff]
    %v2819 = vld [vmem:[#allocation11 + $0xb8] sm:$0xff]
    %v2820 = vld [vmem:[#allocation11 + $0xc0] sm:$0xff]
    %v2821 = vld [vmem:[#allocation11 + $0xc8] sm:$0xff]
    %v2822 = vld [vmem:[#allocation11 + $0xd0] sm:$0xff]
    %v2823 = vld [vmem:[#allocation11 + $0xd8] sm:$0xff]
    %v2824 = vld [vmem:[#allocation11 + $0xe0] sm:$0xff]
    %v2825 = vld [vmem:[#allocation11 + $0xe8] sm:$0xff]
    %v2826 = vld [vmem:[#allocation11 + $0xf0] sm:$0xff]
    %v2827 = vld [vmem:[#allocation11 + $0xf8] sm:$0xff]
    %v2828 = vld [vmem:[%s10] sm:$0x1]
    %v2830 = vperm.slane %v2828, 0
    %2832 = vmatpush.msra.mxu0 %v2811
    %2833 = vmatpush.msra.mxu0 %v2810
    %2834 = vmatpush.msra.mxu0 %v2809
    %2835 = vmatpush.msra.mxu0 %v2808
    %2836 = vmatpush.msra.mxu0 %v2807
    %2837 = vmatpush.msra.mxu0 %v2806
    %2838 = vmatpush.msra.mxu0 %v2805
    %2839 = vmatpush.msra.mxu0 %v2804
    %2840 = vmatpush.msra.mxu0 %v2803
    %2841 = vmatpush.msra.mxu0 %v2802
    %2842 = vmatpush.msra.mxu0 %v2801
    %2843 = vmatpush.msra.mxu0 %v2800
    %2844 = vmatpush.msra.mxu0 %v2799
    %2845 = vmatpush.msra.mxu0 %v2798
    %2846 = vmatpush.msra.mxu0 %v2797
    %2847 = vmatpush.msra.mxu0 %v2796
    %2848 = vmatmul.f32.gmra.mxu0 %v2780
    %v2849 = vpop.f32.mrf.mxu0
    %v2850 = vadd.f32 %v2830, %v2849
    %2851 = vmatmul.f32.gmra.mxu0 %v2782
    %v2852 = vpop.f32.mrf.mxu0
    %v2853 = vadd.f32 %v2830, %v2852
    %2854 = vmatmul.f32.gmra.mxu0 %v2784
    %v2855 = vpop.f32.mrf.mxu0
    %v2856 = vadd.f32 %v2830, %v2855
    %2857 = vmatmul.f32.gmra.mxu0 %v2786
    %v2858 = vpop.f32.mrf.mxu0
    %v2859 = vadd.f32 %v2830, %v2858
    %2860 = vmatmul.f32.gmra.mxu0 %v2788
    %v2861 = vpop.f32.mrf.mxu0
    %v2862 = vadd.f32 %v2830, %v2861
    %2863 = vmatmul.f32.gmra.mxu0 %v2790
    %v2864 = vpop.f32.mrf.mxu0
    %v2865 = vadd.f32 %v2830, %v2864
    %2866 = vmatmul.f32.gmra.mxu0 %v2792
    %v2867 = vpop.f32.mrf.mxu0
    %v2868 = vadd.f32 %v2830, %v2867
    %2869 = vmatmul.f32.gmra.mxu0 %v2794
    %v2870 = vpop.f32.mrf.mxu0
    %v2871 = vadd.f32 %v2830, %v2870
    %2872 = vdwg.mxu0
    %2873 = vmatpush.msra.mxu0 %v2827
    %2874 = vmatpush.msra.mxu0 %v2826
    %2875 = vmatpush.msra.mxu0 %v2825
    %2876 = vmatpush.msra.mxu0 %v2824
    %2877 = vmatpush.msra.mxu0 %v2823
    %2878 = vmatpush.msra.mxu0 %v2822
    %2879 = vmatpush.msra.mxu0 %v2821
    %2880 = vmatpush.msra.mxu0 %v2820
    %2881 = vmatpush.msra.mxu0 %v2819
    %2882 = vmatpush.msra.mxu0 %v2818
    %2883 = vmatpush.msra.mxu0 %v2817
    %2884 = vmatpush.msra.mxu0 %v2816
    %2885 = vmatpush.msra.mxu0 %v2815
    %2886 = vmatpush.msra.mxu0 %v2814
    %2887 = vmatpush.msra.mxu0 %v2813
    %2888 = vmatpush.msra.mxu0 %v2812
    %2889 = vmatmul.f32.gmra.mxu0 %v2781
    %v2890 = vpop.f32.mrf.mxu0
    %v2891 = vadd.f32 %v2850, %v2890
    %2892 = vmatmul.f32.gmra.mxu0 %v2783
    %v2893 = vpop.f32.mrf.mxu0
    %v2894 = vadd.f32 %v2853, %v2893
    %2895 = vmatmul.f32.gmra.mxu0 %v2785
    %v2896 = vpop.f32.mrf.mxu0
    %v2897 = vadd.f32 %v2856, %v2896
    %2898 = vmatmul.f32.gmra.mxu0 %v2787
    %v2899 = vpop.f32.mrf.mxu0
    %v2900 = vadd.f32 %v2859, %v2899
    %2901 = vmatmul.f32.gmra.mxu0 %v2789
    %v2902 = vpop.f32.mrf.mxu0
    %v2903 = vadd.f32 %v2862, %v2902
    %2904 = vmatmul.f32.gmra.mxu0 %v2791
    %v2905 = vpop.f32.mrf.mxu0
    %v2906 = vadd.f32 %v2865, %v2905
    %2907 = vmatmul.f32.gmra.mxu0 %v2793
    %v2908 = vpop.f32.mrf.mxu0
    %v2909 = vadd.f32 %v2868, %v2908
    %2910 = vmatmul.f32.gmra.mxu0 %v2795
    %v2911 = vpop.f32.mrf.mxu0
    %v2912 = vadd.f32 %v2871, %v2911
    %2913 = vdwg.mxu0
    %v2914 = vadd.f32 %v2652, %v2891
    %v2915 = vadd.f32 %v2653, %v2894
    %v2916 = vadd.f32 %v2654, %v2897
    %v2917 = vadd.f32 %v2655, %v2900
    %v2918 = vadd.f32 %v2656, %v2903
    %v2919 = vadd.f32 %v2657, %v2906
    %v2920 = vadd.f32 %v2658, %v2909
    %v2921 = vadd.f32 %v2659, %v2912
    %2922 = vadd.xlane.f32.xlu0 %v2914
    %v2923 = vpop.xlane.xlu0 %2922
    %2924 = vadd.xlane.f32.xlu0 %v2915
    %v2925 = vpop.xlane.xlu0 %2924
    %2926 = vadd.xlane.f32.xlu0 %v2916
    %v2927 = vpop.xlane.xlu0 %2926
    %2928 = vadd.xlane.f32.xlu0 %v2917
    %v2929 = vpop.xlane.xlu0 %2928
    %2930 = vadd.xlane.f32.xlu0 %v2918
    %v2931 = vpop.xlane.xlu0 %2930
    %2932 = vadd.xlane.f32.xlu0 %v2919
    %v2933 = vpop.xlane.xlu0 %2932
    %2934 = vadd.xlane.f32.xlu0 %v2920
    %v2935 = vpop.xlane.xlu0 %2934
    %2936 = vadd.xlane.f32.xlu0 %v2921
    %v2937 = vpop.xlane.xlu0 %2936
    %v2938 = vmul.f32 %v2923, %v2491
    %v2939 = vmul.f32 %v2925, %v2491
    %v2940 = vmul.f32 %v2927, %v2491
    %v2941 = vmul.f32 %v2929, %v2491
    %v2942 = vmul.f32 %v2931, %v2491
    %v2943 = vmul.f32 %v2933, %v2491
    %v2944 = vmul.f32 %v2935, %v2491
    %v2945 = vmul.f32 %v2937, %v2491
    %v2946 = vsub.f32 %v2914, %v2938
    %v2947 = vsub.f32 %v2915, %v2939
    %v2948 = vsub.f32 %v2916, %v2940
    %v2949 = vsub.f32 %v2917, %v2941
    %v2950 = vsub.f32 %v2918, %v2942
    %v2951 = vsub.f32 %v2919, %v2943
    %v2952 = vsub.f32 %v2920, %v2944
    %v2953 = vsub.f32 %v2921, %v2945
    %v2954 = vmul.f32 %v2946, %v2946
    %v2955 = vmul.f32 %v2947, %v2947
    %v2956 = vmul.f32 %v2948, %v2948
    %v2957 = vmul.f32 %v2949, %v2949
    %v2958 = vmul.f32 %v2950, %v2950
    %v2959 = vmul.f32 %v2951, %v2951
    %v2960 = vmul.f32 %v2952, %v2952
    %v2961 = vmul.f32 %v2953, %v2953
    %2962 = vadd.xlane.f32.xlu0 %v2954
    %v2963 = vpop.xlane.xlu0 %2962
    %2964 = vadd.xlane.f32.xlu0 %v2955
    %v2965 = vpop.xlane.xlu0 %2964
    %2966 = vadd.xlane.f32.xlu0 %v2956
    %v2967 = vpop.xlane.xlu0 %2966
    %2968 = vadd.xlane.f32.xlu0 %v2957
    %v2969 = vpop.xlane.xlu0 %2968
    %2970 = vadd.xlane.f32.xlu0 %v2958
    %v2971 = vpop.xlane.xlu0 %2970
    %2972 = vadd.xlane.f32.xlu0 %v2959
    %v2973 = vpop.xlane.xlu0 %2972
    %2974 = vadd.xlane.f32.xlu0 %v2960
    %v2975 = vpop.xlane.xlu0 %2974
    %2976 = vadd.xlane.f32.xlu0 %v2961
    %v2977 = vpop.xlane.xlu0 %2976
    %v2978 = vmul.f32 %v2963, %v2491
    %v2979 = vmul.f32 %v2965, %v2491
    %v2980 = vmul.f32 %v2967, %v2491
    %v2981 = vmul.f32 %v2969, %v2491
    %v2982 = vmul.f32 %v2971, %v2491
    %v2983 = vmul.f32 %v2973, %v2491
    %v2984 = vmul.f32 %v2975, %v2491
    %v2985 = vmul.f32 %v2977, %v2491
    %v2986 = vadd.f32 %v2978, 1e-05
    %v2987 = vadd.f32 %v2979, 1e-05
    %v2988 = vadd.f32 %v2980, 1e-05
    %v2989 = vadd.f32 %v2981, 1e-05
    %v2990 = vadd.f32 %v2982, 1e-05
    %v2991 = vadd.f32 %v2983, 1e-05
    %v2992 = vadd.f32 %v2984, 1e-05
    %v2993 = vadd.f32 %v2985, 1e-05
    %v2994 = vrsqrt.pop %v2986
    %v2995 = vmul.f32 %v2994, %v2986
    %v2996 = vmul.f32 %v2995, %v2994
    %v2997 = vmul.f32 0.5, %v2996
    %v2998 = vsub.f32 1.5, %v2997
    %v2999 = vmul.f32 %v2994, %v2998
    %vm3000 = vweird.f32 %v2986
    %vm3001 = vweird.f32 %v2994
    %vm3002 = vmor %vm3000, %vm3001
    %v3003 = vsel %vm3002, %v2994, %v2999
    %v3004 = vrsqrt.pop %v2987
    %v3005 = vmul.f32 %v3004, %v2987
    %v3006 = vmul.f32 %v3005, %v3004
    %v3007 = vmul.f32 0.5, %v3006
    %v3008 = vsub.f32 1.5, %v3007
    %v3009 = vmul.f32 %v3004, %v3008
    %vm3010 = vweird.f32 %v2987
    %vm3011 = vweird.f32 %v3004
    %vm3012 = vmor %vm3010, %vm3011
    %v3013 = vsel %vm3012, %v3004, %v3009
    %v3014 = vrsqrt.pop %v2988
    %v3015 = vmul.f32 %v3014, %v2988
    %v3016 = vmul.f32 %v3015, %v3014
    %v3017 = vmul.f32 0.5, %v3016
    %v3018 = vsub.f32 1.5, %v3017
    %v3019 = vmul.f32 %v3014, %v3018
    %vm3020 = vweird.f32 %v2988
    %vm3021 = vweird.f32 %v3014
    %vm3022 = vmor %vm3020, %vm3021
    %v3023 = vsel %vm3022, %v3014, %v3019
    %v3024 = vrsqrt.pop %v2989
    %v3025 = vmul.f32 %v3024, %v2989
    %v3026 = vmul.f32 %v3025, %v3024
    %v3027 = vmul.f32 0.5, %v3026
    %v3028 = vsub.f32 1.5, %v3027
    %v3029 = vmul.f32 %v3024, %v3028
    %vm3030 = vweird.f32 %v2989
    %vm3031 = vweird.f32 %v3024
    %vm3032 = vmor %vm3030, %vm3031
    %v3033 = vsel %vm3032, %v3024, %v3029
    %v3034 = vrsqrt.pop %v2990
    %v3035 = vmul.f32 %v3034, %v2990
    %v3036 = vmul.f32 %v3035, %v3034
    %v3037 = vmul.f32 0.5, %v3036
    %v3038 = vsub.f32 1.5, %v3037
    %v3039 = vmul.f32 %v3034, %v3038
    %vm3040 = vweird.f32 %v2990
    %vm3041 = vweird.f32 %v3034
    %vm3042 = vmor %vm3040, %vm3041
    %v3043 = vsel %vm3042, %v3034, %v3039
    %v3044 = vrsqrt.pop %v2991
    %v3045 = vmul.f32 %v3044, %v2991
    %v3046 = vmul.f32 %v3045, %v3044
    %v3047 = vmul.f32 0.5, %v3046
    %v3048 = vsub.f32 1.5, %v3047
    %v3049 = vmul.f32 %v3044, %v3048
    %vm3050 = vweird.f32 %v2991
    %vm3051 = vweird.f32 %v3044
    %vm3052 = vmor %vm3050, %vm3051
    %v3053 = vsel %vm3052, %v3044, %v3049
    %v3054 = vrsqrt.pop %v2992
    %v3055 = vmul.f32 %v3054, %v2992
    %v3056 = vmul.f32 %v3055, %v3054
    %v3057 = vmul.f32 0.5, %v3056
    %v3058 = vsub.f32 1.5, %v3057
    %v3059 = vmul.f32 %v3054, %v3058
    %vm3060 = vweird.f32 %v2992
    %vm3061 = vweird.f32 %v3054
    %vm3062 = vmor %vm3060, %vm3061
    %v3063 = vsel %vm3062, %v3054, %v3059
    %v3064 = vrsqrt.pop %v2993
    %v3065 = vmul.f32 %v3064, %v2993
    %v3066 = vmul.f32 %v3065, %v3064
    %v3067 = vmul.f32 0.5, %v3066
    %v3068 = vsub.f32 1.5, %v3067
    %v3069 = vmul.f32 %v3064, %v3068
    %vm3070 = vweird.f32 %v2993
    %vm3071 = vweird.f32 %v3064
    %vm3072 = vmor %vm3070, %vm3071
    %v3073 = vsel %vm3072, %v3064, %v3069
    %v3074 = vmul.f32 %v2946, %v3003
    %v3075 = vmul.f32 %v2947, %v3013
    %v3076 = vmul.f32 %v2948, %v3023
    %v3077 = vmul.f32 %v2949, %v3033
    %v3078 = vmul.f32 %v2950, %v3043
    %v3079 = vmul.f32 %v2951, %v3053
    %v3080 = vmul.f32 %v2952, %v3063
    %v3081 = vmul.f32 %v2953, %v3073
    %v3082 = vld [vmem:[%s11] sm:$0x1]
    %v3084 = vperm.slane %v3082, 0
    %v3086 = vmul.f32 %v3074, %v3084
    %v3087 = vmul.f32 %v3075, %v3084
    %v3088 = vmul.f32 %v3076, %v3084
    %v3089 = vmul.f32 %v3077, %v3084
    %v3090 = vmul.f32 %v3078, %v3084
    %v3091 = vmul.f32 %v3079, %v3084
    %v3092 = vmul.f32 %v3080, %v3084
    %v3093 = vmul.f32 %v3081, %v3084
    %v3094 = vld [vmem:[%s12] sm:$0x1]
    %v3096 = vperm.slane %v3094, 0
    %v3098 = vadd.f32 %v3086, %v3096
    %v3099 = vadd.f32 %v3087, %v3096
    %v3100 = vadd.f32 %v3088, %v3096
    %v3101 = vadd.f32 %v3089, %v3096
    %v3102 = vadd.f32 %v3090, %v3096
    %v3103 = vadd.f32 %v3091, %v3096
    %v3104 = vadd.f32 %v3092, %v3096
    %v3105 = vadd.f32 %v3093, %v3096
    %3106 = vst [vmem:[#allocation13] sm:$0xff] %v3098
    %3107 = vst [vmem:[#allocation13 + $0x8] sm:$0xff] %v3099
    %3108 = vst [vmem:[#allocation13 + $0x10] sm:$0xff] %v3100
    %3109 = vst [vmem:[#allocation13 + $0x18] sm:$0xff] %v3101
    %3110 = vst [vmem:[#allocation13 + $0x20] sm:$0xff] %v3102
    %3111 = vst [vmem:[#allocation13 + $0x28] sm:$0xff] %v3103
    %3112 = vst [vmem:[#allocation13 + $0x30] sm:$0xff] %v3104
    %3113 = vst [vmem:[#allocation13 + $0x38] sm:$0xff] %v3105
    // Predicated region
    $region78: #{tpu_custom_call.1} parent=1 // pred_check
      _
    $region79: #{tpu_custom_call.1} parent=1 // pred_check_branch
      %3115 = sbr.rel (0) target = $region81
    $region80: #{tpu_custom_call.1} parent=1 // pred_region
      %3117 = vsyncadd [#allocation4], 0
      %s3118 = sshll.u32 [#allocation13], 4
      %s3119 = int_to_ptr.vmem [resolvable:$true] %s3118
      %s3120 = sshll.u32 %s13, 4
      %s3121 = int_to_ptr.hbm [resolvable:$true] %s3120
      %3126 = dma.vmem_to_hbm [thread:$0]  %s3119, 1024, %s3121, [#allocation4], 128, 128, 8
    $region81: #{tpu_custom_call.1} parent=1 // pred_fallthru
      _
    // Predicated region
    $region82: #{tpu_custom_call.1} parent=1 // pred_check
      _
    $region83: #{tpu_custom_call.1} parent=1 // pred_check_branch
      %3128 = sbr.rel (0) target = $region85
    $region84: #{tpu_custom_call.1} parent=1 // pred_region
      %3130 = dma.done [#allocation4], 1024
    $region85: #{tpu_custom_call.1} parent=1 // pred_fallthru
      _
    %3131 = vsyncpa [#allocation3], 1
    %3132 = vsyncpa [#allocation6], 1
    %3133 = vsyncpa [#allocation9], 1
    %3134 = vsyncpa [#allocation12], 1
    %3135 = vsyncpa [#allocation4], 1

</llo_original>
